<compile_context>
chip_gen: v5e
topology: v5e:2x2
jax: 0.10.0
libtpu: 0.0.40
codegen_flags: <defaults>
</compile_context>

<pallas_src>
import functools

import jax
import jax.numpy as jnp
from jax.experimental import pallas as pl
from jax.experimental.pallas import tpu as pltpu

CONV_VMEM_BYTES = 48 * 1024 * 1024   # <= v7x 64 MiB physical, plenty on v5e/v6e
MLP_VMEM_BYTES = 32 * 1024 * 1024


# ----------------------------------------------------------------------------
# Kernel A: conv1 + ReLU + pool + conv2 + ReLU + pool (all activations in VMEM)
# ----------------------------------------------------------------------------
def _conv_stack_kernel(patches_ref, w1_ref, b1_ref, w2_ref, b2_ref,
                       o_ref, pad2_ref, cols2_ref, *, tb):
    # patches_ref: (tb, 784, 9)       bf16   im2col taps of the 28x28 input
    # w1_ref:      (9, 32)            bf16
    # b1_ref:      (1, 32)            f32
    # w2_ref:      (288, 64)          bf16   conv2 weights, row = (dh*3+dw)*32+cin
    # b2_ref:      (1, 64)            f32
    # o_ref:       (tb, 49, 64)       bf16   pooled conv2 output, row = h*7 + w
    # pad2_ref:    (tb, 16, 16, 32)   bf16   VMEM scratch: zero-padded conv2 input
    # cols2_ref:   (tb, 14, 14, 288)  bf16   VMEM scratch: conv2 im2col slab
    f32 = jnp.float32
    bf16 = jnp.bfloat16

    # ---- conv1 as ONE im2col matmul on the MXU: (tb*784, 9) x (9, 32) -----
    cols1 = patches_ref[...].reshape(tb * 784, 9)
    h1 = jnp.dot(cols1, w1_ref[...], preferred_element_type=f32)  # (tb*784,32)
    h1 = jnp.maximum(h1 + b1_ref[...], 0.0)

    # ---- 2x2 max pool, stride 2 (rows are (b, h, w) row-major) ------------
    h1 = h1.reshape(tb * 14, 2, 14, 2, 32)
    p1 = h1.max(axis=3).max(axis=1)                     # (tb*14, 14, 32)
    p1 = p1.reshape(tb, 14, 14, 32)

    # ---- zero-pad conv2 input in a bf16 VMEM scratch ------------------------
    # Only the 1-wide border needs clearing (interior fully overwritten each
    # step).  Re-zeroed every step: with a "parallel" batch axis a core may
    # never see program_id==0, so a first-iteration-only init would be unsafe.
    zrow = jnp.zeros((tb, 1, 16, 32), bf16)
    zcol = jnp.zeros((tb, 16, 1, 32), bf16)
    pad2_ref[:, 0:1, :, :] = zrow
    pad2_ref[:, 15:16, :, :] = zrow
    pad2_ref[:, :, 0:1, :] = zcol
    pad2_ref[:, :, 15:16, :] = zcol
    pad2_ref[:, 1:15, 1:15, :] = p1.astype(bf16)        # single f32->bf16 cast
    xp2 = pad2_ref[...]                                 # (tb, 16, 16, 32) bf16

    # ---- conv2 as ONE K=288 im2col matmul -----------------------------------
    # Build the (tb, 14, 14, 288) patch slab in VMEM with static lane-offset
    # stores (column index = (dh*3+dw)*32 + cin, matching w2's row order).
    for t in range(9):
        dh, dw = divmod(t, 3)
        cols2_ref[:, :, :, t * 32:(t + 1) * 32] = xp2[:, dh:dh + 14, dw:dw + 14, :]
    cols2 = cols2_ref[...].reshape(tb * 196, 288)
    h2 = jnp.dot(cols2, w2_ref[...], preferred_element_type=f32)  # (tb*196,64)
    h2 = jnp.maximum(h2 + b2_ref[...], 0.0)

    # ---- 2x2 max pool on the 14x14 grid ------------------------------------
    h2 = h2.reshape(tb * 7, 2, 7, 2, 64)
    p2 = h2.max(axis=3).max(axis=1)                     # (tb*7, 7, 64)
    # Kept as (tb, 49, 64): lane-keeping reshape only; the HBM block is fully
    # contiguous and the wrapper's flatten to (bp, 3136) is a zero-copy
    # collapse, so the MLP head still receives a lane-dense 3136-wide input.
    o_ref[...] = p2.reshape(tb, 49, 64).astype(o_ref.dtype)


def conv_stack(patches, w1, b1, w2, b2, *, tb):
    bp = patches.shape[0]
    kernel = functools.partial(_conv_stack_kernel, tb=tb)
    flops = 2 * bp * (784 * 9 * 32 + 196 * 288 * 64)
    bytes_accessed = (bp * 784 * 9 * 2 + 9 * 32 * 2 + 32 * 4
                      + 288 * 64 * 2 + 64 * 4 + bp * 49 * 64 * 2)
    return pl.pallas_call(
        kernel,
        out_shape=jax.ShapeDtypeStruct((bp, 49, 64), jnp.bfloat16),
        grid=(bp // tb,),
        in_specs=[
            pl.BlockSpec((tb, 784, 9), lambda i: (i, 0, 0)),
            pl.BlockSpec((9, 32), lambda i: (0, 0)),
            pl.BlockSpec((1, 32), lambda i: (0, 0)),
            pl.BlockSpec((288, 64), lambda i: (0, 0)),
            pl.BlockSpec((1, 64), lambda i: (0, 0)),
        ],
        out_specs=pl.BlockSpec((tb, 49, 64), lambda i: (i, 0, 0)),
        scratch_shapes=[pltpu.VMEM((tb, 16, 16, 32), jnp.bfloat16),
                        pltpu.VMEM((tb, 14, 14, 288), jnp.bfloat16)],
        compiler_params=pltpu.CompilerParams(
            dimension_semantics=("parallel",),
            vmem_limit_bytes=CONV_VMEM_BYTES),
        cost_estimate=pl.CostEstimate(flops=flops, transcendentals=0,
                                      bytes_accessed=bytes_accessed),
    )(patches, w1, b1, w2, b2)


# ----------------------------------------------------------------------------
# Kernel B: fused MLP head  relu(x @ W1 + b1) @ W2 + b2
# ----------------------------------------------------------------------------
def _mlp_head_kernel(x_ref, w1_ref, b1_ref, w2_ref, b2_ref, o_ref):
    h = jnp.dot(x_ref[...], w1_ref[...], preferred_element_type=jnp.float32)
    h = jnp.maximum(h + b1_ref[...], 0.0)
    out = jnp.dot(h.astype(jnp.bfloat16), w2_ref[...],
                  preferred_element_type=jnp.float32)
    o_ref[...] = (out + b2_ref[...]).astype(o_ref.dtype)


def mlp_head(flat, wf1, bf1, wf2, bf2, *, tb):
    bp = flat.shape[0]
    flops = 2 * bp * (3136 * 128 + 128 * 10)
    bytes_accessed = (bp * 3136 * 2 + 3136 * 128 * 2 + 128 * 4
                      + 128 * 10 * 2 + 10 * 4 + bp * 10 * 4)
    return pl.pallas_call(
        _mlp_head_kernel,
        out_shape=jax.ShapeDtypeStruct((bp, 10), jnp.float32),
        grid=(bp // tb,),
        in_specs=[
            pl.BlockSpec((tb, 3136), lambda i: (i, 0)),
            pl.BlockSpec((3136, 128), lambda i: (0, 0)),
            pl.BlockSpec((1, 128), lambda i: (0, 0)),
            pl.BlockSpec((128, 10), lambda i: (0, 0)),
            pl.BlockSpec((1, 10), lambda i: (0, 0)),
        ],
        out_specs=pl.BlockSpec((tb, 10), lambda i: (i, 0)),
        compiler_params=pltpu.CompilerParams(
            dimension_semantics=("parallel",),
            vmem_limit_bytes=MLP_VMEM_BYTES),
        cost_estimate=pl.CostEstimate(flops=flops, transcendentals=0,
                                      bytes_accessed=bytes_accessed),
    )(flat, wf1, bf1, wf2, bf2)


# ----------------------------------------------------------------------------
# Wrapper / parameter plumbing
# ----------------------------------------------------------------------------
def _im2col_3x3(x):
    """x: (B, 28, 28) f32 -> (B, 784, 9) patches; tap order t = dh*3 + dw."""
    b = x.shape[0]
    xp = jnp.pad(x, ((0, 0), (1, 1), (1, 1)))
    taps = [xp[:, dh:dh + 28, dw:dw + 28]
            for dh in range(3) for dw in range(3)]
    return jnp.stack(taps, axis=-1).reshape(b, 784, 9)


def _pick_divisor_tile(total, cap):
    """Largest tile <= cap that evenly divides total (trace-time Python)."""
    t = min(total, cap)
    while total % t:
        t -= 1
    return t


def cnn_forward(x_nchw, kp):
    b = x_nchw.shape[0]
    assert x_nchw.shape[1:] == (1, 28, 28), x_nchw.shape

    # Conv-stack batch tile: up to 64 images/step (fits v7x's 64 MiB VMEM with
    # headroom); keep at least 2 grid steps when possible so both v7x cores
    # get a share of the "parallel" batch axis.
    tb_conv = min(b, 64)
    if b >= 2 and pl.cdiv(b, tb_conv) < 2:
        tb_conv = pl.cdiv(b, 2)
    bp = pl.cdiv(b, tb_conv) * tb_conv

    # Cheap boundary plumbing on the 1-channel input only: im2col the 3x3
    # taps so conv1 becomes a single lane-friendly (rows, 9) x (9, 32) matmul.
    patches = _im2col_3x3(x_nchw.reshape(b, 28, 28)).astype(jnp.bfloat16)
    if bp != b:
        patches = jnp.pad(patches, ((0, bp - b), (0, 0), (0, 0)))

    pooled = conv_stack(patches, kp["w1"], kp["b1"], kp["w2"], kp["b2"],
                        tb=tb_conv)

    # TODO(synk): nn.Dropout(0.25) is an eval-mode identity; train-mode
    # stochastic masking is not reproduced here.

    # (bp, 49, 64) -> (bp, 3136): contiguous collapse (zero-copy); fc1's rows
    # were pre-permuted to (h, w, c) order so this matches PyTorch's flatten.
    flat = pooled.reshape(bp, 49 * 64)
    tb_mlp = _pick_divisor_tile(bp, 256)     # fat M tile fills the MXU on fc1
    out = mlp_head(flat, kp["wf1"], kp["bf1"], kp["wf2"], kp["bf2"], tb=tb_mlp)
    return out[:b]


def init_torch_params(key):
    """Deterministic synthetic params with PyTorch CNNModel shapes/init."""
    ks = jax.random.split(key, 8)

    def u(k, shape, fan_in):
        bound = 1.0 / jnp.sqrt(fan_in)
        return jax.random.uniform(k, shape, jnp.float32, -bound, bound)

    return {
        "conv1_w": u(ks[0], (32, 1, 3, 3), 9),
        "conv1_b": u(ks[1], (32,), 9),
        "conv2_w": u(ks[2], (64, 32, 3, 3), 32 * 9),
        "conv2_b": u(ks[3], (64,), 32 * 9),
        "fc1_w": u(ks[4], (128, 64 * 7 * 7), 64 * 7 * 7),
        "fc1_b": u(ks[5], (128,), 64 * 7 * 7),
        "fc2_w": u(ks[6], (10, 128), 128),
        "fc2_b": u(ks[7], (10,), 128),
    }


def to_kernel_params(tp):
    """One-time host-side repack of PyTorch-layout params for the kernels."""
    bf16 = jnp.bfloat16
    # conv1: tap-major (t = dh*3 + dw) matmul form.
    w1 = tp["conv1_w"].transpose(2, 3, 1, 0).reshape(9, 32)
    # conv2: flat im2col form, row index = (dh*3 + dw)*32 + cin.
    w2 = tp["conv2_w"].transpose(2, 3, 1, 0).reshape(288, 64)
    # fc1 rows permuted from PyTorch's (c, h, w) flatten order to the kernel's
    # (h, w, c) order so no activation transpose is needed before fc1.
    wf1 = (tp["fc1_w"].reshape(128, 64, 7, 7)
           .transpose(2, 3, 1, 0).reshape(3136, 128))
    wf2 = tp["fc2_w"].transpose(1, 0)
    return {
        "w1": w1.astype(bf16), "b1": tp["conv1_b"].reshape(1, 32),
        "w2": w2.astype(bf16), "b2": tp["conv2_b"].reshape(1, 64),
        "wf1": wf1.astype(bf16), "bf1": tp["fc1_b"].reshape(1, 128),
        "wf2": wf2.astype(bf16), "bf2": tp["fc2_b"].reshape(1, 10),
    }


def cnn_reference(x_nchw, tp):
    """Pure-JAX f32 forward mirroring the PyTorch module (for verification)."""
    dn = ("NCHW", "OIHW", "NCHW")

    def conv(x, w, b):
        y = jax.lax.conv_general_dilated(x, w, (1, 1), [(1, 1), (1, 1)],
                                         dimension_numbers=dn)
        return jnp.maximum(y + b[None, :, None, None], 0.0)

    def pool(y):
        n, c, h, w = y.shape
        return y.reshape(n, c, h // 2, 2, w // 2, 2).max(axis=(3, 5))

    y = pool(conv(x_nchw, tp["conv1_w"], tp["conv1_b"]))
    y = pool(conv(y, tp["conv2_w"], tp["conv2_b"]))
    y = y.reshape(y.shape[0], -1)               # (B, 64*7*7) in (c, h, w) order
    y = jnp.maximum(y @ tp["fc1_w"].T + tp["fc1_b"], 0.0)
    return y @ tp["fc2_w"].T + tp["fc2_b"]


if __name__ == "__main__":
    key = jax.random.PRNGKey(0)
    pkey, xkey = jax.random.split(key)
    torch_params = init_torch_params(pkey)
    kparams = to_kernel_params(torch_params)

    # MNIST-shaped input (28x28 is required by fc1 = 64*7*7).
    x = jax.random.normal(xkey, (2, 1, 28, 28), dtype=jnp.float32)

    out = jax.jit(cnn_forward)(x, kparams)
    out = jax.block_until_ready(out)
    assert out.shape == (2, 10), out.shape

    # Check against an f32 pure-JAX reference (bf16 matmuls => loose tol).
    ref = cnn_reference(x, torch_params)
    max_err = float(jnp.max(jnp.abs(out - ref)))
    assert max_err < 5e-2, f"kernel/reference mismatch: max abs err {max_err}"

    print("KERNEL_OK")
</pallas_src>

<mosaic_0001>
module attributes {stable_mosaic.version = 11 : i64} {
  func.func @_conv_stack_kernel(%arg0: i32, %arg1: memref<1x784x9xbf16, #tpu.memory_space<vmem>>, %arg2: memref<9x32xbf16, #tpu.memory_space<vmem>>, %arg3: memref<1x32xf32, #tpu.memory_space<vmem>>, %arg4: memref<288x64xbf16, #tpu.memory_space<vmem>>, %arg5: memref<1x64xf32, #tpu.memory_space<vmem>>, %arg6: memref<1x49x64xbf16, #tpu.memory_space<vmem>>, %arg7: memref<1x16x16x32xbf16, #tpu.memory_space<vmem>>, %arg8: memref<1x14x14x288xbf16, #tpu.memory_space<vmem>>) attributes {dimension_semantics = [#tpu.dimension_semantics<parallel>], iteration_bounds = array<i64: 2>, scalar_prefetch = 0 : i64, scratch_operands = 2 : i64, tpu.core_type = #tpu.core_type<tc>, window_params = [{transform_indices = @transform_0, window_bounds = array<i64: 1, 784, 9>}, {pipeline_mode = #tpu.pipeline_mode<synchronous>, transform_indices = @transform_1, window_bounds = array<i64: 9, 32>}, {pipeline_mode = #tpu.pipeline_mode<synchronous>, transform_indices = @transform_2, window_bounds = array<i64: 1, 32>}, {pipeline_mode = #tpu.pipeline_mode<synchronous>, transform_indices = @transform_3, window_bounds = array<i64: 288, 64>}, {pipeline_mode = #tpu.pipeline_mode<synchronous>, transform_indices = @transform_4, window_bounds = array<i64: 1, 64>}, {transform_indices = @transform_5, window_bounds = array<i64: 1, 49, 64>}]} {
    %c0 = arith.constant 0 : index
    %c0_0 = arith.constant 0 : index
    %c0_1 = arith.constant 0 : index
    %0 = vector.load %arg1[%c0, %c0_0, %c0_1] : memref<1x784x9xbf16, #tpu.memory_space<vmem>>, vector<1x784x9xbf16>
    %1 = vector.shape_cast %0 : vector<1x784x9xbf16> to vector<784x9xbf16>
    %c0_2 = arith.constant 0 : index
    %c0_3 = arith.constant 0 : index
    %2 = vector.load %arg2[%c0_2, %c0_3] : memref<9x32xbf16, #tpu.memory_space<vmem>>, vector<9x32xbf16>
    %cst = arith.constant dense<0.000000e+00> : vector<784x32xf32>
    %3 = tpu.matmul %1, %2, %cst {dimension_numbers = #tpu.dot_dimension_numbers<[1], [0], [0], [1], [0, 0, 1, 1], [], []>} : vector<784x9xbf16>, vector<9x32xbf16>, vector<784x32xf32> -> vector<784x32xf32>
    %c0_4 = arith.constant 0 : index
    %c0_5 = arith.constant 0 : index
    %4 = vector.load %arg3[%c0_4, %c0_5] : memref<1x32xf32, #tpu.memory_space<vmem>>, vector<1x32xf32>
    %5 = vector.broadcast %4 : vector<1x32xf32> to vector<784x32xf32>
    %6 = arith.addf %3, %5 : vector<784x32xf32>
    %cst_6 = arith.constant 0.000000e+00 : f32
    %7 = vector.broadcast %cst_6 : f32 to vector<784x32xf32>
    %8 = arith.maximumf %6, %7 : vector<784x32xf32>
    %9 = vector.shape_cast %8 : vector<784x32xf32> to vector<14x2x14x2x32xf32>
    %cst_7 = arith.constant dense<0xFF800000> : vector<14x2x14x32xf32>
    %10 = vector.multi_reduction <maximumf>, %9, %cst_7 [3] : vector<14x2x14x2x32xf32> to vector<14x2x14x32xf32>
    %cst_8 = arith.constant dense<0xFF800000> : vector<14x14x32xf32>
    %11 = vector.multi_reduction <maximumf>, %10, %cst_8 [1] : vector<14x2x14x32xf32> to vector<14x14x32xf32>
    %12 = vector.shape_cast %11 : vector<14x14x32xf32> to vector<1x14x14x32xf32>
    %cst_9 = arith.constant 0.000000e+00 : bf16
    %13 = vector.broadcast %cst_9 : bf16 to vector<1x1x16x32xbf16>
    %cst_10 = arith.constant 0.000000e+00 : bf16
    %14 = vector.broadcast %cst_10 : bf16 to vector<1x16x1x32xbf16>
    %c0_11 = arith.constant 0 : index
    %c0_12 = arith.constant 0 : index
    %c0_13 = arith.constant 0 : index
    %c0_14 = arith.constant 0 : index
    %15 = vector.load %arg7[%c0_11, %c0_12, %c0_13, %c0_14] : memref<1x16x16x32xbf16, #tpu.memory_space<vmem>>, vector<1x1x16x32xbf16>
    tpu.vector_store %arg7[%c0_11, %c0_12, %c0_13, %c0_14], %13 {strides = array<i32>} : memref<1x16x16x32xbf16, #tpu.memory_space<vmem>>, vector<1x1x16x32xbf16>,
    %c0_15 = arith.constant 0 : index
    %c15 = arith.constant 15 : index
    %c0_16 = arith.constant 0 : index
    %c0_17 = arith.constant 0 : index
    %16 = vector.load %arg7[%c0_15, %c15, %c0_16, %c0_17] : memref<1x16x16x32xbf16, #tpu.memory_space<vmem>>, vector<1x1x16x32xbf16>
    tpu.vector_store %arg7[%c0_15, %c15, %c0_16, %c0_17], %13 {strides = array<i32>} : memref<1x16x16x32xbf16, #tpu.memory_space<vmem>>, vector<1x1x16x32xbf16>,
    %c0_18 = arith.constant 0 : index
    %c0_19 = arith.constant 0 : index
    %c0_20 = arith.constant 0 : index
    %c0_21 = arith.constant 0 : index
    %17 = vector.load %arg7[%c0_18, %c0_19, %c0_20, %c0_21] : memref<1x16x16x32xbf16, #tpu.memory_space<vmem>>, vector<1x16x1x32xbf16>
    tpu.vector_store %arg7[%c0_18, %c0_19, %c0_20, %c0_21], %14 {strides = array<i32>} : memref<1x16x16x32xbf16, #tpu.memory_space<vmem>>, vector<1x16x1x32xbf16>,
    %c0_22 = arith.constant 0 : index
    %c0_23 = arith.constant 0 : index
    %c15_24 = arith.constant 15 : index
    %c0_25 = arith.constant 0 : index
    %18 = vector.load %arg7[%c0_22, %c0_23, %c15_24, %c0_25] : memref<1x16x16x32xbf16, #tpu.memory_space<vmem>>, vector<1x16x1x32xbf16>
    tpu.vector_store %arg7[%c0_22, %c0_23, %c15_24, %c0_25], %14 {strides = array<i32>} : memref<1x16x16x32xbf16, #tpu.memory_space<vmem>>, vector<1x16x1x32xbf16>,
    %19 = arith.truncf %12 : vector<1x14x14x32xf32> to vector<1x14x14x32xbf16>
    %c0_26 = arith.constant 0 : index
    %c1 = arith.constant 1 : index
    %c1_27 = arith.constant 1 : index
    %c0_28 = arith.constant 0 : index
    %20 = vector.load %arg7[%c0_26, %c1, %c1_27, %c0_28] : memref<1x16x16x32xbf16, #tpu.memory_space<vmem>>, vector<1x14x14x32xbf16>
    tpu.vector_store %arg7[%c0_26, %c1, %c1_27, %c0_28], %19 {strides = array<i32>} : memref<1x16x16x32xbf16, #tpu.memory_space<vmem>>, vector<1x14x14x32xbf16>,
    %c0_29 = arith.constant 0 : index
    %c0_30 = arith.constant 0 : index
    %c0_31 = arith.constant 0 : index
    %c0_32 = arith.constant 0 : index
    %21 = vector.load %arg7[%c0_29, %c0_30, %c0_31, %c0_32] : memref<1x16x16x32xbf16, #tpu.memory_space<vmem>>, vector<1x16x16x32xbf16>
    %22 = vector.extract_strided_slice %21 {offsets = [0, 0, 0, 0], sizes = [1, 14, 14, 32], strides = [1, 1, 1, 1]} : vector<1x16x16x32xbf16> to vector<1x14x14x32xbf16>
    %c0_33 = arith.constant 0 : index
    %c0_34 = arith.constant 0 : index
    %c0_35 = arith.constant 0 : index
    %c0_36 = arith.constant 0 : index
    %23 = vector.load %arg8[%c0_33, %c0_34, %c0_35, %c0_36] : memref<1x14x14x288xbf16, #tpu.memory_space<vmem>>, vector<1x14x14x32xbf16>
    tpu.vector_store %arg8[%c0_33, %c0_34, %c0_35, %c0_36], %22 {strides = array<i32>} : memref<1x14x14x288xbf16, #tpu.memory_space<vmem>>, vector<1x14x14x32xbf16>,
    %24 = vector.extract_strided_slice %21 {offsets = [0, 0, 1, 0], sizes = [1, 14, 14, 32], strides = [1, 1, 1, 1]} : vector<1x16x16x32xbf16> to vector<1x14x14x32xbf16>
    %c0_37 = arith.constant 0 : index
    %c0_38 = arith.constant 0 : index
    %c0_39 = arith.constant 0 : index
    %c32 = arith.constant 32 : index
    %25 = vector.load %arg8[%c0_37, %c0_38, %c0_39, %c32] : memref<1x14x14x288xbf16, #tpu.memory_space<vmem>>, vector<1x14x14x32xbf16>
    tpu.vector_store %arg8[%c0_37, %c0_38, %c0_39, %c32], %24 {strides = array<i32>} : memref<1x14x14x288xbf16, #tpu.memory_space<vmem>>, vector<1x14x14x32xbf16>,
    %26 = vector.extract_strided_slice %21 {offsets = [0, 0, 2, 0], sizes = [1, 14, 14, 32], strides = [1, 1, 1, 1]} : vector<1x16x16x32xbf16> to vector<1x14x14x32xbf16>
    %c0_40 = arith.constant 0 : index
    %c0_41 = arith.constant 0 : index
    %c0_42 = arith.constant 0 : index
    %c64 = arith.constant 64 : index
    %27 = vector.load %arg8[%c0_40, %c0_41, %c0_42, %c64] : memref<1x14x14x288xbf16, #tpu.memory_space<vmem>>, vector<1x14x14x32xbf16>
    tpu.vector_store %arg8[%c0_40, %c0_41, %c0_42, %c64], %26 {strides = array<i32>} : memref<1x14x14x288xbf16, #tpu.memory_space<vmem>>, vector<1x14x14x32xbf16>,
    %28 = vector.extract_strided_slice %21 {offsets = [0, 1, 0, 0], sizes = [1, 14, 14, 32], strides = [1, 1, 1, 1]} : vector<1x16x16x32xbf16> to vector<1x14x14x32xbf16>
    %c0_43 = arith.constant 0 : index
    %c0_44 = arith.constant 0 : index
    %c0_45 = arith.constant 0 : index
    %c96 = arith.constant 96 : index
    %29 = vector.load %arg8[%c0_43, %c0_44, %c0_45, %c96] : memref<1x14x14x288xbf16, #tpu.memory_space<vmem>>, vector<1x14x14x32xbf16>
    tpu.vector_store %arg8[%c0_43, %c0_44, %c0_45, %c96], %28 {strides = array<i32>} : memref<1x14x14x288xbf16, #tpu.memory_space<vmem>>, vector<1x14x14x32xbf16>,
    %30 = vector.extract_strided_slice %21 {offsets = [0, 1, 1, 0], sizes = [1, 14, 14, 32], strides = [1, 1, 1, 1]} : vector<1x16x16x32xbf16> to vector<1x14x14x32xbf16>
    %c0_46 = arith.constant 0 : index
    %c0_47 = arith.constant 0 : index
    %c0_48 = arith.constant 0 : index
    %c128 = arith.constant 128 : index
    %31 = vector.load %arg8[%c0_46, %c0_47, %c0_48, %c128] : memref<1x14x14x288xbf16, #tpu.memory_space<vmem>>, vector<1x14x14x32xbf16>
    tpu.vector_store %arg8[%c0_46, %c0_47, %c0_48, %c128], %30 {strides = array<i32>} : memref<1x14x14x288xbf16, #tpu.memory_space<vmem>>, vector<1x14x14x32xbf16>,
    %32 = vector.extract_strided_slice %21 {offsets = [0, 1, 2, 0], sizes = [1, 14, 14, 32], strides = [1, 1, 1, 1]} : vector<1x16x16x32xbf16> to vector<1x14x14x32xbf16>
    %c0_49 = arith.constant 0 : index
    %c0_50 = arith.constant 0 : index
    %c0_51 = arith.constant 0 : index
    %c160 = arith.constant 160 : index
    %33 = vector.load %arg8[%c0_49, %c0_50, %c0_51, %c160] : memref<1x14x14x288xbf16, #tpu.memory_space<vmem>>, vector<1x14x14x32xbf16>
    tpu.vector_store %arg8[%c0_49, %c0_50, %c0_51, %c160], %32 {strides = array<i32>} : memref<1x14x14x288xbf16, #tpu.memory_space<vmem>>, vector<1x14x14x32xbf16>,
    %34 = vector.extract_strided_slice %21 {offsets = [0, 2, 0, 0], sizes = [1, 14, 14, 32], strides = [1, 1, 1, 1]} : vector<1x16x16x32xbf16> to vector<1x14x14x32xbf16>
    %c0_52 = arith.constant 0 : index
    %c0_53 = arith.constant 0 : index
    %c0_54 = arith.constant 0 : index
    %c192 = arith.constant 192 : index
    %35 = vector.load %arg8[%c0_52, %c0_53, %c0_54, %c192] : memref<1x14x14x288xbf16, #tpu.memory_space<vmem>>, vector<1x14x14x32xbf16>
    tpu.vector_store %arg8[%c0_52, %c0_53, %c0_54, %c192], %34 {strides = array<i32>} : memref<1x14x14x288xbf16, #tpu.memory_space<vmem>>, vector<1x14x14x32xbf16>,
    %36 = vector.extract_strided_slice %21 {offsets = [0, 2, 1, 0], sizes = [1, 14, 14, 32], strides = [1, 1, 1, 1]} : vector<1x16x16x32xbf16> to vector<1x14x14x32xbf16>
    %c0_55 = arith.constant 0 : index
    %c0_56 = arith.constant 0 : index
    %c0_57 = arith.constant 0 : index
    %c224 = arith.constant 224 : index
    %37 = vector.load %arg8[%c0_55, %c0_56, %c0_57, %c224] : memref<1x14x14x288xbf16, #tpu.memory_space<vmem>>, vector<1x14x14x32xbf16>
    tpu.vector_store %arg8[%c0_55, %c0_56, %c0_57, %c224], %36 {strides = array<i32>} : memref<1x14x14x288xbf16, #tpu.memory_space<vmem>>, vector<1x14x14x32xbf16>,
    %38 = vector.extract_strided_slice %21 {offsets = [0, 2, 2, 0], sizes = [1, 14, 14, 32], strides = [1, 1, 1, 1]} : vector<1x16x16x32xbf16> to vector<1x14x14x32xbf16>
    %c0_58 = arith.constant 0 : index
    %c0_59 = arith.constant 0 : index
    %c0_60 = arith.constant 0 : index
    %c256 = arith.constant 256 : index
    %39 = vector.load %arg8[%c0_58, %c0_59, %c0_60, %c256] : memref<1x14x14x288xbf16, #tpu.memory_space<vmem>>, vector<1x14x14x32xbf16>
    tpu.vector_store %arg8[%c0_58, %c0_59, %c0_60, %c256], %38 {strides = array<i32>} : memref<1x14x14x288xbf16, #tpu.memory_space<vmem>>, vector<1x14x14x32xbf16>,
    %c0_61 = arith.constant 0 : index
    %c0_62 = arith.constant 0 : index
    %c0_63 = arith.constant 0 : index
    %c0_64 = arith.constant 0 : index
    %40 = vector.load %arg8[%c0_61, %c0_62, %c0_63, %c0_64] : memref<1x14x14x288xbf16, #tpu.memory_space<vmem>>, vector<1x14x14x288xbf16>
    %41 = vector.shape_cast %40 : vector<1x14x14x288xbf16> to vector<196x288xbf16>
    %c0_65 = arith.constant 0 : index
    %c0_66 = arith.constant 0 : index
    %42 = vector.load %arg4[%c0_65, %c0_66] : memref<288x64xbf16, #tpu.memory_space<vmem>>, vector<288x64xbf16>
    %cst_67 = arith.constant dense<0.000000e+00> : vector<196x64xf32>
    %43 = tpu.matmul %41, %42, %cst_67 {dimension_numbers = #tpu.dot_dimension_numbers<[1], [0], [0], [1], [0, 0, 1, 1], [], []>} : vector<196x288xbf16>, vector<288x64xbf16>, vector<196x64xf32> -> vector<196x64xf32>
    %c0_68 = arith.constant 0 : index
    %c0_69 = arith.constant 0 : index
    %44 = vector.load %arg5[%c0_68, %c0_69] : memref<1x64xf32, #tpu.memory_space<vmem>>, vector<1x64xf32>
    %45 = vector.broadcast %44 : vector<1x64xf32> to vector<196x64xf32>
    %46 = arith.addf %43, %45 : vector<196x64xf32>
    %cst_70 = arith.constant 0.000000e+00 : f32
    %47 = vector.broadcast %cst_70 : f32 to vector<196x64xf32>
    %48 = arith.maximumf %46, %47 : vector<196x64xf32>
    %49 = vector.shape_cast %48 : vector<196x64xf32> to vector<7x2x7x2x64xf32>
    %cst_71 = arith.constant dense<0xFF800000> : vector<7x2x7x64xf32>
    %50 = vector.multi_reduction <maximumf>, %49, %cst_71 [3] : vector<7x2x7x2x64xf32> to vector<7x2x7x64xf32>
    %cst_72 = arith.constant dense<0xFF800000> : vector<7x7x64xf32>
    %51 = vector.multi_reduction <maximumf>, %50, %cst_72 [1] : vector<7x2x7x64xf32> to vector<7x7x64xf32>
    %52 = vector.shape_cast %51 : vector<7x7x64xf32> to vector<1x49x64xf32>
    %53 = arith.truncf %52 : vector<1x49x64xf32> to vector<1x49x64xbf16>
    %c0_73 = arith.constant 0 : index
    %c0_74 = arith.constant 0 : index
    %c0_75 = arith.constant 0 : index
    %54 = vector.load %arg6[%c0_73, %c0_74, %c0_75] : memref<1x49x64xbf16, #tpu.memory_space<vmem>>, vector<1x49x64xbf16>
    tpu.vector_store %arg6[%c0_73, %c0_74, %c0_75], %53 {strides = array<i32>} : memref<1x49x64xbf16, #tpu.memory_space<vmem>>, vector<1x49x64xbf16>,
    return
  }
  func.func @transform_0(%arg0: i32) -> (i32, i32, i32) {
    %c0_i32 = arith.constant 0 : i32
    %c0_i32_0 = arith.constant 0 : i32
    %c0_i32_1 = arith.constant 0 : i32
    return %arg0, %c0_i32, %c0_i32_0 : i32, i32, i32
  }
  func.func @transform_1(%arg0: i32) -> (i32, i32) {
    %c0_i32 = arith.constant 0 : i32
    %c0_i32_0 = arith.constant 0 : i32
    %c0_i32_1 = arith.constant 0 : i32
    return %c0_i32, %c0_i32_0 : i32, i32
  }
  func.func @transform_2(%arg0: i32) -> (i32, i32) {
    %c0_i32 = arith.constant 0 : i32
    %c0_i32_0 = arith.constant 0 : i32
    %c0_i32_1 = arith.constant 0 : i32
    return %c0_i32, %c0_i32_0 : i32, i32
  }
  func.func @transform_3(%arg0: i32) -> (i32, i32) {
    %c0_i32 = arith.constant 0 : i32
    %c0_i32_0 = arith.constant 0 : i32
    %c0_i32_1 = arith.constant 0 : i32
    return %c0_i32, %c0_i32_0 : i32, i32
  }
  func.func @transform_4(%arg0: i32) -> (i32, i32) {
    %c0_i32 = arith.constant 0 : i32
    %c0_i32_0 = arith.constant 0 : i32
    %c0_i32_1 = arith.constant 0 : i32
    return %c0_i32, %c0_i32_0 : i32, i32
  }
  func.func @transform_5(%arg0: i32) -> (i32, i32, i32) {
    %c0_i32 = arith.constant 0 : i32
    %c0_i32_0 = arith.constant 0 : i32
    %c0_i32_1 = arith.constant 0 : i32
    return %arg0, %c0_i32, %c0_i32_0 : i32, i32, i32
  }
}

module attributes {stable_mosaic.version = 11 : i64} {
  func.func @_mlp_head_kernel(%arg0: i32, %arg1: memref<2x3136xbf16, #tpu.memory_space<vmem>>, %arg2: memref<3136x128xbf16, #tpu.memory_space<vmem>>, %arg3: memref<1x128xf32, #tpu.memory_space<vmem>>, %arg4: memref<128x10xbf16, #tpu.memory_space<vmem>>, %arg5: memref<1x10xf32, #tpu.memory_space<vmem>>, %arg6: memref<2x10xf32, #tpu.memory_space<vmem>>) attributes {dimension_semantics = [#tpu.dimension_semantics<parallel>], iteration_bounds = array<i64: 1>, scalar_prefetch = 0 : i64, scratch_operands = 0 : i64, tpu.core_type = #tpu.core_type<tc>, window_params = [{transform_indices = @transform_0, window_bounds = array<i64: 2, 3136>}, {pipeline_mode = #tpu.pipeline_mode<synchronous>, transform_indices = @transform_1, window_bounds = array<i64: 3136, 128>}, {pipeline_mode = #tpu.pipeline_mode<synchronous>, transform_indices = @transform_2, window_bounds = array<i64: 1, 128>}, {pipeline_mode = #tpu.pipeline_mode<synchronous>, transform_indices = @transform_3, window_bounds = array<i64: 128, 10>}, {pipeline_mode = #tpu.pipeline_mode<synchronous>, transform_indices = @transform_4, window_bounds = array<i64: 1, 10>}, {transform_indices = @transform_5, window_bounds = array<i64: 2, 10>}]} {
    %c0 = arith.constant 0 : index
    %c0_0 = arith.constant 0 : index
    %0 = vector.load %arg1[%c0, %c0_0] : memref<2x3136xbf16, #tpu.memory_space<vmem>>, vector<2x3136xbf16>
    %c0_1 = arith.constant 0 : index
    %c0_2 = arith.constant 0 : index
    %1 = vector.load %arg2[%c0_1, %c0_2] : memref<3136x128xbf16, #tpu.memory_space<vmem>>, vector<3136x128xbf16>
    %cst = arith.constant dense<0.000000e+00> : vector<2x128xf32>
    %2 = tpu.matmul %0, %1, %cst {dimension_numbers = #tpu.dot_dimension_numbers<[1], [0], [0], [1], [0, 0, 1, 1], [], []>} : vector<2x3136xbf16>, vector<3136x128xbf16>, vector<2x128xf32> -> vector<2x128xf32>
    %c0_3 = arith.constant 0 : index
    %c0_4 = arith.constant 0 : index
    %3 = vector.load %arg3[%c0_3, %c0_4] : memref<1x128xf32, #tpu.memory_space<vmem>>, vector<1x128xf32>
    %4 = vector.broadcast %3 : vector<1x128xf32> to vector<2x128xf32>
    %5 = arith.addf %2, %4 : vector<2x128xf32>
    %cst_5 = arith.constant 0.000000e+00 : f32
    %6 = vector.broadcast %cst_5 : f32 to vector<2x128xf32>
    %7 = arith.maximumf %5, %6 : vector<2x128xf32>
    %8 = arith.truncf %7 : vector<2x128xf32> to vector<2x128xbf16>
    %c0_6 = arith.constant 0 : index
    %c0_7 = arith.constant 0 : index
    %9 = vector.load %arg4[%c0_6, %c0_7] : memref<128x10xbf16, #tpu.memory_space<vmem>>, vector<128x10xbf16>
    %cst_8 = arith.constant dense<0.000000e+00> : vector<2x10xf32>
    %10 = tpu.matmul %8, %9, %cst_8 {dimension_numbers = #tpu.dot_dimension_numbers<[1], [0], [0], [1], [0, 0, 1, 1], [], []>} : vector<2x128xbf16>, vector<128x10xbf16>, vector<2x10xf32> -> vector<2x10xf32>
    %c0_9 = arith.constant 0 : index
    %c0_10 = arith.constant 0 : index
    %11 = vector.load %arg5[%c0_9, %c0_10] : memref<1x10xf32, #tpu.memory_space<vmem>>, vector<1x10xf32>
    %12 = vector.broadcast %11 : vector<1x10xf32> to vector<2x10xf32>
    %13 = arith.addf %10, %12 : vector<2x10xf32>
    %c0_11 = arith.constant 0 : index
    %c0_12 = arith.constant 0 : index
    %14 = vector.load %arg6[%c0_11, %c0_12] : memref<2x10xf32, #tpu.memory_space<vmem>>, vector<2x10xf32>
    tpu.vector_store %arg6[%c0_11, %c0_12], %13 {strides = array<i32>} : memref<2x10xf32, #tpu.memory_space<vmem>>, vector<2x10xf32>,
    return
  }
  func.func @transform_0(%arg0: i32) -> (i32, i32) {
    %c0_i32 = arith.constant 0 : i32
    %c0_i32_0 = arith.constant 0 : i32
    return %arg0, %c0_i32 : i32, i32
  }
  func.func @transform_1(%arg0: i32) -> (i32, i32) {
    %c0_i32 = arith.constant 0 : i32
    %c0_i32_0 = arith.constant 0 : i32
    %c0_i32_1 = arith.constant 0 : i32
    return %c0_i32, %c0_i32_0 : i32, i32
  }
  func.func @transform_2(%arg0: i32) -> (i32, i32) {
    %c0_i32 = arith.constant 0 : i32
    %c0_i32_0 = arith.constant 0 : i32
    %c0_i32_1 = arith.constant 0 : i32
    return %c0_i32, %c0_i32_0 : i32, i32
  }
  func.func @transform_3(%arg0: i32) -> (i32, i32) {
    %c0_i32 = arith.constant 0 : i32
    %c0_i32_0 = arith.constant 0 : i32
    %c0_i32_1 = arith.constant 0 : i32
    return %c0_i32, %c0_i32_0 : i32, i32
  }
  func.func @transform_4(%arg0: i32) -> (i32, i32) {
    %c0_i32 = arith.constant 0 : i32
    %c0_i32_0 = arith.constant 0 : i32
    %c0_i32_1 = arith.constant 0 : i32
    return %c0_i32, %c0_i32_0 : i32, i32
  }
  func.func @transform_5(%arg0: i32) -> (i32, i32) {
    %c0_i32 = arith.constant 0 : i32
    %c0_i32_0 = arith.constant 0 : i32
    return %arg0, %c0_i32 : i32, i32
  }
}

</mosaic_0001>

<llo_original>
// kernel: cnn_forward.3
$region0: #{cnn_forward.3}
  #allocation0 [shape = 'u32[]', space=smem, size = 0x4, offset = 0x4, fixed_abs, tag = 'smem constant byte address 0x4 - core index']
  #allocation1 [shape = 'u32[72,128]{1,0:T(1,128)}', space=vmem, size = 0x9000, scoped, tag = 'internal scratch']
  %s0 = inlined_call_operand.vmem [shape: bf16[2,3136], index: 0, kind: input, shape index: {}]
  %s1 = inlined_call_operand.vmem [shape: bf16[3136,128], index: 1, kind: input, shape index: {}]
  %s2 = inlined_call_operand.vmem [shape: f32[1,128], index: 2, kind: input, shape index: {}]
  %s3 = inlined_call_operand.vmem [shape: bf16[128,10], index: 3, kind: input, shape index: {}]
  %s4 = inlined_call_operand.vmem [shape: f32[1,10], index: 4, kind: input, shape index: {}]
  %s5 = inlined_call_operand.hbm [shape: f32[2,10], index: 5, kind: output, shape index: {}]
  %s6 = sld [smem:[#allocation0]]
  $region30: #{cnn_forward.3} parent=0
    _
  %s8 = ssub.s32 1, %s6
  %s9 = scalar_select 0, %s8, %s6
  $region1: #{cnn_forward.3} parent=0
    #allocation2 [shape = 'u8[1024]{0}', space=vmem, size = 0x400, scoped, tag = 'output window, operand 0, single buffered']
    #allocation3 [shape = 's32[1]{0}', space=sflag, size = 0x4, scoped, tag = 'scoped memory for cnn_forward.3']
    %10 = vsyncpa [#allocation3], 0
    // Predicated region
    $region2: #{cnn_forward.3} parent=1 // pred_check
      _
    $region3: #{cnn_forward.3} parent=1 // pred_check_branch
      %12 = sbr.rel (0) target = $region5
    $region4: #{cnn_forward.3} parent=1 // pred_region
      _
    $region5: #{cnn_forward.3} parent=1 // pred_fallthru
      _
    // Predicated region
    $region6: #{cnn_forward.3} parent=1 // pred_check
      _
    $region7: #{cnn_forward.3} parent=1 // pred_check_branch
      %14 = sbr.rel (0) target = $region9
    $region8: #{cnn_forward.3} parent=1 // pred_region
      _
    $region9: #{cnn_forward.3} parent=1 // pred_fallthru
      _
    // Predicated region
    $region10: #{cnn_forward.3} parent=1 // pred_check
      _
    $region11: #{cnn_forward.3} parent=1 // pred_check_branch
      %16 = sbr.rel (0) target = $region13
    $region12: #{cnn_forward.3} parent=1 // pred_region
      _
    $region13: #{cnn_forward.3} parent=1 // pred_fallthru
      _
    // Predicated region
    $region14: #{cnn_forward.3} parent=1 // pred_check
      _
    $region15: #{cnn_forward.3} parent=1 // pred_check_branch
      %18 = sbr.rel (0) target = $region17
    $region16: #{cnn_forward.3} parent=1 // pred_region
      _
    $region17: #{cnn_forward.3} parent=1 // pred_fallthru
      _
    // Predicated region
    $region18: #{cnn_forward.3} parent=1 // pred_check
      _
    $region19: #{cnn_forward.3} parent=1 // pred_check_branch
      %20 = sbr.rel (0) target = $region21
    $region20: #{cnn_forward.3} parent=1 // pred_region
      _
    $region21: #{cnn_forward.3} parent=1 // pred_fallthru
      _
    %v22 = vld [vmem:[%s0] sm:$0xff]
    %v23 = vld [vmem:[%s0 + $0x8] sm:$0xff]
    %v24 = vld [vmem:[%s0 + $0x10] sm:$0xff]
    %v25 = vld [vmem:[%s0 + $0x18] sm:$0x1]
    %v26 = vld [vmem:[%s1] sm:$0xf]
    %v27 = vld [vmem:[%s1 + $0x4] sm:$0xf]
    %v28 = vld [vmem:[%s1 + $0x8] sm:$0xf]
    %v29 = vld [vmem:[%s1 + $0xc] sm:$0xf]
    %v30 = vld [vmem:[%s1 + $0x10] sm:$0xf]
    %v31 = vld [vmem:[%s1 + $0x14] sm:$0xf]
    %v32 = vld [vmem:[%s1 + $0x18] sm:$0xf]
    %v33 = vld [vmem:[%s1 + $0x1c] sm:$0xf]
    %v34 = vld [vmem:[%s1 + $0x20] sm:$0xf]
    %v35 = vld [vmem:[%s1 + $0x24] sm:$0xf]
    %v36 = vld [vmem:[%s1 + $0x28] sm:$0xf]
    %v37 = vld [vmem:[%s1 + $0x2c] sm:$0xf]
    %v38 = vld [vmem:[%s1 + $0x30] sm:$0xf]
    %v39 = vld [vmem:[%s1 + $0x34] sm:$0xf]
    %v40 = vld [vmem:[%s1 + $0x38] sm:$0xf]
    %v41 = vld [vmem:[%s1 + $0x3c] sm:$0xf]
    %v42 = vld [vmem:[%s1 + $0x40] sm:$0xf]
    %v43 = vld [vmem:[%s1 + $0x44] sm:$0xf]
    %v44 = vld [vmem:[%s1 + $0x48] sm:$0xf]
    %v45 = vld [vmem:[%s1 + $0x4c] sm:$0xf]
    %v46 = vld [vmem:[%s1 + $0x50] sm:$0xf]
    %v47 = vld [vmem:[%s1 + $0x54] sm:$0xf]
    %v48 = vld [vmem:[%s1 + $0x58] sm:$0xf]
    %v49 = vld [vmem:[%s1 + $0x5c] sm:$0xf]
    %v50 = vld [vmem:[%s1 + $0x60] sm:$0xf]
    %v51 = vld [vmem:[%s1 + $0x64] sm:$0xf]
    %v52 = vld [vmem:[%s1 + $0x68] sm:$0xf]
    %v53 = vld [vmem:[%s1 + $0x6c] sm:$0xf]
    %v54 = vld [vmem:[%s1 + $0x70] sm:$0xf]
    %v55 = vld [vmem:[%s1 + $0x74] sm:$0xf]
    %v56 = vld [vmem:[%s1 + $0x78] sm:$0xf]
    %v57 = vld [vmem:[%s1 + $0x7c] sm:$0xf]
    %v58 = vld [vmem:[%s1 + $0x80] sm:$0xf]
    %v59 = vld [vmem:[%s1 + $0x84] sm:$0xf]
    %v60 = vld [vmem:[%s1 + $0x88] sm:$0xf]
    %v61 = vld [vmem:[%s1 + $0x8c] sm:$0xf]
    %v62 = vld [vmem:[%s1 + $0x90] sm:$0xf]
    %v63 = vld [vmem:[%s1 + $0x94] sm:$0xf]
    %v64 = vld [vmem:[%s1 + $0x98] sm:$0xf]
    %v65 = vld [vmem:[%s1 + $0x9c] sm:$0xf]
    %v66 = vld [vmem:[%s1 + $0xa0] sm:$0xf]
    %v67 = vld [vmem:[%s1 + $0xa4] sm:$0xf]
    %v68 = vld [vmem:[%s1 + $0xa8] sm:$0xf]
    %v69 = vld [vmem:[%s1 + $0xac] sm:$0xf]
    %v70 = vld [vmem:[%s1 + $0xb0] sm:$0xf]
    %v71 = vld [vmem:[%s1 + $0xb4] sm:$0xf]
    %v72 = vld [vmem:[%s1 + $0xb8] sm:$0xf]
    %v73 = vld [vmem:[%s1 + $0xbc] sm:$0xf]
    %v74 = vld [vmem:[%s1 + $0xc0] sm:$0xf]
    %v75 = vld [vmem:[%s1 + $0xc4] sm:$0xf]
    %v76 = vld [vmem:[%s1 + $0xc8] sm:$0xf]
    %v77 = vld [vmem:[%s1 + $0xcc] sm:$0xf]
    %v78 = vld [vmem:[%s1 + $0xd0] sm:$0xf]
    %v79 = vld [vmem:[%s1 + $0xd4] sm:$0xf]
    %v80 = vld [vmem:[%s1 + $0xd8] sm:$0xf]
    %v81 = vld [vmem:[%s1 + $0xdc] sm:$0xf]
    %v82 = vld [vmem:[%s1 + $0xe0] sm:$0xf]
    %v83 = vld [vmem:[%s1 + $0xe4] sm:$0xf]
    %v84 = vld [vmem:[%s1 + $0xe8] sm:$0xf]
    %v85 = vld [vmem:[%s1 + $0xec] sm:$0xf]
    %v86 = vld [vmem:[%s1 + $0xf0] sm:$0xf]
    %v87 = vld [vmem:[%s1 + $0xf4] sm:$0xf]
    %v88 = vld [vmem:[%s1 + $0xf8] sm:$0xf]
    %v89 = vld [vmem:[%s1 + $0xfc] sm:$0xf]
    %v90 = vld [vmem:[%s1 + $0x100] sm:$0xf]
    %v91 = vld [vmem:[%s1 + $0x104] sm:$0xf]
    %v92 = vld [vmem:[%s1 + $0x108] sm:$0xf]
    %v93 = vld [vmem:[%s1 + $0x10c] sm:$0xf]
    %v94 = vld [vmem:[%s1 + $0x110] sm:$0xf]
    %v95 = vld [vmem:[%s1 + $0x114] sm:$0xf]
    %v96 = vld [vmem:[%s1 + $0x118] sm:$0xf]
    %v97 = vld [vmem:[%s1 + $0x11c] sm:$0xf]
    %v98 = vld [vmem:[%s1 + $0x120] sm:$0xf]
    %v99 = vld [vmem:[%s1 + $0x124] sm:$0xf]
    %v100 = vld [vmem:[%s1 + $0x128] sm:$0xf]
    %v101 = vld [vmem:[%s1 + $0x12c] sm:$0xf]
    %v102 = vld [vmem:[%s1 + $0x130] sm:$0xf]
    %v103 = vld [vmem:[%s1 + $0x134] sm:$0xf]
    %v104 = vld [vmem:[%s1 + $0x138] sm:$0xf]
    %v105 = vld [vmem:[%s1 + $0x13c] sm:$0xf]
    %v106 = vld [vmem:[%s1 + $0x140] sm:$0xf]
    %v107 = vld [vmem:[%s1 + $0x144] sm:$0xf]
    %v108 = vld [vmem:[%s1 + $0x148] sm:$0xf]
    %v109 = vld [vmem:[%s1 + $0x14c] sm:$0xf]
    %v110 = vld [vmem:[%s1 + $0x150] sm:$0xf]
    %v111 = vld [vmem:[%s1 + $0x154] sm:$0xf]
    %v112 = vld [vmem:[%s1 + $0x158] sm:$0xf]
    %v113 = vld [vmem:[%s1 + $0x15c] sm:$0xf]
    %v114 = vld [vmem:[%s1 + $0x160] sm:$0xf]
    %v115 = vld [vmem:[%s1 + $0x164] sm:$0xf]
    %v116 = vld [vmem:[%s1 + $0x168] sm:$0xf]
    %v117 = vld [vmem:[%s1 + $0x16c] sm:$0xf]
    %v118 = vld [vmem:[%s1 + $0x170] sm:$0xf]
    %v119 = vld [vmem:[%s1 + $0x174] sm:$0xf]
    %v120 = vld [vmem:[%s1 + $0x178] sm:$0xf]
    %v121 = vld [vmem:[%s1 + $0x17c] sm:$0xf]
    %v122 = vld [vmem:[%s1 + $0x180] sm:$0xf]
    %v123 = vld [vmem:[%s1 + $0x184] sm:$0xf]
    %v124 = vld [vmem:[%s1 + $0x188] sm:$0xf]
    %v125 = vld [vmem:[%s1 + $0x18c] sm:$0xf]
    %v126 = vld [vmem:[%s1 + $0x190] sm:$0xf]
    %v127 = vld [vmem:[%s1 + $0x194] sm:$0xf]
    %v128 = vld [vmem:[%s1 + $0x198] sm:$0xf]
    %v129 = vld [vmem:[%s1 + $0x19c] sm:$0xf]
    %v130 = vld [vmem:[%s1 + $0x1a0] sm:$0xf]
    %v131 = vld [vmem:[%s1 + $0x1a4] sm:$0xf]
    %v132 = vld [vmem:[%s1 + $0x1a8] sm:$0xf]
    %v133 = vld [vmem:[%s1 + $0x1ac] sm:$0xf]
    %v134 = vld [vmem:[%s1 + $0x1b0] sm:$0xf]
    %v135 = vld [vmem:[%s1 + $0x1b4] sm:$0xf]
    %v136 = vld [vmem:[%s1 + $0x1b8] sm:$0xf]
    %v137 = vld [vmem:[%s1 + $0x1bc] sm:$0xf]
    %v138 = vld [vmem:[%s1 + $0x1c0] sm:$0xf]
    %v139 = vld [vmem:[%s1 + $0x1c4] sm:$0xf]
    %v140 = vld [vmem:[%s1 + $0x1c8] sm:$0xf]
    %v141 = vld [vmem:[%s1 + $0x1cc] sm:$0xf]
    %v142 = vld [vmem:[%s1 + $0x1d0] sm:$0xf]
    %v143 = vld [vmem:[%s1 + $0x1d4] sm:$0xf]
    %v144 = vld [vmem:[%s1 + $0x1d8] sm:$0xf]
    %v145 = vld [vmem:[%s1 + $0x1dc] sm:$0xf]
    %v146 = vld [vmem:[%s1 + $0x1e0] sm:$0xf]
    %v147 = vld [vmem:[%s1 + $0x1e4] sm:$0xf]
    %v148 = vld [vmem:[%s1 + $0x1e8] sm:$0xf]
    %v149 = vld [vmem:[%s1 + $0x1ec] sm:$0xf]
    %v150 = vld [vmem:[%s1 + $0x1f0] sm:$0xf]
    %v151 = vld [vmem:[%s1 + $0x1f4] sm:$0xf]
    %v152 = vld [vmem:[%s1 + $0x1f8] sm:$0xf]
    %v153 = vld [vmem:[%s1 + $0x1fc] sm:$0xf]
    %v154 = vld [vmem:[%s1 + $0x200] sm:$0xf]
    %v155 = vld [vmem:[%s1 + $0x204] sm:$0xf]
    %v156 = vld [vmem:[%s1 + $0x208] sm:$0xf]
    %v157 = vld [vmem:[%s1 + $0x20c] sm:$0xf]
    %v158 = vld [vmem:[%s1 + $0x210] sm:$0xf]
    %v159 = vld [vmem:[%s1 + $0x214] sm:$0xf]
    %v160 = vld [vmem:[%s1 + $0x218] sm:$0xf]
    %v161 = vld [vmem:[%s1 + $0x21c] sm:$0xf]
    %v162 = vld [vmem:[%s1 + $0x220] sm:$0xf]
    %v163 = vld [vmem:[%s1 + $0x224] sm:$0xf]
    %v164 = vld [vmem:[%s1 + $0x228] sm:$0xf]
    %v165 = vld [vmem:[%s1 + $0x22c] sm:$0xf]
    %v166 = vld [vmem:[%s1 + $0x230] sm:$0xf]
    %v167 = vld [vmem:[%s1 + $0x234] sm:$0xf]
    %v168 = vld [vmem:[%s1 + $0x238] sm:$0xf]
    %v169 = vld [vmem:[%s1 + $0x23c] sm:$0xf]
    %v170 = vld [vmem:[%s1 + $0x240] sm:$0xf]
    %v171 = vld [vmem:[%s1 + $0x244] sm:$0xf]
    %v172 = vld [vmem:[%s1 + $0x248] sm:$0xf]
    %v173 = vld [vmem:[%s1 + $0x24c] sm:$0xf]
    %v174 = vld [vmem:[%s1 + $0x250] sm:$0xf]
    %v175 = vld [vmem:[%s1 + $0x254] sm:$0xf]
    %v176 = vld [vmem:[%s1 + $0x258] sm:$0xf]
    %v177 = vld [vmem:[%s1 + $0x25c] sm:$0xf]
    %v178 = vld [vmem:[%s1 + $0x260] sm:$0xf]
    %v179 = vld [vmem:[%s1 + $0x264] sm:$0xf]
    %v180 = vld [vmem:[%s1 + $0x268] sm:$0xf]
    %v181 = vld [vmem:[%s1 + $0x26c] sm:$0xf]
    %v182 = vld [vmem:[%s1 + $0x270] sm:$0xf]
    %v183 = vld [vmem:[%s1 + $0x274] sm:$0xf]
    %v184 = vld [vmem:[%s1 + $0x278] sm:$0xf]
    %v185 = vld [vmem:[%s1 + $0x27c] sm:$0xf]
    %v186 = vld [vmem:[%s1 + $0x280] sm:$0xf]
    %v187 = vld [vmem:[%s1 + $0x284] sm:$0xf]
    %v188 = vld [vmem:[%s1 + $0x288] sm:$0xf]
    %v189 = vld [vmem:[%s1 + $0x28c] sm:$0xf]
    %v190 = vld [vmem:[%s1 + $0x290] sm:$0xf]
    %v191 = vld [vmem:[%s1 + $0x294] sm:$0xf]
    %v192 = vld [vmem:[%s1 + $0x298] sm:$0xf]
    %v193 = vld [vmem:[%s1 + $0x29c] sm:$0xf]
    %v194 = vld [vmem:[%s1 + $0x2a0] sm:$0xf]
    %v195 = vld [vmem:[%s1 + $0x2a4] sm:$0xf]
    %v196 = vld [vmem:[%s1 + $0x2a8] sm:$0xf]
    %v197 = vld [vmem:[%s1 + $0x2ac] sm:$0xf]
    %v198 = vld [vmem:[%s1 + $0x2b0] sm:$0xf]
    %v199 = vld [vmem:[%s1 + $0x2b4] sm:$0xf]
    %v200 = vld [vmem:[%s1 + $0x2b8] sm:$0xf]
    %v201 = vld [vmem:[%s1 + $0x2bc] sm:$0xf]
    %v202 = vld [vmem:[%s1 + $0x2c0] sm:$0xf]
    %v203 = vld [vmem:[%s1 + $0x2c4] sm:$0xf]
    %v204 = vld [vmem:[%s1 + $0x2c8] sm:$0xf]
    %v205 = vld [vmem:[%s1 + $0x2cc] sm:$0xf]
    %v206 = vld [vmem:[%s1 + $0x2d0] sm:$0xf]
    %v207 = vld [vmem:[%s1 + $0x2d4] sm:$0xf]
    %v208 = vld [vmem:[%s1 + $0x2d8] sm:$0xf]
    %v209 = vld [vmem:[%s1 + $0x2dc] sm:$0xf]
    %v210 = vld [vmem:[%s1 + $0x2e0] sm:$0xf]
    %v211 = vld [vmem:[%s1 + $0x2e4] sm:$0xf]
    %v212 = vld [vmem:[%s1 + $0x2e8] sm:$0xf]
    %v213 = vld [vmem:[%s1 + $0x2ec] sm:$0xf]
    %v214 = vld [vmem:[%s1 + $0x2f0] sm:$0xf]
    %v215 = vld [vmem:[%s1 + $0x2f4] sm:$0xf]
    %v216 = vld [vmem:[%s1 + $0x2f8] sm:$0xf]
    %v217 = vld [vmem:[%s1 + $0x2fc] sm:$0xf]
    %v218 = vld [vmem:[%s1 + $0x300] sm:$0xf]
    %v219 = vld [vmem:[%s1 + $0x304] sm:$0xf]
    %v220 = vld [vmem:[%s1 + $0x308] sm:$0xf]
    %v221 = vld [vmem:[%s1 + $0x30c] sm:$0xf]
    %v222 = vld [vmem:[%s1 + $0x310] sm:$0xf]
    %v223 = vld [vmem:[%s1 + $0x314] sm:$0xf]
    %v224 = vld [vmem:[%s1 + $0x318] sm:$0xf]
    %v225 = vld [vmem:[%s1 + $0x31c] sm:$0xf]
    %v226 = vld [vmem:[%s1 + $0x320] sm:$0xf]
    %v227 = vld [vmem:[%s1 + $0x324] sm:$0xf]
    %v228 = vld [vmem:[%s1 + $0x328] sm:$0xf]
    %v229 = vld [vmem:[%s1 + $0x32c] sm:$0xf]
    %v230 = vld [vmem:[%s1 + $0x330] sm:$0xf]
    %v231 = vld [vmem:[%s1 + $0x334] sm:$0xf]
    %v232 = vld [vmem:[%s1 + $0x338] sm:$0xf]
    %v233 = vld [vmem:[%s1 + $0x33c] sm:$0xf]
    %v234 = vld [vmem:[%s1 + $0x340] sm:$0xf]
    %v235 = vld [vmem:[%s1 + $0x344] sm:$0xf]
    %v236 = vld [vmem:[%s1 + $0x348] sm:$0xf]
    %v237 = vld [vmem:[%s1 + $0x34c] sm:$0xf]
    %v238 = vld [vmem:[%s1 + $0x350] sm:$0xf]
    %v239 = vld [vmem:[%s1 + $0x354] sm:$0xf]
    %v240 = vld [vmem:[%s1 + $0x358] sm:$0xf]
    %v241 = vld [vmem:[%s1 + $0x35c] sm:$0xf]
    %v242 = vld [vmem:[%s1 + $0x360] sm:$0xf]
    %v243 = vld [vmem:[%s1 + $0x364] sm:$0xf]
    %v244 = vld [vmem:[%s1 + $0x368] sm:$0xf]
    %v245 = vld [vmem:[%s1 + $0x36c] sm:$0xf]
    %v246 = vld [vmem:[%s1 + $0x370] sm:$0xf]
    %v247 = vld [vmem:[%s1 + $0x374] sm:$0xf]
    %v248 = vld [vmem:[%s1 + $0x378] sm:$0xf]
    %v249 = vld [vmem:[%s1 + $0x37c] sm:$0xf]
    %v250 = vld [vmem:[%s1 + $0x380] sm:$0xf]
    %v251 = vld [vmem:[%s1 + $0x384] sm:$0xf]
    %v252 = vld [vmem:[%s1 + $0x388] sm:$0xf]
    %v253 = vld [vmem:[%s1 + $0x38c] sm:$0xf]
    %v254 = vld [vmem:[%s1 + $0x390] sm:$0xf]
    %v255 = vld [vmem:[%s1 + $0x394] sm:$0xf]
    %v256 = vld [vmem:[%s1 + $0x398] sm:$0xf]
    %v257 = vld [vmem:[%s1 + $0x39c] sm:$0xf]
    %v258 = vld [vmem:[%s1 + $0x3a0] sm:$0xf]
    %v259 = vld [vmem:[%s1 + $0x3a4] sm:$0xf]
    %v260 = vld [vmem:[%s1 + $0x3a8] sm:$0xf]
    %v261 = vld [vmem:[%s1 + $0x3ac] sm:$0xf]
    %v262 = vld [vmem:[%s1 + $0x3b0] sm:$0xf]
    %v263 = vld [vmem:[%s1 + $0x3b4] sm:$0xf]
    %v264 = vld [vmem:[%s1 + $0x3b8] sm:$0xf]
    %v265 = vld [vmem:[%s1 + $0x3bc] sm:$0xf]
    %v266 = vld [vmem:[%s1 + $0x3c0] sm:$0xf]
    %v267 = vld [vmem:[%s1 + $0x3c4] sm:$0xf]
    %v268 = vld [vmem:[%s1 + $0x3c8] sm:$0xf]
    %v269 = vld [vmem:[%s1 + $0x3cc] sm:$0xf]
    %v270 = vld [vmem:[%s1 + $0x3d0] sm:$0xf]
    %v271 = vld [vmem:[%s1 + $0x3d4] sm:$0xf]
    %v272 = vld [vmem:[%s1 + $0x3d8] sm:$0xf]
    %v273 = vld [vmem:[%s1 + $0x3dc] sm:$0xf]
    %v274 = vld [vmem:[%s1 + $0x3e0] sm:$0xf]
    %v275 = vld [vmem:[%s1 + $0x3e4] sm:$0xf]
    %v276 = vld [vmem:[%s1 + $0x3e8] sm:$0xf]
    %v277 = vld [vmem:[%s1 + $0x3ec] sm:$0xf]
    %v278 = vld [vmem:[%s1 + $0x3f0] sm:$0xf]
    %v279 = vld [vmem:[%s1 + $0x3f4] sm:$0xf]
    %v280 = vld [vmem:[%s1 + $0x3f8] sm:$0xf]
    %v281 = vld [vmem:[%s1 + $0x3fc] sm:$0xf]
    %v282 = vld [vmem:[%s1 + $0x400] sm:$0xf]
    %v283 = vld [vmem:[%s1 + $0x404] sm:$0xf]
    %v284 = vld [vmem:[%s1 + $0x408] sm:$0xf]
    %v285 = vld [vmem:[%s1 + $0x40c] sm:$0xf]
    %v286 = vld [vmem:[%s1 + $0x410] sm:$0xf]
    %v287 = vld [vmem:[%s1 + $0x414] sm:$0xf]
    %v288 = vld [vmem:[%s1 + $0x418] sm:$0xf]
    %v289 = vld [vmem:[%s1 + $0x41c] sm:$0xf]
    %v290 = vld [vmem:[%s1 + $0x420] sm:$0xf]
    %v291 = vld [vmem:[%s1 + $0x424] sm:$0xf]
    %v292 = vld [vmem:[%s1 + $0x428] sm:$0xf]
    %v293 = vld [vmem:[%s1 + $0x42c] sm:$0xf]
    %v294 = vld [vmem:[%s1 + $0x430] sm:$0xf]
    %v295 = vld [vmem:[%s1 + $0x434] sm:$0xf]
    %v296 = vld [vmem:[%s1 + $0x438] sm:$0xf]
    %v297 = vld [vmem:[%s1 + $0x43c] sm:$0xf]
    %v298 = vld [vmem:[%s1 + $0x440] sm:$0xf]
    %v299 = vld [vmem:[%s1 + $0x444] sm:$0xf]
    %v300 = vld [vmem:[%s1 + $0x448] sm:$0xf]
    %v301 = vld [vmem:[%s1 + $0x44c] sm:$0xf]
    %v302 = vld [vmem:[%s1 + $0x450] sm:$0xf]
    %v303 = vld [vmem:[%s1 + $0x454] sm:$0xf]
    %v304 = vld [vmem:[%s1 + $0x458] sm:$0xf]
    %v305 = vld [vmem:[%s1 + $0x45c] sm:$0xf]
    %v306 = vld [vmem:[%s1 + $0x460] sm:$0xf]
    %v307 = vld [vmem:[%s1 + $0x464] sm:$0xf]
    %v308 = vld [vmem:[%s1 + $0x468] sm:$0xf]
    %v309 = vld [vmem:[%s1 + $0x46c] sm:$0xf]
    %v310 = vld [vmem:[%s1 + $0x470] sm:$0xf]
    %v311 = vld [vmem:[%s1 + $0x474] sm:$0xf]
    %v312 = vld [vmem:[%s1 + $0x478] sm:$0xf]
    %v313 = vld [vmem:[%s1 + $0x47c] sm:$0xf]
    %v314 = vld [vmem:[%s1 + $0x480] sm:$0xf]
    %v315 = vld [vmem:[%s1 + $0x484] sm:$0xf]
    %v316 = vld [vmem:[%s1 + $0x488] sm:$0xf]
    %v317 = vld [vmem:[%s1 + $0x48c] sm:$0xf]
    %v318 = vld [vmem:[%s1 + $0x490] sm:$0xf]
    %v319 = vld [vmem:[%s1 + $0x494] sm:$0xf]
    %v320 = vld [vmem:[%s1 + $0x498] sm:$0xf]
    %v321 = vld [vmem:[%s1 + $0x49c] sm:$0xf]
    %v322 = vld [vmem:[%s1 + $0x4a0] sm:$0xf]
    %v323 = vld [vmem:[%s1 + $0x4a4] sm:$0xf]
    %v324 = vld [vmem:[%s1 + $0x4a8] sm:$0xf]
    %v325 = vld [vmem:[%s1 + $0x4ac] sm:$0xf]
    %v326 = vld [vmem:[%s1 + $0x4b0] sm:$0xf]
    %v327 = vld [vmem:[%s1 + $0x4b4] sm:$0xf]
    %v328 = vld [vmem:[%s1 + $0x4b8] sm:$0xf]
    %v329 = vld [vmem:[%s1 + $0x4bc] sm:$0xf]
    %v330 = vld [vmem:[%s1 + $0x4c0] sm:$0xf]
    %v331 = vld [vmem:[%s1 + $0x4c4] sm:$0xf]
    %v332 = vld [vmem:[%s1 + $0x4c8] sm:$0xf]
    %v333 = vld [vmem:[%s1 + $0x4cc] sm:$0xf]
    %v334 = vld [vmem:[%s1 + $0x4d0] sm:$0xf]
    %v335 = vld [vmem:[%s1 + $0x4d4] sm:$0xf]
    %v336 = vld [vmem:[%s1 + $0x4d8] sm:$0xf]
    %v337 = vld [vmem:[%s1 + $0x4dc] sm:$0xf]
    %v338 = vld [vmem:[%s1 + $0x4e0] sm:$0xf]
    %v339 = vld [vmem:[%s1 + $0x4e4] sm:$0xf]
    %v340 = vld [vmem:[%s1 + $0x4e8] sm:$0xf]
    %v341 = vld [vmem:[%s1 + $0x4ec] sm:$0xf]
    %v342 = vld [vmem:[%s1 + $0x4f0] sm:$0xf]
    %v343 = vld [vmem:[%s1 + $0x4f4] sm:$0xf]
    %v344 = vld [vmem:[%s1 + $0x4f8] sm:$0xf]
    %v345 = vld [vmem:[%s1 + $0x4fc] sm:$0xf]
    %v346 = vld [vmem:[%s1 + $0x500] sm:$0xf]
    %v347 = vld [vmem:[%s1 + $0x504] sm:$0xf]
    %v348 = vld [vmem:[%s1 + $0x508] sm:$0xf]
    %v349 = vld [vmem:[%s1 + $0x50c] sm:$0xf]
    %v350 = vld [vmem:[%s1 + $0x510] sm:$0xf]
    %v351 = vld [vmem:[%s1 + $0x514] sm:$0xf]
    %v352 = vld [vmem:[%s1 + $0x518] sm:$0xf]
    %v353 = vld [vmem:[%s1 + $0x51c] sm:$0xf]
    %v354 = vld [vmem:[%s1 + $0x520] sm:$0xf]
    %v355 = vld [vmem:[%s1 + $0x524] sm:$0xf]
    %v356 = vld [vmem:[%s1 + $0x528] sm:$0xf]
    %v357 = vld [vmem:[%s1 + $0x52c] sm:$0xf]
    %v358 = vld [vmem:[%s1 + $0x530] sm:$0xf]
    %v359 = vld [vmem:[%s1 + $0x534] sm:$0xf]
    %v360 = vld [vmem:[%s1 + $0x538] sm:$0xf]
    %v361 = vld [vmem:[%s1 + $0x53c] sm:$0xf]
    %v362 = vld [vmem:[%s1 + $0x540] sm:$0xf]
    %v363 = vld [vmem:[%s1 + $0x544] sm:$0xf]
    %v364 = vld [vmem:[%s1 + $0x548] sm:$0xf]
    %v365 = vld [vmem:[%s1 + $0x54c] sm:$0xf]
    %v366 = vld [vmem:[%s1 + $0x550] sm:$0xf]
    %v367 = vld [vmem:[%s1 + $0x554] sm:$0xf]
    %v368 = vld [vmem:[%s1 + $0x558] sm:$0xf]
    %v369 = vld [vmem:[%s1 + $0x55c] sm:$0xf]
    %v370 = vld [vmem:[%s1 + $0x560] sm:$0xf]
    %v371 = vld [vmem:[%s1 + $0x564] sm:$0xf]
    %v372 = vld [vmem:[%s1 + $0x568] sm:$0xf]
    %v373 = vld [vmem:[%s1 + $0x56c] sm:$0xf]
    %v374 = vld [vmem:[%s1 + $0x570] sm:$0xf]
    %v375 = vld [vmem:[%s1 + $0x574] sm:$0xf]
    %v376 = vld [vmem:[%s1 + $0x578] sm:$0xf]
    %v377 = vld [vmem:[%s1 + $0x57c] sm:$0xf]
    %v378 = vld [vmem:[%s1 + $0x580] sm:$0xf]
    %v379 = vld [vmem:[%s1 + $0x584] sm:$0xf]
    %v380 = vld [vmem:[%s1 + $0x588] sm:$0xf]
    %v381 = vld [vmem:[%s1 + $0x58c] sm:$0xf]
    %v382 = vld [vmem:[%s1 + $0x590] sm:$0xf]
    %v383 = vld [vmem:[%s1 + $0x594] sm:$0xf]
    %v384 = vld [vmem:[%s1 + $0x598] sm:$0xf]
    %v385 = vld [vmem:[%s1 + $0x59c] sm:$0xf]
    %v386 = vld [vmem:[%s1 + $0x5a0] sm:$0xf]
    %v387 = vld [vmem:[%s1 + $0x5a4] sm:$0xf]
    %v388 = vld [vmem:[%s1 + $0x5a8] sm:$0xf]
    %v389 = vld [vmem:[%s1 + $0x5ac] sm:$0xf]
    %v390 = vld [vmem:[%s1 + $0x5b0] sm:$0xf]
    %v391 = vld [vmem:[%s1 + $0x5b4] sm:$0xf]
    %v392 = vld [vmem:[%s1 + $0x5b8] sm:$0xf]
    %v393 = vld [vmem:[%s1 + $0x5bc] sm:$0xf]
    %v394 = vld [vmem:[%s1 + $0x5c0] sm:$0xf]
    %v395 = vld [vmem:[%s1 + $0x5c4] sm:$0xf]
    %v396 = vld [vmem:[%s1 + $0x5c8] sm:$0xf]
    %v397 = vld [vmem:[%s1 + $0x5cc] sm:$0xf]
    %v398 = vld [vmem:[%s1 + $0x5d0] sm:$0xf]
    %v399 = vld [vmem:[%s1 + $0x5d4] sm:$0xf]
    %v400 = vld [vmem:[%s1 + $0x5d8] sm:$0xf]
    %v401 = vld [vmem:[%s1 + $0x5dc] sm:$0xf]
    %v402 = vld [vmem:[%s1 + $0x5e0] sm:$0xf]
    %v403 = vld [vmem:[%s1 + $0x5e4] sm:$0xf]
    %v404 = vld [vmem:[%s1 + $0x5e8] sm:$0xf]
    %v405 = vld [vmem:[%s1 + $0x5ec] sm:$0xf]
    %v406 = vld [vmem:[%s1 + $0x5f0] sm:$0xf]
    %v407 = vld [vmem:[%s1 + $0x5f4] sm:$0xf]
    %v408 = vld [vmem:[%s1 + $0x5f8] sm:$0xf]
    %v409 = vld [vmem:[%s1 + $0x5fc] sm:$0xf]
    %v410 = vld [vmem:[%s1 + $0x600] sm:$0xf]
    %v411 = vld [vmem:[%s1 + $0x604] sm:$0xf]
    %v412 = vld [vmem:[%s1 + $0x608] sm:$0xf]
    %v413 = vld [vmem:[%s1 + $0x60c] sm:$0xf]
    %v414 = vld [vmem:[%s1 + $0x610] sm:$0xf]
    %v415 = vld [vmem:[%s1 + $0x614] sm:$0xf]
    %v416 = vld [vmem:[%s1 + $0x618] sm:$0xf]
    %v417 = vld [vmem:[%s1 + $0x61c] sm:$0xf]
    %v418 = vld [vmem:[%s2] sm:$0x1]
    %v420 = vperm.slane %v418, 0
    %423 = vst [vmem:[#allocation1] ss:$9 sm:$0xff] %v22
    %v424 = vld [vmem:[#allocation1] sm:$0xff]
    %v425 = vld [vmem:[#allocation1 + $0x9] sm:$0xff]
    %v426 = vld [vmem:[#allocation1 + $0x12] sm:$0xff]
    %v427 = vld [vmem:[#allocation1 + $0x1b] sm:$0xff]
    %v428 = vld [vmem:[#allocation1 + $0x24] sm:$0xff]
    %v429 = vld [vmem:[#allocation1 + $0x2d] sm:$0xff]
    %v430 = vld [vmem:[#allocation1 + $0x36] sm:$0xff]
    %v431 = vld [vmem:[#allocation1 + $0x3f] sm:$0xff]
    %433 = vst [vmem:[#allocation1] ss:$9 sm:$0xff] %v23
    %v434 = vld [vmem:[#allocation1] sm:$0xff]
    %v435 = vld [vmem:[#allocation1 + $0x9] sm:$0xff]
    %v436 = vld [vmem:[#allocation1 + $0x12] sm:$0xff]
    %v437 = vld [vmem:[#allocation1 + $0x1b] sm:$0xff]
    %v438 = vld [vmem:[#allocation1 + $0x24] sm:$0xff]
    %v439 = vld [vmem:[#allocation1 + $0x2d] sm:$0xff]
    %v440 = vld [vmem:[#allocation1 + $0x36] sm:$0xff]
    %v441 = vld [vmem:[#allocation1 + $0x3f] sm:$0xff]
    %443 = vst [vmem:[#allocation1] ss:$9 sm:$0xff] %v24
    %v444 = vld [vmem:[#allocation1] sm:$0xff]
    %v445 = vld [vmem:[#allocation1 + $0x9] sm:$0xff]
    %v446 = vld [vmem:[#allocation1 + $0x12] sm:$0xff]
    %v447 = vld [vmem:[#allocation1 + $0x1b] sm:$0xff]
    %v448 = vld [vmem:[#allocation1 + $0x24] sm:$0xff]
    %v449 = vld [vmem:[#allocation1 + $0x2d] sm:$0xff]
    %v450 = vld [vmem:[#allocation1 + $0x36] sm:$0xff]
    %v451 = vld [vmem:[#allocation1 + $0x3f] sm:$0xff]
    %453 = vst [vmem:[#allocation1] ss:$9 sm:$0xff] %v25
    %v454 = vld [vmem:[#allocation1] sm:$0xff]
    %v871 = vunpack.c.l.b16 %v26
    %v872 = vunpack.c.l.b16 %v27
    %v873 = vunpack.c.l.b16 %v28
    %v874 = vunpack.c.l.b16 %v29
    %v875 = vunpack.c.l.b16 %v30
    %v876 = vunpack.c.l.b16 %v31
    %v877 = vunpack.c.l.b16 %v32
    %v878 = vunpack.c.l.b16 %v33
    %v879 = vunpack.c.l.b16 %v34
    %v880 = vunpack.c.l.b16 %v35
    %v881 = vunpack.c.l.b16 %v36
    %v882 = vunpack.c.l.b16 %v37
    %v883 = vunpack.c.l.b16 %v38
    %v884 = vunpack.c.l.b16 %v39
    %v885 = vunpack.c.l.b16 %v40
    %v886 = vunpack.c.l.b16 %v41
    %v887 = vunpack.c.l.b16 %v42
    %v888 = vunpack.c.l.b16 %v43
    %v889 = vunpack.c.l.b16 %v44
    %v890 = vunpack.c.l.b16 %v45
    %v891 = vunpack.c.l.b16 %v46
    %v892 = vunpack.c.l.b16 %v47
    %v893 = vunpack.c.l.b16 %v48
    %v894 = vunpack.c.l.b16 %v49
    %v895 = vunpack.c.l.b16 %v50
    %v896 = vunpack.c.l.b16 %v51
    %v897 = vunpack.c.l.b16 %v52
    %v898 = vunpack.c.l.b16 %v53
    %v899 = vunpack.c.l.b16 %v54
    %v900 = vunpack.c.l.b16 %v55
    %v901 = vunpack.c.l.b16 %v56
    %v902 = vunpack.c.l.b16 %v57
    %v903 = vunpack.c.l.b16 %v58
    %v904 = vunpack.c.l.b16 %v59
    %v905 = vunpack.c.l.b16 %v60
    %v906 = vunpack.c.l.b16 %v61
    %v907 = vunpack.c.l.b16 %v62
    %v908 = vunpack.c.l.b16 %v63
    %v909 = vunpack.c.l.b16 %v64
    %v910 = vunpack.c.l.b16 %v65
    %v911 = vunpack.c.l.b16 %v66
    %v912 = vunpack.c.l.b16 %v67
    %v913 = vunpack.c.l.b16 %v68
    %v914 = vunpack.c.l.b16 %v69
    %v915 = vunpack.c.l.b16 %v70
    %v916 = vunpack.c.l.b16 %v71
    %v917 = vunpack.c.l.b16 %v72
    %v918 = vunpack.c.l.b16 %v73
    %v919 = vunpack.c.l.b16 %v74
    %v920 = vunpack.c.l.b16 %v75
    %v921 = vunpack.c.l.b16 %v76
    %v922 = vunpack.c.l.b16 %v77
    %v923 = vunpack.c.l.b16 %v78
    %v924 = vunpack.c.l.b16 %v79
    %v925 = vunpack.c.l.b16 %v80
    %v926 = vunpack.c.l.b16 %v81
    %v927 = vunpack.c.l.b16 %v82
    %v928 = vunpack.c.l.b16 %v83
    %v929 = vunpack.c.l.b16 %v84
    %v930 = vunpack.c.l.b16 %v85
    %v931 = vunpack.c.l.b16 %v86
    %v932 = vunpack.c.l.b16 %v87
    %v933 = vunpack.c.l.b16 %v88
    %v934 = vunpack.c.l.b16 %v89
    %v935 = vunpack.c.l.b16 %v90
    %v936 = vunpack.c.l.b16 %v91
    %v937 = vunpack.c.l.b16 %v92
    %v938 = vunpack.c.l.b16 %v93
    %v939 = vunpack.c.l.b16 %v94
    %v940 = vunpack.c.l.b16 %v95
    %v941 = vunpack.c.l.b16 %v96
    %v942 = vunpack.c.l.b16 %v97
    %v943 = vunpack.c.l.b16 %v98
    %v944 = vunpack.c.l.b16 %v99
    %v945 = vunpack.c.l.b16 %v100
    %v946 = vunpack.c.l.b16 %v101
    %v947 = vunpack.c.l.b16 %v102
    %v948 = vunpack.c.l.b16 %v103
    %v949 = vunpack.c.l.b16 %v104
    %v950 = vunpack.c.l.b16 %v105
    %v951 = vunpack.c.l.b16 %v106
    %v952 = vunpack.c.l.b16 %v107
    %v953 = vunpack.c.l.b16 %v108
    %v954 = vunpack.c.l.b16 %v109
    %v955 = vunpack.c.l.b16 %v110
    %v956 = vunpack.c.l.b16 %v111
    %v957 = vunpack.c.l.b16 %v112
    %v958 = vunpack.c.l.b16 %v113
    %v959 = vunpack.c.l.b16 %v114
    %v960 = vunpack.c.l.b16 %v115
    %v961 = vunpack.c.l.b16 %v116
    %v962 = vunpack.c.l.b16 %v117
    %v963 = vunpack.c.l.b16 %v118
    %v964 = vunpack.c.l.b16 %v119
    %v965 = vunpack.c.l.b16 %v120
    %v966 = vunpack.c.l.b16 %v121
    %v967 = vunpack.c.l.b16 %v122
    %v968 = vunpack.c.l.b16 %v123
    %v969 = vunpack.c.l.b16 %v124
    %v970 = vunpack.c.l.b16 %v125
    %v971 = vunpack.c.l.b16 %v126
    %v972 = vunpack.c.l.b16 %v127
    %v973 = vunpack.c.l.b16 %v128
    %v974 = vunpack.c.l.b16 %v129
    %v975 = vunpack.c.l.b16 %v130
    %v976 = vunpack.c.l.b16 %v131
    %v977 = vunpack.c.l.b16 %v132
    %v978 = vunpack.c.l.b16 %v133
    %v979 = vunpack.c.l.b16 %v134
    %v980 = vunpack.c.l.b16 %v135
    %v981 = vunpack.c.l.b16 %v136
    %v982 = vunpack.c.l.b16 %v137
    %v983 = vunpack.c.l.b16 %v138
    %v984 = vunpack.c.l.b16 %v139
    %v985 = vunpack.c.l.b16 %v140
    %v986 = vunpack.c.l.b16 %v141
    %v987 = vunpack.c.l.b16 %v142
    %v988 = vunpack.c.l.b16 %v143
    %v989 = vunpack.c.l.b16 %v144
    %v990 = vunpack.c.l.b16 %v145
    %v991 = vunpack.c.l.b16 %v146
    %v992 = vunpack.c.l.b16 %v147
    %v993 = vunpack.c.l.b16 %v148
    %v994 = vunpack.c.l.b16 %v149
    %v995 = vunpack.c.l.b16 %v150
    %v996 = vunpack.c.l.b16 %v151
    %v997 = vunpack.c.l.b16 %v152
    %v998 = vunpack.c.l.b16 %v153
    %v999 = vunpack.c.l.b16 %v154
    %v1000 = vunpack.c.l.b16 %v155
    %v1001 = vunpack.c.l.b16 %v156
    %v1002 = vunpack.c.l.b16 %v157
    %v1003 = vunpack.c.l.b16 %v158
    %v1004 = vunpack.c.l.b16 %v159
    %v1005 = vunpack.c.l.b16 %v160
    %v1006 = vunpack.c.l.b16 %v161
    %v1007 = vunpack.c.l.b16 %v162
    %v1008 = vunpack.c.l.b16 %v163
    %v1009 = vunpack.c.l.b16 %v164
    %v1010 = vunpack.c.l.b16 %v165
    %v1011 = vunpack.c.l.b16 %v166
    %v1012 = vunpack.c.l.b16 %v167
    %v1013 = vunpack.c.l.b16 %v168
    %v1014 = vunpack.c.l.b16 %v169
    %v1015 = vunpack.c.l.b16 %v170
    %v1016 = vunpack.c.l.b16 %v171
    %v1017 = vunpack.c.l.b16 %v172
    %v1018 = vunpack.c.l.b16 %v173
    %v1019 = vunpack.c.l.b16 %v174
    %v1020 = vunpack.c.l.b16 %v175
    %v1021 = vunpack.c.l.b16 %v176
    %v1022 = vunpack.c.l.b16 %v177
    %v1023 = vunpack.c.l.b16 %v178
    %v1024 = vunpack.c.l.b16 %v179
    %v1025 = vunpack.c.l.b16 %v180
    %v1026 = vunpack.c.l.b16 %v181
    %v1027 = vunpack.c.l.b16 %v182
    %v1028 = vunpack.c.l.b16 %v183
    %v1029 = vunpack.c.l.b16 %v184
    %v1030 = vunpack.c.l.b16 %v185
    %v1031 = vunpack.c.l.b16 %v186
    %v1032 = vunpack.c.l.b16 %v187
    %v1033 = vunpack.c.l.b16 %v188
    %v1034 = vunpack.c.l.b16 %v189
    %v1035 = vunpack.c.l.b16 %v190
    %v1036 = vunpack.c.l.b16 %v191
    %v1037 = vunpack.c.l.b16 %v192
    %v1038 = vunpack.c.l.b16 %v193
    %v1039 = vunpack.c.l.b16 %v194
    %v1040 = vunpack.c.l.b16 %v195
    %v1041 = vunpack.c.l.b16 %v196
    %v1042 = vunpack.c.l.b16 %v197
    %v1043 = vunpack.c.l.b16 %v198
    %v1044 = vunpack.c.l.b16 %v199
    %v1045 = vunpack.c.l.b16 %v200
    %v1046 = vunpack.c.l.b16 %v201
    %v1047 = vunpack.c.l.b16 %v202
    %v1048 = vunpack.c.l.b16 %v203
    %v1049 = vunpack.c.l.b16 %v204
    %v1050 = vunpack.c.l.b16 %v205
    %v1051 = vunpack.c.l.b16 %v206
    %v1052 = vunpack.c.l.b16 %v207
    %v1053 = vunpack.c.l.b16 %v208
    %v1054 = vunpack.c.l.b16 %v209
    %v1055 = vunpack.c.l.b16 %v210
    %v1056 = vunpack.c.l.b16 %v211
    %v1057 = vunpack.c.l.b16 %v212
    %v1058 = vunpack.c.l.b16 %v213
    %v1059 = vunpack.c.l.b16 %v214
    %v1060 = vunpack.c.l.b16 %v215
    %v1061 = vunpack.c.l.b16 %v216
    %v1062 = vunpack.c.l.b16 %v217
    %v1063 = vunpack.c.l.b16 %v218
    %v1064 = vunpack.c.l.b16 %v219
    %v1065 = vunpack.c.l.b16 %v220
    %v1066 = vunpack.c.l.b16 %v221
    %v1067 = vunpack.c.l.b16 %v222
    %v1068 = vunpack.c.l.b16 %v223
    %v1069 = vunpack.c.l.b16 %v224
    %v1070 = vunpack.c.l.b16 %v225
    %v1071 = vunpack.c.l.b16 %v226
    %v1072 = vunpack.c.l.b16 %v227
    %v1073 = vunpack.c.l.b16 %v228
    %v1074 = vunpack.c.l.b16 %v229
    %v1075 = vunpack.c.l.b16 %v230
    %v1076 = vunpack.c.l.b16 %v231
    %v1077 = vunpack.c.l.b16 %v232
    %v1078 = vunpack.c.l.b16 %v233
    %v1079 = vunpack.c.l.b16 %v234
    %v1080 = vunpack.c.l.b16 %v235
    %v1081 = vunpack.c.l.b16 %v236
    %v1082 = vunpack.c.l.b16 %v237
    %v1083 = vunpack.c.l.b16 %v238
    %v1084 = vunpack.c.l.b16 %v239
    %v1085 = vunpack.c.l.b16 %v240
    %v1086 = vunpack.c.l.b16 %v241
    %v1087 = vunpack.c.l.b16 %v242
    %v1088 = vunpack.c.l.b16 %v243
    %v1089 = vunpack.c.l.b16 %v244
    %v1090 = vunpack.c.l.b16 %v245
    %v1091 = vunpack.c.l.b16 %v246
    %v1092 = vunpack.c.l.b16 %v247
    %v1093 = vunpack.c.l.b16 %v248
    %v1094 = vunpack.c.l.b16 %v249
    %v1095 = vunpack.c.l.b16 %v250
    %v1096 = vunpack.c.l.b16 %v251
    %v1097 = vunpack.c.l.b16 %v252
    %v1098 = vunpack.c.l.b16 %v253
    %v1099 = vunpack.c.l.b16 %v254
    %v1100 = vunpack.c.l.b16 %v255
    %v1101 = vunpack.c.l.b16 %v256
    %v1102 = vunpack.c.l.b16 %v257
    %v1103 = vunpack.c.l.b16 %v258
    %v1104 = vunpack.c.l.b16 %v259
    %v1105 = vunpack.c.l.b16 %v260
    %v1106 = vunpack.c.l.b16 %v261
    %v1107 = vunpack.c.l.b16 %v262
    %v1108 = vunpack.c.l.b16 %v263
    %v1109 = vunpack.c.l.b16 %v264
    %v1110 = vunpack.c.l.b16 %v265
    %v1111 = vunpack.c.l.b16 %v266
    %v1112 = vunpack.c.l.b16 %v267
    %v1113 = vunpack.c.l.b16 %v268
    %v1114 = vunpack.c.l.b16 %v269
    %v1115 = vunpack.c.l.b16 %v270
    %v1116 = vunpack.c.l.b16 %v271
    %v1117 = vunpack.c.l.b16 %v272
    %v1118 = vunpack.c.l.b16 %v273
    %v1119 = vunpack.c.l.b16 %v274
    %v1120 = vunpack.c.l.b16 %v275
    %v1121 = vunpack.c.l.b16 %v276
    %v1122 = vunpack.c.l.b16 %v277
    %v1123 = vunpack.c.l.b16 %v278
    %v1124 = vunpack.c.l.b16 %v279
    %v1125 = vunpack.c.l.b16 %v280
    %v1126 = vunpack.c.l.b16 %v281
    %v1127 = vunpack.c.l.b16 %v282
    %v1128 = vunpack.c.l.b16 %v283
    %v1129 = vunpack.c.l.b16 %v284
    %v1130 = vunpack.c.l.b16 %v285
    %v1131 = vunpack.c.l.b16 %v286
    %v1132 = vunpack.c.l.b16 %v287
    %v1133 = vunpack.c.l.b16 %v288
    %v1134 = vunpack.c.l.b16 %v289
    %v1135 = vunpack.c.l.b16 %v290
    %v1136 = vunpack.c.l.b16 %v291
    %v1137 = vunpack.c.l.b16 %v292
    %v1138 = vunpack.c.l.b16 %v293
    %v1139 = vunpack.c.l.b16 %v294
    %v1140 = vunpack.c.l.b16 %v295
    %v1141 = vunpack.c.l.b16 %v296
    %v1142 = vunpack.c.l.b16 %v297
    %v1143 = vunpack.c.l.b16 %v298
    %v1144 = vunpack.c.l.b16 %v299
    %v1145 = vunpack.c.l.b16 %v300
    %v1146 = vunpack.c.l.b16 %v301
    %v1147 = vunpack.c.l.b16 %v302
    %v1148 = vunpack.c.l.b16 %v303
    %v1149 = vunpack.c.l.b16 %v304
    %v1150 = vunpack.c.l.b16 %v305
    %v1151 = vunpack.c.l.b16 %v306
    %v1152 = vunpack.c.l.b16 %v307
    %v1153 = vunpack.c.l.b16 %v308
    %v1154 = vunpack.c.l.b16 %v309
    %v1155 = vunpack.c.l.b16 %v310
    %v1156 = vunpack.c.l.b16 %v311
    %v1157 = vunpack.c.l.b16 %v312
    %v1158 = vunpack.c.l.b16 %v313
    %v1159 = vunpack.c.l.b16 %v314
    %v1160 = vunpack.c.l.b16 %v315
    %v1161 = vunpack.c.l.b16 %v316
    %v1162 = vunpack.c.l.b16 %v317
    %v1163 = vunpack.c.l.b16 %v318
    %v1164 = vunpack.c.l.b16 %v319
    %v1165 = vunpack.c.l.b16 %v320
    %v1166 = vunpack.c.l.b16 %v321
    %v1167 = vunpack.c.l.b16 %v322
    %v1168 = vunpack.c.l.b16 %v323
    %v1169 = vunpack.c.l.b16 %v324
    %v1170 = vunpack.c.l.b16 %v325
    %v1171 = vunpack.c.l.b16 %v326
    %v1172 = vunpack.c.l.b16 %v327
    %v1173 = vunpack.c.l.b16 %v328
    %v1174 = vunpack.c.l.b16 %v329
    %v1175 = vunpack.c.l.b16 %v330
    %v1176 = vunpack.c.l.b16 %v331
    %v1177 = vunpack.c.l.b16 %v332
    %v1178 = vunpack.c.l.b16 %v333
    %v1179 = vunpack.c.l.b16 %v334
    %v1180 = vunpack.c.l.b16 %v335
    %v1181 = vunpack.c.l.b16 %v336
    %v1182 = vunpack.c.l.b16 %v337
    %v1183 = vunpack.c.l.b16 %v338
    %v1184 = vunpack.c.l.b16 %v339
    %v1185 = vunpack.c.l.b16 %v340
    %v1186 = vunpack.c.l.b16 %v341
    %v1187 = vunpack.c.l.b16 %v342
    %v1188 = vunpack.c.l.b16 %v343
    %v1189 = vunpack.c.l.b16 %v344
    %v1190 = vunpack.c.l.b16 %v345
    %v1191 = vunpack.c.l.b16 %v346
    %v1192 = vunpack.c.l.b16 %v347
    %v1193 = vunpack.c.l.b16 %v348
    %v1194 = vunpack.c.l.b16 %v349
    %v1195 = vunpack.c.l.b16 %v350
    %v1196 = vunpack.c.l.b16 %v351
    %v1197 = vunpack.c.l.b16 %v352
    %v1198 = vunpack.c.l.b16 %v353
    %v1199 = vunpack.c.l.b16 %v354
    %v1200 = vunpack.c.l.b16 %v355
    %v1201 = vunpack.c.l.b16 %v356
    %v1202 = vunpack.c.l.b16 %v357
    %v1203 = vunpack.c.l.b16 %v358
    %v1204 = vunpack.c.l.b16 %v359
    %v1205 = vunpack.c.l.b16 %v360
    %v1206 = vunpack.c.l.b16 %v361
    %v1207 = vunpack.c.l.b16 %v362
    %v1208 = vunpack.c.l.b16 %v363
    %v1209 = vunpack.c.l.b16 %v364
    %v1210 = vunpack.c.l.b16 %v365
    %v1211 = vunpack.c.l.b16 %v366
    %v1212 = vunpack.c.l.b16 %v367
    %v1213 = vunpack.c.l.b16 %v368
    %v1214 = vunpack.c.l.b16 %v369
    %v1215 = vunpack.c.l.b16 %v370
    %v1216 = vunpack.c.l.b16 %v371
    %v1217 = vunpack.c.l.b16 %v372
    %v1218 = vunpack.c.l.b16 %v373
    %v1219 = vunpack.c.l.b16 %v374
    %v1220 = vunpack.c.l.b16 %v375
    %v1221 = vunpack.c.l.b16 %v376
    %v1222 = vunpack.c.l.b16 %v377
    %v1223 = vunpack.c.l.b16 %v378
    %v1224 = vunpack.c.l.b16 %v379
    %v1225 = vunpack.c.l.b16 %v380
    %v1226 = vunpack.c.l.b16 %v381
    %v1227 = vunpack.c.l.b16 %v382
    %v1228 = vunpack.c.l.b16 %v383
    %v1229 = vunpack.c.l.b16 %v384
    %v1230 = vunpack.c.l.b16 %v385
    %v1231 = vunpack.c.l.b16 %v386
    %v1232 = vunpack.c.l.b16 %v387
    %v1233 = vunpack.c.l.b16 %v388
    %v1234 = vunpack.c.l.b16 %v389
    %v1235 = vunpack.c.l.b16 %v390
    %v1236 = vunpack.c.l.b16 %v391
    %v1237 = vunpack.c.l.b16 %v392
    %v1238 = vunpack.c.l.b16 %v393
    %v1239 = vunpack.c.l.b16 %v394
    %v1240 = vunpack.c.l.b16 %v395
    %v1241 = vunpack.c.l.b16 %v396
    %v1242 = vunpack.c.l.b16 %v397
    %v1243 = vunpack.c.l.b16 %v398
    %v1244 = vunpack.c.l.b16 %v399
    %v1245 = vunpack.c.l.b16 %v400
    %v1246 = vunpack.c.l.b16 %v401
    %v1247 = vunpack.c.l.b16 %v402
    %v1248 = vunpack.c.l.b16 %v403
    %v1249 = vunpack.c.l.b16 %v404
    %v1250 = vunpack.c.l.b16 %v405
    %v1251 = vunpack.c.l.b16 %v406
    %v1252 = vunpack.c.l.b16 %v407
    %v1253 = vunpack.c.l.b16 %v408
    %v1254 = vunpack.c.l.b16 %v409
    %v1255 = vunpack.c.l.b16 %v410
    %v1256 = vunpack.c.l.b16 %v411
    %v1257 = vunpack.c.l.b16 %v412
    %v1258 = vunpack.c.l.b16 %v413
    %v1259 = vunpack.c.l.b16 %v414
    %v1260 = vunpack.c.l.b16 %v415
    %v1261 = vunpack.c.l.b16 %v416
    %v1262 = vunpack.c.l.b16 %v417
    %v1263 = vpack.c.b16 %v872, %v871
    %v1264 = vpack.c.b16 %v874, %v873
    %v1265 = vpack.c.b16 %v876, %v875
    %v1266 = vpack.c.b16 %v878, %v877
    %v1267 = vpack.c.b16 %v880, %v879
    %v1268 = vpack.c.b16 %v882, %v881
    %v1269 = vpack.c.b16 %v884, %v883
    %v1270 = vpack.c.b16 %v886, %v885
    %v1271 = vpack.c.b16 %v888, %v887
    %v1272 = vpack.c.b16 %v890, %v889
    %v1273 = vpack.c.b16 %v892, %v891
    %v1274 = vpack.c.b16 %v894, %v893
    %v1275 = vpack.c.b16 %v896, %v895
    %v1276 = vpack.c.b16 %v898, %v897
    %v1277 = vpack.c.b16 %v900, %v899
    %v1278 = vpack.c.b16 %v902, %v901
    %v1279 = vpack.c.b16 %v904, %v903
    %v1280 = vpack.c.b16 %v906, %v905
    %v1281 = vpack.c.b16 %v908, %v907
    %v1282 = vpack.c.b16 %v910, %v909
    %v1283 = vpack.c.b16 %v912, %v911
    %v1284 = vpack.c.b16 %v914, %v913
    %v1285 = vpack.c.b16 %v916, %v915
    %v1286 = vpack.c.b16 %v918, %v917
    %v1287 = vpack.c.b16 %v920, %v919
    %v1288 = vpack.c.b16 %v922, %v921
    %v1289 = vpack.c.b16 %v924, %v923
    %v1290 = vpack.c.b16 %v926, %v925
    %v1291 = vpack.c.b16 %v928, %v927
    %v1292 = vpack.c.b16 %v930, %v929
    %v1293 = vpack.c.b16 %v932, %v931
    %v1294 = vpack.c.b16 %v934, %v933
    %v1295 = vpack.c.b16 %v936, %v935
    %v1296 = vpack.c.b16 %v938, %v937
    %v1297 = vpack.c.b16 %v940, %v939
    %v1298 = vpack.c.b16 %v942, %v941
    %v1299 = vpack.c.b16 %v944, %v943
    %v1300 = vpack.c.b16 %v946, %v945
    %v1301 = vpack.c.b16 %v948, %v947
    %v1302 = vpack.c.b16 %v950, %v949
    %v1303 = vpack.c.b16 %v952, %v951
    %v1304 = vpack.c.b16 %v954, %v953
    %v1305 = vpack.c.b16 %v956, %v955
    %v1306 = vpack.c.b16 %v958, %v957
    %v1307 = vpack.c.b16 %v960, %v959
    %v1308 = vpack.c.b16 %v962, %v961
    %v1309 = vpack.c.b16 %v964, %v963
    %v1310 = vpack.c.b16 %v966, %v965
    %v1311 = vpack.c.b16 %v968, %v967
    %v1312 = vpack.c.b16 %v970, %v969
    %v1313 = vpack.c.b16 %v972, %v971
    %v1314 = vpack.c.b16 %v974, %v973
    %v1315 = vpack.c.b16 %v976, %v975
    %v1316 = vpack.c.b16 %v978, %v977
    %v1317 = vpack.c.b16 %v980, %v979
    %v1318 = vpack.c.b16 %v982, %v981
    %v1319 = vpack.c.b16 %v984, %v983
    %v1320 = vpack.c.b16 %v986, %v985
    %v1321 = vpack.c.b16 %v988, %v987
    %v1322 = vpack.c.b16 %v990, %v989
    %v1323 = vpack.c.b16 %v992, %v991
    %v1324 = vpack.c.b16 %v994, %v993
    %v1325 = vpack.c.b16 %v996, %v995
    %v1326 = vpack.c.b16 %v998, %v997
    %v1327 = vpack.c.b16 %v1000, %v999
    %v1328 = vpack.c.b16 %v1002, %v1001
    %v1329 = vpack.c.b16 %v1004, %v1003
    %v1330 = vpack.c.b16 %v1006, %v1005
    %v1331 = vpack.c.b16 %v1008, %v1007
    %v1332 = vpack.c.b16 %v1010, %v1009
    %v1333 = vpack.c.b16 %v1012, %v1011
    %v1334 = vpack.c.b16 %v1014, %v1013
    %v1335 = vpack.c.b16 %v1016, %v1015
    %v1336 = vpack.c.b16 %v1018, %v1017
    %v1337 = vpack.c.b16 %v1020, %v1019
    %v1338 = vpack.c.b16 %v1022, %v1021
    %v1339 = vpack.c.b16 %v1024, %v1023
    %v1340 = vpack.c.b16 %v1026, %v1025
    %v1341 = vpack.c.b16 %v1028, %v1027
    %v1342 = vpack.c.b16 %v1030, %v1029
    %v1343 = vpack.c.b16 %v1032, %v1031
    %v1344 = vpack.c.b16 %v1034, %v1033
    %v1345 = vpack.c.b16 %v1036, %v1035
    %v1346 = vpack.c.b16 %v1038, %v1037
    %v1347 = vpack.c.b16 %v1040, %v1039
    %v1348 = vpack.c.b16 %v1042, %v1041
    %v1349 = vpack.c.b16 %v1044, %v1043
    %v1350 = vpack.c.b16 %v1046, %v1045
    %v1351 = vpack.c.b16 %v1048, %v1047
    %v1352 = vpack.c.b16 %v1050, %v1049
    %v1353 = vpack.c.b16 %v1052, %v1051
    %v1354 = vpack.c.b16 %v1054, %v1053
    %v1355 = vpack.c.b16 %v1056, %v1055
    %v1356 = vpack.c.b16 %v1058, %v1057
    %v1357 = vpack.c.b16 %v1060, %v1059
    %v1358 = vpack.c.b16 %v1062, %v1061
    %v1359 = vpack.c.b16 %v1064, %v1063
    %v1360 = vpack.c.b16 %v1066, %v1065
    %v1361 = vpack.c.b16 %v1068, %v1067
    %v1362 = vpack.c.b16 %v1070, %v1069
    %v1363 = vpack.c.b16 %v1072, %v1071
    %v1364 = vpack.c.b16 %v1074, %v1073
    %v1365 = vpack.c.b16 %v1076, %v1075
    %v1366 = vpack.c.b16 %v1078, %v1077
    %v1367 = vpack.c.b16 %v1080, %v1079
    %v1368 = vpack.c.b16 %v1082, %v1081
    %v1369 = vpack.c.b16 %v1084, %v1083
    %v1370 = vpack.c.b16 %v1086, %v1085
    %v1371 = vpack.c.b16 %v1088, %v1087
    %v1372 = vpack.c.b16 %v1090, %v1089
    %v1373 = vpack.c.b16 %v1092, %v1091
    %v1374 = vpack.c.b16 %v1094, %v1093
    %v1375 = vpack.c.b16 %v1096, %v1095
    %v1376 = vpack.c.b16 %v1098, %v1097
    %v1377 = vpack.c.b16 %v1100, %v1099
    %v1378 = vpack.c.b16 %v1102, %v1101
    %v1379 = vpack.c.b16 %v1104, %v1103
    %v1380 = vpack.c.b16 %v1106, %v1105
    %v1381 = vpack.c.b16 %v1108, %v1107
    %v1382 = vpack.c.b16 %v1110, %v1109
    %v1383 = vpack.c.b16 %v1112, %v1111
    %v1384 = vpack.c.b16 %v1114, %v1113
    %v1385 = vpack.c.b16 %v1116, %v1115
    %v1386 = vpack.c.b16 %v1118, %v1117
    %v1387 = vpack.c.b16 %v1120, %v1119
    %v1388 = vpack.c.b16 %v1122, %v1121
    %v1389 = vpack.c.b16 %v1124, %v1123
    %v1390 = vpack.c.b16 %v1126, %v1125
    %v1391 = vpack.c.b16 %v1128, %v1127
    %v1392 = vpack.c.b16 %v1130, %v1129
    %v1393 = vpack.c.b16 %v1132, %v1131
    %v1394 = vpack.c.b16 %v1134, %v1133
    %v1395 = vpack.c.b16 %v1136, %v1135
    %v1396 = vpack.c.b16 %v1138, %v1137
    %v1397 = vpack.c.b16 %v1140, %v1139
    %v1398 = vpack.c.b16 %v1142, %v1141
    %v1399 = vpack.c.b16 %v1144, %v1143
    %v1400 = vpack.c.b16 %v1146, %v1145
    %v1401 = vpack.c.b16 %v1148, %v1147
    %v1402 = vpack.c.b16 %v1150, %v1149
    %v1403 = vpack.c.b16 %v1152, %v1151
    %v1404 = vpack.c.b16 %v1154, %v1153
    %v1405 = vpack.c.b16 %v1156, %v1155
    %v1406 = vpack.c.b16 %v1158, %v1157
    %v1407 = vpack.c.b16 %v1160, %v1159
    %v1408 = vpack.c.b16 %v1162, %v1161
    %v1409 = vpack.c.b16 %v1164, %v1163
    %v1410 = vpack.c.b16 %v1166, %v1165
    %v1411 = vpack.c.b16 %v1168, %v1167
    %v1412 = vpack.c.b16 %v1170, %v1169
    %v1413 = vpack.c.b16 %v1172, %v1171
    %v1414 = vpack.c.b16 %v1174, %v1173
    %v1415 = vpack.c.b16 %v1176, %v1175
    %v1416 = vpack.c.b16 %v1178, %v1177
    %v1417 = vpack.c.b16 %v1180, %v1179
    %v1418 = vpack.c.b16 %v1182, %v1181
    %v1419 = vpack.c.b16 %v1184, %v1183
    %v1420 = vpack.c.b16 %v1186, %v1185
    %v1421 = vpack.c.b16 %v1188, %v1187
    %v1422 = vpack.c.b16 %v1190, %v1189
    %v1423 = vpack.c.b16 %v1192, %v1191
    %v1424 = vpack.c.b16 %v1194, %v1193
    %v1425 = vpack.c.b16 %v1196, %v1195
    %v1426 = vpack.c.b16 %v1198, %v1197
    %v1427 = vpack.c.b16 %v1200, %v1199
    %v1428 = vpack.c.b16 %v1202, %v1201
    %v1429 = vpack.c.b16 %v1204, %v1203
    %v1430 = vpack.c.b16 %v1206, %v1205
    %v1431 = vpack.c.b16 %v1208, %v1207
    %v1432 = vpack.c.b16 %v1210, %v1209
    %v1433 = vpack.c.b16 %v1212, %v1211
    %v1434 = vpack.c.b16 %v1214, %v1213
    %v1435 = vpack.c.b16 %v1216, %v1215
    %v1436 = vpack.c.b16 %v1218, %v1217
    %v1437 = vpack.c.b16 %v1220, %v1219
    %v1438 = vpack.c.b16 %v1222, %v1221
    %v1439 = vpack.c.b16 %v1224, %v1223
    %v1440 = vpack.c.b16 %v1226, %v1225
    %v1441 = vpack.c.b16 %v1228, %v1227
    %v1442 = vpack.c.b16 %v1230, %v1229
    %v1443 = vpack.c.b16 %v1232, %v1231
    %v1444 = vpack.c.b16 %v1234, %v1233
    %v1445 = vpack.c.b16 %v1236, %v1235
    %v1446 = vpack.c.b16 %v1238, %v1237
    %v1447 = vpack.c.b16 %v1240, %v1239
    %v1448 = vpack.c.b16 %v1242, %v1241
    %v1449 = vpack.c.b16 %v1244, %v1243
    %v1450 = vpack.c.b16 %v1246, %v1245
    %v1451 = vpack.c.b16 %v1248, %v1247
    %v1452 = vpack.c.b16 %v1250, %v1249
    %v1453 = vpack.c.b16 %v1252, %v1251
    %v1454 = vpack.c.b16 %v1254, %v1253
    %v1455 = vpack.c.b16 %v1256, %v1255
    %v1456 = vpack.c.b16 %v1258, %v1257
    %v1457 = vpack.c.b16 %v1260, %v1259
    %v1458 = vpack.c.b16 %v1262, %v1261
    %vm1655 = vcmask 523264
    %v1656 = vsel %vm1655, %v454, 0
    %1658 = vmatpush.bf16.msra.mxu0 %v1270
    %1659 = vmatpush.bf16.msra.mxu0 %v1269
    %1660 = vmatpush.bf16.msra.mxu0 %v1268
    %1661 = vmatpush.bf16.msra.mxu0 %v1267
    %1662 = vmatpush.bf16.msra.mxu0 %v1266
    %1663 = vmatpush.bf16.msra.mxu0 %v1265
    %1664 = vmatpush.bf16.msra.mxu0 %v1264
    %1665 = vmatpush.bf16.msra.mxu0 %v1263
    %1666 = vmatmul.bf16.gmra.mxu0 %v424
    %v1667 = vpop.f32.mrf.mxu0
    %v1668 = vadd.f32 %v420, %v1667
    %v1669 = vpop.f32.mrf.mxu0
    %1670 = vdwg.mxu0
    %1671 = vmatpush.bf16.msra.mxu0 %v1278
    %1672 = vmatpush.bf16.msra.mxu0 %v1277
    %1673 = vmatpush.bf16.msra.mxu0 %v1276
    %1674 = vmatpush.bf16.msra.mxu0 %v1275
    %1675 = vmatpush.bf16.msra.mxu0 %v1274
    %1676 = vmatpush.bf16.msra.mxu0 %v1273
    %1677 = vmatpush.bf16.msra.mxu0 %v1272
    %1678 = vmatpush.bf16.msra.mxu0 %v1271
    %1679 = vmatmul.bf16.gmra.mxu0 %v425
    %v1680 = vpop.f32.mrf.mxu0
    %v1681 = vadd.f32 %v1668, %v1680
    %v1682 = vpop.f32.mrf.mxu0
    %1683 = vdwg.mxu0
    %1684 = vmatpush.bf16.msra.mxu0 %v1286
    %1685 = vmatpush.bf16.msra.mxu0 %v1285
    %1686 = vmatpush.bf16.msra.mxu0 %v1284
    %1687 = vmatpush.bf16.msra.mxu0 %v1283
    %1688 = vmatpush.bf16.msra.mxu0 %v1282
    %1689 = vmatpush.bf16.msra.mxu0 %v1281
    %1690 = vmatpush.bf16.msra.mxu0 %v1280
    %1691 = vmatpush.bf16.msra.mxu0 %v1279
    %1692 = vmatmul.bf16.gmra.mxu0 %v426
    %v1693 = vpop.f32.mrf.mxu0
    %v1694 = vadd.f32 %v1681, %v1693
    %v1695 = vpop.f32.mrf.mxu0
    %1696 = vdwg.mxu0
    %1697 = vmatpush.bf16.msra.mxu0 %v1294
    %1698 = vmatpush.bf16.msra.mxu0 %v1293
    %1699 = vmatpush.bf16.msra.mxu0 %v1292
    %1700 = vmatpush.bf16.msra.mxu0 %v1291
    %1701 = vmatpush.bf16.msra.mxu0 %v1290
    %1702 = vmatpush.bf16.msra.mxu0 %v1289
    %1703 = vmatpush.bf16.msra.mxu0 %v1288
    %1704 = vmatpush.bf16.msra.mxu0 %v1287
    %1705 = vmatmul.bf16.gmra.mxu0 %v427
    %v1706 = vpop.f32.mrf.mxu0
    %v1707 = vadd.f32 %v1694, %v1706
    %v1708 = vpop.f32.mrf.mxu0
    %1709 = vdwg.mxu0
    %1710 = vmatpush.bf16.msra.mxu0 %v1302
    %1711 = vmatpush.bf16.msra.mxu0 %v1301
    %1712 = vmatpush.bf16.msra.mxu0 %v1300
    %1713 = vmatpush.bf16.msra.mxu0 %v1299
    %1714 = vmatpush.bf16.msra.mxu0 %v1298
    %1715 = vmatpush.bf16.msra.mxu0 %v1297
    %1716 = vmatpush.bf16.msra.mxu0 %v1296
    %1717 = vmatpush.bf16.msra.mxu0 %v1295
    %1718 = vmatmul.bf16.gmra.mxu0 %v428
    %v1719 = vpop.f32.mrf.mxu0
    %v1720 = vadd.f32 %v1707, %v1719
    %v1721 = vpop.f32.mrf.mxu0
    %1722 = vdwg.mxu0
    %1723 = vmatpush.bf16.msra.mxu0 %v1310
    %1724 = vmatpush.bf16.msra.mxu0 %v1309
    %1725 = vmatpush.bf16.msra.mxu0 %v1308
    %1726 = vmatpush.bf16.msra.mxu0 %v1307
    %1727 = vmatpush.bf16.msra.mxu0 %v1306
    %1728 = vmatpush.bf16.msra.mxu0 %v1305
    %1729 = vmatpush.bf16.msra.mxu0 %v1304
    %1730 = vmatpush.bf16.msra.mxu0 %v1303
    %1731 = vmatmul.bf16.gmra.mxu0 %v429
    %v1732 = vpop.f32.mrf.mxu0
    %v1733 = vadd.f32 %v1720, %v1732
    %v1734 = vpop.f32.mrf.mxu0
    %1735 = vdwg.mxu0
    %1736 = vmatpush.bf16.msra.mxu0 %v1318
    %1737 = vmatpush.bf16.msra.mxu0 %v1317
    %1738 = vmatpush.bf16.msra.mxu0 %v1316
    %1739 = vmatpush.bf16.msra.mxu0 %v1315
    %1740 = vmatpush.bf16.msra.mxu0 %v1314
    %1741 = vmatpush.bf16.msra.mxu0 %v1313
    %1742 = vmatpush.bf16.msra.mxu0 %v1312
    %1743 = vmatpush.bf16.msra.mxu0 %v1311
    %1744 = vmatmul.bf16.gmra.mxu0 %v430
    %v1745 = vpop.f32.mrf.mxu0
    %v1746 = vadd.f32 %v1733, %v1745
    %v1747 = vpop.f32.mrf.mxu0
    %1748 = vdwg.mxu0
    %1749 = vmatpush.bf16.msra.mxu0 %v1326
    %1750 = vmatpush.bf16.msra.mxu0 %v1325
    %1751 = vmatpush.bf16.msra.mxu0 %v1324
    %1752 = vmatpush.bf16.msra.mxu0 %v1323
    %1753 = vmatpush.bf16.msra.mxu0 %v1322
    %1754 = vmatpush.bf16.msra.mxu0 %v1321
    %1755 = vmatpush.bf16.msra.mxu0 %v1320
    %1756 = vmatpush.bf16.msra.mxu0 %v1319
    %1757 = vmatmul.bf16.gmra.mxu0 %v431
    %v1758 = vpop.f32.mrf.mxu0
    %v1759 = vadd.f32 %v1746, %v1758
    %v1760 = vpop.f32.mrf.mxu0
    %1761 = vdwg.mxu0
    %1762 = vmatpush.bf16.msra.mxu0 %v1334
    %1763 = vmatpush.bf16.msra.mxu0 %v1333
    %1764 = vmatpush.bf16.msra.mxu0 %v1332
    %1765 = vmatpush.bf16.msra.mxu0 %v1331
    %1766 = vmatpush.bf16.msra.mxu0 %v1330
    %1767 = vmatpush.bf16.msra.mxu0 %v1329
    %1768 = vmatpush.bf16.msra.mxu0 %v1328
    %1769 = vmatpush.bf16.msra.mxu0 %v1327
    %1770 = vmatmul.bf16.gmra.mxu0 %v434
    %v1771 = vpop.f32.mrf.mxu0
    %v1772 = vadd.f32 %v1759, %v1771
    %v1773 = vpop.f32.mrf.mxu0
    %1774 = vdwg.mxu0
    %1775 = vmatpush.bf16.msra.mxu0 %v1342
    %1776 = vmatpush.bf16.msra.mxu0 %v1341
    %1777 = vmatpush.bf16.msra.mxu0 %v1340
    %1778 = vmatpush.bf16.msra.mxu0 %v1339
    %1779 = vmatpush.bf16.msra.mxu0 %v1338
    %1780 = vmatpush.bf16.msra.mxu0 %v1337
    %1781 = vmatpush.bf16.msra.mxu0 %v1336
    %1782 = vmatpush.bf16.msra.mxu0 %v1335
    %1783 = vmatmul.bf16.gmra.mxu0 %v435
    %v1784 = vpop.f32.mrf.mxu0
    %v1785 = vadd.f32 %v1772, %v1784
    %v1786 = vpop.f32.mrf.mxu0
    %1787 = vdwg.mxu0
    %1788 = vmatpush.bf16.msra.mxu0 %v1350
    %1789 = vmatpush.bf16.msra.mxu0 %v1349
    %1790 = vmatpush.bf16.msra.mxu0 %v1348
    %1791 = vmatpush.bf16.msra.mxu0 %v1347
    %1792 = vmatpush.bf16.msra.mxu0 %v1346
    %1793 = vmatpush.bf16.msra.mxu0 %v1345
    %1794 = vmatpush.bf16.msra.mxu0 %v1344
    %1795 = vmatpush.bf16.msra.mxu0 %v1343
    %1796 = vmatmul.bf16.gmra.mxu0 %v436
    %v1797 = vpop.f32.mrf.mxu0
    %v1798 = vadd.f32 %v1785, %v1797
    %v1799 = vpop.f32.mrf.mxu0
    %1800 = vdwg.mxu0
    %1801 = vmatpush.bf16.msra.mxu0 %v1358
    %1802 = vmatpush.bf16.msra.mxu0 %v1357
    %1803 = vmatpush.bf16.msra.mxu0 %v1356
    %1804 = vmatpush.bf16.msra.mxu0 %v1355
    %1805 = vmatpush.bf16.msra.mxu0 %v1354
    %1806 = vmatpush.bf16.msra.mxu0 %v1353
    %1807 = vmatpush.bf16.msra.mxu0 %v1352
    %1808 = vmatpush.bf16.msra.mxu0 %v1351
    %1809 = vmatmul.bf16.gmra.mxu0 %v437
    %v1810 = vpop.f32.mrf.mxu0
    %v1811 = vadd.f32 %v1798, %v1810
    %v1812 = vpop.f32.mrf.mxu0
    %1813 = vdwg.mxu0
    %1814 = vmatpush.bf16.msra.mxu0 %v1366
    %1815 = vmatpush.bf16.msra.mxu0 %v1365
    %1816 = vmatpush.bf16.msra.mxu0 %v1364
    %1817 = vmatpush.bf16.msra.mxu0 %v1363
    %1818 = vmatpush.bf16.msra.mxu0 %v1362
    %1819 = vmatpush.bf16.msra.mxu0 %v1361
    %1820 = vmatpush.bf16.msra.mxu0 %v1360
    %1821 = vmatpush.bf16.msra.mxu0 %v1359
    %1822 = vmatmul.bf16.gmra.mxu0 %v438
    %v1823 = vpop.f32.mrf.mxu0
    %v1824 = vadd.f32 %v1811, %v1823
    %v1825 = vpop.f32.mrf.mxu0
    %1826 = vdwg.mxu0
    %1827 = vmatpush.bf16.msra.mxu0 %v1374
    %1828 = vmatpush.bf16.msra.mxu0 %v1373
    %1829 = vmatpush.bf16.msra.mxu0 %v1372
    %1830 = vmatpush.bf16.msra.mxu0 %v1371
    %1831 = vmatpush.bf16.msra.mxu0 %v1370
    %1832 = vmatpush.bf16.msra.mxu0 %v1369
    %1833 = vmatpush.bf16.msra.mxu0 %v1368
    %1834 = vmatpush.bf16.msra.mxu0 %v1367
    %1835 = vmatmul.bf16.gmra.mxu0 %v439
    %v1836 = vpop.f32.mrf.mxu0
    %v1837 = vadd.f32 %v1824, %v1836
    %v1838 = vpop.f32.mrf.mxu0
    %1839 = vdwg.mxu0
    %1840 = vmatpush.bf16.msra.mxu0 %v1382
    %1841 = vmatpush.bf16.msra.mxu0 %v1381
    %1842 = vmatpush.bf16.msra.mxu0 %v1380
    %1843 = vmatpush.bf16.msra.mxu0 %v1379
    %1844 = vmatpush.bf16.msra.mxu0 %v1378
    %1845 = vmatpush.bf16.msra.mxu0 %v1377
    %1846 = vmatpush.bf16.msra.mxu0 %v1376
    %1847 = vmatpush.bf16.msra.mxu0 %v1375
    %1848 = vmatmul.bf16.gmra.mxu0 %v440
    %v1849 = vpop.f32.mrf.mxu0
    %v1850 = vadd.f32 %v1837, %v1849
    %v1851 = vpop.f32.mrf.mxu0
    %1852 = vdwg.mxu0
    %1853 = vmatpush.bf16.msra.mxu0 %v1390
    %1854 = vmatpush.bf16.msra.mxu0 %v1389
    %1855 = vmatpush.bf16.msra.mxu0 %v1388
    %1856 = vmatpush.bf16.msra.mxu0 %v1387
    %1857 = vmatpush.bf16.msra.mxu0 %v1386
    %1858 = vmatpush.bf16.msra.mxu0 %v1385
    %1859 = vmatpush.bf16.msra.mxu0 %v1384
    %1860 = vmatpush.bf16.msra.mxu0 %v1383
    %1861 = vmatmul.bf16.gmra.mxu0 %v441
    %v1862 = vpop.f32.mrf.mxu0
    %v1863 = vadd.f32 %v1850, %v1862
    %v1864 = vpop.f32.mrf.mxu0
    %1865 = vdwg.mxu0
    %1866 = vmatpush.bf16.msra.mxu0 %v1398
    %1867 = vmatpush.bf16.msra.mxu0 %v1397
    %1868 = vmatpush.bf16.msra.mxu0 %v1396
    %1869 = vmatpush.bf16.msra.mxu0 %v1395
    %1870 = vmatpush.bf16.msra.mxu0 %v1394
    %1871 = vmatpush.bf16.msra.mxu0 %v1393
    %1872 = vmatpush.bf16.msra.mxu0 %v1392
    %1873 = vmatpush.bf16.msra.mxu0 %v1391
    %1874 = vmatmul.bf16.gmra.mxu0 %v444
    %v1875 = vpop.f32.mrf.mxu0
    %v1876 = vadd.f32 %v1863, %v1875
    %v1877 = vpop.f32.mrf.mxu0
    %1878 = vdwg.mxu0
    %1879 = vmatpush.bf16.msra.mxu0 %v1406
    %1880 = vmatpush.bf16.msra.mxu0 %v1405
    %1881 = vmatpush.bf16.msra.mxu0 %v1404
    %1882 = vmatpush.bf16.msra.mxu0 %v1403
    %1883 = vmatpush.bf16.msra.mxu0 %v1402
    %1884 = vmatpush.bf16.msra.mxu0 %v1401
    %1885 = vmatpush.bf16.msra.mxu0 %v1400
    %1886 = vmatpush.bf16.msra.mxu0 %v1399
    %1887 = vmatmul.bf16.gmra.mxu0 %v445
    %v1888 = vpop.f32.mrf.mxu0
    %v1889 = vadd.f32 %v1876, %v1888
    %v1890 = vpop.f32.mrf.mxu0
    %1891 = vdwg.mxu0
    %1892 = vmatpush.bf16.msra.mxu0 %v1414
    %1893 = vmatpush.bf16.msra.mxu0 %v1413
    %1894 = vmatpush.bf16.msra.mxu0 %v1412
    %1895 = vmatpush.bf16.msra.mxu0 %v1411
    %1896 = vmatpush.bf16.msra.mxu0 %v1410
    %1897 = vmatpush.bf16.msra.mxu0 %v1409
    %1898 = vmatpush.bf16.msra.mxu0 %v1408
    %1899 = vmatpush.bf16.msra.mxu0 %v1407
    %1900 = vmatmul.bf16.gmra.mxu0 %v446
    %v1901 = vpop.f32.mrf.mxu0
    %v1902 = vadd.f32 %v1889, %v1901
    %v1903 = vpop.f32.mrf.mxu0
    %1904 = vdwg.mxu0
    %1905 = vmatpush.bf16.msra.mxu0 %v1422
    %1906 = vmatpush.bf16.msra.mxu0 %v1421
    %1907 = vmatpush.bf16.msra.mxu0 %v1420
    %1908 = vmatpush.bf16.msra.mxu0 %v1419
    %1909 = vmatpush.bf16.msra.mxu0 %v1418
    %1910 = vmatpush.bf16.msra.mxu0 %v1417
    %1911 = vmatpush.bf16.msra.mxu0 %v1416
    %1912 = vmatpush.bf16.msra.mxu0 %v1415
    %1913 = vmatmul.bf16.gmra.mxu0 %v447
    %v1914 = vpop.f32.mrf.mxu0
    %v1915 = vadd.f32 %v1902, %v1914
    %v1916 = vpop.f32.mrf.mxu0
    %1917 = vdwg.mxu0
    %1918 = vmatpush.bf16.msra.mxu0 %v1430
    %1919 = vmatpush.bf16.msra.mxu0 %v1429
    %1920 = vmatpush.bf16.msra.mxu0 %v1428
    %1921 = vmatpush.bf16.msra.mxu0 %v1427
    %1922 = vmatpush.bf16.msra.mxu0 %v1426
    %1923 = vmatpush.bf16.msra.mxu0 %v1425
    %1924 = vmatpush.bf16.msra.mxu0 %v1424
    %1925 = vmatpush.bf16.msra.mxu0 %v1423
    %1926 = vmatmul.bf16.gmra.mxu0 %v448
    %v1927 = vpop.f32.mrf.mxu0
    %v1928 = vadd.f32 %v1915, %v1927
    %v1929 = vpop.f32.mrf.mxu0
    %1930 = vdwg.mxu0
    %1931 = vmatpush.bf16.msra.mxu0 %v1438
    %1932 = vmatpush.bf16.msra.mxu0 %v1437
    %1933 = vmatpush.bf16.msra.mxu0 %v1436
    %1934 = vmatpush.bf16.msra.mxu0 %v1435
    %1935 = vmatpush.bf16.msra.mxu0 %v1434
    %1936 = vmatpush.bf16.msra.mxu0 %v1433
    %1937 = vmatpush.bf16.msra.mxu0 %v1432
    %1938 = vmatpush.bf16.msra.mxu0 %v1431
    %1939 = vmatmul.bf16.gmra.mxu0 %v449
    %v1940 = vpop.f32.mrf.mxu0
    %v1941 = vadd.f32 %v1928, %v1940
    %v1942 = vpop.f32.mrf.mxu0
    %1943 = vdwg.mxu0
    %1944 = vmatpush.bf16.msra.mxu0 %v1446
    %1945 = vmatpush.bf16.msra.mxu0 %v1445
    %1946 = vmatpush.bf16.msra.mxu0 %v1444
    %1947 = vmatpush.bf16.msra.mxu0 %v1443
    %1948 = vmatpush.bf16.msra.mxu0 %v1442
    %1949 = vmatpush.bf16.msra.mxu0 %v1441
    %1950 = vmatpush.bf16.msra.mxu0 %v1440
    %1951 = vmatpush.bf16.msra.mxu0 %v1439
    %1952 = vmatmul.bf16.gmra.mxu0 %v450
    %v1953 = vpop.f32.mrf.mxu0
    %v1954 = vadd.f32 %v1941, %v1953
    %v1955 = vpop.f32.mrf.mxu0
    %1956 = vdwg.mxu0
    %1957 = vmatpush.bf16.msra.mxu0 %v1454
    %1958 = vmatpush.bf16.msra.mxu0 %v1453
    %1959 = vmatpush.bf16.msra.mxu0 %v1452
    %1960 = vmatpush.bf16.msra.mxu0 %v1451
    %1961 = vmatpush.bf16.msra.mxu0 %v1450
    %1962 = vmatpush.bf16.msra.mxu0 %v1449
    %1963 = vmatpush.bf16.msra.mxu0 %v1448
    %1964 = vmatpush.bf16.msra.mxu0 %v1447
    %1965 = vmatmul.bf16.gmra.mxu0 %v451
    %v1966 = vpop.f32.mrf.mxu0
    %v1967 = vadd.f32 %v1954, %v1966
    %v1968 = vpop.f32.mrf.mxu0
    %1969 = vdwg.mxu0
    %1970 = vmatpush.bf16.msra.mxu0 0
    %1971 = vmatpush.bf16.msra.mxu0 0
    %1972 = vmatpush.bf16.msra.mxu0 0
    %1973 = vmatpush.bf16.msra.mxu0 0
    %1974 = vmatpush.bf16.msra.mxu0 %v1458
    %1975 = vmatpush.bf16.msra.mxu0 %v1457
    %1976 = vmatpush.bf16.msra.mxu0 %v1456
    %1977 = vmatpush.bf16.msra.mxu0 %v1455
    %1978 = vmatmul.bf16.gmra.mxu0 %v1656
    %v1979 = vpop.f32.mrf.mxu0
    %v1980 = vadd.f32 %v1967, %v1979
    %v1981 = vpop.f32.mrf.mxu0
    %1982 = vdwg.mxu0
    %v1983 = vmax.f32 %v1980, 0.0
    %v1984 = vpack.c.bf16 %v1983, %v1983
    %v1985 = vld [vmem:[%s3] sm:$0xf]
    %v1986 = vld [vmem:[%s3 + $0x4] sm:$0xf]
    %v1987 = vld [vmem:[%s3 + $0x8] sm:$0xf]
    %v1988 = vld [vmem:[%s3 + $0xc] sm:$0xf]
    %v1989 = vld [vmem:[%s3 + $0x10] sm:$0xf]
    %v1990 = vld [vmem:[%s3 + $0x14] sm:$0xf]
    %v1991 = vld [vmem:[%s3 + $0x18] sm:$0xf]
    %v1992 = vld [vmem:[%s3 + $0x1c] sm:$0xf]
    %v1993 = vld [vmem:[%s3 + $0x20] sm:$0xf]
    %v1994 = vld [vmem:[%s3 + $0x24] sm:$0xf]
    %v1995 = vld [vmem:[%s3 + $0x28] sm:$0xf]
    %v1996 = vld [vmem:[%s3 + $0x2c] sm:$0xf]
    %v1997 = vld [vmem:[%s3 + $0x30] sm:$0xf]
    %v1998 = vld [vmem:[%s3 + $0x34] sm:$0xf]
    %v1999 = vld [vmem:[%s3 + $0x38] sm:$0xf]
    %v2000 = vld [vmem:[%s3 + $0x3c] sm:$0xf]
    %v2001 = vld [vmem:[%s4] sm:$0x1]
    %v2003 = vperm.slane %v2001, 0
    %v2021 = vunpack.c.l.b16 %v1985
    %v2022 = vunpack.c.l.b16 %v1986
    %v2023 = vunpack.c.l.b16 %v1987
    %v2024 = vunpack.c.l.b16 %v1988
    %v2025 = vunpack.c.l.b16 %v1989
    %v2026 = vunpack.c.l.b16 %v1990
    %v2027 = vunpack.c.l.b16 %v1991
    %v2028 = vunpack.c.l.b16 %v1992
    %v2029 = vunpack.c.l.b16 %v1993
    %v2030 = vunpack.c.l.b16 %v1994
    %v2031 = vunpack.c.l.b16 %v1995
    %v2032 = vunpack.c.l.b16 %v1996
    %v2033 = vunpack.c.l.b16 %v1997
    %v2034 = vunpack.c.l.b16 %v1998
    %v2035 = vunpack.c.l.b16 %v1999
    %v2036 = vunpack.c.l.b16 %v2000
    %v2037 = vpack.c.b16 %v2022, %v2021
    %v2038 = vpack.c.b16 %v2024, %v2023
    %v2039 = vpack.c.b16 %v2026, %v2025
    %v2040 = vpack.c.b16 %v2028, %v2027
    %v2041 = vpack.c.b16 %v2030, %v2029
    %v2042 = vpack.c.b16 %v2032, %v2031
    %v2043 = vpack.c.b16 %v2034, %v2033
    %v2044 = vpack.c.b16 %v2036, %v2035
    %2053 = vmatpush.bf16.msra.mxu0 %v2044
    %2054 = vmatpush.bf16.msra.mxu0 %v2043
    %2055 = vmatpush.bf16.msra.mxu0 %v2042
    %2056 = vmatpush.bf16.msra.mxu0 %v2041
    %2057 = vmatpush.bf16.msra.mxu0 %v2040
    %2058 = vmatpush.bf16.msra.mxu0 %v2039
    %2059 = vmatpush.bf16.msra.mxu0 %v2038
    %2060 = vmatpush.bf16.msra.mxu0 %v2037
    %2061 = vmatmul.bf16.gmra.mxu0 %v1984
    %v2062 = vpop.f32.mrf.mxu0
    %v2063 = vadd.f32 %v2003, %v2062
    %v2064 = vpop.f32.mrf.mxu0
    %2065 = vdwg.mxu0
    %vm2066 = vcmask 74752
    %2067 = vst.msk [vmem:[#allocation2] sm:$0x3] %vm2066, %v2063
    // Predicated region
    $region22: #{cnn_forward.3} parent=1 // pred_check
      _
    $region23: #{cnn_forward.3} parent=1 // pred_check_branch
      %2069 = sbr.rel (0) target = $region25
    $region24: #{cnn_forward.3} parent=1 // pred_region
      %2071 = vsyncadd [#allocation3], 0
      %s2073 = sshll.u32 [#allocation2], 4
      %s2074 = int_to_ptr.vmem [resolvable:$true] %s2073
      %s2075 = sshll.u32 %s5, 4
      %s2076 = int_to_ptr.hbm [resolvable:$true] %s2075
      %2078 = dma.vmem_to_hbm [thread:$0]  %s2074, 32, %s2076, [#allocation3]
    $region25: #{cnn_forward.3} parent=1 // pred_fallthru
      _
    // Predicated region
    $region26: #{cnn_forward.3} parent=1 // pred_check
      _
    $region27: #{cnn_forward.3} parent=1 // pred_check_branch
      %2080 = sbr.rel (0) target = $region29
    $region28: #{cnn_forward.3} parent=1 // pred_region
      %2082 = dma.done [#allocation3], 32
    $region29: #{cnn_forward.3} parent=1 // pred_fallthru
      _
    %2083 = vsyncpa [#allocation3], 1

// kernel: cnn_forward.2
$region0: #{cnn_forward.2}
  #allocation0 [shape = 'u32[]', space=smem, size = 0x4, offset = 0x4, fixed_abs, tag = 'smem constant byte address 0x4 - core index']
  #allocation1 [shape = 'u32[72,128]{1,0:T(1,128)}', space=vmem, size = 0x9000, scoped, tag = 'internal scratch']
  #allocation2 [shape = 'bf16[1,16,16,32]{3,2,1,0:T(8,128)(2,1)}', space=vmem, size = 0x10000, scoped, tag = 'scratch operand']
  #allocation3 [shape = 'bf16[1,14,14,288]{3,2,1,0:T(8,128)(2,1)}', space=vmem, size = 0x2a000, scoped, tag = 'scratch operand']
  %s0 = inlined_call_operand.vmem [shape: bf16[2,784,9], index: 0, kind: input, shape index: {}]
  %s1 = inlined_call_operand.vmem [shape: bf16[9,32], index: 1, kind: input, shape index: {}]
  %s2 = inlined_call_operand.vmem [shape: f32[1,32], index: 2, kind: input, shape index: {}]
  %s3 = inlined_call_operand.vmem [shape: bf16[288,64], index: 3, kind: input, shape index: {}]
  %s4 = inlined_call_operand.vmem [shape: f32[1,64], index: 4, kind: input, shape index: {}]
  %s5 = inlined_call_operand.vmem [shape: bf16[2,49,64], index: 5, kind: output, shape index: {}]
  %s6 = sld [smem:[#allocation0]]
  $region53: #{cnn_forward.2} parent=0
    _
  %s8 = ssub.s32 1, %s6
  %s9 = scalar_select 0, %s8, %s6
  loop: start=0, step=1, limit=4
  $region2: #{cnn_forward.2} parent=0 // loop_pre_header
    _
  $region3: #{cnn_forward.2} parent=0 // loop_header
    %s11 = sphi 0, %s15
    %p12 = scmp.ge.s32.totalorder %s11, 4
    %s21 = sphi 0, %s23
    %s24 = sphi 0, %s21
    %s25 = sphi 0, %s24
    %s41 = sphi 0, %s25
    %s45 = sphi 0, %s45
    %s47 = sphi 0, %s45
    %s48 = sphi 0, %s47
    %s62 = sphi 0, %s48
    %s66 = sphi 0, %s66
    %s68 = sphi 0, %s66
    %s69 = sphi 0, %s68
    %s83 = sphi 0, %s69
    %s87 = sphi 0, %s87
    %s89 = sphi 0, %s87
    %s90 = sphi 0, %s89
    %s104 = sphi 0, %s90
    %s108 = sphi 0, %s108
    %s110 = sphi 0, %s108
    %s111 = sphi 0, %s110
    %s125 = sphi 0, %s111
    %s131 = sphi 0, %s133
    %s134 = sphi 0, %s131
    %s135 = sphi 0, %s134
    %s151 = sphi 0, %s135
  $region4: #{cnn_forward.2} parent=0 // loop_header_branch
    %14 = sbr.rel (%p12) target = $region8
  $region5: #{cnn_forward.2} parent=0 // loop_body
    %s16 = ssub.s32 %s11, 1
    %s17 = ssub.s32 %s11, 2
    %s18 = sadd.s32 %s11, 1
    %s19 = ssub.s32 %s11, %s18
    %p20 = scmp.eq.s32.totalorder %s19, 0
    %s22 = sadd.s32 %s21, 1
    %s23 = scalar_select %p20, %s21, %s22
    %p26 = pneg %p20
    %p27 = scmp.eq.s32.totalorder %s11, 1
    %p28 = por %p26, %p27
    %p29 = scmp.ne.s32.totalorder %s21, %s24
    %p30 = scmp.eq.s32.totalorder %s11, 0
    %p31 = por %p29, %p30
    %p32 = scmp.ne.s32.totalorder %s21, %s24
    %p33 = scmp.eq.s32.totalorder %s16, 1
    %p34 = por %p32, %p33
    %p35 = scmp.ne.s32.totalorder %s24, %s25
    %p36 = scmp.eq.s32.totalorder %s16, 0
    %p37 = por %p35, %p36
    %p38 = scmp.ne.s32.totalorder %s24, %s25
    %p39 = scmp.eq.s32.totalorder %s17, 1
    %p40 = por %p38, %p39
    %p42 = scmp.ne.s32.totalorder %s25, %s41
    %p43 = scmp.eq.s32.totalorder %s17, 0
    %p44 = por %p42, %p43
    %s46 = sadd.s32 %s45, 1
    %p49 = scmp.eq.s32.totalorder %s11, 1
    %p50 = scmp.ne.s32.totalorder %s45, %s47
    %p51 = scmp.eq.s32.totalorder %s11, 0
    %p52 = por %p50, %p51
    %p53 = scmp.ne.s32.totalorder %s45, %s47
    %p54 = scmp.eq.s32.totalorder %s16, 1
    %p55 = por %p53, %p54
    %p56 = scmp.ne.s32.totalorder %s47, %s48
    %p57 = scmp.eq.s32.totalorder %s16, 0
    %p58 = por %p56, %p57
    %p59 = scmp.ne.s32.totalorder %s47, %s48
    %p60 = scmp.eq.s32.totalorder %s17, 1
    %p61 = por %p59, %p60
    %p63 = scmp.ne.s32.totalorder %s48, %s62
    %p64 = scmp.eq.s32.totalorder %s17, 0
    %p65 = por %p63, %p64
    %s67 = sadd.s32 %s66, 1
    %p70 = scmp.eq.s32.totalorder %s11, 1
    %p71 = scmp.ne.s32.totalorder %s66, %s68
    %p72 = scmp.eq.s32.totalorder %s11, 0
    %p73 = por %p71, %p72
    %p74 = scmp.ne.s32.totalorder %s66, %s68
    %p75 = scmp.eq.s32.totalorder %s16, 1
    %p76 = por %p74, %p75
    %p77 = scmp.ne.s32.totalorder %s68, %s69
    %p78 = scmp.eq.s32.totalorder %s16, 0
    %p79 = por %p77, %p78
    %p80 = scmp.ne.s32.totalorder %s68, %s69
    %p81 = scmp.eq.s32.totalorder %s17, 1
    %p82 = por %p80, %p81
    %p84 = scmp.ne.s32.totalorder %s69, %s83
    %p85 = scmp.eq.s32.totalorder %s17, 0
    %p86 = por %p84, %p85
    %s88 = sadd.s32 %s87, 1
    %p91 = scmp.eq.s32.totalorder %s11, 1
    %p92 = scmp.ne.s32.totalorder %s87, %s89
    %p93 = scmp.eq.s32.totalorder %s11, 0
    %p94 = por %p92, %p93
    %p95 = scmp.ne.s32.totalorder %s87, %s89
    %p96 = scmp.eq.s32.totalorder %s16, 1
    %p97 = por %p95, %p96
    %p98 = scmp.ne.s32.totalorder %s89, %s90
    %p99 = scmp.eq.s32.totalorder %s16, 0
    %p100 = por %p98, %p99
    %p101 = scmp.ne.s32.totalorder %s89, %s90
    %p102 = scmp.eq.s32.totalorder %s17, 1
    %p103 = por %p101, %p102
    %p105 = scmp.ne.s32.totalorder %s90, %s104
    %p106 = scmp.eq.s32.totalorder %s17, 0
    %p107 = por %p105, %p106
    %s109 = sadd.s32 %s108, 1
    %p112 = scmp.eq.s32.totalorder %s11, 1
    %p113 = scmp.ne.s32.totalorder %s108, %s110
    %p114 = scmp.eq.s32.totalorder %s11, 0
    %p115 = por %p113, %p114
    %p116 = scmp.ne.s32.totalorder %s108, %s110
    %p117 = scmp.eq.s32.totalorder %s16, 1
    %p118 = por %p116, %p117
    %p119 = scmp.ne.s32.totalorder %s110, %s111
    %p120 = scmp.eq.s32.totalorder %s16, 0
    %p121 = por %p119, %p120
    %p122 = scmp.ne.s32.totalorder %s110, %s111
    %p123 = scmp.eq.s32.totalorder %s17, 1
    %p124 = por %p122, %p123
    %p126 = scmp.ne.s32.totalorder %s111, %s125
    %p127 = scmp.eq.s32.totalorder %s17, 0
    %p128 = por %p126, %p127
    %s129 = ssub.s32 %s11, %s18
    %p130 = scmp.eq.s32.totalorder %s129, 0
    %s132 = sadd.s32 %s131, 1
    %s133 = scalar_select %p130, %s131, %s132
    %p136 = pneg %p130
    %p137 = scmp.eq.s32.totalorder %s11, 1
    %p138 = por %p136, %p137
    %p139 = scmp.ne.s32.totalorder %s131, %s134
    %p140 = scmp.eq.s32.totalorder %s11, 0
    %p141 = por %p139, %p140
    %p142 = scmp.ne.s32.totalorder %s131, %s134
    %p143 = scmp.eq.s32.totalorder %s16, 1
    %p144 = por %p142, %p143
    %p145 = scmp.ne.s32.totalorder %s134, %s135
    %p146 = scmp.eq.s32.totalorder %s16, 0
    %p147 = por %p145, %p146
    %p148 = scmp.ne.s32.totalorder %s134, %s135
    %p149 = scmp.eq.s32.totalorder %s17, 1
    %p150 = por %p148, %p149
    %p152 = scmp.ne.s32.totalorder %s135, %s151
    %p153 = scmp.eq.s32.totalorder %s17, 0
    %p154 = por %p152, %p153
    %p155 = scmp.le.s32.totalorder 1, %s11
    %p156 = scmp.lt.s32.totalorder %s11, 3
    %p157 = pnand %p155, %p156
    %p158 = pneg %p157
    // Predicated region
    $region9: #{cnn_forward.2} parent=5 // pred_check
      _
    $region10: #{cnn_forward.2} parent=5 // pred_check_branch
      %160 = sbr.rel (%p157) target = $region12
    $region11: #{cnn_forward.2} parent=5 // pred_region
      %s161 = ssub.s32 %s11, 1
      // Predicated region
      $region13: #{cnn_forward.2} parent=11 // pred_check
        %p162 = pneg %p58
      $region14: #{cnn_forward.2} parent=11 // pred_check_branch
        %164 = sbr.rel (%p162) target = $region16
      $region15: #{cnn_forward.2} parent=11 // pred_region
        _
      $region16: #{cnn_forward.2} parent=11 // pred_fallthru
        _
      // Predicated region
      $region17: #{cnn_forward.2} parent=11 // pred_check
        %p165 = pneg %p79
      $region18: #{cnn_forward.2} parent=11 // pred_check_branch
        %167 = sbr.rel (%p165) target = $region20
      $region19: #{cnn_forward.2} parent=11 // pred_region
        _
      $region20: #{cnn_forward.2} parent=11 // pred_fallthru
        _
      // Predicated region
      $region21: #{cnn_forward.2} parent=11 // pred_check
        %p168 = pneg %p100
      $region22: #{cnn_forward.2} parent=11 // pred_check_branch
        %170 = sbr.rel (%p168) target = $region24
      $region23: #{cnn_forward.2} parent=11 // pred_region
        _
      $region24: #{cnn_forward.2} parent=11 // pred_fallthru
        _
      // Predicated region
      $region25: #{cnn_forward.2} parent=11 // pred_check
        %p171 = pneg %p121
      $region26: #{cnn_forward.2} parent=11 // pred_check_branch
        %173 = sbr.rel (%p171) target = $region28
      $region27: #{cnn_forward.2} parent=11 // pred_region
        _
      $region28: #{cnn_forward.2} parent=11 // pred_fallthru
        _
    $region12: #{cnn_forward.2} parent=5 // pred_fallthru
      _
    %p174 = scmp.lt.s32.totalorder %s11, 2
    // Predicated region
    $region29: #{cnn_forward.2} parent=5 // pred_check
      %p175 = pneg %p174
    $region30: #{cnn_forward.2} parent=5 // pred_check_branch
      %177 = sbr.rel (%p175) target = $region32
    $region31: #{cnn_forward.2} parent=5 // pred_region
      // Predicated region
      $region33: #{cnn_forward.2} parent=31 // pred_check
        %p178 = pneg %p31
      $region34: #{cnn_forward.2} parent=31 // pred_check_branch
        %180 = sbr.rel (%p178) target = $region36
      $region35: #{cnn_forward.2} parent=31 // pred_region
        %p181 = scmp.lt.s32.totalorder %s11, 1
        %s182 = scalar_select %p181, %s11, 1
        %s183 = smul.addr %s182, 98
        %s184 = smul.addr %s183, 4
        %s185 = scalar_lea.vmem %s0, %s184
      $region36: #{cnn_forward.2} parent=31 // pred_fallthru
        _
    $region32: #{cnn_forward.2} parent=5 // pred_fallthru
      _
    %p186 = scmp.le.s32.totalorder 1, %s11
    %p187 = scmp.lt.s32.totalorder %s11, 3
    %p188 = pnand %p186, %p187
    %p189 = pneg %p188
    // Predicated region
    $region37: #{cnn_forward.2} parent=5 // pred_check
      _
    $region38: #{cnn_forward.2} parent=5 // pred_check_branch
      %191 = sbr.rel (%p188) target = $region40
    $region39: #{cnn_forward.2} parent=5 // pred_region
      %s192 = ssub.s32 %s11, 1
      %p193 = scmp.lt.s32.totalorder %s16, 1
      %s194 = scalar_select %p193, %s16, 1
      %s195 = smul.addr %s194, 98
      %s196 = smul.addr %s195, 4
      %s197 = scalar_lea.vmem %s0, %s196
      %p198 = pneg %p37
      %p199 = pneg %p34
      %p200 = pneg %p58
      %p201 = pneg %p55
      %p202 = pneg %p79
      %p203 = pneg %p76
      %p204 = pneg %p100
      %p205 = pneg %p97
      %p206 = pneg %p121
      %p207 = pneg %p118
      %p208 = pneg %p147
      %p209 = pneg %p144
      %p210 = scmp.lt.s32.totalorder %s16, 1
      %s211 = scalar_select %p210, %s16, 1
      %s212 = smul.addr %s211, 7
      %s213 = smul.addr %s212, 4
      %s214 = scalar_lea.vmem %s5, %s213
      %p215 = scmp.lt.s32.totalorder %s16, 1
      %s216 = scalar_select %p215, %s16, 1
      %s217 = smul.addr %s216, 98
      %s218 = smul.addr %s217, 4
      %s219 = scalar_lea.vmem %s0, %s218
      %p220 = scmp.lt.s32.totalorder %s16, 1
      %s221 = scalar_select %p220, %s16, 1
      %s222 = smul.addr %s221, 7
      %s223 = smul.addr %s222, 4
      %s224 = scalar_lea.vmem %s5, %s223
      %v226 = vld [vmem:[%s219] sm:$0xf]
      %v227 = vld [vmem:[%s219 + $0x4] sm:$0xf]
      %v228 = vld [vmem:[%s219 + $0x8] sm:$0xf]
      %v229 = vld [vmem:[%s219 + $0xc] sm:$0xf]
      %v230 = vld [vmem:[%s219 + $0x10] sm:$0xf]
      %v231 = vld [vmem:[%s219 + $0x14] sm:$0xf]
      %v232 = vld [vmem:[%s219 + $0x18] sm:$0xf]
      %v233 = vld [vmem:[%s219 + $0x1c] sm:$0xf]
      %v234 = vld [vmem:[%s219 + $0x20] sm:$0xf]
      %v235 = vld [vmem:[%s219 + $0x24] sm:$0xf]
      %v236 = vld [vmem:[%s219 + $0x28] sm:$0xf]
      %v237 = vld [vmem:[%s219 + $0x2c] sm:$0xf]
      %v238 = vld [vmem:[%s219 + $0x30] sm:$0xf]
      %v239 = vld [vmem:[%s219 + $0x34] sm:$0xf]
      %v240 = vld [vmem:[%s219 + $0x38] sm:$0xf]
      %v241 = vld [vmem:[%s219 + $0x3c] sm:$0xf]
      %v242 = vld [vmem:[%s219 + $0x40] sm:$0xf]
      %v243 = vld [vmem:[%s219 + $0x44] sm:$0xf]
      %v244 = vld [vmem:[%s219 + $0x48] sm:$0xf]
      %v245 = vld [vmem:[%s219 + $0x4c] sm:$0xf]
      %v246 = vld [vmem:[%s219 + $0x50] sm:$0xf]
      %v247 = vld [vmem:[%s219 + $0x54] sm:$0xf]
      %v248 = vld [vmem:[%s219 + $0x58] sm:$0xf]
      %v249 = vld [vmem:[%s219 + $0x5c] sm:$0xf]
      %v250 = vld [vmem:[%s219 + $0x60] sm:$0xf]
      %v251 = vld [vmem:[%s219 + $0x64] sm:$0xf]
      %v252 = vld [vmem:[%s219 + $0x68] sm:$0xf]
      %v253 = vld [vmem:[%s219 + $0x6c] sm:$0xf]
      %v254 = vld [vmem:[%s219 + $0x70] sm:$0xf]
      %v255 = vld [vmem:[%s219 + $0x74] sm:$0xf]
      %v256 = vld [vmem:[%s219 + $0x78] sm:$0xf]
      %v257 = vld [vmem:[%s219 + $0x7c] sm:$0xf]
      %v258 = vld [vmem:[%s219 + $0x80] sm:$0xf]
      %v259 = vld [vmem:[%s219 + $0x84] sm:$0xf]
      %v260 = vld [vmem:[%s219 + $0x88] sm:$0xf]
      %v261 = vld [vmem:[%s219 + $0x8c] sm:$0xf]
      %v262 = vld [vmem:[%s219 + $0x90] sm:$0xf]
      %v263 = vld [vmem:[%s219 + $0x94] sm:$0xf]
      %v264 = vld [vmem:[%s219 + $0x98] sm:$0xf]
      %v265 = vld [vmem:[%s219 + $0x9c] sm:$0xf]
      %v266 = vld [vmem:[%s219 + $0xa0] sm:$0xf]
      %v267 = vld [vmem:[%s219 + $0xa4] sm:$0xf]
      %v268 = vld [vmem:[%s219 + $0xa8] sm:$0xf]
      %v269 = vld [vmem:[%s219 + $0xac] sm:$0xf]
      %v270 = vld [vmem:[%s219 + $0xb0] sm:$0xf]
      %v271 = vld [vmem:[%s219 + $0xb4] sm:$0xf]
      %v272 = vld [vmem:[%s219 + $0xb8] sm:$0xf]
      %v273 = vld [vmem:[%s219 + $0xbc] sm:$0xf]
      %v274 = vld [vmem:[%s219 + $0xc0] sm:$0xf]
      %v275 = vld [vmem:[%s219 + $0xc4] sm:$0xf]
      %v276 = vld [vmem:[%s219 + $0xc8] sm:$0xf]
      %v277 = vld [vmem:[%s219 + $0xcc] sm:$0xf]
      %v278 = vld [vmem:[%s219 + $0xd0] sm:$0xf]
      %v279 = vld [vmem:[%s219 + $0xd4] sm:$0xf]
      %v280 = vld [vmem:[%s219 + $0xd8] sm:$0xf]
      %v281 = vld [vmem:[%s219 + $0xdc] sm:$0xf]
      %v282 = vld [vmem:[%s219 + $0xe0] sm:$0xf]
      %v283 = vld [vmem:[%s219 + $0xe4] sm:$0xf]
      %v284 = vld [vmem:[%s219 + $0xe8] sm:$0xf]
      %v285 = vld [vmem:[%s219 + $0xec] sm:$0xf]
      %v286 = vld [vmem:[%s219 + $0xf0] sm:$0xf]
      %v287 = vld [vmem:[%s219 + $0xf4] sm:$0xf]
      %v288 = vld [vmem:[%s219 + $0xf8] sm:$0xf]
      %v289 = vld [vmem:[%s219 + $0xfc] sm:$0xf]
      %v290 = vld [vmem:[%s219 + $0x100] sm:$0xf]
      %v291 = vld [vmem:[%s219 + $0x104] sm:$0xf]
      %v292 = vld [vmem:[%s219 + $0x108] sm:$0xf]
      %v293 = vld [vmem:[%s219 + $0x10c] sm:$0xf]
      %v294 = vld [vmem:[%s219 + $0x110] sm:$0xf]
      %v295 = vld [vmem:[%s219 + $0x114] sm:$0xf]
      %v296 = vld [vmem:[%s219 + $0x118] sm:$0xf]
      %v297 = vld [vmem:[%s219 + $0x11c] sm:$0xf]
      %v298 = vld [vmem:[%s219 + $0x120] sm:$0xf]
      %v299 = vld [vmem:[%s219 + $0x124] sm:$0xf]
      %v300 = vld [vmem:[%s219 + $0x128] sm:$0xf]
      %v301 = vld [vmem:[%s219 + $0x12c] sm:$0xf]
      %v302 = vld [vmem:[%s219 + $0x130] sm:$0xf]
      %v303 = vld [vmem:[%s219 + $0x134] sm:$0xf]
      %v304 = vld [vmem:[%s219 + $0x138] sm:$0xf]
      %v305 = vld [vmem:[%s219 + $0x13c] sm:$0xf]
      %v306 = vld [vmem:[%s219 + $0x140] sm:$0xf]
      %v307 = vld [vmem:[%s219 + $0x144] sm:$0xf]
      %v308 = vld [vmem:[%s219 + $0x148] sm:$0xf]
      %v309 = vld [vmem:[%s219 + $0x14c] sm:$0xf]
      %v310 = vld [vmem:[%s219 + $0x150] sm:$0xf]
      %v311 = vld [vmem:[%s219 + $0x154] sm:$0xf]
      %v312 = vld [vmem:[%s219 + $0x158] sm:$0xf]
      %v313 = vld [vmem:[%s219 + $0x15c] sm:$0xf]
      %v314 = vld [vmem:[%s219 + $0x160] sm:$0xf]
      %v315 = vld [vmem:[%s219 + $0x164] sm:$0xf]
      %v316 = vld [vmem:[%s219 + $0x168] sm:$0xf]
      %v317 = vld [vmem:[%s219 + $0x16c] sm:$0xf]
      %v318 = vld [vmem:[%s219 + $0x170] sm:$0xf]
      %v319 = vld [vmem:[%s219 + $0x174] sm:$0xf]
      %v320 = vld [vmem:[%s219 + $0x178] sm:$0xf]
      %v321 = vld [vmem:[%s219 + $0x17c] sm:$0xf]
      %v322 = vld [vmem:[%s219 + $0x180] sm:$0xf]
      %v323 = vld [vmem:[%s219 + $0x184] sm:$0xf]
      %v324 = vld [vmem:[%s1] sm:$0xf]
      %v325 = vld [vmem:[%s1 + $0x4] sm:$0x1]
      %v326 = vld [vmem:[%s2] sm:$0x1]
      %v328 = vperm.slane %v326, 0
      %v428 = vunpack.c.l.b16 %v226
      %v429 = vunpack.c.l.b16 %v227
      %v430 = vunpack.c.l.b16 %v228
      %v431 = vunpack.c.l.b16 %v229
      %v432 = vunpack.c.l.b16 %v230
      %v433 = vunpack.c.l.b16 %v231
      %v434 = vunpack.c.l.b16 %v232
      %v435 = vunpack.c.l.b16 %v233
      %v436 = vunpack.c.l.b16 %v234
      %v437 = vunpack.c.l.b16 %v235
      %v438 = vunpack.c.l.b16 %v236
      %v439 = vunpack.c.l.b16 %v237
      %v440 = vunpack.c.l.b16 %v238
      %v441 = vunpack.c.l.b16 %v239
      %v442 = vunpack.c.l.b16 %v240
      %v443 = vunpack.c.l.b16 %v241
      %v444 = vunpack.c.l.b16 %v242
      %v445 = vunpack.c.l.b16 %v243
      %v446 = vunpack.c.l.b16 %v244
      %v447 = vunpack.c.l.b16 %v245
      %v448 = vunpack.c.l.b16 %v246
      %v449 = vunpack.c.l.b16 %v247
      %v450 = vunpack.c.l.b16 %v248
      %v451 = vunpack.c.l.b16 %v249
      %v452 = vunpack.c.l.b16 %v250
      %v453 = vunpack.c.l.b16 %v251
      %v454 = vunpack.c.l.b16 %v252
      %v455 = vunpack.c.l.b16 %v253
      %v456 = vunpack.c.l.b16 %v254
      %v457 = vunpack.c.l.b16 %v255
      %v458 = vunpack.c.l.b16 %v256
      %v459 = vunpack.c.l.b16 %v257
      %v460 = vunpack.c.l.b16 %v258
      %v461 = vunpack.c.l.b16 %v259
      %v462 = vunpack.c.l.b16 %v260
      %v463 = vunpack.c.l.b16 %v261
      %v464 = vunpack.c.l.b16 %v262
      %v465 = vunpack.c.l.b16 %v263
      %v466 = vunpack.c.l.b16 %v264
      %v467 = vunpack.c.l.b16 %v265
      %v468 = vunpack.c.l.b16 %v266
      %v469 = vunpack.c.l.b16 %v267
      %v470 = vunpack.c.l.b16 %v268
      %v471 = vunpack.c.l.b16 %v269
      %v472 = vunpack.c.l.b16 %v270
      %v473 = vunpack.c.l.b16 %v271
      %v474 = vunpack.c.l.b16 %v272
      %v475 = vunpack.c.l.b16 %v273
      %v476 = vunpack.c.l.b16 %v274
      %v477 = vunpack.c.l.b16 %v275
      %v478 = vunpack.c.l.b16 %v276
      %v479 = vunpack.c.l.b16 %v277
      %v480 = vunpack.c.l.b16 %v278
      %v481 = vunpack.c.l.b16 %v279
      %v482 = vunpack.c.l.b16 %v280
      %v483 = vunpack.c.l.b16 %v281
      %v484 = vunpack.c.l.b16 %v282
      %v485 = vunpack.c.l.b16 %v283
      %v486 = vunpack.c.l.b16 %v284
      %v487 = vunpack.c.l.b16 %v285
      %v488 = vunpack.c.l.b16 %v286
      %v489 = vunpack.c.l.b16 %v287
      %v490 = vunpack.c.l.b16 %v288
      %v491 = vunpack.c.l.b16 %v289
      %v492 = vunpack.c.l.b16 %v290
      %v493 = vunpack.c.l.b16 %v291
      %v494 = vunpack.c.l.b16 %v292
      %v495 = vunpack.c.l.b16 %v293
      %v496 = vunpack.c.l.b16 %v294
      %v497 = vunpack.c.l.b16 %v295
      %v498 = vunpack.c.l.b16 %v296
      %v499 = vunpack.c.l.b16 %v297
      %v500 = vunpack.c.l.b16 %v298
      %v501 = vunpack.c.l.b16 %v299
      %v502 = vunpack.c.l.b16 %v300
      %v503 = vunpack.c.l.b16 %v301
      %v504 = vunpack.c.l.b16 %v302
      %v505 = vunpack.c.l.b16 %v303
      %v506 = vunpack.c.l.b16 %v304
      %v507 = vunpack.c.l.b16 %v305
      %v508 = vunpack.c.l.b16 %v306
      %v509 = vunpack.c.l.b16 %v307
      %v510 = vunpack.c.l.b16 %v308
      %v511 = vunpack.c.l.b16 %v309
      %v512 = vunpack.c.l.b16 %v310
      %v513 = vunpack.c.l.b16 %v311
      %v514 = vunpack.c.l.b16 %v312
      %v515 = vunpack.c.l.b16 %v313
      %v516 = vunpack.c.l.b16 %v314
      %v517 = vunpack.c.l.b16 %v315
      %v518 = vunpack.c.l.b16 %v316
      %v519 = vunpack.c.l.b16 %v317
      %v520 = vunpack.c.l.b16 %v318
      %v521 = vunpack.c.l.b16 %v319
      %v522 = vunpack.c.l.b16 %v320
      %v523 = vunpack.c.l.b16 %v321
      %v524 = vunpack.c.l.b16 %v322
      %v525 = vunpack.c.l.b16 %v323
      %v526 = vpack.c.b16 %v429, %v428
      %v527 = vpack.c.b16 %v431, %v430
      %v528 = vpack.c.b16 %v433, %v432
      %v529 = vpack.c.b16 %v435, %v434
      %v530 = vpack.c.b16 %v437, %v436
      %v531 = vpack.c.b16 %v439, %v438
      %v532 = vpack.c.b16 %v441, %v440
      %v533 = vpack.c.b16 %v443, %v442
      %v534 = vpack.c.b16 %v445, %v444
      %v535 = vpack.c.b16 %v447, %v446
      %v536 = vpack.c.b16 %v449, %v448
      %v537 = vpack.c.b16 %v451, %v450
      %v538 = vpack.c.b16 %v453, %v452
      %v539 = vpack.c.b16 %v455, %v454
      %v540 = vpack.c.b16 %v457, %v456
      %v541 = vpack.c.b16 %v459, %v458
      %v542 = vpack.c.b16 %v461, %v460
      %v543 = vpack.c.b16 %v463, %v462
      %v544 = vpack.c.b16 %v465, %v464
      %v545 = vpack.c.b16 %v467, %v466
      %v546 = vpack.c.b16 %v469, %v468
      %v547 = vpack.c.b16 %v471, %v470
      %v548 = vpack.c.b16 %v473, %v472
      %v549 = vpack.c.b16 %v475, %v474
      %v550 = vpack.c.b16 %v477, %v476
      %v551 = vpack.c.b16 %v479, %v478
      %v552 = vpack.c.b16 %v481, %v480
      %v553 = vpack.c.b16 %v483, %v482
      %v554 = vpack.c.b16 %v485, %v484
      %v555 = vpack.c.b16 %v487, %v486
      %v556 = vpack.c.b16 %v489, %v488
      %v557 = vpack.c.b16 %v491, %v490
      %v558 = vpack.c.b16 %v493, %v492
      %v559 = vpack.c.b16 %v495, %v494
      %v560 = vpack.c.b16 %v497, %v496
      %v561 = vpack.c.b16 %v499, %v498
      %v562 = vpack.c.b16 %v501, %v500
      %v563 = vpack.c.b16 %v503, %v502
      %v564 = vpack.c.b16 %v505, %v504
      %v565 = vpack.c.b16 %v507, %v506
      %v566 = vpack.c.b16 %v509, %v508
      %v567 = vpack.c.b16 %v511, %v510
      %v568 = vpack.c.b16 %v513, %v512
      %v569 = vpack.c.b16 %v515, %v514
      %v570 = vpack.c.b16 %v517, %v516
      %v571 = vpack.c.b16 %v519, %v518
      %v572 = vpack.c.b16 %v521, %v520
      %v573 = vpack.c.b16 %v523, %v522
      %v574 = vpack.c.b16 %v525, %v524
      %v577 = vunpack.c.l.b16 %v324
      %v578 = vunpack.c.l.b16 %v325
      %v579 = vpack.c.b16 %v578, %v577
      %vm580 = vcmask 72704
      %v582 = vsel %vm580, %v526, 0
      %v585 = vsel %vm580, %v527, 0
      %v588 = vsel %vm580, %v528, 0
      %v591 = vsel %vm580, %v529, 0
      %v594 = vsel %vm580, %v530, 0
      %v597 = vsel %vm580, %v531, 0
      %v600 = vsel %vm580, %v532, 0
      %v603 = vsel %vm580, %v533, 0
      %v606 = vsel %vm580, %v534, 0
      %v609 = vsel %vm580, %v535, 0
      %v612 = vsel %vm580, %v536, 0
      %v615 = vsel %vm580, %v537, 0
      %v618 = vsel %vm580, %v538, 0
      %v621 = vsel %vm580, %v539, 0
      %v624 = vsel %vm580, %v540, 0
      %v627 = vsel %vm580, %v541, 0
      %v630 = vsel %vm580, %v542, 0
      %v633 = vsel %vm580, %v543, 0
      %v636 = vsel %vm580, %v544, 0
      %v639 = vsel %vm580, %v545, 0
      %v642 = vsel %vm580, %v546, 0
      %v645 = vsel %vm580, %v547, 0
      %v648 = vsel %vm580, %v548, 0
      %v651 = vsel %vm580, %v549, 0
      %v654 = vsel %vm580, %v550, 0
      %v657 = vsel %vm580, %v551, 0
      %v660 = vsel %vm580, %v552, 0
      %v663 = vsel %vm580, %v553, 0
      %v666 = vsel %vm580, %v554, 0
      %v669 = vsel %vm580, %v555, 0
      %v672 = vsel %vm580, %v556, 0
      %v675 = vsel %vm580, %v557, 0
      %v678 = vsel %vm580, %v558, 0
      %v681 = vsel %vm580, %v559, 0
      %v684 = vsel %vm580, %v560, 0
      %v687 = vsel %vm580, %v561, 0
      %v690 = vsel %vm580, %v562, 0
      %v693 = vsel %vm580, %v563, 0
      %v696 = vsel %vm580, %v564, 0
      %v699 = vsel %vm580, %v565, 0
      %v702 = vsel %vm580, %v566, 0
      %v705 = vsel %vm580, %v567, 0
      %v708 = vsel %vm580, %v568, 0
      %v711 = vsel %vm580, %v569, 0
      %v714 = vsel %vm580, %v570, 0
      %v717 = vsel %vm580, %v571, 0
      %v720 = vsel %vm580, %v572, 0
      %v723 = vsel %vm580, %v573, 0
      %v726 = vsel %vm580, %v574, 0
      %vm728 = vcmask 1043456
      %vm729 = vcmask 1044480
      %v730 = vsel %vm728, 4294967295, 65535
      %v731 = vsel %vm729, %v730, 0
      %v733 = vand.u32 %v579, %v731
      %735 = vmatpush.bf16.msra.mxu0 0
      %736 = vmatpush.bf16.msra.mxu0 0
      %737 = vmatpush.bf16.msra.mxu0 0
      %738 = vmatpush.bf16.msra.mxu0 0
      %739 = vmatpush.bf16.msra.mxu0 0
      %740 = vmatpush.bf16.msra.mxu0 0
      %741 = vmatpush.bf16.msra.mxu0 0
      %742 = vmatpush.bf16.msra.mxu0 %v733
      %743 = vmatmul.bf16.gmra.mxu0 %v582
      %v744 = vpop.f32.mrf.mxu0
      %v745 = vadd.f32 %v328, %v744
      %v746 = vpop.f32.mrf.mxu0
      %v747 = vadd.f32 %v328, %v746
      %748 = vmatmul.bf16.gmra.mxu0 %v585
      %v749 = vpop.f32.mrf.mxu0
      %v750 = vadd.f32 %v328, %v749
      %v751 = vpop.f32.mrf.mxu0
      %v752 = vadd.f32 %v328, %v751
      %753 = vmatmul.bf16.gmra.mxu0 %v588
      %v754 = vpop.f32.mrf.mxu0
      %v755 = vadd.f32 %v328, %v754
      %v756 = vpop.f32.mrf.mxu0
      %v757 = vadd.f32 %v328, %v756
      %758 = vmatmul.bf16.gmra.mxu0 %v591
      %v759 = vpop.f32.mrf.mxu0
      %v760 = vadd.f32 %v328, %v759
      %v761 = vpop.f32.mrf.mxu0
      %v762 = vadd.f32 %v328, %v761
      %763 = vmatmul.bf16.gmra.mxu0 %v594
      %v764 = vpop.f32.mrf.mxu0
      %v765 = vadd.f32 %v328, %v764
      %v766 = vpop.f32.mrf.mxu0
      %v767 = vadd.f32 %v328, %v766
      %768 = vmatmul.bf16.gmra.mxu0 %v597
      %v769 = vpop.f32.mrf.mxu0
      %v770 = vadd.f32 %v328, %v769
      %v771 = vpop.f32.mrf.mxu0
      %v772 = vadd.f32 %v328, %v771
      %773 = vmatmul.bf16.gmra.mxu0 %v600
      %v774 = vpop.f32.mrf.mxu0
      %v775 = vadd.f32 %v328, %v774
      %v776 = vpop.f32.mrf.mxu0
      %v777 = vadd.f32 %v328, %v776
      %778 = vmatmul.bf16.gmra.mxu0 %v603
      %v779 = vpop.f32.mrf.mxu0
      %v780 = vadd.f32 %v328, %v779
      %v781 = vpop.f32.mrf.mxu0
      %v782 = vadd.f32 %v328, %v781
      %783 = vmatmul.bf16.gmra.mxu0 %v606
      %v784 = vpop.f32.mrf.mxu0
      %v785 = vadd.f32 %v328, %v784
      %v786 = vpop.f32.mrf.mxu0
      %v787 = vadd.f32 %v328, %v786
      %788 = vmatmul.bf16.gmra.mxu0 %v609
      %v789 = vpop.f32.mrf.mxu0
      %v790 = vadd.f32 %v328, %v789
      %v791 = vpop.f32.mrf.mxu0
      %v792 = vadd.f32 %v328, %v791
      %793 = vmatmul.bf16.gmra.mxu0 %v612
      %v794 = vpop.f32.mrf.mxu0
      %v795 = vadd.f32 %v328, %v794
      %v796 = vpop.f32.mrf.mxu0
      %v797 = vadd.f32 %v328, %v796
      %798 = vmatmul.bf16.gmra.mxu0 %v615
      %v799 = vpop.f32.mrf.mxu0
      %v800 = vadd.f32 %v328, %v799
      %v801 = vpop.f32.mrf.mxu0
      %v802 = vadd.f32 %v328, %v801
      %803 = vmatmul.bf16.gmra.mxu0 %v618
      %v804 = vpop.f32.mrf.mxu0
      %v805 = vadd.f32 %v328, %v804
      %v806 = vpop.f32.mrf.mxu0
      %v807 = vadd.f32 %v328, %v806
      %808 = vmatmul.bf16.gmra.mxu0 %v621
      %v809 = vpop.f32.mrf.mxu0
      %v810 = vadd.f32 %v328, %v809
      %v811 = vpop.f32.mrf.mxu0
      %v812 = vadd.f32 %v328, %v811
      %813 = vmatmul.bf16.gmra.mxu0 %v624
      %v814 = vpop.f32.mrf.mxu0
      %v815 = vadd.f32 %v328, %v814
      %v816 = vpop.f32.mrf.mxu0
      %v817 = vadd.f32 %v328, %v816
      %818 = vmatmul.bf16.gmra.mxu0 %v627
      %v819 = vpop.f32.mrf.mxu0
      %v820 = vadd.f32 %v328, %v819
      %v821 = vpop.f32.mrf.mxu0
      %v822 = vadd.f32 %v328, %v821
      %823 = vmatmul.bf16.gmra.mxu0 %v630
      %v824 = vpop.f32.mrf.mxu0
      %v825 = vadd.f32 %v328, %v824
      %v826 = vpop.f32.mrf.mxu0
      %v827 = vadd.f32 %v328, %v826
      %828 = vmatmul.bf16.gmra.mxu0 %v633
      %v829 = vpop.f32.mrf.mxu0
      %v830 = vadd.f32 %v328, %v829
      %v831 = vpop.f32.mrf.mxu0
      %v832 = vadd.f32 %v328, %v831
      %833 = vmatmul.bf16.gmra.mxu0 %v636
      %v834 = vpop.f32.mrf.mxu0
      %v835 = vadd.f32 %v328, %v834
      %v836 = vpop.f32.mrf.mxu0
      %v837 = vadd.f32 %v328, %v836
      %838 = vmatmul.bf16.gmra.mxu0 %v639
      %v839 = vpop.f32.mrf.mxu0
      %v840 = vadd.f32 %v328, %v839
      %v841 = vpop.f32.mrf.mxu0
      %v842 = vadd.f32 %v328, %v841
      %843 = vmatmul.bf16.gmra.mxu0 %v642
      %v844 = vpop.f32.mrf.mxu0
      %v845 = vadd.f32 %v328, %v844
      %v846 = vpop.f32.mrf.mxu0
      %v847 = vadd.f32 %v328, %v846
      %848 = vmatmul.bf16.gmra.mxu0 %v645
      %v849 = vpop.f32.mrf.mxu0
      %v850 = vadd.f32 %v328, %v849
      %v851 = vpop.f32.mrf.mxu0
      %v852 = vadd.f32 %v328, %v851
      %853 = vmatmul.bf16.gmra.mxu0 %v648
      %v854 = vpop.f32.mrf.mxu0
      %v855 = vadd.f32 %v328, %v854
      %v856 = vpop.f32.mrf.mxu0
      %v857 = vadd.f32 %v328, %v856
      %858 = vmatmul.bf16.gmra.mxu0 %v651
      %v859 = vpop.f32.mrf.mxu0
      %v860 = vadd.f32 %v328, %v859
      %v861 = vpop.f32.mrf.mxu0
      %v862 = vadd.f32 %v328, %v861
      %863 = vmatmul.bf16.gmra.mxu0 %v654
      %v864 = vpop.f32.mrf.mxu0
      %v865 = vadd.f32 %v328, %v864
      %v866 = vpop.f32.mrf.mxu0
      %v867 = vadd.f32 %v328, %v866
      %868 = vmatmul.bf16.gmra.mxu0 %v657
      %v869 = vpop.f32.mrf.mxu0
      %v870 = vadd.f32 %v328, %v869
      %v871 = vpop.f32.mrf.mxu0
      %v872 = vadd.f32 %v328, %v871
      %873 = vmatmul.bf16.gmra.mxu0 %v660
      %v874 = vpop.f32.mrf.mxu0
      %v875 = vadd.f32 %v328, %v874
      %v876 = vpop.f32.mrf.mxu0
      %v877 = vadd.f32 %v328, %v876
      %878 = vmatmul.bf16.gmra.mxu0 %v663
      %v879 = vpop.f32.mrf.mxu0
      %v880 = vadd.f32 %v328, %v879
      %v881 = vpop.f32.mrf.mxu0
      %v882 = vadd.f32 %v328, %v881
      %883 = vmatmul.bf16.gmra.mxu0 %v666
      %v884 = vpop.f32.mrf.mxu0
      %v885 = vadd.f32 %v328, %v884
      %v886 = vpop.f32.mrf.mxu0
      %v887 = vadd.f32 %v328, %v886
      %888 = vmatmul.bf16.gmra.mxu0 %v669
      %v889 = vpop.f32.mrf.mxu0
      %v890 = vadd.f32 %v328, %v889
      %v891 = vpop.f32.mrf.mxu0
      %v892 = vadd.f32 %v328, %v891
      %893 = vmatmul.bf16.gmra.mxu0 %v672
      %v894 = vpop.f32.mrf.mxu0
      %v895 = vadd.f32 %v328, %v894
      %v896 = vpop.f32.mrf.mxu0
      %v897 = vadd.f32 %v328, %v896
      %898 = vmatmul.bf16.gmra.mxu0 %v675
      %v899 = vpop.f32.mrf.mxu0
      %v900 = vadd.f32 %v328, %v899
      %v901 = vpop.f32.mrf.mxu0
      %v902 = vadd.f32 %v328, %v901
      %903 = vmatmul.bf16.gmra.mxu0 %v678
      %v904 = vpop.f32.mrf.mxu0
      %v905 = vadd.f32 %v328, %v904
      %v906 = vpop.f32.mrf.mxu0
      %v907 = vadd.f32 %v328, %v906
      %908 = vmatmul.bf16.gmra.mxu0 %v681
      %v909 = vpop.f32.mrf.mxu0
      %v910 = vadd.f32 %v328, %v909
      %v911 = vpop.f32.mrf.mxu0
      %v912 = vadd.f32 %v328, %v911
      %913 = vmatmul.bf16.gmra.mxu0 %v684
      %v914 = vpop.f32.mrf.mxu0
      %v915 = vadd.f32 %v328, %v914
      %v916 = vpop.f32.mrf.mxu0
      %v917 = vadd.f32 %v328, %v916
      %918 = vmatmul.bf16.gmra.mxu0 %v687
      %v919 = vpop.f32.mrf.mxu0
      %v920 = vadd.f32 %v328, %v919
      %v921 = vpop.f32.mrf.mxu0
      %v922 = vadd.f32 %v328, %v921
      %923 = vmatmul.bf16.gmra.mxu0 %v690
      %v924 = vpop.f32.mrf.mxu0
      %v925 = vadd.f32 %v328, %v924
      %v926 = vpop.f32.mrf.mxu0
      %v927 = vadd.f32 %v328, %v926
      %928 = vmatmul.bf16.gmra.mxu0 %v693
      %v929 = vpop.f32.mrf.mxu0
      %v930 = vadd.f32 %v328, %v929
      %v931 = vpop.f32.mrf.mxu0
      %v932 = vadd.f32 %v328, %v931
      %933 = vmatmul.bf16.gmra.mxu0 %v696
      %v934 = vpop.f32.mrf.mxu0
      %v935 = vadd.f32 %v328, %v934
      %v936 = vpop.f32.mrf.mxu0
      %v937 = vadd.f32 %v328, %v936
      %938 = vmatmul.bf16.gmra.mxu0 %v699
      %v939 = vpop.f32.mrf.mxu0
      %v940 = vadd.f32 %v328, %v939
      %v941 = vpop.f32.mrf.mxu0
      %v942 = vadd.f32 %v328, %v941
      %943 = vmatmul.bf16.gmra.mxu0 %v702
      %v944 = vpop.f32.mrf.mxu0
      %v945 = vadd.f32 %v328, %v944
      %v946 = vpop.f32.mrf.mxu0
      %v947 = vadd.f32 %v328, %v946
      %948 = vmatmul.bf16.gmra.mxu0 %v705
      %v949 = vpop.f32.mrf.mxu0
      %v950 = vadd.f32 %v328, %v949
      %v951 = vpop.f32.mrf.mxu0
      %v952 = vadd.f32 %v328, %v951
      %953 = vmatmul.bf16.gmra.mxu0 %v708
      %v954 = vpop.f32.mrf.mxu0
      %v955 = vadd.f32 %v328, %v954
      %v956 = vpop.f32.mrf.mxu0
      %v957 = vadd.f32 %v328, %v956
      %958 = vmatmul.bf16.gmra.mxu0 %v711
      %v959 = vpop.f32.mrf.mxu0
      %v960 = vadd.f32 %v328, %v959
      %v961 = vpop.f32.mrf.mxu0
      %v962 = vadd.f32 %v328, %v961
      %963 = vmatmul.bf16.gmra.mxu0 %v714
      %v964 = vpop.f32.mrf.mxu0
      %v965 = vadd.f32 %v328, %v964
      %v966 = vpop.f32.mrf.mxu0
      %v967 = vadd.f32 %v328, %v966
      %968 = vmatmul.bf16.gmra.mxu0 %v717
      %v969 = vpop.f32.mrf.mxu0
      %v970 = vadd.f32 %v328, %v969
      %v971 = vpop.f32.mrf.mxu0
      %v972 = vadd.f32 %v328, %v971
      %973 = vmatmul.bf16.gmra.mxu0 %v720
      %v974 = vpop.f32.mrf.mxu0
      %v975 = vadd.f32 %v328, %v974
      %v976 = vpop.f32.mrf.mxu0
      %v977 = vadd.f32 %v328, %v976
      %978 = vmatmul.bf16.gmra.mxu0 %v723
      %v979 = vpop.f32.mrf.mxu0
      %v980 = vadd.f32 %v328, %v979
      %v981 = vpop.f32.mrf.mxu0
      %v982 = vadd.f32 %v328, %v981
      %983 = vmatmul.bf16.gmra.mxu0 %v726
      %v984 = vpop.f32.mrf.mxu0
      %v985 = vadd.f32 %v328, %v984
      %v986 = vpop.f32.mrf.mxu0
      %v987 = vadd.f32 %v328, %v986
      %988 = vdwg.mxu0
      %v989 = vmax.f32 %v745, 0.0
      %v990 = vmax.f32 %v747, 0.0
      %v991 = vmax.f32 %v750, 0.0
      %v992 = vmax.f32 %v752, 0.0
      %v993 = vmax.f32 %v755, 0.0
      %v994 = vmax.f32 %v757, 0.0
      %v995 = vmax.f32 %v760, 0.0
      %v996 = vmax.f32 %v762, 0.0
      %v997 = vmax.f32 %v765, 0.0
      %v998 = vmax.f32 %v767, 0.0
      %v999 = vmax.f32 %v770, 0.0
      %v1000 = vmax.f32 %v772, 0.0
      %v1001 = vmax.f32 %v775, 0.0
      %v1002 = vmax.f32 %v777, 0.0
      %v1003 = vmax.f32 %v780, 0.0
      %v1004 = vmax.f32 %v782, 0.0
      %v1005 = vmax.f32 %v785, 0.0
      %v1006 = vmax.f32 %v787, 0.0
      %v1007 = vmax.f32 %v790, 0.0
      %v1008 = vmax.f32 %v792, 0.0
      %v1009 = vmax.f32 %v795, 0.0
      %v1010 = vmax.f32 %v797, 0.0
      %v1011 = vmax.f32 %v800, 0.0
      %v1012 = vmax.f32 %v802, 0.0
      %v1013 = vmax.f32 %v805, 0.0
      %v1014 = vmax.f32 %v807, 0.0
      %v1015 = vmax.f32 %v810, 0.0
      %v1016 = vmax.f32 %v812, 0.0
      %v1017 = vmax.f32 %v815, 0.0
      %v1018 = vmax.f32 %v817, 0.0
      %v1019 = vmax.f32 %v820, 0.0
      %v1020 = vmax.f32 %v822, 0.0
      %v1021 = vmax.f32 %v825, 0.0
      %v1022 = vmax.f32 %v827, 0.0
      %v1023 = vmax.f32 %v830, 0.0
      %v1024 = vmax.f32 %v832, 0.0
      %v1025 = vmax.f32 %v835, 0.0
      %v1026 = vmax.f32 %v837, 0.0
      %v1027 = vmax.f32 %v840, 0.0
      %v1028 = vmax.f32 %v842, 0.0
      %v1029 = vmax.f32 %v845, 0.0
      %v1030 = vmax.f32 %v847, 0.0
      %v1031 = vmax.f32 %v850, 0.0
      %v1032 = vmax.f32 %v852, 0.0
      %v1033 = vmax.f32 %v855, 0.0
      %v1034 = vmax.f32 %v857, 0.0
      %v1035 = vmax.f32 %v860, 0.0
      %v1036 = vmax.f32 %v862, 0.0
      %v1037 = vmax.f32 %v865, 0.0
      %v1038 = vmax.f32 %v867, 0.0
      %v1039 = vmax.f32 %v870, 0.0
      %v1040 = vmax.f32 %v872, 0.0
      %v1041 = vmax.f32 %v875, 0.0
      %v1042 = vmax.f32 %v877, 0.0
      %v1043 = vmax.f32 %v880, 0.0
      %v1044 = vmax.f32 %v882, 0.0
      %v1045 = vmax.f32 %v885, 0.0
      %v1046 = vmax.f32 %v887, 0.0
      %v1047 = vmax.f32 %v890, 0.0
      %v1048 = vmax.f32 %v892, 0.0
      %v1049 = vmax.f32 %v895, 0.0
      %v1050 = vmax.f32 %v897, 0.0
      %v1051 = vmax.f32 %v900, 0.0
      %v1052 = vmax.f32 %v902, 0.0
      %v1053 = vmax.f32 %v905, 0.0
      %v1054 = vmax.f32 %v907, 0.0
      %v1055 = vmax.f32 %v910, 0.0
      %v1056 = vmax.f32 %v912, 0.0
      %v1057 = vmax.f32 %v915, 0.0
      %v1058 = vmax.f32 %v917, 0.0
      %v1059 = vmax.f32 %v920, 0.0
      %v1060 = vmax.f32 %v922, 0.0
      %v1061 = vmax.f32 %v925, 0.0
      %v1062 = vmax.f32 %v927, 0.0
      %v1063 = vmax.f32 %v930, 0.0
      %v1064 = vmax.f32 %v932, 0.0
      %v1065 = vmax.f32 %v935, 0.0
      %v1066 = vmax.f32 %v937, 0.0
      %v1067 = vmax.f32 %v940, 0.0
      %v1068 = vmax.f32 %v942, 0.0
      %v1069 = vmax.f32 %v945, 0.0
      %v1070 = vmax.f32 %v947, 0.0
      %v1071 = vmax.f32 %v950, 0.0
      %v1072 = vmax.f32 %v952, 0.0
      %v1073 = vmax.f32 %v955, 0.0
      %v1074 = vmax.f32 %v957, 0.0
      %v1075 = vmax.f32 %v960, 0.0
      %v1076 = vmax.f32 %v962, 0.0
      %v1077 = vmax.f32 %v965, 0.0
      %v1078 = vmax.f32 %v967, 0.0
      %v1079 = vmax.f32 %v970, 0.0
      %v1080 = vmax.f32 %v972, 0.0
      %v1081 = vmax.f32 %v975, 0.0
      %v1082 = vmax.f32 %v977, 0.0
      %v1083 = vmax.f32 %v980, 0.0
      %v1084 = vmax.f32 %v982, 0.0
      %v1085 = vmax.f32 %v985, 0.0
      %v1086 = vmax.f32 %v987, 0.0
      %v1185 = vrot.slane %v989, 2
      %v1186 = vrot.slane %v989, 4
      %v1187 = vrot.slane %v989, 6
      %v1188 = vrot.slane %v990, 2
      %v1189 = vrot.slane %v990, 4
      %v1190 = vrot.slane %v990, 6
      %v1191 = vrot.slane %v991, 2
      %v1192 = vrot.slane %v991, 4
      %v1193 = vrot.slane %v991, 6
      %v1194 = vrot.slane %v992, 2
      %v1195 = vrot.slane %v992, 4
      %v1196 = vrot.slane %v992, 6
      %v1197 = vrot.slane %v993, 2
      %v1198 = vrot.slane %v993, 4
      %v1199 = vrot.slane %v993, 6
      %v1200 = vrot.slane %v994, 2
      %v1201 = vrot.slane %v994, 4
      %v1202 = vrot.slane %v994, 6
      %v1203 = vrot.slane %v995, 2
      %v1204 = vrot.slane %v995, 4
      %v1205 = vrot.slane %v995, 6
      %v1206 = vrot.slane %v996, 2
      %v1207 = vrot.slane %v996, 4
      %v1208 = vrot.slane %v996, 6
      %v1209 = vrot.slane %v997, 2
      %v1210 = vrot.slane %v997, 4
      %v1211 = vrot.slane %v997, 6
      %v1212 = vrot.slane %v998, 2
      %v1213 = vrot.slane %v998, 4
      %v1214 = vrot.slane %v998, 6
      %v1215 = vrot.slane %v999, 2
      %v1216 = vrot.slane %v999, 4
      %v1217 = vrot.slane %v999, 6
      %v1218 = vrot.slane %v1000, 2
      %v1219 = vrot.slane %v1000, 4
      %v1220 = vrot.slane %v1000, 6
      %v1221 = vrot.slane %v1001, 2
      %v1222 = vrot.slane %v1001, 4
      %v1223 = vrot.slane %v1001, 6
      %v1224 = vrot.slane %v1002, 2
      %v1225 = vrot.slane %v1002, 4
      %v1226 = vrot.slane %v1002, 6
      %v1227 = vrot.slane %v1003, 2
      %v1228 = vrot.slane %v1003, 4
      %v1229 = vrot.slane %v1003, 6
      %v1230 = vrot.slane %v1004, 2
      %v1231 = vrot.slane %v1004, 4
      %v1232 = vrot.slane %v1004, 6
      %v1233 = vrot.slane %v1005, 2
      %v1234 = vrot.slane %v1005, 4
      %v1235 = vrot.slane %v1005, 6
      %v1236 = vrot.slane %v1006, 2
      %v1237 = vrot.slane %v1006, 4
      %v1238 = vrot.slane %v1006, 6
      %v1239 = vrot.slane %v1007, 2
      %v1240 = vrot.slane %v1007, 4
      %v1241 = vrot.slane %v1007, 6
      %v1242 = vrot.slane %v1008, 2
      %v1243 = vrot.slane %v1008, 4
      %v1244 = vrot.slane %v1008, 6
      %v1245 = vrot.slane %v1009, 2
      %v1246 = vrot.slane %v1009, 4
      %v1247 = vrot.slane %v1009, 6
      %v1248 = vrot.slane %v1010, 2
      %v1249 = vrot.slane %v1010, 4
      %v1250 = vrot.slane %v1010, 6
      %v1251 = vrot.slane %v1011, 2
      %v1252 = vrot.slane %v1011, 4
      %v1253 = vrot.slane %v1011, 6
      %v1254 = vrot.slane %v1012, 2
      %v1255 = vrot.slane %v1012, 4
      %v1256 = vrot.slane %v1012, 6
      %v1257 = vrot.slane %v1013, 2
      %v1258 = vrot.slane %v1013, 4
      %v1259 = vrot.slane %v1013, 6
      %v1260 = vrot.slane %v1014, 2
      %v1261 = vrot.slane %v1014, 4
      %v1262 = vrot.slane %v1014, 6
      %v1263 = vrot.slane %v1015, 2
      %v1264 = vrot.slane %v1015, 4
      %v1265 = vrot.slane %v1015, 6
      %v1266 = vrot.slane %v1016, 2
      %v1267 = vrot.slane %v1016, 4
      %v1268 = vrot.slane %v1016, 6
      %v1269 = vrot.slane %v1017, 2
      %v1270 = vrot.slane %v1017, 4
      %v1271 = vrot.slane %v1017, 6
      %v1272 = vrot.slane %v1018, 2
      %v1273 = vrot.slane %v1018, 4
      %v1274 = vrot.slane %v1018, 6
      %v1275 = vrot.slane %v1019, 2
      %v1276 = vrot.slane %v1019, 4
      %v1277 = vrot.slane %v1019, 6
      %v1278 = vrot.slane %v1020, 2
      %v1279 = vrot.slane %v1020, 4
      %v1280 = vrot.slane %v1020, 6
      %v1281 = vrot.slane %v1021, 2
      %v1282 = vrot.slane %v1021, 4
      %v1283 = vrot.slane %v1021, 6
      %v1284 = vrot.slane %v1022, 2
      %v1285 = vrot.slane %v1022, 4
      %v1286 = vrot.slane %v1022, 6
      %v1287 = vrot.slane %v1023, 2
      %v1288 = vrot.slane %v1023, 4
      %v1289 = vrot.slane %v1023, 6
      %v1290 = vrot.slane %v1024, 2
      %v1291 = vrot.slane %v1024, 4
      %v1292 = vrot.slane %v1024, 6
      %v1293 = vrot.slane %v1025, 2
      %v1294 = vrot.slane %v1025, 4
      %v1295 = vrot.slane %v1025, 6
      %v1296 = vrot.slane %v1026, 2
      %v1297 = vrot.slane %v1026, 4
      %v1298 = vrot.slane %v1026, 6
      %v1299 = vrot.slane %v1027, 2
      %v1300 = vrot.slane %v1027, 4
      %v1301 = vrot.slane %v1027, 6
      %v1302 = vrot.slane %v1028, 2
      %v1303 = vrot.slane %v1028, 4
      %v1304 = vrot.slane %v1028, 6
      %v1305 = vrot.slane %v1029, 2
      %v1306 = vrot.slane %v1029, 4
      %v1307 = vrot.slane %v1029, 6
      %v1308 = vrot.slane %v1030, 2
      %v1309 = vrot.slane %v1030, 4
      %v1310 = vrot.slane %v1030, 6
      %v1311 = vrot.slane %v1031, 2
      %v1312 = vrot.slane %v1031, 4
      %v1313 = vrot.slane %v1031, 6
      %v1314 = vrot.slane %v1032, 2
      %v1315 = vrot.slane %v1032, 4
      %v1316 = vrot.slane %v1032, 6
      %v1317 = vrot.slane %v1033, 2
      %v1318 = vrot.slane %v1033, 4
      %v1319 = vrot.slane %v1033, 6
      %v1320 = vrot.slane %v1034, 2
      %v1321 = vrot.slane %v1034, 4
      %v1322 = vrot.slane %v1034, 6
      %v1323 = vrot.slane %v1035, 2
      %v1324 = vrot.slane %v1035, 4
      %v1325 = vrot.slane %v1035, 6
      %v1326 = vrot.slane %v1036, 2
      %v1327 = vrot.slane %v1036, 4
      %v1328 = vrot.slane %v1036, 6
      %v1329 = vrot.slane %v1037, 2
      %v1330 = vrot.slane %v1037, 4
      %v1331 = vrot.slane %v1037, 6
      %v1332 = vrot.slane %v1038, 2
      %v1333 = vrot.slane %v1038, 4
      %v1334 = vrot.slane %v1038, 6
      %v1335 = vrot.slane %v1039, 2
      %v1336 = vrot.slane %v1039, 4
      %v1337 = vrot.slane %v1039, 6
      %v1338 = vrot.slane %v1040, 2
      %v1339 = vrot.slane %v1040, 4
      %v1340 = vrot.slane %v1040, 6
      %v1341 = vrot.slane %v1041, 2
      %v1342 = vrot.slane %v1041, 4
      %v1343 = vrot.slane %v1041, 6
      %v1344 = vrot.slane %v1042, 2
      %v1345 = vrot.slane %v1042, 4
      %v1346 = vrot.slane %v1042, 6
      %v1347 = vrot.slane %v1043, 2
      %v1348 = vrot.slane %v1043, 4
      %v1349 = vrot.slane %v1043, 6
      %v1350 = vrot.slane %v1044, 2
      %v1351 = vrot.slane %v1044, 4
      %v1352 = vrot.slane %v1044, 6
      %v1353 = vrot.slane %v1045, 2
      %v1354 = vrot.slane %v1045, 4
      %v1355 = vrot.slane %v1045, 6
      %v1356 = vrot.slane %v1046, 2
      %v1357 = vrot.slane %v1046, 4
      %v1358 = vrot.slane %v1046, 6
      %v1359 = vrot.slane %v1047, 2
      %v1360 = vrot.slane %v1047, 4
      %v1361 = vrot.slane %v1047, 6
      %v1362 = vrot.slane %v1048, 2
      %v1363 = vrot.slane %v1048, 4
      %v1364 = vrot.slane %v1048, 6
      %v1365 = vrot.slane %v1049, 2
      %v1366 = vrot.slane %v1049, 4
      %v1367 = vrot.slane %v1049, 6
      %v1368 = vrot.slane %v1050, 2
      %v1369 = vrot.slane %v1050, 4
      %v1370 = vrot.slane %v1050, 6
      %v1371 = vrot.slane %v1051, 2
      %v1372 = vrot.slane %v1051, 4
      %v1373 = vrot.slane %v1051, 6
      %v1374 = vrot.slane %v1052, 2
      %v1375 = vrot.slane %v1052, 4
      %v1376 = vrot.slane %v1052, 6
      %v1377 = vrot.slane %v1053, 2
      %v1378 = vrot.slane %v1053, 4
      %v1379 = vrot.slane %v1053, 6
      %v1380 = vrot.slane %v1054, 2
      %v1381 = vrot.slane %v1054, 4
      %v1382 = vrot.slane %v1054, 6
      %v1383 = vrot.slane %v1055, 2
      %v1384 = vrot.slane %v1055, 4
      %v1385 = vrot.slane %v1055, 6
      %v1386 = vrot.slane %v1056, 2
      %v1387 = vrot.slane %v1056, 4
      %v1388 = vrot.slane %v1056, 6
      %v1389 = vrot.slane %v1057, 2
      %v1390 = vrot.slane %v1057, 4
      %v1391 = vrot.slane %v1057, 6
      %v1392 = vrot.slane %v1058, 2
      %v1393 = vrot.slane %v1058, 4
      %v1394 = vrot.slane %v1058, 6
      %v1395 = vrot.slane %v1059, 2
      %v1396 = vrot.slane %v1059, 4
      %v1397 = vrot.slane %v1059, 6
      %v1398 = vrot.slane %v1060, 2
      %v1399 = vrot.slane %v1060, 4
      %v1400 = vrot.slane %v1060, 6
      %v1401 = vrot.slane %v1061, 2
      %v1402 = vrot.slane %v1061, 4
      %v1403 = vrot.slane %v1061, 6
      %v1404 = vrot.slane %v1062, 2
      %v1405 = vrot.slane %v1062, 4
      %v1406 = vrot.slane %v1062, 6
      %v1407 = vrot.slane %v1063, 2
      %v1408 = vrot.slane %v1063, 4
      %v1409 = vrot.slane %v1063, 6
      %v1410 = vrot.slane %v1064, 2
      %v1411 = vrot.slane %v1064, 4
      %v1412 = vrot.slane %v1064, 6
      %v1413 = vrot.slane %v1065, 2
      %v1414 = vrot.slane %v1065, 4
      %v1415 = vrot.slane %v1065, 6
      %v1416 = vrot.slane %v1066, 2
      %v1417 = vrot.slane %v1066, 4
      %v1418 = vrot.slane %v1066, 6
      %v1419 = vrot.slane %v1067, 2
      %v1420 = vrot.slane %v1067, 4
      %v1421 = vrot.slane %v1067, 6
      %v1422 = vrot.slane %v1068, 2
      %v1423 = vrot.slane %v1068, 4
      %v1424 = vrot.slane %v1068, 6
      %v1425 = vrot.slane %v1069, 2
      %v1426 = vrot.slane %v1069, 4
      %v1427 = vrot.slane %v1069, 6
      %v1428 = vrot.slane %v1070, 2
      %v1429 = vrot.slane %v1070, 4
      %v1430 = vrot.slane %v1070, 6
      %v1431 = vrot.slane %v1071, 2
      %v1432 = vrot.slane %v1071, 4
      %v1433 = vrot.slane %v1071, 6
      %v1434 = vrot.slane %v1072, 2
      %v1435 = vrot.slane %v1072, 4
      %v1436 = vrot.slane %v1072, 6
      %v1437 = vrot.slane %v1073, 2
      %v1438 = vrot.slane %v1073, 4
      %v1439 = vrot.slane %v1073, 6
      %v1440 = vrot.slane %v1074, 2
      %v1441 = vrot.slane %v1074, 4
      %v1442 = vrot.slane %v1074, 6
      %v1443 = vrot.slane %v1075, 2
      %v1444 = vrot.slane %v1075, 4
      %v1445 = vrot.slane %v1075, 6
      %v1446 = vrot.slane %v1076, 2
      %v1447 = vrot.slane %v1076, 4
      %v1448 = vrot.slane %v1076, 6
      %v1449 = vrot.slane %v1077, 2
      %v1450 = vrot.slane %v1077, 4
      %v1451 = vrot.slane %v1077, 6
      %v1452 = vrot.slane %v1078, 2
      %v1453 = vrot.slane %v1078, 4
      %v1454 = vrot.slane %v1078, 6
      %v1455 = vrot.slane %v1079, 2
      %v1456 = vrot.slane %v1079, 4
      %v1457 = vrot.slane %v1079, 6
      %v1458 = vrot.slane %v1080, 2
      %v1459 = vrot.slane %v1080, 4
      %v1460 = vrot.slane %v1080, 6
      %v1461 = vrot.slane %v1081, 2
      %v1462 = vrot.slane %v1081, 4
      %v1463 = vrot.slane %v1081, 6
      %v1464 = vrot.slane %v1082, 2
      %v1465 = vrot.slane %v1082, 4
      %v1466 = vrot.slane %v1082, 6
      %v1467 = vrot.slane %v1083, 2
      %v1468 = vrot.slane %v1083, 4
      %v1469 = vrot.slane %v1083, 6
      %v1470 = vrot.slane %v1084, 2
      %v1471 = vrot.slane %v1084, 4
      %v1472 = vrot.slane %v1084, 6
      %v1473 = vrot.slane %v1085, 2
      %v1474 = vrot.slane %v1085, 4
      %v1475 = vrot.slane %v1085, 6
      %v1476 = vrot.slane %v1086, 2
      %v1477 = vrot.slane %v1086, 4
      %v1478 = vrot.slane %v1086, 6
      %vm1773 = vcmask 254976
      %v1774 = vsel %vm1773, %v989, -inf
      %v1775 = vrot.slane %v1774, 4
      %v1776 = vmax.f32 %v1774, %v1775
      %v1777 = vrot.slane %v1776, 2
      %v1778 = vmax.f32 %v1776, %v1777
      %v1779 = vrot.slane %v1778, 1
      %v1780 = vmax.f32 %v1778, %v1779
      %v1781 = vsel %vm1773, %v1185, -inf
      %v1782 = vrot.slane %v1781, 4
      %v1783 = vmax.f32 %v1781, %v1782
      %v1784 = vrot.slane %v1783, 2
      %v1785 = vmax.f32 %v1783, %v1784
      %v1786 = vrot.slane %v1785, 1
      %v1787 = vmax.f32 %v1785, %v1786
      %v1788 = vsel %vm1773, %v1186, -inf
      %v1789 = vrot.slane %v1788, 4
      %v1790 = vmax.f32 %v1788, %v1789
      %v1791 = vrot.slane %v1790, 2
      %v1792 = vmax.f32 %v1790, %v1791
      %v1793 = vrot.slane %v1792, 1
      %v1794 = vmax.f32 %v1792, %v1793
      %v1795 = vsel %vm1773, %v1187, -inf
      %v1796 = vrot.slane %v1795, 4
      %v1797 = vmax.f32 %v1795, %v1796
      %v1798 = vrot.slane %v1797, 2
      %v1799 = vmax.f32 %v1797, %v1798
      %v1800 = vrot.slane %v1799, 1
      %v1801 = vmax.f32 %v1799, %v1800
      %v1802 = vsel %vm1773, %v990, -inf
      %v1803 = vrot.slane %v1802, 4
      %v1804 = vmax.f32 %v1802, %v1803
      %v1805 = vrot.slane %v1804, 2
      %v1806 = vmax.f32 %v1804, %v1805
      %v1807 = vrot.slane %v1806, 1
      %v1808 = vmax.f32 %v1806, %v1807
      %v1809 = vsel %vm1773, %v1188, -inf
      %v1810 = vrot.slane %v1809, 4
      %v1811 = vmax.f32 %v1809, %v1810
      %v1812 = vrot.slane %v1811, 2
      %v1813 = vmax.f32 %v1811, %v1812
      %v1814 = vrot.slane %v1813, 1
      %v1815 = vmax.f32 %v1813, %v1814
      %v1816 = vsel %vm1773, %v1189, -inf
      %v1817 = vrot.slane %v1816, 4
      %v1818 = vmax.f32 %v1816, %v1817
      %v1819 = vrot.slane %v1818, 2
      %v1820 = vmax.f32 %v1818, %v1819
      %v1821 = vrot.slane %v1820, 1
      %v1822 = vmax.f32 %v1820, %v1821
      %v1823 = vsel %vm1773, %v1190, -inf
      %v1824 = vrot.slane %v1823, 4
      %v1825 = vmax.f32 %v1823, %v1824
      %v1826 = vrot.slane %v1825, 2
      %v1827 = vmax.f32 %v1825, %v1826
      %v1828 = vrot.slane %v1827, 1
      %v1829 = vmax.f32 %v1827, %v1828
      %v1830 = vsel %vm1773, %v991, -inf
      %v1831 = vrot.slane %v1830, 4
      %v1832 = vmax.f32 %v1830, %v1831
      %v1833 = vrot.slane %v1832, 2
      %v1834 = vmax.f32 %v1832, %v1833
      %v1835 = vrot.slane %v1834, 1
      %v1836 = vmax.f32 %v1834, %v1835
      %v1837 = vsel %vm1773, %v1191, -inf
      %v1838 = vrot.slane %v1837, 4
      %v1839 = vmax.f32 %v1837, %v1838
      %v1840 = vrot.slane %v1839, 2
      %v1841 = vmax.f32 %v1839, %v1840
      %v1842 = vrot.slane %v1841, 1
      %v1843 = vmax.f32 %v1841, %v1842
      %v1844 = vsel %vm1773, %v1192, -inf
      %v1845 = vrot.slane %v1844, 4
      %v1846 = vmax.f32 %v1844, %v1845
      %v1847 = vrot.slane %v1846, 2
      %v1848 = vmax.f32 %v1846, %v1847
      %v1849 = vrot.slane %v1848, 1
      %v1850 = vmax.f32 %v1848, %v1849
      %v1851 = vsel %vm1773, %v1193, -inf
      %v1852 = vrot.slane %v1851, 4
      %v1853 = vmax.f32 %v1851, %v1852
      %v1854 = vrot.slane %v1853, 2
      %v1855 = vmax.f32 %v1853, %v1854
      %v1856 = vrot.slane %v1855, 1
      %v1857 = vmax.f32 %v1855, %v1856
      %v1858 = vsel %vm1773, %v992, -inf
      %v1859 = vrot.slane %v1858, 4
      %v1860 = vmax.f32 %v1858, %v1859
      %v1861 = vrot.slane %v1860, 2
      %v1862 = vmax.f32 %v1860, %v1861
      %v1863 = vrot.slane %v1862, 1
      %v1864 = vmax.f32 %v1862, %v1863
      %v1865 = vsel %vm1773, %v1194, -inf
      %v1866 = vrot.slane %v1865, 4
      %v1867 = vmax.f32 %v1865, %v1866
      %v1868 = vrot.slane %v1867, 2
      %v1869 = vmax.f32 %v1867, %v1868
      %v1870 = vrot.slane %v1869, 1
      %v1871 = vmax.f32 %v1869, %v1870
      %v1872 = vsel %vm1773, %v1195, -inf
      %v1873 = vrot.slane %v1872, 4
      %v1874 = vmax.f32 %v1872, %v1873
      %v1875 = vrot.slane %v1874, 2
      %v1876 = vmax.f32 %v1874, %v1875
      %v1877 = vrot.slane %v1876, 1
      %v1878 = vmax.f32 %v1876, %v1877
      %v1879 = vsel %vm1773, %v1196, -inf
      %v1880 = vrot.slane %v1879, 4
      %v1881 = vmax.f32 %v1879, %v1880
      %v1882 = vrot.slane %v1881, 2
      %v1883 = vmax.f32 %v1881, %v1882
      %v1884 = vrot.slane %v1883, 1
      %v1885 = vmax.f32 %v1883, %v1884
      %v1886 = vsel %vm1773, %v993, -inf
      %v1887 = vrot.slane %v1886, 4
      %v1888 = vmax.f32 %v1886, %v1887
      %v1889 = vrot.slane %v1888, 2
      %v1890 = vmax.f32 %v1888, %v1889
      %v1891 = vrot.slane %v1890, 1
      %v1892 = vmax.f32 %v1890, %v1891
      %v1893 = vsel %vm1773, %v1197, -inf
      %v1894 = vrot.slane %v1893, 4
      %v1895 = vmax.f32 %v1893, %v1894
      %v1896 = vrot.slane %v1895, 2
      %v1897 = vmax.f32 %v1895, %v1896
      %v1898 = vrot.slane %v1897, 1
      %v1899 = vmax.f32 %v1897, %v1898
      %v1900 = vsel %vm1773, %v1198, -inf
      %v1901 = vrot.slane %v1900, 4
      %v1902 = vmax.f32 %v1900, %v1901
      %v1903 = vrot.slane %v1902, 2
      %v1904 = vmax.f32 %v1902, %v1903
      %v1905 = vrot.slane %v1904, 1
      %v1906 = vmax.f32 %v1904, %v1905
      %v1907 = vsel %vm1773, %v1199, -inf
      %v1908 = vrot.slane %v1907, 4
      %v1909 = vmax.f32 %v1907, %v1908
      %v1910 = vrot.slane %v1909, 2
      %v1911 = vmax.f32 %v1909, %v1910
      %v1912 = vrot.slane %v1911, 1
      %v1913 = vmax.f32 %v1911, %v1912
      %v1914 = vsel %vm1773, %v994, -inf
      %v1915 = vrot.slane %v1914, 4
      %v1916 = vmax.f32 %v1914, %v1915
      %v1917 = vrot.slane %v1916, 2
      %v1918 = vmax.f32 %v1916, %v1917
      %v1919 = vrot.slane %v1918, 1
      %v1920 = vmax.f32 %v1918, %v1919
      %v1921 = vsel %vm1773, %v1200, -inf
      %v1922 = vrot.slane %v1921, 4
      %v1923 = vmax.f32 %v1921, %v1922
      %v1924 = vrot.slane %v1923, 2
      %v1925 = vmax.f32 %v1923, %v1924
      %v1926 = vrot.slane %v1925, 1
      %v1927 = vmax.f32 %v1925, %v1926
      %v1928 = vsel %vm1773, %v1201, -inf
      %v1929 = vrot.slane %v1928, 4
      %v1930 = vmax.f32 %v1928, %v1929
      %v1931 = vrot.slane %v1930, 2
      %v1932 = vmax.f32 %v1930, %v1931
      %v1933 = vrot.slane %v1932, 1
      %v1934 = vmax.f32 %v1932, %v1933
      %v1935 = vsel %vm1773, %v1202, -inf
      %v1936 = vrot.slane %v1935, 4
      %v1937 = vmax.f32 %v1935, %v1936
      %v1938 = vrot.slane %v1937, 2
      %v1939 = vmax.f32 %v1937, %v1938
      %v1940 = vrot.slane %v1939, 1
      %v1941 = vmax.f32 %v1939, %v1940
      %v1942 = vsel %vm1773, %v995, -inf
      %v1943 = vrot.slane %v1942, 4
      %v1944 = vmax.f32 %v1942, %v1943
      %v1945 = vrot.slane %v1944, 2
      %v1946 = vmax.f32 %v1944, %v1945
      %v1947 = vrot.slane %v1946, 1
      %v1948 = vmax.f32 %v1946, %v1947
      %v1949 = vsel %vm1773, %v1203, -inf
      %v1950 = vrot.slane %v1949, 4
      %v1951 = vmax.f32 %v1949, %v1950
      %v1952 = vrot.slane %v1951, 2
      %v1953 = vmax.f32 %v1951, %v1952
      %v1954 = vrot.slane %v1953, 1
      %v1955 = vmax.f32 %v1953, %v1954
      %v1956 = vsel %vm1773, %v1204, -inf
      %v1957 = vrot.slane %v1956, 4
      %v1958 = vmax.f32 %v1956, %v1957
      %v1959 = vrot.slane %v1958, 2
      %v1960 = vmax.f32 %v1958, %v1959
      %v1961 = vrot.slane %v1960, 1
      %v1962 = vmax.f32 %v1960, %v1961
      %v1963 = vsel %vm1773, %v1205, -inf
      %v1964 = vrot.slane %v1963, 4
      %v1965 = vmax.f32 %v1963, %v1964
      %v1966 = vrot.slane %v1965, 2
      %v1967 = vmax.f32 %v1965, %v1966
      %v1968 = vrot.slane %v1967, 1
      %v1969 = vmax.f32 %v1967, %v1968
      %v1970 = vsel %vm1773, %v996, -inf
      %v1971 = vrot.slane %v1970, 4
      %v1972 = vmax.f32 %v1970, %v1971
      %v1973 = vrot.slane %v1972, 2
      %v1974 = vmax.f32 %v1972, %v1973
      %v1975 = vrot.slane %v1974, 1
      %v1976 = vmax.f32 %v1974, %v1975
      %v1977 = vsel %vm1773, %v1206, -inf
      %v1978 = vrot.slane %v1977, 4
      %v1979 = vmax.f32 %v1977, %v1978
      %v1980 = vrot.slane %v1979, 2
      %v1981 = vmax.f32 %v1979, %v1980
      %v1982 = vrot.slane %v1981, 1
      %v1983 = vmax.f32 %v1981, %v1982
      %v1984 = vsel %vm1773, %v1207, -inf
      %v1985 = vrot.slane %v1984, 4
      %v1986 = vmax.f32 %v1984, %v1985
      %v1987 = vrot.slane %v1986, 2
      %v1988 = vmax.f32 %v1986, %v1987
      %v1989 = vrot.slane %v1988, 1
      %v1990 = vmax.f32 %v1988, %v1989
      %v1991 = vsel %vm1773, %v1208, -inf
      %v1992 = vrot.slane %v1991, 4
      %v1993 = vmax.f32 %v1991, %v1992
      %v1994 = vrot.slane %v1993, 2
      %v1995 = vmax.f32 %v1993, %v1994
      %v1996 = vrot.slane %v1995, 1
      %v1997 = vmax.f32 %v1995, %v1996
      %v1998 = vsel %vm1773, %v997, -inf
      %v1999 = vrot.slane %v1998, 4
      %v2000 = vmax.f32 %v1998, %v1999
      %v2001 = vrot.slane %v2000, 2
      %v2002 = vmax.f32 %v2000, %v2001
      %v2003 = vrot.slane %v2002, 1
      %v2004 = vmax.f32 %v2002, %v2003
      %v2005 = vsel %vm1773, %v1209, -inf
      %v2006 = vrot.slane %v2005, 4
      %v2007 = vmax.f32 %v2005, %v2006
      %v2008 = vrot.slane %v2007, 2
      %v2009 = vmax.f32 %v2007, %v2008
      %v2010 = vrot.slane %v2009, 1
      %v2011 = vmax.f32 %v2009, %v2010
      %v2012 = vsel %vm1773, %v1210, -inf
      %v2013 = vrot.slane %v2012, 4
      %v2014 = vmax.f32 %v2012, %v2013
      %v2015 = vrot.slane %v2014, 2
      %v2016 = vmax.f32 %v2014, %v2015
      %v2017 = vrot.slane %v2016, 1
      %v2018 = vmax.f32 %v2016, %v2017
      %v2019 = vsel %vm1773, %v1211, -inf
      %v2020 = vrot.slane %v2019, 4
      %v2021 = vmax.f32 %v2019, %v2020
      %v2022 = vrot.slane %v2021, 2
      %v2023 = vmax.f32 %v2021, %v2022
      %v2024 = vrot.slane %v2023, 1
      %v2025 = vmax.f32 %v2023, %v2024
      %v2026 = vsel %vm1773, %v998, -inf
      %v2027 = vrot.slane %v2026, 4
      %v2028 = vmax.f32 %v2026, %v2027
      %v2029 = vrot.slane %v2028, 2
      %v2030 = vmax.f32 %v2028, %v2029
      %v2031 = vrot.slane %v2030, 1
      %v2032 = vmax.f32 %v2030, %v2031
      %v2033 = vsel %vm1773, %v1212, -inf
      %v2034 = vrot.slane %v2033, 4
      %v2035 = vmax.f32 %v2033, %v2034
      %v2036 = vrot.slane %v2035, 2
      %v2037 = vmax.f32 %v2035, %v2036
      %v2038 = vrot.slane %v2037, 1
      %v2039 = vmax.f32 %v2037, %v2038
      %v2040 = vsel %vm1773, %v1213, -inf
      %v2041 = vrot.slane %v2040, 4
      %v2042 = vmax.f32 %v2040, %v2041
      %v2043 = vrot.slane %v2042, 2
      %v2044 = vmax.f32 %v2042, %v2043
      %v2045 = vrot.slane %v2044, 1
      %v2046 = vmax.f32 %v2044, %v2045
      %v2047 = vsel %vm1773, %v1214, -inf
      %v2048 = vrot.slane %v2047, 4
      %v2049 = vmax.f32 %v2047, %v2048
      %v2050 = vrot.slane %v2049, 2
      %v2051 = vmax.f32 %v2049, %v2050
      %v2052 = vrot.slane %v2051, 1
      %v2053 = vmax.f32 %v2051, %v2052
      %v2054 = vsel %vm1773, %v999, -inf
      %v2055 = vrot.slane %v2054, 4
      %v2056 = vmax.f32 %v2054, %v2055
      %v2057 = vrot.slane %v2056, 2
      %v2058 = vmax.f32 %v2056, %v2057
      %v2059 = vrot.slane %v2058, 1
      %v2060 = vmax.f32 %v2058, %v2059
      %v2061 = vsel %vm1773, %v1215, -inf
      %v2062 = vrot.slane %v2061, 4
      %v2063 = vmax.f32 %v2061, %v2062
      %v2064 = vrot.slane %v2063, 2
      %v2065 = vmax.f32 %v2063, %v2064
      %v2066 = vrot.slane %v2065, 1
      %v2067 = vmax.f32 %v2065, %v2066
      %v2068 = vsel %vm1773, %v1216, -inf
      %v2069 = vrot.slane %v2068, 4
      %v2070 = vmax.f32 %v2068, %v2069
      %v2071 = vrot.slane %v2070, 2
      %v2072 = vmax.f32 %v2070, %v2071
      %v2073 = vrot.slane %v2072, 1
      %v2074 = vmax.f32 %v2072, %v2073
      %v2075 = vsel %vm1773, %v1217, -inf
      %v2076 = vrot.slane %v2075, 4
      %v2077 = vmax.f32 %v2075, %v2076
      %v2078 = vrot.slane %v2077, 2
      %v2079 = vmax.f32 %v2077, %v2078
      %v2080 = vrot.slane %v2079, 1
      %v2081 = vmax.f32 %v2079, %v2080
      %v2082 = vsel %vm1773, %v1000, -inf
      %v2083 = vrot.slane %v2082, 4
      %v2084 = vmax.f32 %v2082, %v2083
      %v2085 = vrot.slane %v2084, 2
      %v2086 = vmax.f32 %v2084, %v2085
      %v2087 = vrot.slane %v2086, 1
      %v2088 = vmax.f32 %v2086, %v2087
      %v2089 = vsel %vm1773, %v1218, -inf
      %v2090 = vrot.slane %v2089, 4
      %v2091 = vmax.f32 %v2089, %v2090
      %v2092 = vrot.slane %v2091, 2
      %v2093 = vmax.f32 %v2091, %v2092
      %v2094 = vrot.slane %v2093, 1
      %v2095 = vmax.f32 %v2093, %v2094
      %v2096 = vsel %vm1773, %v1219, -inf
      %v2097 = vrot.slane %v2096, 4
      %v2098 = vmax.f32 %v2096, %v2097
      %v2099 = vrot.slane %v2098, 2
      %v2100 = vmax.f32 %v2098, %v2099
      %v2101 = vrot.slane %v2100, 1
      %v2102 = vmax.f32 %v2100, %v2101
      %v2103 = vsel %vm1773, %v1220, -inf
      %v2104 = vrot.slane %v2103, 4
      %v2105 = vmax.f32 %v2103, %v2104
      %v2106 = vrot.slane %v2105, 2
      %v2107 = vmax.f32 %v2105, %v2106
      %v2108 = vrot.slane %v2107, 1
      %v2109 = vmax.f32 %v2107, %v2108
      %v2110 = vsel %vm1773, %v1001, -inf
      %v2111 = vrot.slane %v2110, 4
      %v2112 = vmax.f32 %v2110, %v2111
      %v2113 = vrot.slane %v2112, 2
      %v2114 = vmax.f32 %v2112, %v2113
      %v2115 = vrot.slane %v2114, 1
      %v2116 = vmax.f32 %v2114, %v2115
      %v2117 = vsel %vm1773, %v1221, -inf
      %v2118 = vrot.slane %v2117, 4
      %v2119 = vmax.f32 %v2117, %v2118
      %v2120 = vrot.slane %v2119, 2
      %v2121 = vmax.f32 %v2119, %v2120
      %v2122 = vrot.slane %v2121, 1
      %v2123 = vmax.f32 %v2121, %v2122
      %v2124 = vsel %vm1773, %v1222, -inf
      %v2125 = vrot.slane %v2124, 4
      %v2126 = vmax.f32 %v2124, %v2125
      %v2127 = vrot.slane %v2126, 2
      %v2128 = vmax.f32 %v2126, %v2127
      %v2129 = vrot.slane %v2128, 1
      %v2130 = vmax.f32 %v2128, %v2129
      %v2131 = vsel %vm1773, %v1223, -inf
      %v2132 = vrot.slane %v2131, 4
      %v2133 = vmax.f32 %v2131, %v2132
      %v2134 = vrot.slane %v2133, 2
      %v2135 = vmax.f32 %v2133, %v2134
      %v2136 = vrot.slane %v2135, 1
      %v2137 = vmax.f32 %v2135, %v2136
      %v2138 = vsel %vm1773, %v1002, -inf
      %v2139 = vrot.slane %v2138, 4
      %v2140 = vmax.f32 %v2138, %v2139
      %v2141 = vrot.slane %v2140, 2
      %v2142 = vmax.f32 %v2140, %v2141
      %v2143 = vrot.slane %v2142, 1
      %v2144 = vmax.f32 %v2142, %v2143
      %v2145 = vsel %vm1773, %v1224, -inf
      %v2146 = vrot.slane %v2145, 4
      %v2147 = vmax.f32 %v2145, %v2146
      %v2148 = vrot.slane %v2147, 2
      %v2149 = vmax.f32 %v2147, %v2148
      %v2150 = vrot.slane %v2149, 1
      %v2151 = vmax.f32 %v2149, %v2150
      %v2152 = vsel %vm1773, %v1225, -inf
      %v2153 = vrot.slane %v2152, 4
      %v2154 = vmax.f32 %v2152, %v2153
      %v2155 = vrot.slane %v2154, 2
      %v2156 = vmax.f32 %v2154, %v2155
      %v2157 = vrot.slane %v2156, 1
      %v2158 = vmax.f32 %v2156, %v2157
      %v2159 = vsel %vm1773, %v1226, -inf
      %v2160 = vrot.slane %v2159, 4
      %v2161 = vmax.f32 %v2159, %v2160
      %v2162 = vrot.slane %v2161, 2
      %v2163 = vmax.f32 %v2161, %v2162
      %v2164 = vrot.slane %v2163, 1
      %v2165 = vmax.f32 %v2163, %v2164
      %v2166 = vsel %vm1773, %v1003, -inf
      %v2167 = vrot.slane %v2166, 4
      %v2168 = vmax.f32 %v2166, %v2167
      %v2169 = vrot.slane %v2168, 2
      %v2170 = vmax.f32 %v2168, %v2169
      %v2171 = vrot.slane %v2170, 1
      %v2172 = vmax.f32 %v2170, %v2171
      %v2173 = vsel %vm1773, %v1227, -inf
      %v2174 = vrot.slane %v2173, 4
      %v2175 = vmax.f32 %v2173, %v2174
      %v2176 = vrot.slane %v2175, 2
      %v2177 = vmax.f32 %v2175, %v2176
      %v2178 = vrot.slane %v2177, 1
      %v2179 = vmax.f32 %v2177, %v2178
      %v2180 = vsel %vm1773, %v1228, -inf
      %v2181 = vrot.slane %v2180, 4
      %v2182 = vmax.f32 %v2180, %v2181
      %v2183 = vrot.slane %v2182, 2
      %v2184 = vmax.f32 %v2182, %v2183
      %v2185 = vrot.slane %v2184, 1
      %v2186 = vmax.f32 %v2184, %v2185
      %v2187 = vsel %vm1773, %v1229, -inf
      %v2188 = vrot.slane %v2187, 4
      %v2189 = vmax.f32 %v2187, %v2188
      %v2190 = vrot.slane %v2189, 2
      %v2191 = vmax.f32 %v2189, %v2190
      %v2192 = vrot.slane %v2191, 1
      %v2193 = vmax.f32 %v2191, %v2192
      %v2194 = vsel %vm1773, %v1004, -inf
      %v2195 = vrot.slane %v2194, 4
      %v2196 = vmax.f32 %v2194, %v2195
      %v2197 = vrot.slane %v2196, 2
      %v2198 = vmax.f32 %v2196, %v2197
      %v2199 = vrot.slane %v2198, 1
      %v2200 = vmax.f32 %v2198, %v2199
      %v2201 = vsel %vm1773, %v1230, -inf
      %v2202 = vrot.slane %v2201, 4
      %v2203 = vmax.f32 %v2201, %v2202
      %v2204 = vrot.slane %v2203, 2
      %v2205 = vmax.f32 %v2203, %v2204
      %v2206 = vrot.slane %v2205, 1
      %v2207 = vmax.f32 %v2205, %v2206
      %v2208 = vsel %vm1773, %v1231, -inf
      %v2209 = vrot.slane %v2208, 4
      %v2210 = vmax.f32 %v2208, %v2209
      %v2211 = vrot.slane %v2210, 2
      %v2212 = vmax.f32 %v2210, %v2211
      %v2213 = vrot.slane %v2212, 1
      %v2214 = vmax.f32 %v2212, %v2213
      %v2215 = vsel %vm1773, %v1232, -inf
      %v2216 = vrot.slane %v2215, 4
      %v2217 = vmax.f32 %v2215, %v2216
      %v2218 = vrot.slane %v2217, 2
      %v2219 = vmax.f32 %v2217, %v2218
      %v2220 = vrot.slane %v2219, 1
      %v2221 = vmax.f32 %v2219, %v2220
      %v2222 = vsel %vm1773, %v1005, -inf
      %v2223 = vrot.slane %v2222, 4
      %v2224 = vmax.f32 %v2222, %v2223
      %v2225 = vrot.slane %v2224, 2
      %v2226 = vmax.f32 %v2224, %v2225
      %v2227 = vrot.slane %v2226, 1
      %v2228 = vmax.f32 %v2226, %v2227
      %v2229 = vsel %vm1773, %v1233, -inf
      %v2230 = vrot.slane %v2229, 4
      %v2231 = vmax.f32 %v2229, %v2230
      %v2232 = vrot.slane %v2231, 2
      %v2233 = vmax.f32 %v2231, %v2232
      %v2234 = vrot.slane %v2233, 1
      %v2235 = vmax.f32 %v2233, %v2234
      %v2236 = vsel %vm1773, %v1234, -inf
      %v2237 = vrot.slane %v2236, 4
      %v2238 = vmax.f32 %v2236, %v2237
      %v2239 = vrot.slane %v2238, 2
      %v2240 = vmax.f32 %v2238, %v2239
      %v2241 = vrot.slane %v2240, 1
      %v2242 = vmax.f32 %v2240, %v2241
      %v2243 = vsel %vm1773, %v1235, -inf
      %v2244 = vrot.slane %v2243, 4
      %v2245 = vmax.f32 %v2243, %v2244
      %v2246 = vrot.slane %v2245, 2
      %v2247 = vmax.f32 %v2245, %v2246
      %v2248 = vrot.slane %v2247, 1
      %v2249 = vmax.f32 %v2247, %v2248
      %v2250 = vsel %vm1773, %v1006, -inf
      %v2251 = vrot.slane %v2250, 4
      %v2252 = vmax.f32 %v2250, %v2251
      %v2253 = vrot.slane %v2252, 2
      %v2254 = vmax.f32 %v2252, %v2253
      %v2255 = vrot.slane %v2254, 1
      %v2256 = vmax.f32 %v2254, %v2255
      %v2257 = vsel %vm1773, %v1236, -inf
      %v2258 = vrot.slane %v2257, 4
      %v2259 = vmax.f32 %v2257, %v2258
      %v2260 = vrot.slane %v2259, 2
      %v2261 = vmax.f32 %v2259, %v2260
      %v2262 = vrot.slane %v2261, 1
      %v2263 = vmax.f32 %v2261, %v2262
      %v2264 = vsel %vm1773, %v1237, -inf
      %v2265 = vrot.slane %v2264, 4
      %v2266 = vmax.f32 %v2264, %v2265
      %v2267 = vrot.slane %v2266, 2
      %v2268 = vmax.f32 %v2266, %v2267
      %v2269 = vrot.slane %v2268, 1
      %v2270 = vmax.f32 %v2268, %v2269
      %v2271 = vsel %vm1773, %v1238, -inf
      %v2272 = vrot.slane %v2271, 4
      %v2273 = vmax.f32 %v2271, %v2272
      %v2274 = vrot.slane %v2273, 2
      %v2275 = vmax.f32 %v2273, %v2274
      %v2276 = vrot.slane %v2275, 1
      %v2277 = vmax.f32 %v2275, %v2276
      %v2278 = vsel %vm1773, %v1007, -inf
      %v2279 = vrot.slane %v2278, 4
      %v2280 = vmax.f32 %v2278, %v2279
      %v2281 = vrot.slane %v2280, 2
      %v2282 = vmax.f32 %v2280, %v2281
      %v2283 = vrot.slane %v2282, 1
      %v2284 = vmax.f32 %v2282, %v2283
      %v2285 = vsel %vm1773, %v1239, -inf
      %v2286 = vrot.slane %v2285, 4
      %v2287 = vmax.f32 %v2285, %v2286
      %v2288 = vrot.slane %v2287, 2
      %v2289 = vmax.f32 %v2287, %v2288
      %v2290 = vrot.slane %v2289, 1
      %v2291 = vmax.f32 %v2289, %v2290
      %v2292 = vsel %vm1773, %v1240, -inf
      %v2293 = vrot.slane %v2292, 4
      %v2294 = vmax.f32 %v2292, %v2293
      %v2295 = vrot.slane %v2294, 2
      %v2296 = vmax.f32 %v2294, %v2295
      %v2297 = vrot.slane %v2296, 1
      %v2298 = vmax.f32 %v2296, %v2297
      %v2299 = vsel %vm1773, %v1241, -inf
      %v2300 = vrot.slane %v2299, 4
      %v2301 = vmax.f32 %v2299, %v2300
      %v2302 = vrot.slane %v2301, 2
      %v2303 = vmax.f32 %v2301, %v2302
      %v2304 = vrot.slane %v2303, 1
      %v2305 = vmax.f32 %v2303, %v2304
      %v2306 = vsel %vm1773, %v1008, -inf
      %v2307 = vrot.slane %v2306, 4
      %v2308 = vmax.f32 %v2306, %v2307
      %v2309 = vrot.slane %v2308, 2
      %v2310 = vmax.f32 %v2308, %v2309
      %v2311 = vrot.slane %v2310, 1
      %v2312 = vmax.f32 %v2310, %v2311
      %v2313 = vsel %vm1773, %v1242, -inf
      %v2314 = vrot.slane %v2313, 4
      %v2315 = vmax.f32 %v2313, %v2314
      %v2316 = vrot.slane %v2315, 2
      %v2317 = vmax.f32 %v2315, %v2316
      %v2318 = vrot.slane %v2317, 1
      %v2319 = vmax.f32 %v2317, %v2318
      %v2320 = vsel %vm1773, %v1243, -inf
      %v2321 = vrot.slane %v2320, 4
      %v2322 = vmax.f32 %v2320, %v2321
      %v2323 = vrot.slane %v2322, 2
      %v2324 = vmax.f32 %v2322, %v2323
      %v2325 = vrot.slane %v2324, 1
      %v2326 = vmax.f32 %v2324, %v2325
      %v2327 = vsel %vm1773, %v1244, -inf
      %v2328 = vrot.slane %v2327, 4
      %v2329 = vmax.f32 %v2327, %v2328
      %v2330 = vrot.slane %v2329, 2
      %v2331 = vmax.f32 %v2329, %v2330
      %v2332 = vrot.slane %v2331, 1
      %v2333 = vmax.f32 %v2331, %v2332
      %v2334 = vsel %vm1773, %v1009, -inf
      %v2335 = vrot.slane %v2334, 4
      %v2336 = vmax.f32 %v2334, %v2335
      %v2337 = vrot.slane %v2336, 2
      %v2338 = vmax.f32 %v2336, %v2337
      %v2339 = vrot.slane %v2338, 1
      %v2340 = vmax.f32 %v2338, %v2339
      %v2341 = vsel %vm1773, %v1245, -inf
      %v2342 = vrot.slane %v2341, 4
      %v2343 = vmax.f32 %v2341, %v2342
      %v2344 = vrot.slane %v2343, 2
      %v2345 = vmax.f32 %v2343, %v2344
      %v2346 = vrot.slane %v2345, 1
      %v2347 = vmax.f32 %v2345, %v2346
      %v2348 = vsel %vm1773, %v1246, -inf
      %v2349 = vrot.slane %v2348, 4
      %v2350 = vmax.f32 %v2348, %v2349
      %v2351 = vrot.slane %v2350, 2
      %v2352 = vmax.f32 %v2350, %v2351
      %v2353 = vrot.slane %v2352, 1
      %v2354 = vmax.f32 %v2352, %v2353
      %v2355 = vsel %vm1773, %v1247, -inf
      %v2356 = vrot.slane %v2355, 4
      %v2357 = vmax.f32 %v2355, %v2356
      %v2358 = vrot.slane %v2357, 2
      %v2359 = vmax.f32 %v2357, %v2358
      %v2360 = vrot.slane %v2359, 1
      %v2361 = vmax.f32 %v2359, %v2360
      %v2362 = vsel %vm1773, %v1010, -inf
      %v2363 = vrot.slane %v2362, 4
      %v2364 = vmax.f32 %v2362, %v2363
      %v2365 = vrot.slane %v2364, 2
      %v2366 = vmax.f32 %v2364, %v2365
      %v2367 = vrot.slane %v2366, 1
      %v2368 = vmax.f32 %v2366, %v2367
      %v2369 = vsel %vm1773, %v1248, -inf
      %v2370 = vrot.slane %v2369, 4
      %v2371 = vmax.f32 %v2369, %v2370
      %v2372 = vrot.slane %v2371, 2
      %v2373 = vmax.f32 %v2371, %v2372
      %v2374 = vrot.slane %v2373, 1
      %v2375 = vmax.f32 %v2373, %v2374
      %v2376 = vsel %vm1773, %v1249, -inf
      %v2377 = vrot.slane %v2376, 4
      %v2378 = vmax.f32 %v2376, %v2377
      %v2379 = vrot.slane %v2378, 2
      %v2380 = vmax.f32 %v2378, %v2379
      %v2381 = vrot.slane %v2380, 1
      %v2382 = vmax.f32 %v2380, %v2381
      %v2383 = vsel %vm1773, %v1250, -inf
      %v2384 = vrot.slane %v2383, 4
      %v2385 = vmax.f32 %v2383, %v2384
      %v2386 = vrot.slane %v2385, 2
      %v2387 = vmax.f32 %v2385, %v2386
      %v2388 = vrot.slane %v2387, 1
      %v2389 = vmax.f32 %v2387, %v2388
      %v2390 = vsel %vm1773, %v1011, -inf
      %v2391 = vrot.slane %v2390, 4
      %v2392 = vmax.f32 %v2390, %v2391
      %v2393 = vrot.slane %v2392, 2
      %v2394 = vmax.f32 %v2392, %v2393
      %v2395 = vrot.slane %v2394, 1
      %v2396 = vmax.f32 %v2394, %v2395
      %v2397 = vsel %vm1773, %v1251, -inf
      %v2398 = vrot.slane %v2397, 4
      %v2399 = vmax.f32 %v2397, %v2398
      %v2400 = vrot.slane %v2399, 2
      %v2401 = vmax.f32 %v2399, %v2400
      %v2402 = vrot.slane %v2401, 1
      %v2403 = vmax.f32 %v2401, %v2402
      %v2404 = vsel %vm1773, %v1252, -inf
      %v2405 = vrot.slane %v2404, 4
      %v2406 = vmax.f32 %v2404, %v2405
      %v2407 = vrot.slane %v2406, 2
      %v2408 = vmax.f32 %v2406, %v2407
      %v2409 = vrot.slane %v2408, 1
      %v2410 = vmax.f32 %v2408, %v2409
      %v2411 = vsel %vm1773, %v1253, -inf
      %v2412 = vrot.slane %v2411, 4
      %v2413 = vmax.f32 %v2411, %v2412
      %v2414 = vrot.slane %v2413, 2
      %v2415 = vmax.f32 %v2413, %v2414
      %v2416 = vrot.slane %v2415, 1
      %v2417 = vmax.f32 %v2415, %v2416
      %v2418 = vsel %vm1773, %v1012, -inf
      %v2419 = vrot.slane %v2418, 4
      %v2420 = vmax.f32 %v2418, %v2419
      %v2421 = vrot.slane %v2420, 2
      %v2422 = vmax.f32 %v2420, %v2421
      %v2423 = vrot.slane %v2422, 1
      %v2424 = vmax.f32 %v2422, %v2423
      %v2425 = vsel %vm1773, %v1254, -inf
      %v2426 = vrot.slane %v2425, 4
      %v2427 = vmax.f32 %v2425, %v2426
      %v2428 = vrot.slane %v2427, 2
      %v2429 = vmax.f32 %v2427, %v2428
      %v2430 = vrot.slane %v2429, 1
      %v2431 = vmax.f32 %v2429, %v2430
      %v2432 = vsel %vm1773, %v1255, -inf
      %v2433 = vrot.slane %v2432, 4
      %v2434 = vmax.f32 %v2432, %v2433
      %v2435 = vrot.slane %v2434, 2
      %v2436 = vmax.f32 %v2434, %v2435
      %v2437 = vrot.slane %v2436, 1
      %v2438 = vmax.f32 %v2436, %v2437
      %v2439 = vsel %vm1773, %v1256, -inf
      %v2440 = vrot.slane %v2439, 4
      %v2441 = vmax.f32 %v2439, %v2440
      %v2442 = vrot.slane %v2441, 2
      %v2443 = vmax.f32 %v2441, %v2442
      %v2444 = vrot.slane %v2443, 1
      %v2445 = vmax.f32 %v2443, %v2444
      %v2446 = vsel %vm1773, %v1013, -inf
      %v2447 = vrot.slane %v2446, 4
      %v2448 = vmax.f32 %v2446, %v2447
      %v2449 = vrot.slane %v2448, 2
      %v2450 = vmax.f32 %v2448, %v2449
      %v2451 = vrot.slane %v2450, 1
      %v2452 = vmax.f32 %v2450, %v2451
      %v2453 = vsel %vm1773, %v1257, -inf
      %v2454 = vrot.slane %v2453, 4
      %v2455 = vmax.f32 %v2453, %v2454
      %v2456 = vrot.slane %v2455, 2
      %v2457 = vmax.f32 %v2455, %v2456
      %v2458 = vrot.slane %v2457, 1
      %v2459 = vmax.f32 %v2457, %v2458
      %v2460 = vsel %vm1773, %v1258, -inf
      %v2461 = vrot.slane %v2460, 4
      %v2462 = vmax.f32 %v2460, %v2461
      %v2463 = vrot.slane %v2462, 2
      %v2464 = vmax.f32 %v2462, %v2463
      %v2465 = vrot.slane %v2464, 1
      %v2466 = vmax.f32 %v2464, %v2465
      %v2467 = vsel %vm1773, %v1259, -inf
      %v2468 = vrot.slane %v2467, 4
      %v2469 = vmax.f32 %v2467, %v2468
      %v2470 = vrot.slane %v2469, 2
      %v2471 = vmax.f32 %v2469, %v2470
      %v2472 = vrot.slane %v2471, 1
      %v2473 = vmax.f32 %v2471, %v2472
      %v2474 = vsel %vm1773, %v1014, -inf
      %v2475 = vrot.slane %v2474, 4
      %v2476 = vmax.f32 %v2474, %v2475
      %v2477 = vrot.slane %v2476, 2
      %v2478 = vmax.f32 %v2476, %v2477
      %v2479 = vrot.slane %v2478, 1
      %v2480 = vmax.f32 %v2478, %v2479
      %v2481 = vsel %vm1773, %v1260, -inf
      %v2482 = vrot.slane %v2481, 4
      %v2483 = vmax.f32 %v2481, %v2482
      %v2484 = vrot.slane %v2483, 2
      %v2485 = vmax.f32 %v2483, %v2484
      %v2486 = vrot.slane %v2485, 1
      %v2487 = vmax.f32 %v2485, %v2486
      %v2488 = vsel %vm1773, %v1261, -inf
      %v2489 = vrot.slane %v2488, 4
      %v2490 = vmax.f32 %v2488, %v2489
      %v2491 = vrot.slane %v2490, 2
      %v2492 = vmax.f32 %v2490, %v2491
      %v2493 = vrot.slane %v2492, 1
      %v2494 = vmax.f32 %v2492, %v2493
      %v2495 = vsel %vm1773, %v1262, -inf
      %v2496 = vrot.slane %v2495, 4
      %v2497 = vmax.f32 %v2495, %v2496
      %v2498 = vrot.slane %v2497, 2
      %v2499 = vmax.f32 %v2497, %v2498
      %v2500 = vrot.slane %v2499, 1
      %v2501 = vmax.f32 %v2499, %v2500
      %v2502 = vsel %vm1773, %v1015, -inf
      %v2503 = vrot.slane %v2502, 4
      %v2504 = vmax.f32 %v2502, %v2503
      %v2505 = vrot.slane %v2504, 2
      %v2506 = vmax.f32 %v2504, %v2505
      %v2507 = vrot.slane %v2506, 1
      %v2508 = vmax.f32 %v2506, %v2507
      %v2509 = vsel %vm1773, %v1263, -inf
      %v2510 = vrot.slane %v2509, 4
      %v2511 = vmax.f32 %v2509, %v2510
      %v2512 = vrot.slane %v2511, 2
      %v2513 = vmax.f32 %v2511, %v2512
      %v2514 = vrot.slane %v2513, 1
      %v2515 = vmax.f32 %v2513, %v2514
      %v2516 = vsel %vm1773, %v1264, -inf
      %v2517 = vrot.slane %v2516, 4
      %v2518 = vmax.f32 %v2516, %v2517
      %v2519 = vrot.slane %v2518, 2
      %v2520 = vmax.f32 %v2518, %v2519
      %v2521 = vrot.slane %v2520, 1
      %v2522 = vmax.f32 %v2520, %v2521
      %v2523 = vsel %vm1773, %v1265, -inf
      %v2524 = vrot.slane %v2523, 4
      %v2525 = vmax.f32 %v2523, %v2524
      %v2526 = vrot.slane %v2525, 2
      %v2527 = vmax.f32 %v2525, %v2526
      %v2528 = vrot.slane %v2527, 1
      %v2529 = vmax.f32 %v2527, %v2528
      %v2530 = vsel %vm1773, %v1016, -inf
      %v2531 = vrot.slane %v2530, 4
      %v2532 = vmax.f32 %v2530, %v2531
      %v2533 = vrot.slane %v2532, 2
      %v2534 = vmax.f32 %v2532, %v2533
      %v2535 = vrot.slane %v2534, 1
      %v2536 = vmax.f32 %v2534, %v2535
      %v2537 = vsel %vm1773, %v1266, -inf
      %v2538 = vrot.slane %v2537, 4
      %v2539 = vmax.f32 %v2537, %v2538
      %v2540 = vrot.slane %v2539, 2
      %v2541 = vmax.f32 %v2539, %v2540
      %v2542 = vrot.slane %v2541, 1
      %v2543 = vmax.f32 %v2541, %v2542
      %v2544 = vsel %vm1773, %v1267, -inf
      %v2545 = vrot.slane %v2544, 4
      %v2546 = vmax.f32 %v2544, %v2545
      %v2547 = vrot.slane %v2546, 2
      %v2548 = vmax.f32 %v2546, %v2547
      %v2549 = vrot.slane %v2548, 1
      %v2550 = vmax.f32 %v2548, %v2549
      %v2551 = vsel %vm1773, %v1268, -inf
      %v2552 = vrot.slane %v2551, 4
      %v2553 = vmax.f32 %v2551, %v2552
      %v2554 = vrot.slane %v2553, 2
      %v2555 = vmax.f32 %v2553, %v2554
      %v2556 = vrot.slane %v2555, 1
      %v2557 = vmax.f32 %v2555, %v2556
      %v2558 = vsel %vm1773, %v1017, -inf
      %v2559 = vrot.slane %v2558, 4
      %v2560 = vmax.f32 %v2558, %v2559
      %v2561 = vrot.slane %v2560, 2
      %v2562 = vmax.f32 %v2560, %v2561
      %v2563 = vrot.slane %v2562, 1
      %v2564 = vmax.f32 %v2562, %v2563
      %v2565 = vsel %vm1773, %v1269, -inf
      %v2566 = vrot.slane %v2565, 4
      %v2567 = vmax.f32 %v2565, %v2566
      %v2568 = vrot.slane %v2567, 2
      %v2569 = vmax.f32 %v2567, %v2568
      %v2570 = vrot.slane %v2569, 1
      %v2571 = vmax.f32 %v2569, %v2570
      %v2572 = vsel %vm1773, %v1270, -inf
      %v2573 = vrot.slane %v2572, 4
      %v2574 = vmax.f32 %v2572, %v2573
      %v2575 = vrot.slane %v2574, 2
      %v2576 = vmax.f32 %v2574, %v2575
      %v2577 = vrot.slane %v2576, 1
      %v2578 = vmax.f32 %v2576, %v2577
      %v2579 = vsel %vm1773, %v1271, -inf
      %v2580 = vrot.slane %v2579, 4
      %v2581 = vmax.f32 %v2579, %v2580
      %v2582 = vrot.slane %v2581, 2
      %v2583 = vmax.f32 %v2581, %v2582
      %v2584 = vrot.slane %v2583, 1
      %v2585 = vmax.f32 %v2583, %v2584
      %v2586 = vsel %vm1773, %v1018, -inf
      %v2587 = vrot.slane %v2586, 4
      %v2588 = vmax.f32 %v2586, %v2587
      %v2589 = vrot.slane %v2588, 2
      %v2590 = vmax.f32 %v2588, %v2589
      %v2591 = vrot.slane %v2590, 1
      %v2592 = vmax.f32 %v2590, %v2591
      %v2593 = vsel %vm1773, %v1272, -inf
      %v2594 = vrot.slane %v2593, 4
      %v2595 = vmax.f32 %v2593, %v2594
      %v2596 = vrot.slane %v2595, 2
      %v2597 = vmax.f32 %v2595, %v2596
      %v2598 = vrot.slane %v2597, 1
      %v2599 = vmax.f32 %v2597, %v2598
      %v2600 = vsel %vm1773, %v1273, -inf
      %v2601 = vrot.slane %v2600, 4
      %v2602 = vmax.f32 %v2600, %v2601
      %v2603 = vrot.slane %v2602, 2
      %v2604 = vmax.f32 %v2602, %v2603
      %v2605 = vrot.slane %v2604, 1
      %v2606 = vmax.f32 %v2604, %v2605
      %v2607 = vsel %vm1773, %v1274, -inf
      %v2608 = vrot.slane %v2607, 4
      %v2609 = vmax.f32 %v2607, %v2608
      %v2610 = vrot.slane %v2609, 2
      %v2611 = vmax.f32 %v2609, %v2610
      %v2612 = vrot.slane %v2611, 1
      %v2613 = vmax.f32 %v2611, %v2612
      %v2614 = vsel %vm1773, %v1019, -inf
      %v2615 = vrot.slane %v2614, 4
      %v2616 = vmax.f32 %v2614, %v2615
      %v2617 = vrot.slane %v2616, 2
      %v2618 = vmax.f32 %v2616, %v2617
      %v2619 = vrot.slane %v2618, 1
      %v2620 = vmax.f32 %v2618, %v2619
      %v2621 = vsel %vm1773, %v1275, -inf
      %v2622 = vrot.slane %v2621, 4
      %v2623 = vmax.f32 %v2621, %v2622
      %v2624 = vrot.slane %v2623, 2
      %v2625 = vmax.f32 %v2623, %v2624
      %v2626 = vrot.slane %v2625, 1
      %v2627 = vmax.f32 %v2625, %v2626
      %v2628 = vsel %vm1773, %v1276, -inf
      %v2629 = vrot.slane %v2628, 4
      %v2630 = vmax.f32 %v2628, %v2629
      %v2631 = vrot.slane %v2630, 2
      %v2632 = vmax.f32 %v2630, %v2631
      %v2633 = vrot.slane %v2632, 1
      %v2634 = vmax.f32 %v2632, %v2633
      %v2635 = vsel %vm1773, %v1277, -inf
      %v2636 = vrot.slane %v2635, 4
      %v2637 = vmax.f32 %v2635, %v2636
      %v2638 = vrot.slane %v2637, 2
      %v2639 = vmax.f32 %v2637, %v2638
      %v2640 = vrot.slane %v2639, 1
      %v2641 = vmax.f32 %v2639, %v2640
      %v2642 = vsel %vm1773, %v1020, -inf
      %v2643 = vrot.slane %v2642, 4
      %v2644 = vmax.f32 %v2642, %v2643
      %v2645 = vrot.slane %v2644, 2
      %v2646 = vmax.f32 %v2644, %v2645
      %v2647 = vrot.slane %v2646, 1
      %v2648 = vmax.f32 %v2646, %v2647
      %v2649 = vsel %vm1773, %v1278, -inf
      %v2650 = vrot.slane %v2649, 4
      %v2651 = vmax.f32 %v2649, %v2650
      %v2652 = vrot.slane %v2651, 2
      %v2653 = vmax.f32 %v2651, %v2652
      %v2654 = vrot.slane %v2653, 1
      %v2655 = vmax.f32 %v2653, %v2654
      %v2656 = vsel %vm1773, %v1279, -inf
      %v2657 = vrot.slane %v2656, 4
      %v2658 = vmax.f32 %v2656, %v2657
      %v2659 = vrot.slane %v2658, 2
      %v2660 = vmax.f32 %v2658, %v2659
      %v2661 = vrot.slane %v2660, 1
      %v2662 = vmax.f32 %v2660, %v2661
      %v2663 = vsel %vm1773, %v1280, -inf
      %v2664 = vrot.slane %v2663, 4
      %v2665 = vmax.f32 %v2663, %v2664
      %v2666 = vrot.slane %v2665, 2
      %v2667 = vmax.f32 %v2665, %v2666
      %v2668 = vrot.slane %v2667, 1
      %v2669 = vmax.f32 %v2667, %v2668
      %v2670 = vsel %vm1773, %v1021, -inf
      %v2671 = vrot.slane %v2670, 4
      %v2672 = vmax.f32 %v2670, %v2671
      %v2673 = vrot.slane %v2672, 2
      %v2674 = vmax.f32 %v2672, %v2673
      %v2675 = vrot.slane %v2674, 1
      %v2676 = vmax.f32 %v2674, %v2675
      %v2677 = vsel %vm1773, %v1281, -inf
      %v2678 = vrot.slane %v2677, 4
      %v2679 = vmax.f32 %v2677, %v2678
      %v2680 = vrot.slane %v2679, 2
      %v2681 = vmax.f32 %v2679, %v2680
      %v2682 = vrot.slane %v2681, 1
      %v2683 = vmax.f32 %v2681, %v2682
      %v2684 = vsel %vm1773, %v1282, -inf
      %v2685 = vrot.slane %v2684, 4
      %v2686 = vmax.f32 %v2684, %v2685
      %v2687 = vrot.slane %v2686, 2
      %v2688 = vmax.f32 %v2686, %v2687
      %v2689 = vrot.slane %v2688, 1
      %v2690 = vmax.f32 %v2688, %v2689
      %v2691 = vsel %vm1773, %v1283, -inf
      %v2692 = vrot.slane %v2691, 4
      %v2693 = vmax.f32 %v2691, %v2692
      %v2694 = vrot.slane %v2693, 2
      %v2695 = vmax.f32 %v2693, %v2694
      %v2696 = vrot.slane %v2695, 1
      %v2697 = vmax.f32 %v2695, %v2696
      %v2698 = vsel %vm1773, %v1022, -inf
      %v2699 = vrot.slane %v2698, 4
      %v2700 = vmax.f32 %v2698, %v2699
      %v2701 = vrot.slane %v2700, 2
      %v2702 = vmax.f32 %v2700, %v2701
      %v2703 = vrot.slane %v2702, 1
      %v2704 = vmax.f32 %v2702, %v2703
      %v2705 = vsel %vm1773, %v1284, -inf
      %v2706 = vrot.slane %v2705, 4
      %v2707 = vmax.f32 %v2705, %v2706
      %v2708 = vrot.slane %v2707, 2
      %v2709 = vmax.f32 %v2707, %v2708
      %v2710 = vrot.slane %v2709, 1
      %v2711 = vmax.f32 %v2709, %v2710
      %v2712 = vsel %vm1773, %v1285, -inf
      %v2713 = vrot.slane %v2712, 4
      %v2714 = vmax.f32 %v2712, %v2713
      %v2715 = vrot.slane %v2714, 2
      %v2716 = vmax.f32 %v2714, %v2715
      %v2717 = vrot.slane %v2716, 1
      %v2718 = vmax.f32 %v2716, %v2717
      %v2719 = vsel %vm1773, %v1286, -inf
      %v2720 = vrot.slane %v2719, 4
      %v2721 = vmax.f32 %v2719, %v2720
      %v2722 = vrot.slane %v2721, 2
      %v2723 = vmax.f32 %v2721, %v2722
      %v2724 = vrot.slane %v2723, 1
      %v2725 = vmax.f32 %v2723, %v2724
      %v2726 = vsel %vm1773, %v1023, -inf
      %v2727 = vrot.slane %v2726, 4
      %v2728 = vmax.f32 %v2726, %v2727
      %v2729 = vrot.slane %v2728, 2
      %v2730 = vmax.f32 %v2728, %v2729
      %v2731 = vrot.slane %v2730, 1
      %v2732 = vmax.f32 %v2730, %v2731
      %v2733 = vsel %vm1773, %v1287, -inf
      %v2734 = vrot.slane %v2733, 4
      %v2735 = vmax.f32 %v2733, %v2734
      %v2736 = vrot.slane %v2735, 2
      %v2737 = vmax.f32 %v2735, %v2736
      %v2738 = vrot.slane %v2737, 1
      %v2739 = vmax.f32 %v2737, %v2738
      %v2740 = vsel %vm1773, %v1288, -inf
      %v2741 = vrot.slane %v2740, 4
      %v2742 = vmax.f32 %v2740, %v2741
      %v2743 = vrot.slane %v2742, 2
      %v2744 = vmax.f32 %v2742, %v2743
      %v2745 = vrot.slane %v2744, 1
      %v2746 = vmax.f32 %v2744, %v2745
      %v2747 = vsel %vm1773, %v1289, -inf
      %v2748 = vrot.slane %v2747, 4
      %v2749 = vmax.f32 %v2747, %v2748
      %v2750 = vrot.slane %v2749, 2
      %v2751 = vmax.f32 %v2749, %v2750
      %v2752 = vrot.slane %v2751, 1
      %v2753 = vmax.f32 %v2751, %v2752
      %v2754 = vsel %vm1773, %v1024, -inf
      %v2755 = vrot.slane %v2754, 4
      %v2756 = vmax.f32 %v2754, %v2755
      %v2757 = vrot.slane %v2756, 2
      %v2758 = vmax.f32 %v2756, %v2757
      %v2759 = vrot.slane %v2758, 1
      %v2760 = vmax.f32 %v2758, %v2759
      %v2761 = vsel %vm1773, %v1290, -inf
      %v2762 = vrot.slane %v2761, 4
      %v2763 = vmax.f32 %v2761, %v2762
      %v2764 = vrot.slane %v2763, 2
      %v2765 = vmax.f32 %v2763, %v2764
      %v2766 = vrot.slane %v2765, 1
      %v2767 = vmax.f32 %v2765, %v2766
      %v2768 = vsel %vm1773, %v1291, -inf
      %v2769 = vrot.slane %v2768, 4
      %v2770 = vmax.f32 %v2768, %v2769
      %v2771 = vrot.slane %v2770, 2
      %v2772 = vmax.f32 %v2770, %v2771
      %v2773 = vrot.slane %v2772, 1
      %v2774 = vmax.f32 %v2772, %v2773
      %v2775 = vsel %vm1773, %v1292, -inf
      %v2776 = vrot.slane %v2775, 4
      %v2777 = vmax.f32 %v2775, %v2776
      %v2778 = vrot.slane %v2777, 2
      %v2779 = vmax.f32 %v2777, %v2778
      %v2780 = vrot.slane %v2779, 1
      %v2781 = vmax.f32 %v2779, %v2780
      %v2782 = vsel %vm1773, %v1025, -inf
      %v2783 = vrot.slane %v2782, 4
      %v2784 = vmax.f32 %v2782, %v2783
      %v2785 = vrot.slane %v2784, 2
      %v2786 = vmax.f32 %v2784, %v2785
      %v2787 = vrot.slane %v2786, 1
      %v2788 = vmax.f32 %v2786, %v2787
      %v2789 = vsel %vm1773, %v1293, -inf
      %v2790 = vrot.slane %v2789, 4
      %v2791 = vmax.f32 %v2789, %v2790
      %v2792 = vrot.slane %v2791, 2
      %v2793 = vmax.f32 %v2791, %v2792
      %v2794 = vrot.slane %v2793, 1
      %v2795 = vmax.f32 %v2793, %v2794
      %v2796 = vsel %vm1773, %v1294, -inf
      %v2797 = vrot.slane %v2796, 4
      %v2798 = vmax.f32 %v2796, %v2797
      %v2799 = vrot.slane %v2798, 2
      %v2800 = vmax.f32 %v2798, %v2799
      %v2801 = vrot.slane %v2800, 1
      %v2802 = vmax.f32 %v2800, %v2801
      %v2803 = vsel %vm1773, %v1295, -inf
      %v2804 = vrot.slane %v2803, 4
      %v2805 = vmax.f32 %v2803, %v2804
      %v2806 = vrot.slane %v2805, 2
      %v2807 = vmax.f32 %v2805, %v2806
      %v2808 = vrot.slane %v2807, 1
      %v2809 = vmax.f32 %v2807, %v2808
      %v2810 = vsel %vm1773, %v1026, -inf
      %v2811 = vrot.slane %v2810, 4
      %v2812 = vmax.f32 %v2810, %v2811
      %v2813 = vrot.slane %v2812, 2
      %v2814 = vmax.f32 %v2812, %v2813
      %v2815 = vrot.slane %v2814, 1
      %v2816 = vmax.f32 %v2814, %v2815
      %v2817 = vsel %vm1773, %v1296, -inf
      %v2818 = vrot.slane %v2817, 4
      %v2819 = vmax.f32 %v2817, %v2818
      %v2820 = vrot.slane %v2819, 2
      %v2821 = vmax.f32 %v2819, %v2820
      %v2822 = vrot.slane %v2821, 1
      %v2823 = vmax.f32 %v2821, %v2822
      %v2824 = vsel %vm1773, %v1297, -inf
      %v2825 = vrot.slane %v2824, 4
      %v2826 = vmax.f32 %v2824, %v2825
      %v2827 = vrot.slane %v2826, 2
      %v2828 = vmax.f32 %v2826, %v2827
      %v2829 = vrot.slane %v2828, 1
      %v2830 = vmax.f32 %v2828, %v2829
      %v2831 = vsel %vm1773, %v1298, -inf
      %v2832 = vrot.slane %v2831, 4
      %v2833 = vmax.f32 %v2831, %v2832
      %v2834 = vrot.slane %v2833, 2
      %v2835 = vmax.f32 %v2833, %v2834
      %v2836 = vrot.slane %v2835, 1
      %v2837 = vmax.f32 %v2835, %v2836
      %v2838 = vsel %vm1773, %v1027, -inf
      %v2839 = vrot.slane %v2838, 4
      %v2840 = vmax.f32 %v2838, %v2839
      %v2841 = vrot.slane %v2840, 2
      %v2842 = vmax.f32 %v2840, %v2841
      %v2843 = vrot.slane %v2842, 1
      %v2844 = vmax.f32 %v2842, %v2843
      %v2845 = vsel %vm1773, %v1299, -inf
      %v2846 = vrot.slane %v2845, 4
      %v2847 = vmax.f32 %v2845, %v2846
      %v2848 = vrot.slane %v2847, 2
      %v2849 = vmax.f32 %v2847, %v2848
      %v2850 = vrot.slane %v2849, 1
      %v2851 = vmax.f32 %v2849, %v2850
      %v2852 = vsel %vm1773, %v1300, -inf
      %v2853 = vrot.slane %v2852, 4
      %v2854 = vmax.f32 %v2852, %v2853
      %v2855 = vrot.slane %v2854, 2
      %v2856 = vmax.f32 %v2854, %v2855
      %v2857 = vrot.slane %v2856, 1
      %v2858 = vmax.f32 %v2856, %v2857
      %v2859 = vsel %vm1773, %v1301, -inf
      %v2860 = vrot.slane %v2859, 4
      %v2861 = vmax.f32 %v2859, %v2860
      %v2862 = vrot.slane %v2861, 2
      %v2863 = vmax.f32 %v2861, %v2862
      %v2864 = vrot.slane %v2863, 1
      %v2865 = vmax.f32 %v2863, %v2864
      %v2866 = vsel %vm1773, %v1028, -inf
      %v2867 = vrot.slane %v2866, 4
      %v2868 = vmax.f32 %v2866, %v2867
      %v2869 = vrot.slane %v2868, 2
      %v2870 = vmax.f32 %v2868, %v2869
      %v2871 = vrot.slane %v2870, 1
      %v2872 = vmax.f32 %v2870, %v2871
      %v2873 = vsel %vm1773, %v1302, -inf
      %v2874 = vrot.slane %v2873, 4
      %v2875 = vmax.f32 %v2873, %v2874
      %v2876 = vrot.slane %v2875, 2
      %v2877 = vmax.f32 %v2875, %v2876
      %v2878 = vrot.slane %v2877, 1
      %v2879 = vmax.f32 %v2877, %v2878
      %v2880 = vsel %vm1773, %v1303, -inf
      %v2881 = vrot.slane %v2880, 4
      %v2882 = vmax.f32 %v2880, %v2881
      %v2883 = vrot.slane %v2882, 2
      %v2884 = vmax.f32 %v2882, %v2883
      %v2885 = vrot.slane %v2884, 1
      %v2886 = vmax.f32 %v2884, %v2885
      %v2887 = vsel %vm1773, %v1304, -inf
      %v2888 = vrot.slane %v2887, 4
      %v2889 = vmax.f32 %v2887, %v2888
      %v2890 = vrot.slane %v2889, 2
      %v2891 = vmax.f32 %v2889, %v2890
      %v2892 = vrot.slane %v2891, 1
      %v2893 = vmax.f32 %v2891, %v2892
      %v2894 = vsel %vm1773, %v1029, -inf
      %v2895 = vrot.slane %v2894, 4
      %v2896 = vmax.f32 %v2894, %v2895
      %v2897 = vrot.slane %v2896, 2
      %v2898 = vmax.f32 %v2896, %v2897
      %v2899 = vrot.slane %v2898, 1
      %v2900 = vmax.f32 %v2898, %v2899
      %v2901 = vsel %vm1773, %v1305, -inf
      %v2902 = vrot.slane %v2901, 4
      %v2903 = vmax.f32 %v2901, %v2902
      %v2904 = vrot.slane %v2903, 2
      %v2905 = vmax.f32 %v2903, %v2904
      %v2906 = vrot.slane %v2905, 1
      %v2907 = vmax.f32 %v2905, %v2906
      %v2908 = vsel %vm1773, %v1306, -inf
      %v2909 = vrot.slane %v2908, 4
      %v2910 = vmax.f32 %v2908, %v2909
      %v2911 = vrot.slane %v2910, 2
      %v2912 = vmax.f32 %v2910, %v2911
      %v2913 = vrot.slane %v2912, 1
      %v2914 = vmax.f32 %v2912, %v2913
      %v2915 = vsel %vm1773, %v1307, -inf
      %v2916 = vrot.slane %v2915, 4
      %v2917 = vmax.f32 %v2915, %v2916
      %v2918 = vrot.slane %v2917, 2
      %v2919 = vmax.f32 %v2917, %v2918
      %v2920 = vrot.slane %v2919, 1
      %v2921 = vmax.f32 %v2919, %v2920
      %v2922 = vsel %vm1773, %v1030, -inf
      %v2923 = vrot.slane %v2922, 4
      %v2924 = vmax.f32 %v2922, %v2923
      %v2925 = vrot.slane %v2924, 2
      %v2926 = vmax.f32 %v2924, %v2925
      %v2927 = vrot.slane %v2926, 1
      %v2928 = vmax.f32 %v2926, %v2927
      %v2929 = vsel %vm1773, %v1308, -inf
      %v2930 = vrot.slane %v2929, 4
      %v2931 = vmax.f32 %v2929, %v2930
      %v2932 = vrot.slane %v2931, 2
      %v2933 = vmax.f32 %v2931, %v2932
      %v2934 = vrot.slane %v2933, 1
      %v2935 = vmax.f32 %v2933, %v2934
      %v2936 = vsel %vm1773, %v1309, -inf
      %v2937 = vrot.slane %v2936, 4
      %v2938 = vmax.f32 %v2936, %v2937
      %v2939 = vrot.slane %v2938, 2
      %v2940 = vmax.f32 %v2938, %v2939
      %v2941 = vrot.slane %v2940, 1
      %v2942 = vmax.f32 %v2940, %v2941
      %v2943 = vsel %vm1773, %v1310, -inf
      %v2944 = vrot.slane %v2943, 4
      %v2945 = vmax.f32 %v2943, %v2944
      %v2946 = vrot.slane %v2945, 2
      %v2947 = vmax.f32 %v2945, %v2946
      %v2948 = vrot.slane %v2947, 1
      %v2949 = vmax.f32 %v2947, %v2948
      %v2950 = vsel %vm1773, %v1031, -inf
      %v2951 = vrot.slane %v2950, 4
      %v2952 = vmax.f32 %v2950, %v2951
      %v2953 = vrot.slane %v2952, 2
      %v2954 = vmax.f32 %v2952, %v2953
      %v2955 = vrot.slane %v2954, 1
      %v2956 = vmax.f32 %v2954, %v2955
      %v2957 = vsel %vm1773, %v1311, -inf
      %v2958 = vrot.slane %v2957, 4
      %v2959 = vmax.f32 %v2957, %v2958
      %v2960 = vrot.slane %v2959, 2
      %v2961 = vmax.f32 %v2959, %v2960
      %v2962 = vrot.slane %v2961, 1
      %v2963 = vmax.f32 %v2961, %v2962
      %v2964 = vsel %vm1773, %v1312, -inf
      %v2965 = vrot.slane %v2964, 4
      %v2966 = vmax.f32 %v2964, %v2965
      %v2967 = vrot.slane %v2966, 2
      %v2968 = vmax.f32 %v2966, %v2967
      %v2969 = vrot.slane %v2968, 1
      %v2970 = vmax.f32 %v2968, %v2969
      %v2971 = vsel %vm1773, %v1313, -inf
      %v2972 = vrot.slane %v2971, 4
      %v2973 = vmax.f32 %v2971, %v2972
      %v2974 = vrot.slane %v2973, 2
      %v2975 = vmax.f32 %v2973, %v2974
      %v2976 = vrot.slane %v2975, 1
      %v2977 = vmax.f32 %v2975, %v2976
      %v2978 = vsel %vm1773, %v1032, -inf
      %v2979 = vrot.slane %v2978, 4
      %v2980 = vmax.f32 %v2978, %v2979
      %v2981 = vrot.slane %v2980, 2
      %v2982 = vmax.f32 %v2980, %v2981
      %v2983 = vrot.slane %v2982, 1
      %v2984 = vmax.f32 %v2982, %v2983
      %v2985 = vsel %vm1773, %v1314, -inf
      %v2986 = vrot.slane %v2985, 4
      %v2987 = vmax.f32 %v2985, %v2986
      %v2988 = vrot.slane %v2987, 2
      %v2989 = vmax.f32 %v2987, %v2988
      %v2990 = vrot.slane %v2989, 1
      %v2991 = vmax.f32 %v2989, %v2990
      %v2992 = vsel %vm1773, %v1315, -inf
      %v2993 = vrot.slane %v2992, 4
      %v2994 = vmax.f32 %v2992, %v2993
      %v2995 = vrot.slane %v2994, 2
      %v2996 = vmax.f32 %v2994, %v2995
      %v2997 = vrot.slane %v2996, 1
      %v2998 = vmax.f32 %v2996, %v2997
      %v2999 = vsel %vm1773, %v1316, -inf
      %v3000 = vrot.slane %v2999, 4
      %v3001 = vmax.f32 %v2999, %v3000
      %v3002 = vrot.slane %v3001, 2
      %v3003 = vmax.f32 %v3001, %v3002
      %v3004 = vrot.slane %v3003, 1
      %v3005 = vmax.f32 %v3003, %v3004
      %v3006 = vsel %vm1773, %v1033, -inf
      %v3007 = vrot.slane %v3006, 4
      %v3008 = vmax.f32 %v3006, %v3007
      %v3009 = vrot.slane %v3008, 2
      %v3010 = vmax.f32 %v3008, %v3009
      %v3011 = vrot.slane %v3010, 1
      %v3012 = vmax.f32 %v3010, %v3011
      %v3013 = vsel %vm1773, %v1317, -inf
      %v3014 = vrot.slane %v3013, 4
      %v3015 = vmax.f32 %v3013, %v3014
      %v3016 = vrot.slane %v3015, 2
      %v3017 = vmax.f32 %v3015, %v3016
      %v3018 = vrot.slane %v3017, 1
      %v3019 = vmax.f32 %v3017, %v3018
      %v3020 = vsel %vm1773, %v1318, -inf
      %v3021 = vrot.slane %v3020, 4
      %v3022 = vmax.f32 %v3020, %v3021
      %v3023 = vrot.slane %v3022, 2
      %v3024 = vmax.f32 %v3022, %v3023
      %v3025 = vrot.slane %v3024, 1
      %v3026 = vmax.f32 %v3024, %v3025
      %v3027 = vsel %vm1773, %v1319, -inf
      %v3028 = vrot.slane %v3027, 4
      %v3029 = vmax.f32 %v3027, %v3028
      %v3030 = vrot.slane %v3029, 2
      %v3031 = vmax.f32 %v3029, %v3030
      %v3032 = vrot.slane %v3031, 1
      %v3033 = vmax.f32 %v3031, %v3032
      %v3034 = vsel %vm1773, %v1034, -inf
      %v3035 = vrot.slane %v3034, 4
      %v3036 = vmax.f32 %v3034, %v3035
      %v3037 = vrot.slane %v3036, 2
      %v3038 = vmax.f32 %v3036, %v3037
      %v3039 = vrot.slane %v3038, 1
      %v3040 = vmax.f32 %v3038, %v3039
      %v3041 = vsel %vm1773, %v1320, -inf
      %v3042 = vrot.slane %v3041, 4
      %v3043 = vmax.f32 %v3041, %v3042
      %v3044 = vrot.slane %v3043, 2
      %v3045 = vmax.f32 %v3043, %v3044
      %v3046 = vrot.slane %v3045, 1
      %v3047 = vmax.f32 %v3045, %v3046
      %v3048 = vsel %vm1773, %v1321, -inf
      %v3049 = vrot.slane %v3048, 4
      %v3050 = vmax.f32 %v3048, %v3049
      %v3051 = vrot.slane %v3050, 2
      %v3052 = vmax.f32 %v3050, %v3051
      %v3053 = vrot.slane %v3052, 1
      %v3054 = vmax.f32 %v3052, %v3053
      %v3055 = vsel %vm1773, %v1322, -inf
      %v3056 = vrot.slane %v3055, 4
      %v3057 = vmax.f32 %v3055, %v3056
      %v3058 = vrot.slane %v3057, 2
      %v3059 = vmax.f32 %v3057, %v3058
      %v3060 = vrot.slane %v3059, 1
      %v3061 = vmax.f32 %v3059, %v3060
      %v3062 = vsel %vm1773, %v1035, -inf
      %v3063 = vrot.slane %v3062, 4
      %v3064 = vmax.f32 %v3062, %v3063
      %v3065 = vrot.slane %v3064, 2
      %v3066 = vmax.f32 %v3064, %v3065
      %v3067 = vrot.slane %v3066, 1
      %v3068 = vmax.f32 %v3066, %v3067
      %v3069 = vsel %vm1773, %v1323, -inf
      %v3070 = vrot.slane %v3069, 4
      %v3071 = vmax.f32 %v3069, %v3070
      %v3072 = vrot.slane %v3071, 2
      %v3073 = vmax.f32 %v3071, %v3072
      %v3074 = vrot.slane %v3073, 1
      %v3075 = vmax.f32 %v3073, %v3074
      %v3076 = vsel %vm1773, %v1324, -inf
      %v3077 = vrot.slane %v3076, 4
      %v3078 = vmax.f32 %v3076, %v3077
      %v3079 = vrot.slane %v3078, 2
      %v3080 = vmax.f32 %v3078, %v3079
      %v3081 = vrot.slane %v3080, 1
      %v3082 = vmax.f32 %v3080, %v3081
      %v3083 = vsel %vm1773, %v1325, -inf
      %v3084 = vrot.slane %v3083, 4
      %v3085 = vmax.f32 %v3083, %v3084
      %v3086 = vrot.slane %v3085, 2
      %v3087 = vmax.f32 %v3085, %v3086
      %v3088 = vrot.slane %v3087, 1
      %v3089 = vmax.f32 %v3087, %v3088
      %v3090 = vsel %vm1773, %v1036, -inf
      %v3091 = vrot.slane %v3090, 4
      %v3092 = vmax.f32 %v3090, %v3091
      %v3093 = vrot.slane %v3092, 2
      %v3094 = vmax.f32 %v3092, %v3093
      %v3095 = vrot.slane %v3094, 1
      %v3096 = vmax.f32 %v3094, %v3095
      %v3097 = vsel %vm1773, %v1326, -inf
      %v3098 = vrot.slane %v3097, 4
      %v3099 = vmax.f32 %v3097, %v3098
      %v3100 = vrot.slane %v3099, 2
      %v3101 = vmax.f32 %v3099, %v3100
      %v3102 = vrot.slane %v3101, 1
      %v3103 = vmax.f32 %v3101, %v3102
      %v3104 = vsel %vm1773, %v1327, -inf
      %v3105 = vrot.slane %v3104, 4
      %v3106 = vmax.f32 %v3104, %v3105
      %v3107 = vrot.slane %v3106, 2
      %v3108 = vmax.f32 %v3106, %v3107
      %v3109 = vrot.slane %v3108, 1
      %v3110 = vmax.f32 %v3108, %v3109
      %v3111 = vsel %vm1773, %v1328, -inf
      %v3112 = vrot.slane %v3111, 4
      %v3113 = vmax.f32 %v3111, %v3112
      %v3114 = vrot.slane %v3113, 2
      %v3115 = vmax.f32 %v3113, %v3114
      %v3116 = vrot.slane %v3115, 1
      %v3117 = vmax.f32 %v3115, %v3116
      %v3118 = vsel %vm1773, %v1037, -inf
      %v3119 = vrot.slane %v3118, 4
      %v3120 = vmax.f32 %v3118, %v3119
      %v3121 = vrot.slane %v3120, 2
      %v3122 = vmax.f32 %v3120, %v3121
      %v3123 = vrot.slane %v3122, 1
      %v3124 = vmax.f32 %v3122, %v3123
      %v3125 = vsel %vm1773, %v1329, -inf
      %v3126 = vrot.slane %v3125, 4
      %v3127 = vmax.f32 %v3125, %v3126
      %v3128 = vrot.slane %v3127, 2
      %v3129 = vmax.f32 %v3127, %v3128
      %v3130 = vrot.slane %v3129, 1
      %v3131 = vmax.f32 %v3129, %v3130
      %v3132 = vsel %vm1773, %v1330, -inf
      %v3133 = vrot.slane %v3132, 4
      %v3134 = vmax.f32 %v3132, %v3133
      %v3135 = vrot.slane %v3134, 2
      %v3136 = vmax.f32 %v3134, %v3135
      %v3137 = vrot.slane %v3136, 1
      %v3138 = vmax.f32 %v3136, %v3137
      %v3139 = vsel %vm1773, %v1331, -inf
      %v3140 = vrot.slane %v3139, 4
      %v3141 = vmax.f32 %v3139, %v3140
      %v3142 = vrot.slane %v3141, 2
      %v3143 = vmax.f32 %v3141, %v3142
      %v3144 = vrot.slane %v3143, 1
      %v3145 = vmax.f32 %v3143, %v3144
      %v3146 = vsel %vm1773, %v1038, -inf
      %v3147 = vrot.slane %v3146, 4
      %v3148 = vmax.f32 %v3146, %v3147
      %v3149 = vrot.slane %v3148, 2
      %v3150 = vmax.f32 %v3148, %v3149
      %v3151 = vrot.slane %v3150, 1
      %v3152 = vmax.f32 %v3150, %v3151
      %v3153 = vsel %vm1773, %v1332, -inf
      %v3154 = vrot.slane %v3153, 4
      %v3155 = vmax.f32 %v3153, %v3154
      %v3156 = vrot.slane %v3155, 2
      %v3157 = vmax.f32 %v3155, %v3156
      %v3158 = vrot.slane %v3157, 1
      %v3159 = vmax.f32 %v3157, %v3158
      %v3160 = vsel %vm1773, %v1333, -inf
      %v3161 = vrot.slane %v3160, 4
      %v3162 = vmax.f32 %v3160, %v3161
      %v3163 = vrot.slane %v3162, 2
      %v3164 = vmax.f32 %v3162, %v3163
      %v3165 = vrot.slane %v3164, 1
      %v3166 = vmax.f32 %v3164, %v3165
      %v3167 = vsel %vm1773, %v1334, -inf
      %v3168 = vrot.slane %v3167, 4
      %v3169 = vmax.f32 %v3167, %v3168
      %v3170 = vrot.slane %v3169, 2
      %v3171 = vmax.f32 %v3169, %v3170
      %v3172 = vrot.slane %v3171, 1
      %v3173 = vmax.f32 %v3171, %v3172
      %v3174 = vsel %vm1773, %v1039, -inf
      %v3175 = vrot.slane %v3174, 4
      %v3176 = vmax.f32 %v3174, %v3175
      %v3177 = vrot.slane %v3176, 2
      %v3178 = vmax.f32 %v3176, %v3177
      %v3179 = vrot.slane %v3178, 1
      %v3180 = vmax.f32 %v3178, %v3179
      %v3181 = vsel %vm1773, %v1335, -inf
      %v3182 = vrot.slane %v3181, 4
      %v3183 = vmax.f32 %v3181, %v3182
      %v3184 = vrot.slane %v3183, 2
      %v3185 = vmax.f32 %v3183, %v3184
      %v3186 = vrot.slane %v3185, 1
      %v3187 = vmax.f32 %v3185, %v3186
      %v3188 = vsel %vm1773, %v1336, -inf
      %v3189 = vrot.slane %v3188, 4
      %v3190 = vmax.f32 %v3188, %v3189
      %v3191 = vrot.slane %v3190, 2
      %v3192 = vmax.f32 %v3190, %v3191
      %v3193 = vrot.slane %v3192, 1
      %v3194 = vmax.f32 %v3192, %v3193
      %v3195 = vsel %vm1773, %v1337, -inf
      %v3196 = vrot.slane %v3195, 4
      %v3197 = vmax.f32 %v3195, %v3196
      %v3198 = vrot.slane %v3197, 2
      %v3199 = vmax.f32 %v3197, %v3198
      %v3200 = vrot.slane %v3199, 1
      %v3201 = vmax.f32 %v3199, %v3200
      %v3202 = vsel %vm1773, %v1040, -inf
      %v3203 = vrot.slane %v3202, 4
      %v3204 = vmax.f32 %v3202, %v3203
      %v3205 = vrot.slane %v3204, 2
      %v3206 = vmax.f32 %v3204, %v3205
      %v3207 = vrot.slane %v3206, 1
      %v3208 = vmax.f32 %v3206, %v3207
      %v3209 = vsel %vm1773, %v1338, -inf
      %v3210 = vrot.slane %v3209, 4
      %v3211 = vmax.f32 %v3209, %v3210
      %v3212 = vrot.slane %v3211, 2
      %v3213 = vmax.f32 %v3211, %v3212
      %v3214 = vrot.slane %v3213, 1
      %v3215 = vmax.f32 %v3213, %v3214
      %v3216 = vsel %vm1773, %v1339, -inf
      %v3217 = vrot.slane %v3216, 4
      %v3218 = vmax.f32 %v3216, %v3217
      %v3219 = vrot.slane %v3218, 2
      %v3220 = vmax.f32 %v3218, %v3219
      %v3221 = vrot.slane %v3220, 1
      %v3222 = vmax.f32 %v3220, %v3221
      %v3223 = vsel %vm1773, %v1340, -inf
      %v3224 = vrot.slane %v3223, 4
      %v3225 = vmax.f32 %v3223, %v3224
      %v3226 = vrot.slane %v3225, 2
      %v3227 = vmax.f32 %v3225, %v3226
      %v3228 = vrot.slane %v3227, 1
      %v3229 = vmax.f32 %v3227, %v3228
      %v3230 = vsel %vm1773, %v1041, -inf
      %v3231 = vrot.slane %v3230, 4
      %v3232 = vmax.f32 %v3230, %v3231
      %v3233 = vrot.slane %v3232, 2
      %v3234 = vmax.f32 %v3232, %v3233
      %v3235 = vrot.slane %v3234, 1
      %v3236 = vmax.f32 %v3234, %v3235
      %v3237 = vsel %vm1773, %v1341, -inf
      %v3238 = vrot.slane %v3237, 4
      %v3239 = vmax.f32 %v3237, %v3238
      %v3240 = vrot.slane %v3239, 2
      %v3241 = vmax.f32 %v3239, %v3240
      %v3242 = vrot.slane %v3241, 1
      %v3243 = vmax.f32 %v3241, %v3242
      %v3244 = vsel %vm1773, %v1342, -inf
      %v3245 = vrot.slane %v3244, 4
      %v3246 = vmax.f32 %v3244, %v3245
      %v3247 = vrot.slane %v3246, 2
      %v3248 = vmax.f32 %v3246, %v3247
      %v3249 = vrot.slane %v3248, 1
      %v3250 = vmax.f32 %v3248, %v3249
      %v3251 = vsel %vm1773, %v1343, -inf
      %v3252 = vrot.slane %v3251, 4
      %v3253 = vmax.f32 %v3251, %v3252
      %v3254 = vrot.slane %v3253, 2
      %v3255 = vmax.f32 %v3253, %v3254
      %v3256 = vrot.slane %v3255, 1
      %v3257 = vmax.f32 %v3255, %v3256
      %v3258 = vsel %vm1773, %v1042, -inf
      %v3259 = vrot.slane %v3258, 4
      %v3260 = vmax.f32 %v3258, %v3259
      %v3261 = vrot.slane %v3260, 2
      %v3262 = vmax.f32 %v3260, %v3261
      %v3263 = vrot.slane %v3262, 1
      %v3264 = vmax.f32 %v3262, %v3263
      %v3265 = vsel %vm1773, %v1344, -inf
      %v3266 = vrot.slane %v3265, 4
      %v3267 = vmax.f32 %v3265, %v3266
      %v3268 = vrot.slane %v3267, 2
      %v3269 = vmax.f32 %v3267, %v3268
      %v3270 = vrot.slane %v3269, 1
      %v3271 = vmax.f32 %v3269, %v3270
      %v3272 = vsel %vm1773, %v1345, -inf
      %v3273 = vrot.slane %v3272, 4
      %v3274 = vmax.f32 %v3272, %v3273
      %v3275 = vrot.slane %v3274, 2
      %v3276 = vmax.f32 %v3274, %v3275
      %v3277 = vrot.slane %v3276, 1
      %v3278 = vmax.f32 %v3276, %v3277
      %v3279 = vsel %vm1773, %v1346, -inf
      %v3280 = vrot.slane %v3279, 4
      %v3281 = vmax.f32 %v3279, %v3280
      %v3282 = vrot.slane %v3281, 2
      %v3283 = vmax.f32 %v3281, %v3282
      %v3284 = vrot.slane %v3283, 1
      %v3285 = vmax.f32 %v3283, %v3284
      %v3286 = vsel %vm1773, %v1043, -inf
      %v3287 = vrot.slane %v3286, 4
      %v3288 = vmax.f32 %v3286, %v3287
      %v3289 = vrot.slane %v3288, 2
      %v3290 = vmax.f32 %v3288, %v3289
      %v3291 = vrot.slane %v3290, 1
      %v3292 = vmax.f32 %v3290, %v3291
      %v3293 = vsel %vm1773, %v1347, -inf
      %v3294 = vrot.slane %v3293, 4
      %v3295 = vmax.f32 %v3293, %v3294
      %v3296 = vrot.slane %v3295, 2
      %v3297 = vmax.f32 %v3295, %v3296
      %v3298 = vrot.slane %v3297, 1
      %v3299 = vmax.f32 %v3297, %v3298
      %v3300 = vsel %vm1773, %v1348, -inf
      %v3301 = vrot.slane %v3300, 4
      %v3302 = vmax.f32 %v3300, %v3301
      %v3303 = vrot.slane %v3302, 2
      %v3304 = vmax.f32 %v3302, %v3303
      %v3305 = vrot.slane %v3304, 1
      %v3306 = vmax.f32 %v3304, %v3305
      %v3307 = vsel %vm1773, %v1349, -inf
      %v3308 = vrot.slane %v3307, 4
      %v3309 = vmax.f32 %v3307, %v3308
      %v3310 = vrot.slane %v3309, 2
      %v3311 = vmax.f32 %v3309, %v3310
      %v3312 = vrot.slane %v3311, 1
      %v3313 = vmax.f32 %v3311, %v3312
      %v3314 = vsel %vm1773, %v1044, -inf
      %v3315 = vrot.slane %v3314, 4
      %v3316 = vmax.f32 %v3314, %v3315
      %v3317 = vrot.slane %v3316, 2
      %v3318 = vmax.f32 %v3316, %v3317
      %v3319 = vrot.slane %v3318, 1
      %v3320 = vmax.f32 %v3318, %v3319
      %v3321 = vsel %vm1773, %v1350, -inf
      %v3322 = vrot.slane %v3321, 4
      %v3323 = vmax.f32 %v3321, %v3322
      %v3324 = vrot.slane %v3323, 2
      %v3325 = vmax.f32 %v3323, %v3324
      %v3326 = vrot.slane %v3325, 1
      %v3327 = vmax.f32 %v3325, %v3326
      %v3328 = vsel %vm1773, %v1351, -inf
      %v3329 = vrot.slane %v3328, 4
      %v3330 = vmax.f32 %v3328, %v3329
      %v3331 = vrot.slane %v3330, 2
      %v3332 = vmax.f32 %v3330, %v3331
      %v3333 = vrot.slane %v3332, 1
      %v3334 = vmax.f32 %v3332, %v3333
      %v3335 = vsel %vm1773, %v1352, -inf
      %v3336 = vrot.slane %v3335, 4
      %v3337 = vmax.f32 %v3335, %v3336
      %v3338 = vrot.slane %v3337, 2
      %v3339 = vmax.f32 %v3337, %v3338
      %v3340 = vrot.slane %v3339, 1
      %v3341 = vmax.f32 %v3339, %v3340
      %v3342 = vsel %vm1773, %v1045, -inf
      %v3343 = vrot.slane %v3342, 4
      %v3344 = vmax.f32 %v3342, %v3343
      %v3345 = vrot.slane %v3344, 2
      %v3346 = vmax.f32 %v3344, %v3345
      %v3347 = vrot.slane %v3346, 1
      %v3348 = vmax.f32 %v3346, %v3347
      %v3349 = vsel %vm1773, %v1353, -inf
      %v3350 = vrot.slane %v3349, 4
      %v3351 = vmax.f32 %v3349, %v3350
      %v3352 = vrot.slane %v3351, 2
      %v3353 = vmax.f32 %v3351, %v3352
      %v3354 = vrot.slane %v3353, 1
      %v3355 = vmax.f32 %v3353, %v3354
      %v3356 = vsel %vm1773, %v1354, -inf
      %v3357 = vrot.slane %v3356, 4
      %v3358 = vmax.f32 %v3356, %v3357
      %v3359 = vrot.slane %v3358, 2
      %v3360 = vmax.f32 %v3358, %v3359
      %v3361 = vrot.slane %v3360, 1
      %v3362 = vmax.f32 %v3360, %v3361
      %v3363 = vsel %vm1773, %v1355, -inf
      %v3364 = vrot.slane %v3363, 4
      %v3365 = vmax.f32 %v3363, %v3364
      %v3366 = vrot.slane %v3365, 2
      %v3367 = vmax.f32 %v3365, %v3366
      %v3368 = vrot.slane %v3367, 1
      %v3369 = vmax.f32 %v3367, %v3368
      %v3370 = vsel %vm1773, %v1046, -inf
      %v3371 = vrot.slane %v3370, 4
      %v3372 = vmax.f32 %v3370, %v3371
      %v3373 = vrot.slane %v3372, 2
      %v3374 = vmax.f32 %v3372, %v3373
      %v3375 = vrot.slane %v3374, 1
      %v3376 = vmax.f32 %v3374, %v3375
      %v3377 = vsel %vm1773, %v1356, -inf
      %v3378 = vrot.slane %v3377, 4
      %v3379 = vmax.f32 %v3377, %v3378
      %v3380 = vrot.slane %v3379, 2
      %v3381 = vmax.f32 %v3379, %v3380
      %v3382 = vrot.slane %v3381, 1
      %v3383 = vmax.f32 %v3381, %v3382
      %v3384 = vsel %vm1773, %v1357, -inf
      %v3385 = vrot.slane %v3384, 4
      %v3386 = vmax.f32 %v3384, %v3385
      %v3387 = vrot.slane %v3386, 2
      %v3388 = vmax.f32 %v3386, %v3387
      %v3389 = vrot.slane %v3388, 1
      %v3390 = vmax.f32 %v3388, %v3389
      %v3391 = vsel %vm1773, %v1358, -inf
      %v3392 = vrot.slane %v3391, 4
      %v3393 = vmax.f32 %v3391, %v3392
      %v3394 = vrot.slane %v3393, 2
      %v3395 = vmax.f32 %v3393, %v3394
      %v3396 = vrot.slane %v3395, 1
      %v3397 = vmax.f32 %v3395, %v3396
      %v3398 = vsel %vm1773, %v1047, -inf
      %v3399 = vrot.slane %v3398, 4
      %v3400 = vmax.f32 %v3398, %v3399
      %v3401 = vrot.slane %v3400, 2
      %v3402 = vmax.f32 %v3400, %v3401
      %v3403 = vrot.slane %v3402, 1
      %v3404 = vmax.f32 %v3402, %v3403
      %v3405 = vsel %vm1773, %v1359, -inf
      %v3406 = vrot.slane %v3405, 4
      %v3407 = vmax.f32 %v3405, %v3406
      %v3408 = vrot.slane %v3407, 2
      %v3409 = vmax.f32 %v3407, %v3408
      %v3410 = vrot.slane %v3409, 1
      %v3411 = vmax.f32 %v3409, %v3410
      %v3412 = vsel %vm1773, %v1360, -inf
      %v3413 = vrot.slane %v3412, 4
      %v3414 = vmax.f32 %v3412, %v3413
      %v3415 = vrot.slane %v3414, 2
      %v3416 = vmax.f32 %v3414, %v3415
      %v3417 = vrot.slane %v3416, 1
      %v3418 = vmax.f32 %v3416, %v3417
      %v3419 = vsel %vm1773, %v1361, -inf
      %v3420 = vrot.slane %v3419, 4
      %v3421 = vmax.f32 %v3419, %v3420
      %v3422 = vrot.slane %v3421, 2
      %v3423 = vmax.f32 %v3421, %v3422
      %v3424 = vrot.slane %v3423, 1
      %v3425 = vmax.f32 %v3423, %v3424
      %v3426 = vsel %vm1773, %v1048, -inf
      %v3427 = vrot.slane %v3426, 4
      %v3428 = vmax.f32 %v3426, %v3427
      %v3429 = vrot.slane %v3428, 2
      %v3430 = vmax.f32 %v3428, %v3429
      %v3431 = vrot.slane %v3430, 1
      %v3432 = vmax.f32 %v3430, %v3431
      %v3433 = vsel %vm1773, %v1362, -inf
      %v3434 = vrot.slane %v3433, 4
      %v3435 = vmax.f32 %v3433, %v3434
      %v3436 = vrot.slane %v3435, 2
      %v3437 = vmax.f32 %v3435, %v3436
      %v3438 = vrot.slane %v3437, 1
      %v3439 = vmax.f32 %v3437, %v3438
      %v3440 = vsel %vm1773, %v1363, -inf
      %v3441 = vrot.slane %v3440, 4
      %v3442 = vmax.f32 %v3440, %v3441
      %v3443 = vrot.slane %v3442, 2
      %v3444 = vmax.f32 %v3442, %v3443
      %v3445 = vrot.slane %v3444, 1
      %v3446 = vmax.f32 %v3444, %v3445
      %v3447 = vsel %vm1773, %v1364, -inf
      %v3448 = vrot.slane %v3447, 4
      %v3449 = vmax.f32 %v3447, %v3448
      %v3450 = vrot.slane %v3449, 2
      %v3451 = vmax.f32 %v3449, %v3450
      %v3452 = vrot.slane %v3451, 1
      %v3453 = vmax.f32 %v3451, %v3452
      %v3454 = vsel %vm1773, %v1049, -inf
      %v3455 = vrot.slane %v3454, 4
      %v3456 = vmax.f32 %v3454, %v3455
      %v3457 = vrot.slane %v3456, 2
      %v3458 = vmax.f32 %v3456, %v3457
      %v3459 = vrot.slane %v3458, 1
      %v3460 = vmax.f32 %v3458, %v3459
      %v3461 = vsel %vm1773, %v1365, -inf
      %v3462 = vrot.slane %v3461, 4
      %v3463 = vmax.f32 %v3461, %v3462
      %v3464 = vrot.slane %v3463, 2
      %v3465 = vmax.f32 %v3463, %v3464
      %v3466 = vrot.slane %v3465, 1
      %v3467 = vmax.f32 %v3465, %v3466
      %v3468 = vsel %vm1773, %v1366, -inf
      %v3469 = vrot.slane %v3468, 4
      %v3470 = vmax.f32 %v3468, %v3469
      %v3471 = vrot.slane %v3470, 2
      %v3472 = vmax.f32 %v3470, %v3471
      %v3473 = vrot.slane %v3472, 1
      %v3474 = vmax.f32 %v3472, %v3473
      %v3475 = vsel %vm1773, %v1367, -inf
      %v3476 = vrot.slane %v3475, 4
      %v3477 = vmax.f32 %v3475, %v3476
      %v3478 = vrot.slane %v3477, 2
      %v3479 = vmax.f32 %v3477, %v3478
      %v3480 = vrot.slane %v3479, 1
      %v3481 = vmax.f32 %v3479, %v3480
      %v3482 = vsel %vm1773, %v1050, -inf
      %v3483 = vrot.slane %v3482, 4
      %v3484 = vmax.f32 %v3482, %v3483
      %v3485 = vrot.slane %v3484, 2
      %v3486 = vmax.f32 %v3484, %v3485
      %v3487 = vrot.slane %v3486, 1
      %v3488 = vmax.f32 %v3486, %v3487
      %v3489 = vsel %vm1773, %v1368, -inf
      %v3490 = vrot.slane %v3489, 4
      %v3491 = vmax.f32 %v3489, %v3490
      %v3492 = vrot.slane %v3491, 2
      %v3493 = vmax.f32 %v3491, %v3492
      %v3494 = vrot.slane %v3493, 1
      %v3495 = vmax.f32 %v3493, %v3494
      %v3496 = vsel %vm1773, %v1369, -inf
      %v3497 = vrot.slane %v3496, 4
      %v3498 = vmax.f32 %v3496, %v3497
      %v3499 = vrot.slane %v3498, 2
      %v3500 = vmax.f32 %v3498, %v3499
      %v3501 = vrot.slane %v3500, 1
      %v3502 = vmax.f32 %v3500, %v3501
      %v3503 = vsel %vm1773, %v1370, -inf
      %v3504 = vrot.slane %v3503, 4
      %v3505 = vmax.f32 %v3503, %v3504
      %v3506 = vrot.slane %v3505, 2
      %v3507 = vmax.f32 %v3505, %v3506
      %v3508 = vrot.slane %v3507, 1
      %v3509 = vmax.f32 %v3507, %v3508
      %v3510 = vsel %vm1773, %v1051, -inf
      %v3511 = vrot.slane %v3510, 4
      %v3512 = vmax.f32 %v3510, %v3511
      %v3513 = vrot.slane %v3512, 2
      %v3514 = vmax.f32 %v3512, %v3513
      %v3515 = vrot.slane %v3514, 1
      %v3516 = vmax.f32 %v3514, %v3515
      %v3517 = vsel %vm1773, %v1371, -inf
      %v3518 = vrot.slane %v3517, 4
      %v3519 = vmax.f32 %v3517, %v3518
      %v3520 = vrot.slane %v3519, 2
      %v3521 = vmax.f32 %v3519, %v3520
      %v3522 = vrot.slane %v3521, 1
      %v3523 = vmax.f32 %v3521, %v3522
      %v3524 = vsel %vm1773, %v1372, -inf
      %v3525 = vrot.slane %v3524, 4
      %v3526 = vmax.f32 %v3524, %v3525
      %v3527 = vrot.slane %v3526, 2
      %v3528 = vmax.f32 %v3526, %v3527
      %v3529 = vrot.slane %v3528, 1
      %v3530 = vmax.f32 %v3528, %v3529
      %v3531 = vsel %vm1773, %v1373, -inf
      %v3532 = vrot.slane %v3531, 4
      %v3533 = vmax.f32 %v3531, %v3532
      %v3534 = vrot.slane %v3533, 2
      %v3535 = vmax.f32 %v3533, %v3534
      %v3536 = vrot.slane %v3535, 1
      %v3537 = vmax.f32 %v3535, %v3536
      %v3538 = vsel %vm1773, %v1052, -inf
      %v3539 = vrot.slane %v3538, 4
      %v3540 = vmax.f32 %v3538, %v3539
      %v3541 = vrot.slane %v3540, 2
      %v3542 = vmax.f32 %v3540, %v3541
      %v3543 = vrot.slane %v3542, 1
      %v3544 = vmax.f32 %v3542, %v3543
      %v3545 = vsel %vm1773, %v1374, -inf
      %v3546 = vrot.slane %v3545, 4
      %v3547 = vmax.f32 %v3545, %v3546
      %v3548 = vrot.slane %v3547, 2
      %v3549 = vmax.f32 %v3547, %v3548
      %v3550 = vrot.slane %v3549, 1
      %v3551 = vmax.f32 %v3549, %v3550
      %v3552 = vsel %vm1773, %v1375, -inf
      %v3553 = vrot.slane %v3552, 4
      %v3554 = vmax.f32 %v3552, %v3553
      %v3555 = vrot.slane %v3554, 2
      %v3556 = vmax.f32 %v3554, %v3555
      %v3557 = vrot.slane %v3556, 1
      %v3558 = vmax.f32 %v3556, %v3557
      %v3559 = vsel %vm1773, %v1376, -inf
      %v3560 = vrot.slane %v3559, 4
      %v3561 = vmax.f32 %v3559, %v3560
      %v3562 = vrot.slane %v3561, 2
      %v3563 = vmax.f32 %v3561, %v3562
      %v3564 = vrot.slane %v3563, 1
      %v3565 = vmax.f32 %v3563, %v3564
      %v3566 = vsel %vm1773, %v1053, -inf
      %v3567 = vrot.slane %v3566, 4
      %v3568 = vmax.f32 %v3566, %v3567
      %v3569 = vrot.slane %v3568, 2
      %v3570 = vmax.f32 %v3568, %v3569
      %v3571 = vrot.slane %v3570, 1
      %v3572 = vmax.f32 %v3570, %v3571
      %v3573 = vsel %vm1773, %v1377, -inf
      %v3574 = vrot.slane %v3573, 4
      %v3575 = vmax.f32 %v3573, %v3574
      %v3576 = vrot.slane %v3575, 2
      %v3577 = vmax.f32 %v3575, %v3576
      %v3578 = vrot.slane %v3577, 1
      %v3579 = vmax.f32 %v3577, %v3578
      %v3580 = vsel %vm1773, %v1378, -inf
      %v3581 = vrot.slane %v3580, 4
      %v3582 = vmax.f32 %v3580, %v3581
      %v3583 = vrot.slane %v3582, 2
      %v3584 = vmax.f32 %v3582, %v3583
      %v3585 = vrot.slane %v3584, 1
      %v3586 = vmax.f32 %v3584, %v3585
      %v3587 = vsel %vm1773, %v1379, -inf
      %v3588 = vrot.slane %v3587, 4
      %v3589 = vmax.f32 %v3587, %v3588
      %v3590 = vrot.slane %v3589, 2
      %v3591 = vmax.f32 %v3589, %v3590
      %v3592 = vrot.slane %v3591, 1
      %v3593 = vmax.f32 %v3591, %v3592
      %v3594 = vsel %vm1773, %v1054, -inf
      %v3595 = vrot.slane %v3594, 4
      %v3596 = vmax.f32 %v3594, %v3595
      %v3597 = vrot.slane %v3596, 2
      %v3598 = vmax.f32 %v3596, %v3597
      %v3599 = vrot.slane %v3598, 1
      %v3600 = vmax.f32 %v3598, %v3599
      %v3601 = vsel %vm1773, %v1380, -inf
      %v3602 = vrot.slane %v3601, 4
      %v3603 = vmax.f32 %v3601, %v3602
      %v3604 = vrot.slane %v3603, 2
      %v3605 = vmax.f32 %v3603, %v3604
      %v3606 = vrot.slane %v3605, 1
      %v3607 = vmax.f32 %v3605, %v3606
      %v3608 = vsel %vm1773, %v1381, -inf
      %v3609 = vrot.slane %v3608, 4
      %v3610 = vmax.f32 %v3608, %v3609
      %v3611 = vrot.slane %v3610, 2
      %v3612 = vmax.f32 %v3610, %v3611
      %v3613 = vrot.slane %v3612, 1
      %v3614 = vmax.f32 %v3612, %v3613
      %v3615 = vsel %vm1773, %v1382, -inf
      %v3616 = vrot.slane %v3615, 4
      %v3617 = vmax.f32 %v3615, %v3616
      %v3618 = vrot.slane %v3617, 2
      %v3619 = vmax.f32 %v3617, %v3618
      %v3620 = vrot.slane %v3619, 1
      %v3621 = vmax.f32 %v3619, %v3620
      %v3622 = vsel %vm1773, %v1055, -inf
      %v3623 = vrot.slane %v3622, 4
      %v3624 = vmax.f32 %v3622, %v3623
      %v3625 = vrot.slane %v3624, 2
      %v3626 = vmax.f32 %v3624, %v3625
      %v3627 = vrot.slane %v3626, 1
      %v3628 = vmax.f32 %v3626, %v3627
      %v3629 = vsel %vm1773, %v1383, -inf
      %v3630 = vrot.slane %v3629, 4
      %v3631 = vmax.f32 %v3629, %v3630
      %v3632 = vrot.slane %v3631, 2
      %v3633 = vmax.f32 %v3631, %v3632
      %v3634 = vrot.slane %v3633, 1
      %v3635 = vmax.f32 %v3633, %v3634
      %v3636 = vsel %vm1773, %v1384, -inf
      %v3637 = vrot.slane %v3636, 4
      %v3638 = vmax.f32 %v3636, %v3637
      %v3639 = vrot.slane %v3638, 2
      %v3640 = vmax.f32 %v3638, %v3639
      %v3641 = vrot.slane %v3640, 1
      %v3642 = vmax.f32 %v3640, %v3641
      %v3643 = vsel %vm1773, %v1385, -inf
      %v3644 = vrot.slane %v3643, 4
      %v3645 = vmax.f32 %v3643, %v3644
      %v3646 = vrot.slane %v3645, 2
      %v3647 = vmax.f32 %v3645, %v3646
      %v3648 = vrot.slane %v3647, 1
      %v3649 = vmax.f32 %v3647, %v3648
      %v3650 = vsel %vm1773, %v1056, -inf
      %v3651 = vrot.slane %v3650, 4
      %v3652 = vmax.f32 %v3650, %v3651
      %v3653 = vrot.slane %v3652, 2
      %v3654 = vmax.f32 %v3652, %v3653
      %v3655 = vrot.slane %v3654, 1
      %v3656 = vmax.f32 %v3654, %v3655
      %v3657 = vsel %vm1773, %v1386, -inf
      %v3658 = vrot.slane %v3657, 4
      %v3659 = vmax.f32 %v3657, %v3658
      %v3660 = vrot.slane %v3659, 2
      %v3661 = vmax.f32 %v3659, %v3660
      %v3662 = vrot.slane %v3661, 1
      %v3663 = vmax.f32 %v3661, %v3662
      %v3664 = vsel %vm1773, %v1387, -inf
      %v3665 = vrot.slane %v3664, 4
      %v3666 = vmax.f32 %v3664, %v3665
      %v3667 = vrot.slane %v3666, 2
      %v3668 = vmax.f32 %v3666, %v3667
      %v3669 = vrot.slane %v3668, 1
      %v3670 = vmax.f32 %v3668, %v3669
      %v3671 = vsel %vm1773, %v1388, -inf
      %v3672 = vrot.slane %v3671, 4
      %v3673 = vmax.f32 %v3671, %v3672
      %v3674 = vrot.slane %v3673, 2
      %v3675 = vmax.f32 %v3673, %v3674
      %v3676 = vrot.slane %v3675, 1
      %v3677 = vmax.f32 %v3675, %v3676
      %v3678 = vsel %vm1773, %v1057, -inf
      %v3679 = vrot.slane %v3678, 4
      %v3680 = vmax.f32 %v3678, %v3679
      %v3681 = vrot.slane %v3680, 2
      %v3682 = vmax.f32 %v3680, %v3681
      %v3683 = vrot.slane %v3682, 1
      %v3684 = vmax.f32 %v3682, %v3683
      %v3685 = vsel %vm1773, %v1389, -inf
      %v3686 = vrot.slane %v3685, 4
      %v3687 = vmax.f32 %v3685, %v3686
      %v3688 = vrot.slane %v3687, 2
      %v3689 = vmax.f32 %v3687, %v3688
      %v3690 = vrot.slane %v3689, 1
      %v3691 = vmax.f32 %v3689, %v3690
      %v3692 = vsel %vm1773, %v1390, -inf
      %v3693 = vrot.slane %v3692, 4
      %v3694 = vmax.f32 %v3692, %v3693
      %v3695 = vrot.slane %v3694, 2
      %v3696 = vmax.f32 %v3694, %v3695
      %v3697 = vrot.slane %v3696, 1
      %v3698 = vmax.f32 %v3696, %v3697
      %v3699 = vsel %vm1773, %v1391, -inf
      %v3700 = vrot.slane %v3699, 4
      %v3701 = vmax.f32 %v3699, %v3700
      %v3702 = vrot.slane %v3701, 2
      %v3703 = vmax.f32 %v3701, %v3702
      %v3704 = vrot.slane %v3703, 1
      %v3705 = vmax.f32 %v3703, %v3704
      %v3706 = vsel %vm1773, %v1058, -inf
      %v3707 = vrot.slane %v3706, 4
      %v3708 = vmax.f32 %v3706, %v3707
      %v3709 = vrot.slane %v3708, 2
      %v3710 = vmax.f32 %v3708, %v3709
      %v3711 = vrot.slane %v3710, 1
      %v3712 = vmax.f32 %v3710, %v3711
      %v3713 = vsel %vm1773, %v1392, -inf
      %v3714 = vrot.slane %v3713, 4
      %v3715 = vmax.f32 %v3713, %v3714
      %v3716 = vrot.slane %v3715, 2
      %v3717 = vmax.f32 %v3715, %v3716
      %v3718 = vrot.slane %v3717, 1
      %v3719 = vmax.f32 %v3717, %v3718
      %v3720 = vsel %vm1773, %v1393, -inf
      %v3721 = vrot.slane %v3720, 4
      %v3722 = vmax.f32 %v3720, %v3721
      %v3723 = vrot.slane %v3722, 2
      %v3724 = vmax.f32 %v3722, %v3723
      %v3725 = vrot.slane %v3724, 1
      %v3726 = vmax.f32 %v3724, %v3725
      %v3727 = vsel %vm1773, %v1394, -inf
      %v3728 = vrot.slane %v3727, 4
      %v3729 = vmax.f32 %v3727, %v3728
      %v3730 = vrot.slane %v3729, 2
      %v3731 = vmax.f32 %v3729, %v3730
      %v3732 = vrot.slane %v3731, 1
      %v3733 = vmax.f32 %v3731, %v3732
      %v3734 = vsel %vm1773, %v1059, -inf
      %v3735 = vrot.slane %v3734, 4
      %v3736 = vmax.f32 %v3734, %v3735
      %v3737 = vrot.slane %v3736, 2
      %v3738 = vmax.f32 %v3736, %v3737
      %v3739 = vrot.slane %v3738, 1
      %v3740 = vmax.f32 %v3738, %v3739
      %v3741 = vsel %vm1773, %v1395, -inf
      %v3742 = vrot.slane %v3741, 4
      %v3743 = vmax.f32 %v3741, %v3742
      %v3744 = vrot.slane %v3743, 2
      %v3745 = vmax.f32 %v3743, %v3744
      %v3746 = vrot.slane %v3745, 1
      %v3747 = vmax.f32 %v3745, %v3746
      %v3748 = vsel %vm1773, %v1396, -inf
      %v3749 = vrot.slane %v3748, 4
      %v3750 = vmax.f32 %v3748, %v3749
      %v3751 = vrot.slane %v3750, 2
      %v3752 = vmax.f32 %v3750, %v3751
      %v3753 = vrot.slane %v3752, 1
      %v3754 = vmax.f32 %v3752, %v3753
      %v3755 = vsel %vm1773, %v1397, -inf
      %v3756 = vrot.slane %v3755, 4
      %v3757 = vmax.f32 %v3755, %v3756
      %v3758 = vrot.slane %v3757, 2
      %v3759 = vmax.f32 %v3757, %v3758
      %v3760 = vrot.slane %v3759, 1
      %v3761 = vmax.f32 %v3759, %v3760
      %v3762 = vsel %vm1773, %v1060, -inf
      %v3763 = vrot.slane %v3762, 4
      %v3764 = vmax.f32 %v3762, %v3763
      %v3765 = vrot.slane %v3764, 2
      %v3766 = vmax.f32 %v3764, %v3765
      %v3767 = vrot.slane %v3766, 1
      %v3768 = vmax.f32 %v3766, %v3767
      %v3769 = vsel %vm1773, %v1398, -inf
      %v3770 = vrot.slane %v3769, 4
      %v3771 = vmax.f32 %v3769, %v3770
      %v3772 = vrot.slane %v3771, 2
      %v3773 = vmax.f32 %v3771, %v3772
      %v3774 = vrot.slane %v3773, 1
      %v3775 = vmax.f32 %v3773, %v3774
      %v3776 = vsel %vm1773, %v1399, -inf
      %v3777 = vrot.slane %v3776, 4
      %v3778 = vmax.f32 %v3776, %v3777
      %v3779 = vrot.slane %v3778, 2
      %v3780 = vmax.f32 %v3778, %v3779
      %v3781 = vrot.slane %v3780, 1
      %v3782 = vmax.f32 %v3780, %v3781
      %v3783 = vsel %vm1773, %v1400, -inf
      %v3784 = vrot.slane %v3783, 4
      %v3785 = vmax.f32 %v3783, %v3784
      %v3786 = vrot.slane %v3785, 2
      %v3787 = vmax.f32 %v3785, %v3786
      %v3788 = vrot.slane %v3787, 1
      %v3789 = vmax.f32 %v3787, %v3788
      %v3790 = vsel %vm1773, %v1061, -inf
      %v3791 = vrot.slane %v3790, 4
      %v3792 = vmax.f32 %v3790, %v3791
      %v3793 = vrot.slane %v3792, 2
      %v3794 = vmax.f32 %v3792, %v3793
      %v3795 = vrot.slane %v3794, 1
      %v3796 = vmax.f32 %v3794, %v3795
      %v3797 = vsel %vm1773, %v1401, -inf
      %v3798 = vrot.slane %v3797, 4
      %v3799 = vmax.f32 %v3797, %v3798
      %v3800 = vrot.slane %v3799, 2
      %v3801 = vmax.f32 %v3799, %v3800
      %v3802 = vrot.slane %v3801, 1
      %v3803 = vmax.f32 %v3801, %v3802
      %v3804 = vsel %vm1773, %v1402, -inf
      %v3805 = vrot.slane %v3804, 4
      %v3806 = vmax.f32 %v3804, %v3805
      %v3807 = vrot.slane %v3806, 2
      %v3808 = vmax.f32 %v3806, %v3807
      %v3809 = vrot.slane %v3808, 1
      %v3810 = vmax.f32 %v3808, %v3809
      %v3811 = vsel %vm1773, %v1403, -inf
      %v3812 = vrot.slane %v3811, 4
      %v3813 = vmax.f32 %v3811, %v3812
      %v3814 = vrot.slane %v3813, 2
      %v3815 = vmax.f32 %v3813, %v3814
      %v3816 = vrot.slane %v3815, 1
      %v3817 = vmax.f32 %v3815, %v3816
      %v3818 = vsel %vm1773, %v1062, -inf
      %v3819 = vrot.slane %v3818, 4
      %v3820 = vmax.f32 %v3818, %v3819
      %v3821 = vrot.slane %v3820, 2
      %v3822 = vmax.f32 %v3820, %v3821
      %v3823 = vrot.slane %v3822, 1
      %v3824 = vmax.f32 %v3822, %v3823
      %v3825 = vsel %vm1773, %v1404, -inf
      %v3826 = vrot.slane %v3825, 4
      %v3827 = vmax.f32 %v3825, %v3826
      %v3828 = vrot.slane %v3827, 2
      %v3829 = vmax.f32 %v3827, %v3828
      %v3830 = vrot.slane %v3829, 1
      %v3831 = vmax.f32 %v3829, %v3830
      %v3832 = vsel %vm1773, %v1405, -inf
      %v3833 = vrot.slane %v3832, 4
      %v3834 = vmax.f32 %v3832, %v3833
      %v3835 = vrot.slane %v3834, 2
      %v3836 = vmax.f32 %v3834, %v3835
      %v3837 = vrot.slane %v3836, 1
      %v3838 = vmax.f32 %v3836, %v3837
      %v3839 = vsel %vm1773, %v1406, -inf
      %v3840 = vrot.slane %v3839, 4
      %v3841 = vmax.f32 %v3839, %v3840
      %v3842 = vrot.slane %v3841, 2
      %v3843 = vmax.f32 %v3841, %v3842
      %v3844 = vrot.slane %v3843, 1
      %v3845 = vmax.f32 %v3843, %v3844
      %v3846 = vsel %vm1773, %v1063, -inf
      %v3847 = vrot.slane %v3846, 4
      %v3848 = vmax.f32 %v3846, %v3847
      %v3849 = vrot.slane %v3848, 2
      %v3850 = vmax.f32 %v3848, %v3849
      %v3851 = vrot.slane %v3850, 1
      %v3852 = vmax.f32 %v3850, %v3851
      %v3853 = vsel %vm1773, %v1407, -inf
      %v3854 = vrot.slane %v3853, 4
      %v3855 = vmax.f32 %v3853, %v3854
      %v3856 = vrot.slane %v3855, 2
      %v3857 = vmax.f32 %v3855, %v3856
      %v3858 = vrot.slane %v3857, 1
      %v3859 = vmax.f32 %v3857, %v3858
      %v3860 = vsel %vm1773, %v1408, -inf
      %v3861 = vrot.slane %v3860, 4
      %v3862 = vmax.f32 %v3860, %v3861
      %v3863 = vrot.slane %v3862, 2
      %v3864 = vmax.f32 %v3862, %v3863
      %v3865 = vrot.slane %v3864, 1
      %v3866 = vmax.f32 %v3864, %v3865
      %v3867 = vsel %vm1773, %v1409, -inf
      %v3868 = vrot.slane %v3867, 4
      %v3869 = vmax.f32 %v3867, %v3868
      %v3870 = vrot.slane %v3869, 2
      %v3871 = vmax.f32 %v3869, %v3870
      %v3872 = vrot.slane %v3871, 1
      %v3873 = vmax.f32 %v3871, %v3872
      %v3874 = vsel %vm1773, %v1064, -inf
      %v3875 = vrot.slane %v3874, 4
      %v3876 = vmax.f32 %v3874, %v3875
      %v3877 = vrot.slane %v3876, 2
      %v3878 = vmax.f32 %v3876, %v3877
      %v3879 = vrot.slane %v3878, 1
      %v3880 = vmax.f32 %v3878, %v3879
      %v3881 = vsel %vm1773, %v1410, -inf
      %v3882 = vrot.slane %v3881, 4
      %v3883 = vmax.f32 %v3881, %v3882
      %v3884 = vrot.slane %v3883, 2
      %v3885 = vmax.f32 %v3883, %v3884
      %v3886 = vrot.slane %v3885, 1
      %v3887 = vmax.f32 %v3885, %v3886
      %v3888 = vsel %vm1773, %v1411, -inf
      %v3889 = vrot.slane %v3888, 4
      %v3890 = vmax.f32 %v3888, %v3889
      %v3891 = vrot.slane %v3890, 2
      %v3892 = vmax.f32 %v3890, %v3891
      %v3893 = vrot.slane %v3892, 1
      %v3894 = vmax.f32 %v3892, %v3893
      %v3895 = vsel %vm1773, %v1412, -inf
      %v3896 = vrot.slane %v3895, 4
      %v3897 = vmax.f32 %v3895, %v3896
      %v3898 = vrot.slane %v3897, 2
      %v3899 = vmax.f32 %v3897, %v3898
      %v3900 = vrot.slane %v3899, 1
      %v3901 = vmax.f32 %v3899, %v3900
      %v3902 = vsel %vm1773, %v1065, -inf
      %v3903 = vrot.slane %v3902, 4
      %v3904 = vmax.f32 %v3902, %v3903
      %v3905 = vrot.slane %v3904, 2
      %v3906 = vmax.f32 %v3904, %v3905
      %v3907 = vrot.slane %v3906, 1
      %v3908 = vmax.f32 %v3906, %v3907
      %v3909 = vsel %vm1773, %v1413, -inf
      %v3910 = vrot.slane %v3909, 4
      %v3911 = vmax.f32 %v3909, %v3910
      %v3912 = vrot.slane %v3911, 2
      %v3913 = vmax.f32 %v3911, %v3912
      %v3914 = vrot.slane %v3913, 1
      %v3915 = vmax.f32 %v3913, %v3914
      %v3916 = vsel %vm1773, %v1414, -inf
      %v3917 = vrot.slane %v3916, 4
      %v3918 = vmax.f32 %v3916, %v3917
      %v3919 = vrot.slane %v3918, 2
      %v3920 = vmax.f32 %v3918, %v3919
      %v3921 = vrot.slane %v3920, 1
      %v3922 = vmax.f32 %v3920, %v3921
      %v3923 = vsel %vm1773, %v1415, -inf
      %v3924 = vrot.slane %v3923, 4
      %v3925 = vmax.f32 %v3923, %v3924
      %v3926 = vrot.slane %v3925, 2
      %v3927 = vmax.f32 %v3925, %v3926
      %v3928 = vrot.slane %v3927, 1
      %v3929 = vmax.f32 %v3927, %v3928
      %v3930 = vsel %vm1773, %v1066, -inf
      %v3931 = vrot.slane %v3930, 4
      %v3932 = vmax.f32 %v3930, %v3931
      %v3933 = vrot.slane %v3932, 2
      %v3934 = vmax.f32 %v3932, %v3933
      %v3935 = vrot.slane %v3934, 1
      %v3936 = vmax.f32 %v3934, %v3935
      %v3937 = vsel %vm1773, %v1416, -inf
      %v3938 = vrot.slane %v3937, 4
      %v3939 = vmax.f32 %v3937, %v3938
      %v3940 = vrot.slane %v3939, 2
      %v3941 = vmax.f32 %v3939, %v3940
      %v3942 = vrot.slane %v3941, 1
      %v3943 = vmax.f32 %v3941, %v3942
      %v3944 = vsel %vm1773, %v1417, -inf
      %v3945 = vrot.slane %v3944, 4
      %v3946 = vmax.f32 %v3944, %v3945
      %v3947 = vrot.slane %v3946, 2
      %v3948 = vmax.f32 %v3946, %v3947
      %v3949 = vrot.slane %v3948, 1
      %v3950 = vmax.f32 %v3948, %v3949
      %v3951 = vsel %vm1773, %v1418, -inf
      %v3952 = vrot.slane %v3951, 4
      %v3953 = vmax.f32 %v3951, %v3952
      %v3954 = vrot.slane %v3953, 2
      %v3955 = vmax.f32 %v3953, %v3954
      %v3956 = vrot.slane %v3955, 1
      %v3957 = vmax.f32 %v3955, %v3956
      %v3958 = vsel %vm1773, %v1067, -inf
      %v3959 = vrot.slane %v3958, 4
      %v3960 = vmax.f32 %v3958, %v3959
      %v3961 = vrot.slane %v3960, 2
      %v3962 = vmax.f32 %v3960, %v3961
      %v3963 = vrot.slane %v3962, 1
      %v3964 = vmax.f32 %v3962, %v3963
      %v3965 = vsel %vm1773, %v1419, -inf
      %v3966 = vrot.slane %v3965, 4
      %v3967 = vmax.f32 %v3965, %v3966
      %v3968 = vrot.slane %v3967, 2
      %v3969 = vmax.f32 %v3967, %v3968
      %v3970 = vrot.slane %v3969, 1
      %v3971 = vmax.f32 %v3969, %v3970
      %v3972 = vsel %vm1773, %v1420, -inf
      %v3973 = vrot.slane %v3972, 4
      %v3974 = vmax.f32 %v3972, %v3973
      %v3975 = vrot.slane %v3974, 2
      %v3976 = vmax.f32 %v3974, %v3975
      %v3977 = vrot.slane %v3976, 1
      %v3978 = vmax.f32 %v3976, %v3977
      %v3979 = vsel %vm1773, %v1421, -inf
      %v3980 = vrot.slane %v3979, 4
      %v3981 = vmax.f32 %v3979, %v3980
      %v3982 = vrot.slane %v3981, 2
      %v3983 = vmax.f32 %v3981, %v3982
      %v3984 = vrot.slane %v3983, 1
      %v3985 = vmax.f32 %v3983, %v3984
      %v3986 = vsel %vm1773, %v1068, -inf
      %v3987 = vrot.slane %v3986, 4
      %v3988 = vmax.f32 %v3986, %v3987
      %v3989 = vrot.slane %v3988, 2
      %v3990 = vmax.f32 %v3988, %v3989
      %v3991 = vrot.slane %v3990, 1
      %v3992 = vmax.f32 %v3990, %v3991
      %v3993 = vsel %vm1773, %v1422, -inf
      %v3994 = vrot.slane %v3993, 4
      %v3995 = vmax.f32 %v3993, %v3994
      %v3996 = vrot.slane %v3995, 2
      %v3997 = vmax.f32 %v3995, %v3996
      %v3998 = vrot.slane %v3997, 1
      %v3999 = vmax.f32 %v3997, %v3998
      %v4000 = vsel %vm1773, %v1423, -inf
      %v4001 = vrot.slane %v4000, 4
      %v4002 = vmax.f32 %v4000, %v4001
      %v4003 = vrot.slane %v4002, 2
      %v4004 = vmax.f32 %v4002, %v4003
      %v4005 = vrot.slane %v4004, 1
      %v4006 = vmax.f32 %v4004, %v4005
      %v4007 = vsel %vm1773, %v1424, -inf
      %v4008 = vrot.slane %v4007, 4
      %v4009 = vmax.f32 %v4007, %v4008
      %v4010 = vrot.slane %v4009, 2
      %v4011 = vmax.f32 %v4009, %v4010
      %v4012 = vrot.slane %v4011, 1
      %v4013 = vmax.f32 %v4011, %v4012
      %v4014 = vsel %vm1773, %v1069, -inf
      %v4015 = vrot.slane %v4014, 4
      %v4016 = vmax.f32 %v4014, %v4015
      %v4017 = vrot.slane %v4016, 2
      %v4018 = vmax.f32 %v4016, %v4017
      %v4019 = vrot.slane %v4018, 1
      %v4020 = vmax.f32 %v4018, %v4019
      %v4021 = vsel %vm1773, %v1425, -inf
      %v4022 = vrot.slane %v4021, 4
      %v4023 = vmax.f32 %v4021, %v4022
      %v4024 = vrot.slane %v4023, 2
      %v4025 = vmax.f32 %v4023, %v4024
      %v4026 = vrot.slane %v4025, 1
      %v4027 = vmax.f32 %v4025, %v4026
      %v4028 = vsel %vm1773, %v1426, -inf
      %v4029 = vrot.slane %v4028, 4
      %v4030 = vmax.f32 %v4028, %v4029
      %v4031 = vrot.slane %v4030, 2
      %v4032 = vmax.f32 %v4030, %v4031
      %v4033 = vrot.slane %v4032, 1
      %v4034 = vmax.f32 %v4032, %v4033
      %v4035 = vsel %vm1773, %v1427, -inf
      %v4036 = vrot.slane %v4035, 4
      %v4037 = vmax.f32 %v4035, %v4036
      %v4038 = vrot.slane %v4037, 2
      %v4039 = vmax.f32 %v4037, %v4038
      %v4040 = vrot.slane %v4039, 1
      %v4041 = vmax.f32 %v4039, %v4040
      %v4042 = vsel %vm1773, %v1070, -inf
      %v4043 = vrot.slane %v4042, 4
      %v4044 = vmax.f32 %v4042, %v4043
      %v4045 = vrot.slane %v4044, 2
      %v4046 = vmax.f32 %v4044, %v4045
      %v4047 = vrot.slane %v4046, 1
      %v4048 = vmax.f32 %v4046, %v4047
      %v4049 = vsel %vm1773, %v1428, -inf
      %v4050 = vrot.slane %v4049, 4
      %v4051 = vmax.f32 %v4049, %v4050
      %v4052 = vrot.slane %v4051, 2
      %v4053 = vmax.f32 %v4051, %v4052
      %v4054 = vrot.slane %v4053, 1
      %v4055 = vmax.f32 %v4053, %v4054
      %v4056 = vsel %vm1773, %v1429, -inf
      %v4057 = vrot.slane %v4056, 4
      %v4058 = vmax.f32 %v4056, %v4057
      %v4059 = vrot.slane %v4058, 2
      %v4060 = vmax.f32 %v4058, %v4059
      %v4061 = vrot.slane %v4060, 1
      %v4062 = vmax.f32 %v4060, %v4061
      %v4063 = vsel %vm1773, %v1430, -inf
      %v4064 = vrot.slane %v4063, 4
      %v4065 = vmax.f32 %v4063, %v4064
      %v4066 = vrot.slane %v4065, 2
      %v4067 = vmax.f32 %v4065, %v4066
      %v4068 = vrot.slane %v4067, 1
      %v4069 = vmax.f32 %v4067, %v4068
      %v4070 = vsel %vm1773, %v1071, -inf
      %v4071 = vrot.slane %v4070, 4
      %v4072 = vmax.f32 %v4070, %v4071
      %v4073 = vrot.slane %v4072, 2
      %v4074 = vmax.f32 %v4072, %v4073
      %v4075 = vrot.slane %v4074, 1
      %v4076 = vmax.f32 %v4074, %v4075
      %v4077 = vsel %vm1773, %v1431, -inf
      %v4078 = vrot.slane %v4077, 4
      %v4079 = vmax.f32 %v4077, %v4078
      %v4080 = vrot.slane %v4079, 2
      %v4081 = vmax.f32 %v4079, %v4080
      %v4082 = vrot.slane %v4081, 1
      %v4083 = vmax.f32 %v4081, %v4082
      %v4084 = vsel %vm1773, %v1432, -inf
      %v4085 = vrot.slane %v4084, 4
      %v4086 = vmax.f32 %v4084, %v4085
      %v4087 = vrot.slane %v4086, 2
      %v4088 = vmax.f32 %v4086, %v4087
      %v4089 = vrot.slane %v4088, 1
      %v4090 = vmax.f32 %v4088, %v4089
      %v4091 = vsel %vm1773, %v1433, -inf
      %v4092 = vrot.slane %v4091, 4
      %v4093 = vmax.f32 %v4091, %v4092
      %v4094 = vrot.slane %v4093, 2
      %v4095 = vmax.f32 %v4093, %v4094
      %v4096 = vrot.slane %v4095, 1
      %v4097 = vmax.f32 %v4095, %v4096
      %v4098 = vsel %vm1773, %v1072, -inf
      %v4099 = vrot.slane %v4098, 4
      %v4100 = vmax.f32 %v4098, %v4099
      %v4101 = vrot.slane %v4100, 2
      %v4102 = vmax.f32 %v4100, %v4101
      %v4103 = vrot.slane %v4102, 1
      %v4104 = vmax.f32 %v4102, %v4103
      %v4105 = vsel %vm1773, %v1434, -inf
      %v4106 = vrot.slane %v4105, 4
      %v4107 = vmax.f32 %v4105, %v4106
      %v4108 = vrot.slane %v4107, 2
      %v4109 = vmax.f32 %v4107, %v4108
      %v4110 = vrot.slane %v4109, 1
      %v4111 = vmax.f32 %v4109, %v4110
      %v4112 = vsel %vm1773, %v1435, -inf
      %v4113 = vrot.slane %v4112, 4
      %v4114 = vmax.f32 %v4112, %v4113
      %v4115 = vrot.slane %v4114, 2
      %v4116 = vmax.f32 %v4114, %v4115
      %v4117 = vrot.slane %v4116, 1
      %v4118 = vmax.f32 %v4116, %v4117
      %v4119 = vsel %vm1773, %v1436, -inf
      %v4120 = vrot.slane %v4119, 4
      %v4121 = vmax.f32 %v4119, %v4120
      %v4122 = vrot.slane %v4121, 2
      %v4123 = vmax.f32 %v4121, %v4122
      %v4124 = vrot.slane %v4123, 1
      %v4125 = vmax.f32 %v4123, %v4124
      %v4126 = vsel %vm1773, %v1073, -inf
      %v4127 = vrot.slane %v4126, 4
      %v4128 = vmax.f32 %v4126, %v4127
      %v4129 = vrot.slane %v4128, 2
      %v4130 = vmax.f32 %v4128, %v4129
      %v4131 = vrot.slane %v4130, 1
      %v4132 = vmax.f32 %v4130, %v4131
      %v4133 = vsel %vm1773, %v1437, -inf
      %v4134 = vrot.slane %v4133, 4
      %v4135 = vmax.f32 %v4133, %v4134
      %v4136 = vrot.slane %v4135, 2
      %v4137 = vmax.f32 %v4135, %v4136
      %v4138 = vrot.slane %v4137, 1
      %v4139 = vmax.f32 %v4137, %v4138
      %v4140 = vsel %vm1773, %v1438, -inf
      %v4141 = vrot.slane %v4140, 4
      %v4142 = vmax.f32 %v4140, %v4141
      %v4143 = vrot.slane %v4142, 2
      %v4144 = vmax.f32 %v4142, %v4143
      %v4145 = vrot.slane %v4144, 1
      %v4146 = vmax.f32 %v4144, %v4145
      %v4147 = vsel %vm1773, %v1439, -inf
      %v4148 = vrot.slane %v4147, 4
      %v4149 = vmax.f32 %v4147, %v4148
      %v4150 = vrot.slane %v4149, 2
      %v4151 = vmax.f32 %v4149, %v4150
      %v4152 = vrot.slane %v4151, 1
      %v4153 = vmax.f32 %v4151, %v4152
      %v4154 = vsel %vm1773, %v1074, -inf
      %v4155 = vrot.slane %v4154, 4
      %v4156 = vmax.f32 %v4154, %v4155
      %v4157 = vrot.slane %v4156, 2
      %v4158 = vmax.f32 %v4156, %v4157
      %v4159 = vrot.slane %v4158, 1
      %v4160 = vmax.f32 %v4158, %v4159
      %v4161 = vsel %vm1773, %v1440, -inf
      %v4162 = vrot.slane %v4161, 4
      %v4163 = vmax.f32 %v4161, %v4162
      %v4164 = vrot.slane %v4163, 2
      %v4165 = vmax.f32 %v4163, %v4164
      %v4166 = vrot.slane %v4165, 1
      %v4167 = vmax.f32 %v4165, %v4166
      %v4168 = vsel %vm1773, %v1441, -inf
      %v4169 = vrot.slane %v4168, 4
      %v4170 = vmax.f32 %v4168, %v4169
      %v4171 = vrot.slane %v4170, 2
      %v4172 = vmax.f32 %v4170, %v4171
      %v4173 = vrot.slane %v4172, 1
      %v4174 = vmax.f32 %v4172, %v4173
      %v4175 = vsel %vm1773, %v1442, -inf
      %v4176 = vrot.slane %v4175, 4
      %v4177 = vmax.f32 %v4175, %v4176
      %v4178 = vrot.slane %v4177, 2
      %v4179 = vmax.f32 %v4177, %v4178
      %v4180 = vrot.slane %v4179, 1
      %v4181 = vmax.f32 %v4179, %v4180
      %v4182 = vsel %vm1773, %v1075, -inf
      %v4183 = vrot.slane %v4182, 4
      %v4184 = vmax.f32 %v4182, %v4183
      %v4185 = vrot.slane %v4184, 2
      %v4186 = vmax.f32 %v4184, %v4185
      %v4187 = vrot.slane %v4186, 1
      %v4188 = vmax.f32 %v4186, %v4187
      %v4189 = vsel %vm1773, %v1443, -inf
      %v4190 = vrot.slane %v4189, 4
      %v4191 = vmax.f32 %v4189, %v4190
      %v4192 = vrot.slane %v4191, 2
      %v4193 = vmax.f32 %v4191, %v4192
      %v4194 = vrot.slane %v4193, 1
      %v4195 = vmax.f32 %v4193, %v4194
      %v4196 = vsel %vm1773, %v1444, -inf
      %v4197 = vrot.slane %v4196, 4
      %v4198 = vmax.f32 %v4196, %v4197
      %v4199 = vrot.slane %v4198, 2
      %v4200 = vmax.f32 %v4198, %v4199
      %v4201 = vrot.slane %v4200, 1
      %v4202 = vmax.f32 %v4200, %v4201
      %v4203 = vsel %vm1773, %v1445, -inf
      %v4204 = vrot.slane %v4203, 4
      %v4205 = vmax.f32 %v4203, %v4204
      %v4206 = vrot.slane %v4205, 2
      %v4207 = vmax.f32 %v4205, %v4206
      %v4208 = vrot.slane %v4207, 1
      %v4209 = vmax.f32 %v4207, %v4208
      %v4210 = vsel %vm1773, %v1076, -inf
      %v4211 = vrot.slane %v4210, 4
      %v4212 = vmax.f32 %v4210, %v4211
      %v4213 = vrot.slane %v4212, 2
      %v4214 = vmax.f32 %v4212, %v4213
      %v4215 = vrot.slane %v4214, 1
      %v4216 = vmax.f32 %v4214, %v4215
      %v4217 = vsel %vm1773, %v1446, -inf
      %v4218 = vrot.slane %v4217, 4
      %v4219 = vmax.f32 %v4217, %v4218
      %v4220 = vrot.slane %v4219, 2
      %v4221 = vmax.f32 %v4219, %v4220
      %v4222 = vrot.slane %v4221, 1
      %v4223 = vmax.f32 %v4221, %v4222
      %v4224 = vsel %vm1773, %v1447, -inf
      %v4225 = vrot.slane %v4224, 4
      %v4226 = vmax.f32 %v4224, %v4225
      %v4227 = vrot.slane %v4226, 2
      %v4228 = vmax.f32 %v4226, %v4227
      %v4229 = vrot.slane %v4228, 1
      %v4230 = vmax.f32 %v4228, %v4229
      %v4231 = vsel %vm1773, %v1448, -inf
      %v4232 = vrot.slane %v4231, 4
      %v4233 = vmax.f32 %v4231, %v4232
      %v4234 = vrot.slane %v4233, 2
      %v4235 = vmax.f32 %v4233, %v4234
      %v4236 = vrot.slane %v4235, 1
      %v4237 = vmax.f32 %v4235, %v4236
      %v4238 = vsel %vm1773, %v1077, -inf
      %v4239 = vrot.slane %v4238, 4
      %v4240 = vmax.f32 %v4238, %v4239
      %v4241 = vrot.slane %v4240, 2
      %v4242 = vmax.f32 %v4240, %v4241
      %v4243 = vrot.slane %v4242, 1
      %v4244 = vmax.f32 %v4242, %v4243
      %v4245 = vsel %vm1773, %v1449, -inf
      %v4246 = vrot.slane %v4245, 4
      %v4247 = vmax.f32 %v4245, %v4246
      %v4248 = vrot.slane %v4247, 2
      %v4249 = vmax.f32 %v4247, %v4248
      %v4250 = vrot.slane %v4249, 1
      %v4251 = vmax.f32 %v4249, %v4250
      %v4252 = vsel %vm1773, %v1450, -inf
      %v4253 = vrot.slane %v4252, 4
      %v4254 = vmax.f32 %v4252, %v4253
      %v4255 = vrot.slane %v4254, 2
      %v4256 = vmax.f32 %v4254, %v4255
      %v4257 = vrot.slane %v4256, 1
      %v4258 = vmax.f32 %v4256, %v4257
      %v4259 = vsel %vm1773, %v1451, -inf
      %v4260 = vrot.slane %v4259, 4
      %v4261 = vmax.f32 %v4259, %v4260
      %v4262 = vrot.slane %v4261, 2
      %v4263 = vmax.f32 %v4261, %v4262
      %v4264 = vrot.slane %v4263, 1
      %v4265 = vmax.f32 %v4263, %v4264
      %v4266 = vsel %vm1773, %v1078, -inf
      %v4267 = vrot.slane %v4266, 4
      %v4268 = vmax.f32 %v4266, %v4267
      %v4269 = vrot.slane %v4268, 2
      %v4270 = vmax.f32 %v4268, %v4269
      %v4271 = vrot.slane %v4270, 1
      %v4272 = vmax.f32 %v4270, %v4271
      %v4273 = vsel %vm1773, %v1452, -inf
      %v4274 = vrot.slane %v4273, 4
      %v4275 = vmax.f32 %v4273, %v4274
      %v4276 = vrot.slane %v4275, 2
      %v4277 = vmax.f32 %v4275, %v4276
      %v4278 = vrot.slane %v4277, 1
      %v4279 = vmax.f32 %v4277, %v4278
      %v4280 = vsel %vm1773, %v1453, -inf
      %v4281 = vrot.slane %v4280, 4
      %v4282 = vmax.f32 %v4280, %v4281
      %v4283 = vrot.slane %v4282, 2
      %v4284 = vmax.f32 %v4282, %v4283
      %v4285 = vrot.slane %v4284, 1
      %v4286 = vmax.f32 %v4284, %v4285
      %v4287 = vsel %vm1773, %v1454, -inf
      %v4288 = vrot.slane %v4287, 4
      %v4289 = vmax.f32 %v4287, %v4288
      %v4290 = vrot.slane %v4289, 2
      %v4291 = vmax.f32 %v4289, %v4290
      %v4292 = vrot.slane %v4291, 1
      %v4293 = vmax.f32 %v4291, %v4292
      %v4294 = vsel %vm1773, %v1079, -inf
      %v4295 = vrot.slane %v4294, 4
      %v4296 = vmax.f32 %v4294, %v4295
      %v4297 = vrot.slane %v4296, 2
      %v4298 = vmax.f32 %v4296, %v4297
      %v4299 = vrot.slane %v4298, 1
      %v4300 = vmax.f32 %v4298, %v4299
      %v4301 = vsel %vm1773, %v1455, -inf
      %v4302 = vrot.slane %v4301, 4
      %v4303 = vmax.f32 %v4301, %v4302
      %v4304 = vrot.slane %v4303, 2
      %v4305 = vmax.f32 %v4303, %v4304
      %v4306 = vrot.slane %v4305, 1
      %v4307 = vmax.f32 %v4305, %v4306
      %v4308 = vsel %vm1773, %v1456, -inf
      %v4309 = vrot.slane %v4308, 4
      %v4310 = vmax.f32 %v4308, %v4309
      %v4311 = vrot.slane %v4310, 2
      %v4312 = vmax.f32 %v4310, %v4311
      %v4313 = vrot.slane %v4312, 1
      %v4314 = vmax.f32 %v4312, %v4313
      %v4315 = vsel %vm1773, %v1457, -inf
      %v4316 = vrot.slane %v4315, 4
      %v4317 = vmax.f32 %v4315, %v4316
      %v4318 = vrot.slane %v4317, 2
      %v4319 = vmax.f32 %v4317, %v4318
      %v4320 = vrot.slane %v4319, 1
      %v4321 = vmax.f32 %v4319, %v4320
      %v4322 = vsel %vm1773, %v1080, -inf
      %v4323 = vrot.slane %v4322, 4
      %v4324 = vmax.f32 %v4322, %v4323
      %v4325 = vrot.slane %v4324, 2
      %v4326 = vmax.f32 %v4324, %v4325
      %v4327 = vrot.slane %v4326, 1
      %v4328 = vmax.f32 %v4326, %v4327
      %v4329 = vsel %vm1773, %v1458, -inf
      %v4330 = vrot.slane %v4329, 4
      %v4331 = vmax.f32 %v4329, %v4330
      %v4332 = vrot.slane %v4331, 2
      %v4333 = vmax.f32 %v4331, %v4332
      %v4334 = vrot.slane %v4333, 1
      %v4335 = vmax.f32 %v4333, %v4334
      %v4336 = vsel %vm1773, %v1459, -inf
      %v4337 = vrot.slane %v4336, 4
      %v4338 = vmax.f32 %v4336, %v4337
      %v4339 = vrot.slane %v4338, 2
      %v4340 = vmax.f32 %v4338, %v4339
      %v4341 = vrot.slane %v4340, 1
      %v4342 = vmax.f32 %v4340, %v4341
      %v4343 = vsel %vm1773, %v1460, -inf
      %v4344 = vrot.slane %v4343, 4
      %v4345 = vmax.f32 %v4343, %v4344
      %v4346 = vrot.slane %v4345, 2
      %v4347 = vmax.f32 %v4345, %v4346
      %v4348 = vrot.slane %v4347, 1
      %v4349 = vmax.f32 %v4347, %v4348
      %v4350 = vsel %vm1773, %v1081, -inf
      %v4351 = vrot.slane %v4350, 4
      %v4352 = vmax.f32 %v4350, %v4351
      %v4353 = vrot.slane %v4352, 2
      %v4354 = vmax.f32 %v4352, %v4353
      %v4355 = vrot.slane %v4354, 1
      %v4356 = vmax.f32 %v4354, %v4355
      %v4357 = vsel %vm1773, %v1461, -inf
      %v4358 = vrot.slane %v4357, 4
      %v4359 = vmax.f32 %v4357, %v4358
      %v4360 = vrot.slane %v4359, 2
      %v4361 = vmax.f32 %v4359, %v4360
      %v4362 = vrot.slane %v4361, 1
      %v4363 = vmax.f32 %v4361, %v4362
      %v4364 = vsel %vm1773, %v1462, -inf
      %v4365 = vrot.slane %v4364, 4
      %v4366 = vmax.f32 %v4364, %v4365
      %v4367 = vrot.slane %v4366, 2
      %v4368 = vmax.f32 %v4366, %v4367
      %v4369 = vrot.slane %v4368, 1
      %v4370 = vmax.f32 %v4368, %v4369
      %v4371 = vsel %vm1773, %v1463, -inf
      %v4372 = vrot.slane %v4371, 4
      %v4373 = vmax.f32 %v4371, %v4372
      %v4374 = vrot.slane %v4373, 2
      %v4375 = vmax.f32 %v4373, %v4374
      %v4376 = vrot.slane %v4375, 1
      %v4377 = vmax.f32 %v4375, %v4376
      %v4378 = vsel %vm1773, %v1082, -inf
      %v4379 = vrot.slane %v4378, 4
      %v4380 = vmax.f32 %v4378, %v4379
      %v4381 = vrot.slane %v4380, 2
      %v4382 = vmax.f32 %v4380, %v4381
      %v4383 = vrot.slane %v4382, 1
      %v4384 = vmax.f32 %v4382, %v4383
      %v4385 = vsel %vm1773, %v1464, -inf
      %v4386 = vrot.slane %v4385, 4
      %v4387 = vmax.f32 %v4385, %v4386
      %v4388 = vrot.slane %v4387, 2
      %v4389 = vmax.f32 %v4387, %v4388
      %v4390 = vrot.slane %v4389, 1
      %v4391 = vmax.f32 %v4389, %v4390
      %v4392 = vsel %vm1773, %v1465, -inf
      %v4393 = vrot.slane %v4392, 4
      %v4394 = vmax.f32 %v4392, %v4393
      %v4395 = vrot.slane %v4394, 2
      %v4396 = vmax.f32 %v4394, %v4395
      %v4397 = vrot.slane %v4396, 1
      %v4398 = vmax.f32 %v4396, %v4397
      %v4399 = vsel %vm1773, %v1466, -inf
      %v4400 = vrot.slane %v4399, 4
      %v4401 = vmax.f32 %v4399, %v4400
      %v4402 = vrot.slane %v4401, 2
      %v4403 = vmax.f32 %v4401, %v4402
      %v4404 = vrot.slane %v4403, 1
      %v4405 = vmax.f32 %v4403, %v4404
      %v4406 = vsel %vm1773, %v1083, -inf
      %v4407 = vrot.slane %v4406, 4
      %v4408 = vmax.f32 %v4406, %v4407
      %v4409 = vrot.slane %v4408, 2
      %v4410 = vmax.f32 %v4408, %v4409
      %v4411 = vrot.slane %v4410, 1
      %v4412 = vmax.f32 %v4410, %v4411
      %v4413 = vsel %vm1773, %v1467, -inf
      %v4414 = vrot.slane %v4413, 4
      %v4415 = vmax.f32 %v4413, %v4414
      %v4416 = vrot.slane %v4415, 2
      %v4417 = vmax.f32 %v4415, %v4416
      %v4418 = vrot.slane %v4417, 1
      %v4419 = vmax.f32 %v4417, %v4418
      %v4420 = vsel %vm1773, %v1468, -inf
      %v4421 = vrot.slane %v4420, 4
      %v4422 = vmax.f32 %v4420, %v4421
      %v4423 = vrot.slane %v4422, 2
      %v4424 = vmax.f32 %v4422, %v4423
      %v4425 = vrot.slane %v4424, 1
      %v4426 = vmax.f32 %v4424, %v4425
      %v4427 = vsel %vm1773, %v1469, -inf
      %v4428 = vrot.slane %v4427, 4
      %v4429 = vmax.f32 %v4427, %v4428
      %v4430 = vrot.slane %v4429, 2
      %v4431 = vmax.f32 %v4429, %v4430
      %v4432 = vrot.slane %v4431, 1
      %v4433 = vmax.f32 %v4431, %v4432
      %v4434 = vsel %vm1773, %v1084, -inf
      %v4435 = vrot.slane %v4434, 4
      %v4436 = vmax.f32 %v4434, %v4435
      %v4437 = vrot.slane %v4436, 2
      %v4438 = vmax.f32 %v4436, %v4437
      %v4439 = vrot.slane %v4438, 1
      %v4440 = vmax.f32 %v4438, %v4439
      %v4441 = vsel %vm1773, %v1470, -inf
      %v4442 = vrot.slane %v4441, 4
      %v4443 = vmax.f32 %v4441, %v4442
      %v4444 = vrot.slane %v4443, 2
      %v4445 = vmax.f32 %v4443, %v4444
      %v4446 = vrot.slane %v4445, 1
      %v4447 = vmax.f32 %v4445, %v4446
      %v4448 = vsel %vm1773, %v1471, -inf
      %v4449 = vrot.slane %v4448, 4
      %v4450 = vmax.f32 %v4448, %v4449
      %v4451 = vrot.slane %v4450, 2
      %v4452 = vmax.f32 %v4450, %v4451
      %v4453 = vrot.slane %v4452, 1
      %v4454 = vmax.f32 %v4452, %v4453
      %v4455 = vsel %vm1773, %v1472, -inf
      %v4456 = vrot.slane %v4455, 4
      %v4457 = vmax.f32 %v4455, %v4456
      %v4458 = vrot.slane %v4457, 2
      %v4459 = vmax.f32 %v4457, %v4458
      %v4460 = vrot.slane %v4459, 1
      %v4461 = vmax.f32 %v4459, %v4460
      %v4462 = vsel %vm1773, %v1085, -inf
      %v4463 = vrot.slane %v4462, 4
      %v4464 = vmax.f32 %v4462, %v4463
      %v4465 = vrot.slane %v4464, 2
      %v4466 = vmax.f32 %v4464, %v4465
      %v4467 = vrot.slane %v4466, 1
      %v4468 = vmax.f32 %v4466, %v4467
      %v4469 = vsel %vm1773, %v1473, -inf
      %v4470 = vrot.slane %v4469, 4
      %v4471 = vmax.f32 %v4469, %v4470
      %v4472 = vrot.slane %v4471, 2
      %v4473 = vmax.f32 %v4471, %v4472
      %v4474 = vrot.slane %v4473, 1
      %v4475 = vmax.f32 %v4473, %v4474
      %v4476 = vsel %vm1773, %v1474, -inf
      %v4477 = vrot.slane %v4476, 4
      %v4478 = vmax.f32 %v4476, %v4477
      %v4479 = vrot.slane %v4478, 2
      %v4480 = vmax.f32 %v4478, %v4479
      %v4481 = vrot.slane %v4480, 1
      %v4482 = vmax.f32 %v4480, %v4481
      %v4483 = vsel %vm1773, %v1475, -inf
      %v4484 = vrot.slane %v4483, 4
      %v4485 = vmax.f32 %v4483, %v4484
      %v4486 = vrot.slane %v4485, 2
      %v4487 = vmax.f32 %v4485, %v4486
      %v4488 = vrot.slane %v4487, 1
      %v4489 = vmax.f32 %v4487, %v4488
      %v4490 = vsel %vm1773, %v1086, -inf
      %v4491 = vrot.slane %v4490, 4
      %v4492 = vmax.f32 %v4490, %v4491
      %v4493 = vrot.slane %v4492, 2
      %v4494 = vmax.f32 %v4492, %v4493
      %v4495 = vrot.slane %v4494, 1
      %v4496 = vmax.f32 %v4494, %v4495
      %v4497 = vsel %vm1773, %v1476, -inf
      %v4498 = vrot.slane %v4497, 4
      %v4499 = vmax.f32 %v4497, %v4498
      %v4500 = vrot.slane %v4499, 2
      %v4501 = vmax.f32 %v4499, %v4500
      %v4502 = vrot.slane %v4501, 1
      %v4503 = vmax.f32 %v4501, %v4502
      %v4504 = vsel %vm1773, %v1477, -inf
      %v4505 = vrot.slane %v4504, 4
      %v4506 = vmax.f32 %v4504, %v4505
      %v4507 = vrot.slane %v4506, 2
      %v4508 = vmax.f32 %v4506, %v4507
      %v4509 = vrot.slane %v4508, 1
      %v4510 = vmax.f32 %v4508, %v4509
      %v4511 = vsel %vm1773, %v1478, -inf
      %v4512 = vrot.slane %v4511, 4
      %v4513 = vmax.f32 %v4511, %v4512
      %v4514 = vrot.slane %v4513, 2
      %v4515 = vmax.f32 %v4513, %v4514
      %v4516 = vrot.slane %v4515, 1
      %v4517 = vmax.f32 %v4515, %v4516
      %vm4518 = vcmask 261120
      %v4519 = vsel %vm4518, %v1780, -inf
      %v4520 = vsel %vm4518, %v1878, -inf
      %v4521 = vmax.f32 %v4519, %v4520
      %v4522 = vsel %vm4518, %v1787, -inf
      %v4523 = vsel %vm4518, %v1885, -inf
      %v4524 = vmax.f32 %v4522, %v4523
      %v4525 = vsel %vm4518, %v1794, -inf
      %v4526 = vsel %vm4518, %v1892, -inf
      %v4527 = vmax.f32 %v4525, %v4526
      %v4528 = vsel %vm4518, %v1801, -inf
      %v4529 = vsel %vm4518, %v1899, -inf
      %v4530 = vmax.f32 %v4528, %v4529
      %v4531 = vsel %vm4518, %v1808, -inf
      %v4532 = vsel %vm4518, %v1906, -inf
      %v4533 = vmax.f32 %v4531, %v4532
      %v4534 = vsel %vm4518, %v1815, -inf
      %v4535 = vsel %vm4518, %v1913, -inf
      %v4536 = vmax.f32 %v4534, %v4535
      %v4537 = vsel %vm4518, %v1822, -inf
      %v4538 = vsel %vm4518, %v1920, -inf
      %v4539 = vmax.f32 %v4537, %v4538
      %v4540 = vsel %vm4518, %v1829, -inf
      %v4541 = vsel %vm4518, %v1927, -inf
      %v4542 = vmax.f32 %v4540, %v4541
      %v4543 = vsel %vm4518, %v1836, -inf
      %v4544 = vsel %vm4518, %v1934, -inf
      %v4545 = vmax.f32 %v4543, %v4544
      %v4546 = vsel %vm4518, %v1843, -inf
      %v4547 = vsel %vm4518, %v1941, -inf
      %v4548 = vmax.f32 %v4546, %v4547
      %v4549 = vsel %vm4518, %v1850, -inf
      %v4550 = vsel %vm4518, %v1948, -inf
      %v4551 = vmax.f32 %v4549, %v4550
      %v4552 = vsel %vm4518, %v1857, -inf
      %v4553 = vsel %vm4518, %v1955, -inf
      %v4554 = vmax.f32 %v4552, %v4553
      %v4555 = vsel %vm4518, %v1864, -inf
      %v4556 = vsel %vm4518, %v1962, -inf
      %v4557 = vmax.f32 %v4555, %v4556
      %v4558 = vsel %vm4518, %v1871, -inf
      %v4559 = vsel %vm4518, %v1969, -inf
      %v4560 = vmax.f32 %v4558, %v4559
      %v4561 = vsel %vm4518, %v1976, -inf
      %v4562 = vsel %vm4518, %v2074, -inf
      %v4563 = vmax.f32 %v4561, %v4562
      %v4564 = vsel %vm4518, %v1983, -inf
      %v4565 = vsel %vm4518, %v2081, -inf
      %v4566 = vmax.f32 %v4564, %v4565
      %v4567 = vsel %vm4518, %v1990, -inf
      %v4568 = vsel %vm4518, %v2088, -inf
      %v4569 = vmax.f32 %v4567, %v4568
      %v4570 = vsel %vm4518, %v1997, -inf
      %v4571 = vsel %vm4518, %v2095, -inf
      %v4572 = vmax.f32 %v4570, %v4571
      %v4573 = vsel %vm4518, %v2004, -inf
      %v4574 = vsel %vm4518, %v2102, -inf
      %v4575 = vmax.f32 %v4573, %v4574
      %v4576 = vsel %vm4518, %v2011, -inf
      %v4577 = vsel %vm4518, %v2109, -inf
      %v4578 = vmax.f32 %v4576, %v4577
      %v4579 = vsel %vm4518, %v2018, -inf
      %v4580 = vsel %vm4518, %v2116, -inf
      %v4581 = vmax.f32 %v4579, %v4580
      %v4582 = vsel %vm4518, %v2025, -inf
      %v4583 = vsel %vm4518, %v2123, -inf
      %v4584 = vmax.f32 %v4582, %v4583
      %v4585 = vsel %vm4518, %v2032, -inf
      %v4586 = vsel %vm4518, %v2130, -inf
      %v4587 = vmax.f32 %v4585, %v4586
      %v4588 = vsel %vm4518, %v2039, -inf
      %v4589 = vsel %vm4518, %v2137, -inf
      %v4590 = vmax.f32 %v4588, %v4589
      %v4591 = vsel %vm4518, %v2046, -inf
      %v4592 = vsel %vm4518, %v2144, -inf
      %v4593 = vmax.f32 %v4591, %v4592
      %v4594 = vsel %vm4518, %v2053, -inf
      %v4595 = vsel %vm4518, %v2151, -inf
      %v4596 = vmax.f32 %v4594, %v4595
      %v4597 = vsel %vm4518, %v2060, -inf
      %v4598 = vsel %vm4518, %v2158, -inf
      %v4599 = vmax.f32 %v4597, %v4598
      %v4600 = vsel %vm4518, %v2067, -inf
      %v4601 = vsel %vm4518, %v2165, -inf
      %v4602 = vmax.f32 %v4600, %v4601
      %v4603 = vsel %vm4518, %v2172, -inf
      %v4604 = vsel %vm4518, %v2270, -inf
      %v4605 = vmax.f32 %v4603, %v4604
      %v4606 = vsel %vm4518, %v2179, -inf
      %v4607 = vsel %vm4518, %v2277, -inf
      %v4608 = vmax.f32 %v4606, %v4607
      %v4609 = vsel %vm4518, %v2186, -inf
      %v4610 = vsel %vm4518, %v2284, -inf
      %v4611 = vmax.f32 %v4609, %v4610
      %v4612 = vsel %vm4518, %v2193, -inf
      %v4613 = vsel %vm4518, %v2291, -inf
      %v4614 = vmax.f32 %v4612, %v4613
      %v4615 = vsel %vm4518, %v2200, -inf
      %v4616 = vsel %vm4518, %v2298, -inf
      %v4617 = vmax.f32 %v4615, %v4616
      %v4618 = vsel %vm4518, %v2207, -inf
      %v4619 = vsel %vm4518, %v2305, -inf
      %v4620 = vmax.f32 %v4618, %v4619
      %v4621 = vsel %vm4518, %v2214, -inf
      %v4622 = vsel %vm4518, %v2312, -inf
      %v4623 = vmax.f32 %v4621, %v4622
      %v4624 = vsel %vm4518, %v2221, -inf
      %v4625 = vsel %vm4518, %v2319, -inf
      %v4626 = vmax.f32 %v4624, %v4625
      %v4627 = vsel %vm4518, %v2228, -inf
      %v4628 = vsel %vm4518, %v2326, -inf
      %v4629 = vmax.f32 %v4627, %v4628
      %v4630 = vsel %vm4518, %v2235, -inf
      %v4631 = vsel %vm4518, %v2333, -inf
      %v4632 = vmax.f32 %v4630, %v4631
      %v4633 = vsel %vm4518, %v2242, -inf
      %v4634 = vsel %vm4518, %v2340, -inf
      %v4635 = vmax.f32 %v4633, %v4634
      %v4636 = vsel %vm4518, %v2249, -inf
      %v4637 = vsel %vm4518, %v2347, -inf
      %v4638 = vmax.f32 %v4636, %v4637
      %v4639 = vsel %vm4518, %v2256, -inf
      %v4640 = vsel %vm4518, %v2354, -inf
      %v4641 = vmax.f32 %v4639, %v4640
      %v4642 = vsel %vm4518, %v2263, -inf
      %v4643 = vsel %vm4518, %v2361, -inf
      %v4644 = vmax.f32 %v4642, %v4643
      %v4645 = vsel %vm4518, %v2368, -inf
      %v4646 = vsel %vm4518, %v2466, -inf
      %v4647 = vmax.f32 %v4645, %v4646
      %v4648 = vsel %vm4518, %v2375, -inf
      %v4649 = vsel %vm4518, %v2473, -inf
      %v4650 = vmax.f32 %v4648, %v4649
      %v4651 = vsel %vm4518, %v2382, -inf
      %v4652 = vsel %vm4518, %v2480, -inf
      %v4653 = vmax.f32 %v4651, %v4652
      %v4654 = vsel %vm4518, %v2389, -inf
      %v4655 = vsel %vm4518, %v2487, -inf
      %v4656 = vmax.f32 %v4654, %v4655
      %v4657 = vsel %vm4518, %v2396, -inf
      %v4658 = vsel %vm4518, %v2494, -inf
      %v4659 = vmax.f32 %v4657, %v4658
      %v4660 = vsel %vm4518, %v2403, -inf
      %v4661 = vsel %vm4518, %v2501, -inf
      %v4662 = vmax.f32 %v4660, %v4661
      %v4663 = vsel %vm4518, %v2410, -inf
      %v4664 = vsel %vm4518, %v2508, -inf
      %v4665 = vmax.f32 %v4663, %v4664
      %v4666 = vsel %vm4518, %v2417, -inf
      %v4667 = vsel %vm4518, %v2515, -inf
      %v4668 = vmax.f32 %v4666, %v4667
      %v4669 = vsel %vm4518, %v2424, -inf
      %v4670 = vsel %vm4518, %v2522, -inf
      %v4671 = vmax.f32 %v4669, %v4670
      %v4672 = vsel %vm4518, %v2431, -inf
      %v4673 = vsel %vm4518, %v2529, -inf
      %v4674 = vmax.f32 %v4672, %v4673
      %v4675 = vsel %vm4518, %v2438, -inf
      %v4676 = vsel %vm4518, %v2536, -inf
      %v4677 = vmax.f32 %v4675, %v4676
      %v4678 = vsel %vm4518, %v2445, -inf
      %v4679 = vsel %vm4518, %v2543, -inf
      %v4680 = vmax.f32 %v4678, %v4679
      %v4681 = vsel %vm4518, %v2452, -inf
      %v4682 = vsel %vm4518, %v2550, -inf
      %v4683 = vmax.f32 %v4681, %v4682
      %v4684 = vsel %vm4518, %v2459, -inf
      %v4685 = vsel %vm4518, %v2557, -inf
      %v4686 = vmax.f32 %v4684, %v4685
      %v4687 = vsel %vm4518, %v2564, -inf
      %v4688 = vsel %vm4518, %v2662, -inf
      %v4689 = vmax.f32 %v4687, %v4688
      %v4690 = vsel %vm4518, %v2571, -inf
      %v4691 = vsel %vm4518, %v2669, -inf
      %v4692 = vmax.f32 %v4690, %v4691
      %v4693 = vsel %vm4518, %v2578, -inf
      %v4694 = vsel %vm4518, %v2676, -inf
      %v4695 = vmax.f32 %v4693, %v4694
      %v4696 = vsel %vm4518, %v2585, -inf
      %v4697 = vsel %vm4518, %v2683, -inf
      %v4698 = vmax.f32 %v4696, %v4697
      %v4699 = vsel %vm4518, %v2592, -inf
      %v4700 = vsel %vm4518, %v2690, -inf
      %v4701 = vmax.f32 %v4699, %v4700
      %v4702 = vsel %vm4518, %v2599, -inf
      %v4703 = vsel %vm4518, %v2697, -inf
      %v4704 = vmax.f32 %v4702, %v4703
      %v4705 = vsel %vm4518, %v2606, -inf
      %v4706 = vsel %vm4518, %v2704, -inf
      %v4707 = vmax.f32 %v4705, %v4706
      %v4708 = vsel %vm4518, %v2613, -inf
      %v4709 = vsel %vm4518, %v2711, -inf
      %v4710 = vmax.f32 %v4708, %v4709
      %v4711 = vsel %vm4518, %v2620, -inf
      %v4712 = vsel %vm4518, %v2718, -inf
      %v4713 = vmax.f32 %v4711, %v4712
      %v4714 = vsel %vm4518, %v2627, -inf
      %v4715 = vsel %vm4518, %v2725, -inf
      %v4716 = vmax.f32 %v4714, %v4715
      %v4717 = vsel %vm4518, %v2634, -inf
      %v4718 = vsel %vm4518, %v2732, -inf
      %v4719 = vmax.f32 %v4717, %v4718
      %v4720 = vsel %vm4518, %v2641, -inf
      %v4721 = vsel %vm4518, %v2739, -inf
      %v4722 = vmax.f32 %v4720, %v4721
      %v4723 = vsel %vm4518, %v2648, -inf
      %v4724 = vsel %vm4518, %v2746, -inf
      %v4725 = vmax.f32 %v4723, %v4724
      %v4726 = vsel %vm4518, %v2655, -inf
      %v4727 = vsel %vm4518, %v2753, -inf
      %v4728 = vmax.f32 %v4726, %v4727
      %v4729 = vsel %vm4518, %v2760, -inf
      %v4730 = vsel %vm4518, %v2858, -inf
      %v4731 = vmax.f32 %v4729, %v4730
      %v4732 = vsel %vm4518, %v2767, -inf
      %v4733 = vsel %vm4518, %v2865, -inf
      %v4734 = vmax.f32 %v4732, %v4733
      %v4735 = vsel %vm4518, %v2774, -inf
      %v4736 = vsel %vm4518, %v2872, -inf
      %v4737 = vmax.f32 %v4735, %v4736
      %v4738 = vsel %vm4518, %v2781, -inf
      %v4739 = vsel %vm4518, %v2879, -inf
      %v4740 = vmax.f32 %v4738, %v4739
      %v4741 = vsel %vm4518, %v2788, -inf
      %v4742 = vsel %vm4518, %v2886, -inf
      %v4743 = vmax.f32 %v4741, %v4742
      %v4744 = vsel %vm4518, %v2795, -inf
      %v4745 = vsel %vm4518, %v2893, -inf
      %v4746 = vmax.f32 %v4744, %v4745
      %v4747 = vsel %vm4518, %v2802, -inf
      %v4748 = vsel %vm4518, %v2900, -inf
      %v4749 = vmax.f32 %v4747, %v4748
      %v4750 = vsel %vm4518, %v2809, -inf
      %v4751 = vsel %vm4518, %v2907, -inf
      %v4752 = vmax.f32 %v4750, %v4751
      %v4753 = vsel %vm4518, %v2816, -inf
      %v4754 = vsel %vm4518, %v2914, -inf
      %v4755 = vmax.f32 %v4753, %v4754
      %v4756 = vsel %vm4518, %v2823, -inf
      %v4757 = vsel %vm4518, %v2921, -inf
      %v4758 = vmax.f32 %v4756, %v4757
      %v4759 = vsel %vm4518, %v2830, -inf
      %v4760 = vsel %vm4518, %v2928, -inf
      %v4761 = vmax.f32 %v4759, %v4760
      %v4762 = vsel %vm4518, %v2837, -inf
      %v4763 = vsel %vm4518, %v2935, -inf
      %v4764 = vmax.f32 %v4762, %v4763
      %v4765 = vsel %vm4518, %v2844, -inf
      %v4766 = vsel %vm4518, %v2942, -inf
      %v4767 = vmax.f32 %v4765, %v4766
      %v4768 = vsel %vm4518, %v2851, -inf
      %v4769 = vsel %vm4518, %v2949, -inf
      %v4770 = vmax.f32 %v4768, %v4769
      %v4771 = vsel %vm4518, %v2956, -inf
      %v4772 = vsel %vm4518, %v3054, -inf
      %v4773 = vmax.f32 %v4771, %v4772
      %v4774 = vsel %vm4518, %v2963, -inf
      %v4775 = vsel %vm4518, %v3061, -inf
      %v4776 = vmax.f32 %v4774, %v4775
      %v4777 = vsel %vm4518, %v2970, -inf
      %v4778 = vsel %vm4518, %v3068, -inf
      %v4779 = vmax.f32 %v4777, %v4778
      %v4780 = vsel %vm4518, %v2977, -inf
      %v4781 = vsel %vm4518, %v3075, -inf
      %v4782 = vmax.f32 %v4780, %v4781
      %v4783 = vsel %vm4518, %v2984, -inf
      %v4784 = vsel %vm4518, %v3082, -inf
      %v4785 = vmax.f32 %v4783, %v4784
      %v4786 = vsel %vm4518, %v2991, -inf
      %v4787 = vsel %vm4518, %v3089, -inf
      %v4788 = vmax.f32 %v4786, %v4787
      %v4789 = vsel %vm4518, %v2998, -inf
      %v4790 = vsel %vm4518, %v3096, -inf
      %v4791 = vmax.f32 %v4789, %v4790
      %v4792 = vsel %vm4518, %v3005, -inf
      %v4793 = vsel %vm4518, %v3103, -inf
      %v4794 = vmax.f32 %v4792, %v4793
      %v4795 = vsel %vm4518, %v3012, -inf
      %v4796 = vsel %vm4518, %v3110, -inf
      %v4797 = vmax.f32 %v4795, %v4796
      %v4798 = vsel %vm4518, %v3019, -inf
      %v4799 = vsel %vm4518, %v3117, -inf
      %v4800 = vmax.f32 %v4798, %v4799
      %v4801 = vsel %vm4518, %v3026, -inf
      %v4802 = vsel %vm4518, %v3124, -inf
      %v4803 = vmax.f32 %v4801, %v4802
      %v4804 = vsel %vm4518, %v3033, -inf
      %v4805 = vsel %vm4518, %v3131, -inf
      %v4806 = vmax.f32 %v4804, %v4805
      %v4807 = vsel %vm4518, %v3040, -inf
      %v4808 = vsel %vm4518, %v3138, -inf
      %v4809 = vmax.f32 %v4807, %v4808
      %v4810 = vsel %vm4518, %v3047, -inf
      %v4811 = vsel %vm4518, %v3145, -inf
      %v4812 = vmax.f32 %v4810, %v4811
      %v4813 = vsel %vm4518, %v3152, -inf
      %v4814 = vsel %vm4518, %v3250, -inf
      %v4815 = vmax.f32 %v4813, %v4814
      %v4816 = vsel %vm4518, %v3159, -inf
      %v4817 = vsel %vm4518, %v3257, -inf
      %v4818 = vmax.f32 %v4816, %v4817
      %v4819 = vsel %vm4518, %v3166, -inf
      %v4820 = vsel %vm4518, %v3264, -inf
      %v4821 = vmax.f32 %v4819, %v4820
      %v4822 = vsel %vm4518, %v3173, -inf
      %v4823 = vsel %vm4518, %v3271, -inf
      %v4824 = vmax.f32 %v4822, %v4823
      %v4825 = vsel %vm4518, %v3180, -inf
      %v4826 = vsel %vm4518, %v3278, -inf
      %v4827 = vmax.f32 %v4825, %v4826
      %v4828 = vsel %vm4518, %v3187, -inf
      %v4829 = vsel %vm4518, %v3285, -inf
      %v4830 = vmax.f32 %v4828, %v4829
      %v4831 = vsel %vm4518, %v3194, -inf
      %v4832 = vsel %vm4518, %v3292, -inf
      %v4833 = vmax.f32 %v4831, %v4832
      %v4834 = vsel %vm4518, %v3201, -inf
      %v4835 = vsel %vm4518, %v3299, -inf
      %v4836 = vmax.f32 %v4834, %v4835
      %v4837 = vsel %vm4518, %v3208, -inf
      %v4838 = vsel %vm4518, %v3306, -inf
      %v4839 = vmax.f32 %v4837, %v4838
      %v4840 = vsel %vm4518, %v3215, -inf
      %v4841 = vsel %vm4518, %v3313, -inf
      %v4842 = vmax.f32 %v4840, %v4841
      %v4843 = vsel %vm4518, %v3222, -inf
      %v4844 = vsel %vm4518, %v3320, -inf
      %v4845 = vmax.f32 %v4843, %v4844
      %v4846 = vsel %vm4518, %v3229, -inf
      %v4847 = vsel %vm4518, %v3327, -inf
      %v4848 = vmax.f32 %v4846, %v4847
      %v4849 = vsel %vm4518, %v3236, -inf
      %v4850 = vsel %vm4518, %v3334, -inf
      %v4851 = vmax.f32 %v4849, %v4850
      %v4852 = vsel %vm4518, %v3243, -inf
      %v4853 = vsel %vm4518, %v3341, -inf
      %v4854 = vmax.f32 %v4852, %v4853
      %v4855 = vsel %vm4518, %v3348, -inf
      %v4856 = vsel %vm4518, %v3446, -inf
      %v4857 = vmax.f32 %v4855, %v4856
      %v4858 = vsel %vm4518, %v3355, -inf
      %v4859 = vsel %vm4518, %v3453, -inf
      %v4860 = vmax.f32 %v4858, %v4859
      %v4861 = vsel %vm4518, %v3362, -inf
      %v4862 = vsel %vm4518, %v3460, -inf
      %v4863 = vmax.f32 %v4861, %v4862
      %v4864 = vsel %vm4518, %v3369, -inf
      %v4865 = vsel %vm4518, %v3467, -inf
      %v4866 = vmax.f32 %v4864, %v4865
      %v4867 = vsel %vm4518, %v3376, -inf
      %v4868 = vsel %vm4518, %v3474, -inf
      %v4869 = vmax.f32 %v4867, %v4868
      %v4870 = vsel %vm4518, %v3383, -inf
      %v4871 = vsel %vm4518, %v3481, -inf
      %v4872 = vmax.f32 %v4870, %v4871
      %v4873 = vsel %vm4518, %v3390, -inf
      %v4874 = vsel %vm4518, %v3488, -inf
      %v4875 = vmax.f32 %v4873, %v4874
      %v4876 = vsel %vm4518, %v3397, -inf
      %v4877 = vsel %vm4518, %v3495, -inf
      %v4878 = vmax.f32 %v4876, %v4877
      %v4879 = vsel %vm4518, %v3404, -inf
      %v4880 = vsel %vm4518, %v3502, -inf
      %v4881 = vmax.f32 %v4879, %v4880
      %v4882 = vsel %vm4518, %v3411, -inf
      %v4883 = vsel %vm4518, %v3509, -inf
      %v4884 = vmax.f32 %v4882, %v4883
      %v4885 = vsel %vm4518, %v3418, -inf
      %v4886 = vsel %vm4518, %v3516, -inf
      %v4887 = vmax.f32 %v4885, %v4886
      %v4888 = vsel %vm4518, %v3425, -inf
      %v4889 = vsel %vm4518, %v3523, -inf
      %v4890 = vmax.f32 %v4888, %v4889
      %v4891 = vsel %vm4518, %v3432, -inf
      %v4892 = vsel %vm4518, %v3530, -inf
      %v4893 = vmax.f32 %v4891, %v4892
      %v4894 = vsel %vm4518, %v3439, -inf
      %v4895 = vsel %vm4518, %v3537, -inf
      %v4896 = vmax.f32 %v4894, %v4895
      %v4897 = vsel %vm4518, %v3544, -inf
      %v4898 = vsel %vm4518, %v3642, -inf
      %v4899 = vmax.f32 %v4897, %v4898
      %v4900 = vsel %vm4518, %v3551, -inf
      %v4901 = vsel %vm4518, %v3649, -inf
      %v4902 = vmax.f32 %v4900, %v4901
      %v4903 = vsel %vm4518, %v3558, -inf
      %v4904 = vsel %vm4518, %v3656, -inf
      %v4905 = vmax.f32 %v4903, %v4904
      %v4906 = vsel %vm4518, %v3565, -inf
      %v4907 = vsel %vm4518, %v3663, -inf
      %v4908 = vmax.f32 %v4906, %v4907
      %v4909 = vsel %vm4518, %v3572, -inf
      %v4910 = vsel %vm4518, %v3670, -inf
      %v4911 = vmax.f32 %v4909, %v4910
      %v4912 = vsel %vm4518, %v3579, -inf
      %v4913 = vsel %vm4518, %v3677, -inf
      %v4914 = vmax.f32 %v4912, %v4913
      %v4915 = vsel %vm4518, %v3586, -inf
      %v4916 = vsel %vm4518, %v3684, -inf
      %v4917 = vmax.f32 %v4915, %v4916
      %v4918 = vsel %vm4518, %v3593, -inf
      %v4919 = vsel %vm4518, %v3691, -inf
      %v4920 = vmax.f32 %v4918, %v4919
      %v4921 = vsel %vm4518, %v3600, -inf
      %v4922 = vsel %vm4518, %v3698, -inf
      %v4923 = vmax.f32 %v4921, %v4922
      %v4924 = vsel %vm4518, %v3607, -inf
      %v4925 = vsel %vm4518, %v3705, -inf
      %v4926 = vmax.f32 %v4924, %v4925
      %v4927 = vsel %vm4518, %v3614, -inf
      %v4928 = vsel %vm4518, %v3712, -inf
      %v4929 = vmax.f32 %v4927, %v4928
      %v4930 = vsel %vm4518, %v3621, -inf
      %v4931 = vsel %vm4518, %v3719, -inf
      %v4932 = vmax.f32 %v4930, %v4931
      %v4933 = vsel %vm4518, %v3628, -inf
      %v4934 = vsel %vm4518, %v3726, -inf
      %v4935 = vmax.f32 %v4933, %v4934
      %v4936 = vsel %vm4518, %v3635, -inf
      %v4937 = vsel %vm4518, %v3733, -inf
      %v4938 = vmax.f32 %v4936, %v4937
      %v4939 = vsel %vm4518, %v3740, -inf
      %v4940 = vsel %vm4518, %v3838, -inf
      %v4941 = vmax.f32 %v4939, %v4940
      %v4942 = vsel %vm4518, %v3747, -inf
      %v4943 = vsel %vm4518, %v3845, -inf
      %v4944 = vmax.f32 %v4942, %v4943
      %v4945 = vsel %vm4518, %v3754, -inf
      %v4946 = vsel %vm4518, %v3852, -inf
      %v4947 = vmax.f32 %v4945, %v4946
      %v4948 = vsel %vm4518, %v3761, -inf
      %v4949 = vsel %vm4518, %v3859, -inf
      %v4950 = vmax.f32 %v4948, %v4949
      %v4951 = vsel %vm4518, %v3768, -inf
      %v4952 = vsel %vm4518, %v3866, -inf
      %v4953 = vmax.f32 %v4951, %v4952
      %v4954 = vsel %vm4518, %v3775, -inf
      %v4955 = vsel %vm4518, %v3873, -inf
      %v4956 = vmax.f32 %v4954, %v4955
      %v4957 = vsel %vm4518, %v3782, -inf
      %v4958 = vsel %vm4518, %v3880, -inf
      %v4959 = vmax.f32 %v4957, %v4958
      %v4960 = vsel %vm4518, %v3789, -inf
      %v4961 = vsel %vm4518, %v3887, -inf
      %v4962 = vmax.f32 %v4960, %v4961
      %v4963 = vsel %vm4518, %v3796, -inf
      %v4964 = vsel %vm4518, %v3894, -inf
      %v4965 = vmax.f32 %v4963, %v4964
      %v4966 = vsel %vm4518, %v3803, -inf
      %v4967 = vsel %vm4518, %v3901, -inf
      %v4968 = vmax.f32 %v4966, %v4967
      %v4969 = vsel %vm4518, %v3810, -inf
      %v4970 = vsel %vm4518, %v3908, -inf
      %v4971 = vmax.f32 %v4969, %v4970
      %v4972 = vsel %vm4518, %v3817, -inf
      %v4973 = vsel %vm4518, %v3915, -inf
      %v4974 = vmax.f32 %v4972, %v4973
      %v4975 = vsel %vm4518, %v3824, -inf
      %v4976 = vsel %vm4518, %v3922, -inf
      %v4977 = vmax.f32 %v4975, %v4976
      %v4978 = vsel %vm4518, %v3831, -inf
      %v4979 = vsel %vm4518, %v3929, -inf
      %v4980 = vmax.f32 %v4978, %v4979
      %v4981 = vsel %vm4518, %v3936, -inf
      %v4982 = vsel %vm4518, %v4034, -inf
      %v4983 = vmax.f32 %v4981, %v4982
      %v4984 = vsel %vm4518, %v3943, -inf
      %v4985 = vsel %vm4518, %v4041, -inf
      %v4986 = vmax.f32 %v4984, %v4985
      %v4987 = vsel %vm4518, %v3950, -inf
      %v4988 = vsel %vm4518, %v4048, -inf
      %v4989 = vmax.f32 %v4987, %v4988
      %v4990 = vsel %vm4518, %v3957, -inf
      %v4991 = vsel %vm4518, %v4055, -inf
      %v4992 = vmax.f32 %v4990, %v4991
      %v4993 = vsel %vm4518, %v3964, -inf
      %v4994 = vsel %vm4518, %v4062, -inf
      %v4995 = vmax.f32 %v4993, %v4994
      %v4996 = vsel %vm4518, %v3971, -inf
      %v4997 = vsel %vm4518, %v4069, -inf
      %v4998 = vmax.f32 %v4996, %v4997
      %v4999 = vsel %vm4518, %v3978, -inf
      %v5000 = vsel %vm4518, %v4076, -inf
      %v5001 = vmax.f32 %v4999, %v5000
      %v5002 = vsel %vm4518, %v3985, -inf
      %v5003 = vsel %vm4518, %v4083, -inf
      %v5004 = vmax.f32 %v5002, %v5003
      %v5005 = vsel %vm4518, %v3992, -inf
      %v5006 = vsel %vm4518, %v4090, -inf
      %v5007 = vmax.f32 %v5005, %v5006
      %v5008 = vsel %vm4518, %v3999, -inf
      %v5009 = vsel %vm4518, %v4097, -inf
      %v5010 = vmax.f32 %v5008, %v5009
      %v5011 = vsel %vm4518, %v4006, -inf
      %v5012 = vsel %vm4518, %v4104, -inf
      %v5013 = vmax.f32 %v5011, %v5012
      %v5014 = vsel %vm4518, %v4013, -inf
      %v5015 = vsel %vm4518, %v4111, -inf
      %v5016 = vmax.f32 %v5014, %v5015
      %v5017 = vsel %vm4518, %v4020, -inf
      %v5018 = vsel %vm4518, %v4118, -inf
      %v5019 = vmax.f32 %v5017, %v5018
      %v5020 = vsel %vm4518, %v4027, -inf
      %v5021 = vsel %vm4518, %v4125, -inf
      %v5022 = vmax.f32 %v5020, %v5021
      %v5023 = vsel %vm4518, %v4132, -inf
      %v5024 = vsel %vm4518, %v4230, -inf
      %v5025 = vmax.f32 %v5023, %v5024
      %v5026 = vsel %vm4518, %v4139, -inf
      %v5027 = vsel %vm4518, %v4237, -inf
      %v5028 = vmax.f32 %v5026, %v5027
      %v5029 = vsel %vm4518, %v4146, -inf
      %v5030 = vsel %vm4518, %v4244, -inf
      %v5031 = vmax.f32 %v5029, %v5030
      %v5032 = vsel %vm4518, %v4153, -inf
      %v5033 = vsel %vm4518, %v4251, -inf
      %v5034 = vmax.f32 %v5032, %v5033
      %v5035 = vsel %vm4518, %v4160, -inf
      %v5036 = vsel %vm4518, %v4258, -inf
      %v5037 = vmax.f32 %v5035, %v5036
      %v5038 = vsel %vm4518, %v4167, -inf
      %v5039 = vsel %vm4518, %v4265, -inf
      %v5040 = vmax.f32 %v5038, %v5039
      %v5041 = vsel %vm4518, %v4174, -inf
      %v5042 = vsel %vm4518, %v4272, -inf
      %v5043 = vmax.f32 %v5041, %v5042
      %v5044 = vsel %vm4518, %v4181, -inf
      %v5045 = vsel %vm4518, %v4279, -inf
      %v5046 = vmax.f32 %v5044, %v5045
      %v5047 = vsel %vm4518, %v4188, -inf
      %v5048 = vsel %vm4518, %v4286, -inf
      %v5049 = vmax.f32 %v5047, %v5048
      %v5050 = vsel %vm4518, %v4195, -inf
      %v5051 = vsel %vm4518, %v4293, -inf
      %v5052 = vmax.f32 %v5050, %v5051
      %v5053 = vsel %vm4518, %v4202, -inf
      %v5054 = vsel %vm4518, %v4300, -inf
      %v5055 = vmax.f32 %v5053, %v5054
      %v5056 = vsel %vm4518, %v4209, -inf
      %v5057 = vsel %vm4518, %v4307, -inf
      %v5058 = vmax.f32 %v5056, %v5057
      %v5059 = vsel %vm4518, %v4216, -inf
      %v5060 = vsel %vm4518, %v4314, -inf
      %v5061 = vmax.f32 %v5059, %v5060
      %v5062 = vsel %vm4518, %v4223, -inf
      %v5063 = vsel %vm4518, %v4321, -inf
      %v5064 = vmax.f32 %v5062, %v5063
      %v5065 = vsel %vm4518, %v4328, -inf
      %v5066 = vsel %vm4518, %v4426, -inf
      %v5067 = vmax.f32 %v5065, %v5066
      %v5068 = vsel %vm4518, %v4335, -inf
      %v5069 = vsel %vm4518, %v4433, -inf
      %v5070 = vmax.f32 %v5068, %v5069
      %v5071 = vsel %vm4518, %v4342, -inf
      %v5072 = vsel %vm4518, %v4440, -inf
      %v5073 = vmax.f32 %v5071, %v5072
      %v5074 = vsel %vm4518, %v4349, -inf
      %v5075 = vsel %vm4518, %v4447, -inf
      %v5076 = vmax.f32 %v5074, %v5075
      %v5077 = vsel %vm4518, %v4356, -inf
      %v5078 = vsel %vm4518, %v4454, -inf
      %v5079 = vmax.f32 %v5077, %v5078
      %v5080 = vsel %vm4518, %v4363, -inf
      %v5081 = vsel %vm4518, %v4461, -inf
      %v5082 = vmax.f32 %v5080, %v5081
      %v5083 = vsel %vm4518, %v4370, -inf
      %v5084 = vsel %vm4518, %v4468, -inf
      %v5085 = vmax.f32 %v5083, %v5084
      %v5086 = vsel %vm4518, %v4377, -inf
      %v5087 = vsel %vm4518, %v4475, -inf
      %v5088 = vmax.f32 %v5086, %v5087
      %v5089 = vsel %vm4518, %v4384, -inf
      %v5090 = vsel %vm4518, %v4482, -inf
      %v5091 = vmax.f32 %v5089, %v5090
      %v5092 = vsel %vm4518, %v4391, -inf
      %v5093 = vsel %vm4518, %v4489, -inf
      %v5094 = vmax.f32 %v5092, %v5093
      %v5095 = vsel %vm4518, %v4398, -inf
      %v5096 = vsel %vm4518, %v4496, -inf
      %v5097 = vmax.f32 %v5095, %v5096
      %v5098 = vsel %vm4518, %v4405, -inf
      %v5099 = vsel %vm4518, %v4503, -inf
      %v5100 = vmax.f32 %v5098, %v5099
      %v5101 = vsel %vm4518, %v4412, -inf
      %v5102 = vsel %vm4518, %v4510, -inf
      %v5103 = vmax.f32 %v5101, %v5102
      %v5104 = vsel %vm4518, %v4419, -inf
      %v5105 = vsel %vm4518, %v4517, -inf
      %v5106 = vmax.f32 %v5104, %v5105
      %vm5107 = vcmask 257024
      %5108 = vst.msk [vmem:[#allocation2] sm:$0xf] %vm5107, 0
      %5109 = vst.msk [vmem:[#allocation2 + $0x4] sm:$0xf] %vm5107, 0
      %s5110 = scalar_lea.vmem [#allocation2], 120
      %5111 = vst.msk [vmem:[%s5110] sm:$0xf] %vm5107, 0
      %5112 = vst.msk [vmem:[%s5110 + $0x4] sm:$0xf] %vm5107, 0
      %vm5113 = vcmask 253952
      %vm5114 = vsmask.f32 256
      %vm5115 = vmand %vm5113, %vm5114
      %v5116 = vld [vmem:[#allocation2] sm:$0x1]
      %v5117 = vsel %vm5115, 0, %v5116
      %5118 = vst [vmem:[#allocation2] sm:$0x1] %v5117
      %v5119 = vld [vmem:[#allocation2 + $0x8] sm:$0x1]
      %v5120 = vsel %vm5115, 0, %v5119
      %5121 = vst [vmem:[#allocation2 + $0x8] sm:$0x1] %v5120
      %v5122 = vld [vmem:[#allocation2 + $0x10] sm:$0x1]
      %v5123 = vsel %vm5115, 0, %v5122
      %5124 = vst [vmem:[#allocation2 + $0x10] sm:$0x1] %v5123
      %v5125 = vld [vmem:[#allocation2 + $0x18] sm:$0x1]
      %v5126 = vsel %vm5115, 0, %v5125
      %5127 = vst [vmem:[#allocation2 + $0x18] sm:$0x1] %v5126
      %v5128 = vld [vmem:[#allocation2 + $0x20] sm:$0x1]
      %v5129 = vsel %vm5115, 0, %v5128
      %5130 = vst [vmem:[#allocation2 + $0x20] sm:$0x1] %v5129
      %v5131 = vld [vmem:[#allocation2 + $0x28] sm:$0x1]
      %v5132 = vsel %vm5115, 0, %v5131
      %5133 = vst [vmem:[#allocation2 + $0x28] sm:$0x1] %v5132
      %v5134 = vld [vmem:[#allocation2 + $0x30] sm:$0x1]
      %v5135 = vsel %vm5115, 0, %v5134
      %5136 = vst [vmem:[#allocation2 + $0x30] sm:$0x1] %v5135
      %v5137 = vld [vmem:[#allocation2 + $0x38] sm:$0x1]
      %v5138 = vsel %vm5115, 0, %v5137
      %5139 = vst [vmem:[#allocation2 + $0x38] sm:$0x1] %v5138
      %v5140 = vld [vmem:[#allocation2 + $0x40] sm:$0x1]
      %v5141 = vsel %vm5115, 0, %v5140
      %5142 = vst [vmem:[#allocation2 + $0x40] sm:$0x1] %v5141
      %v5143 = vld [vmem:[#allocation2 + $0x48] sm:$0x1]
      %v5144 = vsel %vm5115, 0, %v5143
      %5145 = vst [vmem:[#allocation2 + $0x48] sm:$0x1] %v5144
      %v5146 = vld [vmem:[#allocation2 + $0x50] sm:$0x1]
      %v5147 = vsel %vm5115, 0, %v5146
      %5148 = vst [vmem:[#allocation2 + $0x50] sm:$0x1] %v5147
      %v5149 = vld [vmem:[#allocation2 + $0x58] sm:$0x1]
      %v5150 = vsel %vm5115, 0, %v5149
      %5151 = vst [vmem:[#allocation2 + $0x58] sm:$0x1] %v5150
      %v5152 = vld [vmem:[#allocation2 + $0x60] sm:$0x1]
      %v5153 = vsel %vm5115, 0, %v5152
      %5154 = vst [vmem:[#allocation2 + $0x60] sm:$0x1] %v5153
      %v5155 = vld [vmem:[#allocation2 + $0x68] sm:$0x1]
      %v5156 = vsel %vm5115, 0, %v5155
      %5157 = vst [vmem:[#allocation2 + $0x68] sm:$0x1] %v5156
      %v5158 = vld [vmem:[#allocation2 + $0x70] sm:$0x1]
      %v5159 = vsel %vm5115, 0, %v5158
      %5160 = vst [vmem:[#allocation2 + $0x70] sm:$0x1] %v5159
      %v5161 = vld [vmem:[#allocation2 + $0x78] sm:$0x1]
      %v5162 = vsel %vm5115, 0, %v5161
      %5163 = vst [vmem:[#allocation2 + $0x78] sm:$0x1] %v5162
      %vm5164 = vcmask 257027
      %vm5165 = vsmask.f32 7950
      %vm5166 = vmand %vm5164, %vm5165
      %v5167 = vld [vmem:[#allocation2 + $0x4] sm:$0x8]
      %v5168 = vsel %vm5166, 0, %v5167
      %5169 = vst [vmem:[#allocation2 + $0x4] sm:$0x8] %v5168
      %v5170 = vld [vmem:[#allocation2 + $0xc] sm:$0x8]
      %v5171 = vsel %vm5166, 0, %v5170
      %5172 = vst [vmem:[#allocation2 + $0xc] sm:$0x8] %v5171
      %v5173 = vld [vmem:[#allocation2 + $0x14] sm:$0x8]
      %v5174 = vsel %vm5166, 0, %v5173
      %5175 = vst [vmem:[#allocation2 + $0x14] sm:$0x8] %v5174
      %v5176 = vld [vmem:[#allocation2 + $0x1c] sm:$0x8]
      %v5177 = vsel %vm5166, 0, %v5176
      %5178 = vst [vmem:[#allocation2 + $0x1c] sm:$0x8] %v5177
      %v5179 = vld [vmem:[#allocation2 + $0x24] sm:$0x8]
      %v5180 = vsel %vm5166, 0, %v5179
      %5181 = vst [vmem:[#allocation2 + $0x24] sm:$0x8] %v5180
      %v5182 = vld [vmem:[#allocation2 + $0x2c] sm:$0x8]
      %v5183 = vsel %vm5166, 0, %v5182
      %5184 = vst [vmem:[#allocation2 + $0x2c] sm:$0x8] %v5183
      %v5185 = vld [vmem:[#allocation2 + $0x34] sm:$0x8]
      %v5186 = vsel %vm5166, 0, %v5185
      %5187 = vst [vmem:[#allocation2 + $0x34] sm:$0x8] %v5186
      %v5188 = vld [vmem:[#allocation2 + $0x3c] sm:$0x8]
      %v5189 = vsel %vm5166, 0, %v5188
      %5190 = vst [vmem:[#allocation2 + $0x3c] sm:$0x8] %v5189
      %v5191 = vld [vmem:[#allocation2 + $0x44] sm:$0x8]
      %v5192 = vsel %vm5166, 0, %v5191
      %5193 = vst [vmem:[#allocation2 + $0x44] sm:$0x8] %v5192
      %v5194 = vld [vmem:[#allocation2 + $0x4c] sm:$0x8]
      %v5195 = vsel %vm5166, 0, %v5194
      %5196 = vst [vmem:[#allocation2 + $0x4c] sm:$0x8] %v5195
      %v5197 = vld [vmem:[#allocation2 + $0x54] sm:$0x8]
      %v5198 = vsel %vm5166, 0, %v5197
      %5199 = vst [vmem:[#allocation2 + $0x54] sm:$0x8] %v5198
      %v5200 = vld [vmem:[#allocation2 + $0x5c] sm:$0x8]
      %v5201 = vsel %vm5166, 0, %v5200
      %5202 = vst [vmem:[#allocation2 + $0x5c] sm:$0x8] %v5201
      %v5203 = vld [vmem:[#allocation2 + $0x64] sm:$0x8]
      %v5204 = vsel %vm5166, 0, %v5203
      %5205 = vst [vmem:[#allocation2 + $0x64] sm:$0x8] %v5204
      %v5206 = vld [vmem:[#allocation2 + $0x6c] sm:$0x8]
      %v5207 = vsel %vm5166, 0, %v5206
      %5208 = vst [vmem:[#allocation2 + $0x6c] sm:$0x8] %v5207
      %v5209 = vld [vmem:[#allocation2 + $0x74] sm:$0x8]
      %v5210 = vsel %vm5166, 0, %v5209
      %5211 = vst [vmem:[#allocation2 + $0x74] sm:$0x8] %v5210
      %v5212 = vld [vmem:[#allocation2 + $0x7c] sm:$0x8]
      %v5213 = vsel %vm5166, 0, %v5212
      %5214 = vst [vmem:[#allocation2 + $0x7c] sm:$0x8] %v5213
      %v5215 = vpack.c.bf16 %v4521, %v4521
      %v5216 = vpack.c.bf16 %v4524, %v4524
      %v5217 = vpack.c.bf16 %v4527, %v4527
      %v5218 = vpack.c.bf16 %v4530, %v4530
      %v5219 = vpack.c.bf16 %v4533, %v4533
      %v5220 = vpack.c.bf16 %v4536, %v4536
      %v5221 = vpack.c.bf16 %v4539, %v4539
      %v5222 = vpack.c.bf16 %v4542, %v4542
      %v5223 = vpack.c.bf16 %v4545, %v4545
      %v5224 = vpack.c.bf16 %v4548, %v4548
      %v5225 = vpack.c.bf16 %v4551, %v4551
      %v5226 = vpack.c.bf16 %v4554, %v4554
      %v5227 = vpack.c.bf16 %v4557, %v4557
      %v5228 = vpack.c.bf16 %v4560, %v4560
      %v5229 = vpack.c.bf16 %v4563, %v4563
      %v5230 = vpack.c.bf16 %v4566, %v4566
      %v5231 = vpack.c.bf16 %v4569, %v4569
      %v5232 = vpack.c.bf16 %v4572, %v4572
      %v5233 = vpack.c.bf16 %v4575, %v4575
      %v5234 = vpack.c.bf16 %v4578, %v4578
      %v5235 = vpack.c.bf16 %v4581, %v4581
      %v5236 = vpack.c.bf16 %v4584, %v4584
      %v5237 = vpack.c.bf16 %v4587, %v4587
      %v5238 = vpack.c.bf16 %v4590, %v4590
      %v5239 = vpack.c.bf16 %v4593, %v4593
      %v5240 = vpack.c.bf16 %v4596, %v4596
      %v5241 = vpack.c.bf16 %v4599, %v4599
      %v5242 = vpack.c.bf16 %v4602, %v4602
      %v5243 = vpack.c.bf16 %v4605, %v4605
      %v5244 = vpack.c.bf16 %v4608, %v4608
      %v5245 = vpack.c.bf16 %v4611, %v4611
      %v5246 = vpack.c.bf16 %v4614, %v4614
      %v5247 = vpack.c.bf16 %v4617, %v4617
      %v5248 = vpack.c.bf16 %v4620, %v4620
      %v5249 = vpack.c.bf16 %v4623, %v4623
      %v5250 = vpack.c.bf16 %v4626, %v4626
      %v5251 = vpack.c.bf16 %v4629, %v4629
      %v5252 = vpack.c.bf16 %v4632, %v4632
      %v5253 = vpack.c.bf16 %v4635, %v4635
      %v5254 = vpack.c.bf16 %v4638, %v4638
      %v5255 = vpack.c.bf16 %v4641, %v4641
      %v5256 = vpack.c.bf16 %v4644, %v4644
      %v5257 = vpack.c.bf16 %v4647, %v4647
      %v5258 = vpack.c.bf16 %v4650, %v4650
      %v5259 = vpack.c.bf16 %v4653, %v4653
      %v5260 = vpack.c.bf16 %v4656, %v4656
      %v5261 = vpack.c.bf16 %v4659, %v4659
      %v5262 = vpack.c.bf16 %v4662, %v4662
      %v5263 = vpack.c.bf16 %v4665, %v4665
      %v5264 = vpack.c.bf16 %v4668, %v4668
      %v5265 = vpack.c.bf16 %v4671, %v4671
      %v5266 = vpack.c.bf16 %v4674, %v4674
      %v5267 = vpack.c.bf16 %v4677, %v4677
      %v5268 = vpack.c.bf16 %v4680, %v4680
      %v5269 = vpack.c.bf16 %v4683, %v4683
      %v5270 = vpack.c.bf16 %v4686, %v4686
      %v5271 = vpack.c.bf16 %v4689, %v4689
      %v5272 = vpack.c.bf16 %v4692, %v4692
      %v5273 = vpack.c.bf16 %v4695, %v4695
      %v5274 = vpack.c.bf16 %v4698, %v4698
      %v5275 = vpack.c.bf16 %v4701, %v4701
      %v5276 = vpack.c.bf16 %v4704, %v4704
      %v5277 = vpack.c.bf16 %v4707, %v4707
      %v5278 = vpack.c.bf16 %v4710, %v4710
      %v5279 = vpack.c.bf16 %v4713, %v4713
      %v5280 = vpack.c.bf16 %v4716, %v4716
      %v5281 = vpack.c.bf16 %v4719, %v4719
      %v5282 = vpack.c.bf16 %v4722, %v4722
      %v5283 = vpack.c.bf16 %v4725, %v4725
      %v5284 = vpack.c.bf16 %v4728, %v4728
      %v5285 = vpack.c.bf16 %v4731, %v4731
      %v5286 = vpack.c.bf16 %v4734, %v4734
      %v5287 = vpack.c.bf16 %v4737, %v4737
      %v5288 = vpack.c.bf16 %v4740, %v4740
      %v5289 = vpack.c.bf16 %v4743, %v4743
      %v5290 = vpack.c.bf16 %v4746, %v4746
      %v5291 = vpack.c.bf16 %v4749, %v4749
      %v5292 = vpack.c.bf16 %v4752, %v4752
      %v5293 = vpack.c.bf16 %v4755, %v4755
      %v5294 = vpack.c.bf16 %v4758, %v4758
      %v5295 = vpack.c.bf16 %v4761, %v4761
      %v5296 = vpack.c.bf16 %v4764, %v4764
      %v5297 = vpack.c.bf16 %v4767, %v4767
      %v5298 = vpack.c.bf16 %v4770, %v4770
      %v5299 = vpack.c.bf16 %v4773, %v4773
      %v5300 = vpack.c.bf16 %v4776, %v4776
      %v5301 = vpack.c.bf16 %v4779, %v4779
      %v5302 = vpack.c.bf16 %v4782, %v4782
      %v5303 = vpack.c.bf16 %v4785, %v4785
      %v5304 = vpack.c.bf16 %v4788, %v4788
      %v5305 = vpack.c.bf16 %v4791, %v4791
      %v5306 = vpack.c.bf16 %v4794, %v4794
      %v5307 = vpack.c.bf16 %v4797, %v4797
      %v5308 = vpack.c.bf16 %v4800, %v4800
      %v5309 = vpack.c.bf16 %v4803, %v4803
      %v5310 = vpack.c.bf16 %v4806, %v4806
      %v5311 = vpack.c.bf16 %v4809, %v4809
      %v5312 = vpack.c.bf16 %v4812, %v4812
      %v5313 = vpack.c.bf16 %v4815, %v4815
      %v5314 = vpack.c.bf16 %v4818, %v4818
      %v5315 = vpack.c.bf16 %v4821, %v4821
      %v5316 = vpack.c.bf16 %v4824, %v4824
      %v5317 = vpack.c.bf16 %v4827, %v4827
      %v5318 = vpack.c.bf16 %v4830, %v4830
      %v5319 = vpack.c.bf16 %v4833, %v4833
      %v5320 = vpack.c.bf16 %v4836, %v4836
      %v5321 = vpack.c.bf16 %v4839, %v4839
      %v5322 = vpack.c.bf16 %v4842, %v4842
      %v5323 = vpack.c.bf16 %v4845, %v4845
      %v5324 = vpack.c.bf16 %v4848, %v4848
      %v5325 = vpack.c.bf16 %v4851, %v4851
      %v5326 = vpack.c.bf16 %v4854, %v4854
      %v5327 = vpack.c.bf16 %v4857, %v4857
      %v5328 = vpack.c.bf16 %v4860, %v4860
      %v5329 = vpack.c.bf16 %v4863, %v4863
      %v5330 = vpack.c.bf16 %v4866, %v4866
      %v5331 = vpack.c.bf16 %v4869, %v4869
      %v5332 = vpack.c.bf16 %v4872, %v4872
      %v5333 = vpack.c.bf16 %v4875, %v4875
      %v5334 = vpack.c.bf16 %v4878, %v4878
      %v5335 = vpack.c.bf16 %v4881, %v4881
      %v5336 = vpack.c.bf16 %v4884, %v4884
      %v5337 = vpack.c.bf16 %v4887, %v4887
      %v5338 = vpack.c.bf16 %v4890, %v4890
      %v5339 = vpack.c.bf16 %v4893, %v4893
      %v5340 = vpack.c.bf16 %v4896, %v4896
      %v5341 = vpack.c.bf16 %v4899, %v4899
      %v5342 = vpack.c.bf16 %v4902, %v4902
      %v5343 = vpack.c.bf16 %v4905, %v4905
      %v5344 = vpack.c.bf16 %v4908, %v4908
      %v5345 = vpack.c.bf16 %v4911, %v4911
      %v5346 = vpack.c.bf16 %v4914, %v4914
      %v5347 = vpack.c.bf16 %v4917, %v4917
      %v5348 = vpack.c.bf16 %v4920, %v4920
      %v5349 = vpack.c.bf16 %v4923, %v4923
      %v5350 = vpack.c.bf16 %v4926, %v4926
      %v5351 = vpack.c.bf16 %v4929, %v4929
      %v5352 = vpack.c.bf16 %v4932, %v4932
      %v5353 = vpack.c.bf16 %v4935, %v4935
      %v5354 = vpack.c.bf16 %v4938, %v4938
      %v5355 = vpack.c.bf16 %v4941, %v4941
      %v5356 = vpack.c.bf16 %v4944, %v4944
      %v5357 = vpack.c.bf16 %v4947, %v4947
      %v5358 = vpack.c.bf16 %v4950, %v4950
      %v5359 = vpack.c.bf16 %v4953, %v4953
      %v5360 = vpack.c.bf16 %v4956, %v4956
      %v5361 = vpack.c.bf16 %v4959, %v4959
      %v5362 = vpack.c.bf16 %v4962, %v4962
      %v5363 = vpack.c.bf16 %v4965, %v4965
      %v5364 = vpack.c.bf16 %v4968, %v4968
      %v5365 = vpack.c.bf16 %v4971, %v4971
      %v5366 = vpack.c.bf16 %v4974, %v4974
      %v5367 = vpack.c.bf16 %v4977, %v4977
      %v5368 = vpack.c.bf16 %v4980, %v4980
      %v5369 = vpack.c.bf16 %v4983, %v4983
      %v5370 = vpack.c.bf16 %v4986, %v4986
      %v5371 = vpack.c.bf16 %v4989, %v4989
      %v5372 = vpack.c.bf16 %v4992, %v4992
      %v5373 = vpack.c.bf16 %v4995, %v4995
      %v5374 = vpack.c.bf16 %v4998, %v4998
      %v5375 = vpack.c.bf16 %v5001, %v5001
      %v5376 = vpack.c.bf16 %v5004, %v5004
      %v5377 = vpack.c.bf16 %v5007, %v5007
      %v5378 = vpack.c.bf16 %v5010, %v5010
      %v5379 = vpack.c.bf16 %v5013, %v5013
      %v5380 = vpack.c.bf16 %v5016, %v5016
      %v5381 = vpack.c.bf16 %v5019, %v5019
      %v5382 = vpack.c.bf16 %v5022, %v5022
      %v5383 = vpack.c.bf16 %v5025, %v5025
      %v5384 = vpack.c.bf16 %v5028, %v5028
      %v5385 = vpack.c.bf16 %v5031, %v5031
      %v5386 = vpack.c.bf16 %v5034, %v5034
      %v5387 = vpack.c.bf16 %v5037, %v5037
      %v5388 = vpack.c.bf16 %v5040, %v5040
      %v5389 = vpack.c.bf16 %v5043, %v5043
      %v5390 = vpack.c.bf16 %v5046, %v5046
      %v5391 = vpack.c.bf16 %v5049, %v5049
      %v5392 = vpack.c.bf16 %v5052, %v5052
      %v5393 = vpack.c.bf16 %v5055, %v5055
      %v5394 = vpack.c.bf16 %v5058, %v5058
      %v5395 = vpack.c.bf16 %v5061, %v5061
      %v5396 = vpack.c.bf16 %v5064, %v5064
      %v5397 = vpack.c.bf16 %v5067, %v5067
      %v5398 = vpack.c.bf16 %v5070, %v5070
      %v5399 = vpack.c.bf16 %v5073, %v5073
      %v5400 = vpack.c.bf16 %v5076, %v5076
      %v5401 = vpack.c.bf16 %v5079, %v5079
      %v5402 = vpack.c.bf16 %v5082, %v5082
      %v5403 = vpack.c.bf16 %v5085, %v5085
      %v5404 = vpack.c.bf16 %v5088, %v5088
      %v5405 = vpack.c.bf16 %v5091, %v5091
      %v5406 = vpack.c.bf16 %v5094, %v5094
      %v5407 = vpack.c.bf16 %v5097, %v5097
      %v5408 = vpack.c.bf16 %v5100, %v5100
      %v5409 = vpack.c.bf16 %v5103, %v5103
      %v5410 = vpack.c.bf16 %v5106, %v5106
      %v5607 = vunpack.c.l.b16 %v5215
      %v5608 = vunpack.c.l.b16 %v5216
      %v5609 = vunpack.c.l.b16 %v5217
      %v5610 = vunpack.c.l.b16 %v5218
      %v5611 = vunpack.c.l.b16 %v5219
      %v5612 = vunpack.c.l.b16 %v5220
      %v5613 = vunpack.c.l.b16 %v5221
      %v5614 = vunpack.c.l.b16 %v5222
      %v5615 = vunpack.c.l.b16 %v5223
      %v5616 = vunpack.c.l.b16 %v5224
      %v5617 = vunpack.c.l.b16 %v5225
      %v5618 = vunpack.c.l.b16 %v5226
      %v5619 = vunpack.c.l.b16 %v5227
      %v5620 = vunpack.c.l.b16 %v5228
      %v5621 = vunpack.c.l.b16 %v5229
      %v5622 = vunpack.c.l.b16 %v5230
      %v5623 = vunpack.c.l.b16 %v5231
      %v5624 = vunpack.c.l.b16 %v5232
      %v5625 = vunpack.c.l.b16 %v5233
      %v5626 = vunpack.c.l.b16 %v5234
      %v5627 = vunpack.c.l.b16 %v5235
      %v5628 = vunpack.c.l.b16 %v5236
      %v5629 = vunpack.c.l.b16 %v5237
      %v5630 = vunpack.c.l.b16 %v5238
      %v5631 = vunpack.c.l.b16 %v5239
      %v5632 = vunpack.c.l.b16 %v5240
      %v5633 = vunpack.c.l.b16 %v5241
      %v5634 = vunpack.c.l.b16 %v5242
      %v5635 = vunpack.c.l.b16 %v5243
      %v5636 = vunpack.c.l.b16 %v5244
      %v5637 = vunpack.c.l.b16 %v5245
      %v5638 = vunpack.c.l.b16 %v5246
      %v5639 = vunpack.c.l.b16 %v5247
      %v5640 = vunpack.c.l.b16 %v5248
      %v5641 = vunpack.c.l.b16 %v5249
      %v5642 = vunpack.c.l.b16 %v5250
      %v5643 = vunpack.c.l.b16 %v5251
      %v5644 = vunpack.c.l.b16 %v5252
      %v5645 = vunpack.c.l.b16 %v5253
      %v5646 = vunpack.c.l.b16 %v5254
      %v5647 = vunpack.c.l.b16 %v5255
      %v5648 = vunpack.c.l.b16 %v5256
      %v5649 = vunpack.c.l.b16 %v5257
      %v5650 = vunpack.c.l.b16 %v5258
      %v5651 = vunpack.c.l.b16 %v5259
      %v5652 = vunpack.c.l.b16 %v5260
      %v5653 = vunpack.c.l.b16 %v5261
      %v5654 = vunpack.c.l.b16 %v5262
      %v5655 = vunpack.c.l.b16 %v5263
      %v5656 = vunpack.c.l.b16 %v5264
      %v5657 = vunpack.c.l.b16 %v5265
      %v5658 = vunpack.c.l.b16 %v5266
      %v5659 = vunpack.c.l.b16 %v5267
      %v5660 = vunpack.c.l.b16 %v5268
      %v5661 = vunpack.c.l.b16 %v5269
      %v5662 = vunpack.c.l.b16 %v5270
      %v5663 = vunpack.c.l.b16 %v5271
      %v5664 = vunpack.c.l.b16 %v5272
      %v5665 = vunpack.c.l.b16 %v5273
      %v5666 = vunpack.c.l.b16 %v5274
      %v5667 = vunpack.c.l.b16 %v5275
      %v5668 = vunpack.c.l.b16 %v5276
      %v5669 = vunpack.c.l.b16 %v5277
      %v5670 = vunpack.c.l.b16 %v5278
      %v5671 = vunpack.c.l.b16 %v5279
      %v5672 = vunpack.c.l.b16 %v5280
      %v5673 = vunpack.c.l.b16 %v5281
      %v5674 = vunpack.c.l.b16 %v5282
      %v5675 = vunpack.c.l.b16 %v5283
      %v5676 = vunpack.c.l.b16 %v5284
      %v5677 = vunpack.c.l.b16 %v5285
      %v5678 = vunpack.c.l.b16 %v5286
      %v5679 = vunpack.c.l.b16 %v5287
      %v5680 = vunpack.c.l.b16 %v5288
      %v5681 = vunpack.c.l.b16 %v5289
      %v5682 = vunpack.c.l.b16 %v5290
      %v5683 = vunpack.c.l.b16 %v5291
      %v5684 = vunpack.c.l.b16 %v5292
      %v5685 = vunpack.c.l.b16 %v5293
      %v5686 = vunpack.c.l.b16 %v5294
      %v5687 = vunpack.c.l.b16 %v5295
      %v5688 = vunpack.c.l.b16 %v5296
      %v5689 = vunpack.c.l.b16 %v5297
      %v5690 = vunpack.c.l.b16 %v5298
      %v5691 = vunpack.c.l.b16 %v5299
      %v5692 = vunpack.c.l.b16 %v5300
      %v5693 = vunpack.c.l.b16 %v5301
      %v5694 = vunpack.c.l.b16 %v5302
      %v5695 = vunpack.c.l.b16 %v5303
      %v5696 = vunpack.c.l.b16 %v5304
      %v5697 = vunpack.c.l.b16 %v5305
      %v5698 = vunpack.c.l.b16 %v5306
      %v5699 = vunpack.c.l.b16 %v5307
      %v5700 = vunpack.c.l.b16 %v5308
      %v5701 = vunpack.c.l.b16 %v5309
      %v5702 = vunpack.c.l.b16 %v5310
      %v5703 = vunpack.c.l.b16 %v5311
      %v5704 = vunpack.c.l.b16 %v5312
      %v5705 = vunpack.c.l.b16 %v5313
      %v5706 = vunpack.c.l.b16 %v5314
      %v5707 = vunpack.c.l.b16 %v5315
      %v5708 = vunpack.c.l.b16 %v5316
      %v5709 = vunpack.c.l.b16 %v5317
      %v5710 = vunpack.c.l.b16 %v5318
      %v5711 = vunpack.c.l.b16 %v5319
      %v5712 = vunpack.c.l.b16 %v5320
      %v5713 = vunpack.c.l.b16 %v5321
      %v5714 = vunpack.c.l.b16 %v5322
      %v5715 = vunpack.c.l.b16 %v5323
      %v5716 = vunpack.c.l.b16 %v5324
      %v5717 = vunpack.c.l.b16 %v5325
      %v5718 = vunpack.c.l.b16 %v5326
      %v5719 = vunpack.c.l.b16 %v5327
      %v5720 = vunpack.c.l.b16 %v5328
      %v5721 = vunpack.c.l.b16 %v5329
      %v5722 = vunpack.c.l.b16 %v5330
      %v5723 = vunpack.c.l.b16 %v5331
      %v5724 = vunpack.c.l.b16 %v5332
      %v5725 = vunpack.c.l.b16 %v5333
      %v5726 = vunpack.c.l.b16 %v5334
      %v5727 = vunpack.c.l.b16 %v5335
      %v5728 = vunpack.c.l.b16 %v5336
      %v5729 = vunpack.c.l.b16 %v5337
      %v5730 = vunpack.c.l.b16 %v5338
      %v5731 = vunpack.c.l.b16 %v5339
      %v5732 = vunpack.c.l.b16 %v5340
      %v5733 = vunpack.c.l.b16 %v5341
      %v5734 = vunpack.c.l.b16 %v5342
      %v5735 = vunpack.c.l.b16 %v5343
      %v5736 = vunpack.c.l.b16 %v5344
      %v5737 = vunpack.c.l.b16 %v5345
      %v5738 = vunpack.c.l.b16 %v5346
      %v5739 = vunpack.c.l.b16 %v5347
      %v5740 = vunpack.c.l.b16 %v5348
      %v5741 = vunpack.c.l.b16 %v5349
      %v5742 = vunpack.c.l.b16 %v5350
      %v5743 = vunpack.c.l.b16 %v5351
      %v5744 = vunpack.c.l.b16 %v5352
      %v5745 = vunpack.c.l.b16 %v5353
      %v5746 = vunpack.c.l.b16 %v5354
      %v5747 = vunpack.c.l.b16 %v5355
      %v5748 = vunpack.c.l.b16 %v5356
      %v5749 = vunpack.c.l.b16 %v5357
      %v5750 = vunpack.c.l.b16 %v5358
      %v5751 = vunpack.c.l.b16 %v5359
      %v5752 = vunpack.c.l.b16 %v5360
      %v5753 = vunpack.c.l.b16 %v5361
      %v5754 = vunpack.c.l.b16 %v5362
      %v5755 = vunpack.c.l.b16 %v5363
      %v5756 = vunpack.c.l.b16 %v5364
      %v5757 = vunpack.c.l.b16 %v5365
      %v5758 = vunpack.c.l.b16 %v5366
      %v5759 = vunpack.c.l.b16 %v5367
      %v5760 = vunpack.c.l.b16 %v5368
      %v5761 = vunpack.c.l.b16 %v5369
      %v5762 = vunpack.c.l.b16 %v5370
      %v5763 = vunpack.c.l.b16 %v5371
      %v5764 = vunpack.c.l.b16 %v5372
      %v5765 = vunpack.c.l.b16 %v5373
      %v5766 = vunpack.c.l.b16 %v5374
      %v5767 = vunpack.c.l.b16 %v5375
      %v5768 = vunpack.c.l.b16 %v5376
      %v5769 = vunpack.c.l.b16 %v5377
      %v5770 = vunpack.c.l.b16 %v5378
      %v5771 = vunpack.c.l.b16 %v5379
      %v5772 = vunpack.c.l.b16 %v5380
      %v5773 = vunpack.c.l.b16 %v5381
      %v5774 = vunpack.c.l.b16 %v5382
      %v5775 = vunpack.c.l.b16 %v5383
      %v5776 = vunpack.c.l.b16 %v5384
      %v5777 = vunpack.c.l.b16 %v5385
      %v5778 = vunpack.c.l.b16 %v5386
      %v5779 = vunpack.c.l.b16 %v5387
      %v5780 = vunpack.c.l.b16 %v5388
      %v5781 = vunpack.c.l.b16 %v5389
      %v5782 = vunpack.c.l.b16 %v5390
      %v5783 = vunpack.c.l.b16 %v5391
      %v5784 = vunpack.c.l.b16 %v5392
      %v5785 = vunpack.c.l.b16 %v5393
      %v5786 = vunpack.c.l.b16 %v5394
      %v5787 = vunpack.c.l.b16 %v5395
      %v5788 = vunpack.c.l.b16 %v5396
      %v5789 = vunpack.c.l.b16 %v5397
      %v5790 = vunpack.c.l.b16 %v5398
      %v5791 = vunpack.c.l.b16 %v5399
      %v5792 = vunpack.c.l.b16 %v5400
      %v5793 = vunpack.c.l.b16 %v5401
      %v5794 = vunpack.c.l.b16 %v5402
      %v5795 = vunpack.c.l.b16 %v5403
      %v5796 = vunpack.c.l.b16 %v5404
      %v5797 = vunpack.c.l.b16 %v5405
      %v5798 = vunpack.c.l.b16 %v5406
      %v5799 = vunpack.c.l.b16 %v5407
      %v5800 = vunpack.c.l.b16 %v5408
      %v5801 = vunpack.c.l.b16 %v5409
      %v5802 = vunpack.c.l.b16 %v5410
      %vm5803 = vcmask 1042434
      %v5804 = vsel %vm5803, %v5608, %v5607
      %vm5805 = vcmask 1043459
      %v5806 = vsel %vm5805, %v5609, %v5804
      %vm5807 = vcmask 1044484
      %v5808 = vsel %vm5807, %v5610, %v5806
      %vm5809 = vcmask 1045509
      %v5810 = vsel %vm5809, %v5611, %v5808
      %vm5811 = vcmask 1046534
      %v5812 = vsel %vm5811, %v5612, %v5810
      %vm5813 = vcmask 1047559
      %v5814 = vsel %vm5813, %v5613, %v5812
      %vm5815 = vcmask 1041409
      %v5816 = vsel %vm5815, %v5615, %v5614
      %v5817 = vsel %vm5803, %v5616, %v5816
      %v5818 = vsel %vm5805, %v5617, %v5817
      %v5819 = vsel %vm5807, %v5618, %v5818
      %v5820 = vsel %vm5809, %v5619, %v5819
      %v5821 = vsel %vm5811, %v5620, %v5820
      %v5822 = vsel %vm5803, %v5622, %v5621
      %v5823 = vsel %vm5805, %v5623, %v5822
      %v5824 = vsel %vm5807, %v5624, %v5823
      %v5825 = vsel %vm5809, %v5625, %v5824
      %v5826 = vsel %vm5811, %v5626, %v5825
      %v5827 = vsel %vm5813, %v5627, %v5826
      %v5828 = vsel %vm5815, %v5629, %v5628
      %v5829 = vsel %vm5803, %v5630, %v5828
      %v5830 = vsel %vm5805, %v5631, %v5829
      %v5831 = vsel %vm5807, %v5632, %v5830
      %v5832 = vsel %vm5809, %v5633, %v5831
      %v5833 = vsel %vm5811, %v5634, %v5832
      %v5834 = vsel %vm5803, %v5636, %v5635
      %v5835 = vsel %vm5805, %v5637, %v5834
      %v5836 = vsel %vm5807, %v5638, %v5835
      %v5837 = vsel %vm5809, %v5639, %v5836
      %v5838 = vsel %vm5811, %v5640, %v5837
      %v5839 = vsel %vm5813, %v5641, %v5838
      %v5840 = vsel %vm5815, %v5643, %v5642
      %v5841 = vsel %vm5803, %v5644, %v5840
      %v5842 = vsel %vm5805, %v5645, %v5841
      %v5843 = vsel %vm5807, %v5646, %v5842
      %v5844 = vsel %vm5809, %v5647, %v5843
      %v5845 = vsel %vm5811, %v5648, %v5844
      %v5846 = vsel %vm5803, %v5650, %v5649
      %v5847 = vsel %vm5805, %v5651, %v5846
      %v5848 = vsel %vm5807, %v5652, %v5847
      %v5849 = vsel %vm5809, %v5653, %v5848
      %v5850 = vsel %vm5811, %v5654, %v5849
      %v5851 = vsel %vm5813, %v5655, %v5850
      %v5852 = vsel %vm5815, %v5657, %v5656
      %v5853 = vsel %vm5803, %v5658, %v5852
      %v5854 = vsel %vm5805, %v5659, %v5853
      %v5855 = vsel %vm5807, %v5660, %v5854
      %v5856 = vsel %vm5809, %v5661, %v5855
      %v5857 = vsel %vm5811, %v5662, %v5856
      %v5858 = vsel %vm5803, %v5664, %v5663
      %v5859 = vsel %vm5805, %v5665, %v5858
      %v5860 = vsel %vm5807, %v5666, %v5859
      %v5861 = vsel %vm5809, %v5667, %v5860
      %v5862 = vsel %vm5811, %v5668, %v5861
      %v5863 = vsel %vm5813, %v5669, %v5862
      %v5864 = vsel %vm5815, %v5671, %v5670
      %v5865 = vsel %vm5803, %v5672, %v5864
      %v5866 = vsel %vm5805, %v5673, %v5865
      %v5867 = vsel %vm5807, %v5674, %v5866
      %v5868 = vsel %vm5809, %v5675, %v5867
      %v5869 = vsel %vm5811, %v5676, %v5868
      %v5870 = vsel %vm5803, %v5678, %v5677
      %v5871 = vsel %vm5805, %v5679, %v5870
      %v5872 = vsel %vm5807, %v5680, %v5871
      %v5873 = vsel %vm5809, %v5681, %v5872
      %v5874 = vsel %vm5811, %v5682, %v5873
      %v5875 = vsel %vm5813, %v5683, %v5874
      %v5876 = vsel %vm5815, %v5685, %v5684
      %v5877 = vsel %vm5803, %v5686, %v5876
      %v5878 = vsel %vm5805, %v5687, %v5877
      %v5879 = vsel %vm5807, %v5688, %v5878
      %v5880 = vsel %vm5809, %v5689, %v5879
      %v5881 = vsel %vm5811, %v5690, %v5880
      %v5882 = vsel %vm5803, %v5692, %v5691
      %v5883 = vsel %vm5805, %v5693, %v5882
      %v5884 = vsel %vm5807, %v5694, %v5883
      %v5885 = vsel %vm5809, %v5695, %v5884
      %v5886 = vsel %vm5811, %v5696, %v5885
      %v5887 = vsel %vm5813, %v5697, %v5886
      %v5888 = vsel %vm5815, %v5699, %v5698
      %v5889 = vsel %vm5803, %v5700, %v5888
      %v5890 = vsel %vm5805, %v5701, %v5889
      %v5891 = vsel %vm5807, %v5702, %v5890
      %v5892 = vsel %vm5809, %v5703, %v5891
      %v5893 = vsel %vm5811, %v5704, %v5892
      %v5894 = vsel %vm5803, %v5706, %v5705
      %v5895 = vsel %vm5805, %v5707, %v5894
      %v5896 = vsel %vm5807, %v5708, %v5895
      %v5897 = vsel %vm5809, %v5709, %v5896
      %v5898 = vsel %vm5811, %v5710, %v5897
      %v5899 = vsel %vm5813, %v5711, %v5898
      %v5900 = vsel %vm5815, %v5713, %v5712
      %v5901 = vsel %vm5803, %v5714, %v5900
      %v5902 = vsel %vm5805, %v5715, %v5901
      %v5903 = vsel %vm5807, %v5716, %v5902
      %v5904 = vsel %vm5809, %v5717, %v5903
      %v5905 = vsel %vm5811, %v5718, %v5904
      %v5906 = vsel %vm5803, %v5720, %v5719
      %v5907 = vsel %vm5805, %v5721, %v5906
      %v5908 = vsel %vm5807, %v5722, %v5907
      %v5909 = vsel %vm5809, %v5723, %v5908
      %v5910 = vsel %vm5811, %v5724, %v5909
      %v5911 = vsel %vm5813, %v5725, %v5910
      %v5912 = vsel %vm5815, %v5727, %v5726
      %v5913 = vsel %vm5803, %v5728, %v5912
      %v5914 = vsel %vm5805, %v5729, %v5913
      %v5915 = vsel %vm5807, %v5730, %v5914
      %v5916 = vsel %vm5809, %v5731, %v5915
      %v5917 = vsel %vm5811, %v5732, %v5916
      %v5918 = vsel %vm5803, %v5734, %v5733
      %v5919 = vsel %vm5805, %v5735, %v5918
      %v5920 = vsel %vm5807, %v5736, %v5919
      %v5921 = vsel %vm5809, %v5737, %v5920
      %v5922 = vsel %vm5811, %v5738, %v5921
      %v5923 = vsel %vm5813, %v5739, %v5922
      %v5924 = vsel %vm5815, %v5741, %v5740
      %v5925 = vsel %vm5803, %v5742, %v5924
      %v5926 = vsel %vm5805, %v5743, %v5925
      %v5927 = vsel %vm5807, %v5744, %v5926
      %v5928 = vsel %vm5809, %v5745, %v5927
      %v5929 = vsel %vm5811, %v5746, %v5928
      %v5930 = vsel %vm5803, %v5748, %v5747
      %v5931 = vsel %vm5805, %v5749, %v5930
      %v5932 = vsel %vm5807, %v5750, %v5931
      %v5933 = vsel %vm5809, %v5751, %v5932
      %v5934 = vsel %vm5811, %v5752, %v5933
      %v5935 = vsel %vm5813, %v5753, %v5934
      %v5936 = vsel %vm5815, %v5755, %v5754
      %v5937 = vsel %vm5803, %v5756, %v5936
      %v5938 = vsel %vm5805, %v5757, %v5937
      %v5939 = vsel %vm5807, %v5758, %v5938
      %v5940 = vsel %vm5809, %v5759, %v5939
      %v5941 = vsel %vm5811, %v5760, %v5940
      %v5942 = vsel %vm5803, %v5762, %v5761
      %v5943 = vsel %vm5805, %v5763, %v5942
      %v5944 = vsel %vm5807, %v5764, %v5943
      %v5945 = vsel %vm5809, %v5765, %v5944
      %v5946 = vsel %vm5811, %v5766, %v5945
      %v5947 = vsel %vm5813, %v5767, %v5946
      %v5948 = vsel %vm5815, %v5769, %v5768
      %v5949 = vsel %vm5803, %v5770, %v5948
      %v5950 = vsel %vm5805, %v5771, %v5949
      %v5951 = vsel %vm5807, %v5772, %v5950
      %v5952 = vsel %vm5809, %v5773, %v5951
      %v5953 = vsel %vm5811, %v5774, %v5952
      %v5954 = vsel %vm5803, %v5776, %v5775
      %v5955 = vsel %vm5805, %v5777, %v5954
      %v5956 = vsel %vm5807, %v5778, %v5955
      %v5957 = vsel %vm5809, %v5779, %v5956
      %v5958 = vsel %vm5811, %v5780, %v5957
      %v5959 = vsel %vm5813, %v5781, %v5958
      %v5960 = vsel %vm5815, %v5783, %v5782
      %v5961 = vsel %vm5803, %v5784, %v5960
      %v5962 = vsel %vm5805, %v5785, %v5961
      %v5963 = vsel %vm5807, %v5786, %v5962
      %v5964 = vsel %vm5809, %v5787, %v5963
      %v5965 = vsel %vm5811, %v5788, %v5964
      %v5966 = vsel %vm5803, %v5790, %v5789
      %v5967 = vsel %vm5805, %v5791, %v5966
      %v5968 = vsel %vm5807, %v5792, %v5967
      %v5969 = vsel %vm5809, %v5793, %v5968
      %v5970 = vsel %vm5811, %v5794, %v5969
      %v5971 = vsel %vm5813, %v5795, %v5970
      %v5972 = vsel %vm5815, %v5797, %v5796
      %v5973 = vsel %vm5803, %v5798, %v5972
      %v5974 = vsel %vm5805, %v5799, %v5973
      %v5975 = vsel %vm5807, %v5800, %v5974
      %v5976 = vsel %vm5809, %v5801, %v5975
      %v5977 = vsel %vm5811, %v5802, %v5976
      %v5978 = vpack.c.b16 %v5814, %v5814
      %v5979 = vpack.c.b16 %v5821, %v5821
      %v5980 = vpack.c.b16 %v5827, %v5827
      %v5981 = vpack.c.b16 %v5833, %v5833
      %v5982 = vpack.c.b16 %v5839, %v5839
      %v5983 = vpack.c.b16 %v5845, %v5845
      %v5984 = vpack.c.b16 %v5851, %v5851
      %v5985 = vpack.c.b16 %v5857, %v5857
      %v5986 = vpack.c.b16 %v5863, %v5863
      %v5987 = vpack.c.b16 %v5869, %v5869
      %v5988 = vpack.c.b16 %v5875, %v5875
      %v5989 = vpack.c.b16 %v5881, %v5881
      %v5990 = vpack.c.b16 %v5887, %v5887
      %v5991 = vpack.c.b16 %v5893, %v5893
      %v5992 = vpack.c.b16 %v5899, %v5899
      %v5993 = vpack.c.b16 %v5905, %v5905
      %v5994 = vpack.c.b16 %v5911, %v5911
      %v5995 = vpack.c.b16 %v5917, %v5917
      %v5996 = vpack.c.b16 %v5923, %v5923
      %v5997 = vpack.c.b16 %v5929, %v5929
      %v5998 = vpack.c.b16 %v5935, %v5935
      %v5999 = vpack.c.b16 %v5941, %v5941
      %v6000 = vpack.c.b16 %v5947, %v5947
      %v6001 = vpack.c.b16 %v5953, %v5953
      %v6002 = vpack.c.b16 %v5959, %v5959
      %v6003 = vpack.c.b16 %v5965, %v5965
      %v6004 = vpack.c.b16 %v5971, %v5971
      %v6005 = vpack.c.b16 %v5977, %v5977
      %s6034 = scalar_lea.vmem [#allocation2], 8
      %vm6035 = vcmask 257024
      %vm6036 = vsmask.f32 7938
      %vm6037 = vmand %vm6035, %vm6036
      %v6038 = vld [vmem:[%s6034] sm:$0xf]
      %v6039 = vsel %vm6037, %v5978, %v6038
      %6040 = vst [vmem:[%s6034] sm:$0xf] %v6039
      %vm6041 = vsmask.f32 3328
      %vm6042 = vmand %vm6035, %vm6041
      %v6043 = vld [vmem:[%s6034 + $0x4] sm:$0xf]
      %v6044 = vsel %vm6042, %v5979, %v6043
      %6045 = vst [vmem:[%s6034 + $0x4] sm:$0xf] %v6044
      %v6046 = vld [vmem:[%s6034 + $0x8] sm:$0xf]
      %v6047 = vsel %vm6037, %v5980, %v6046
      %6048 = vst [vmem:[%s6034 + $0x8] sm:$0xf] %v6047
      %v6049 = vld [vmem:[%s6034 + $0xc] sm:$0xf]
      %v6050 = vsel %vm6042, %v5981, %v6049
      %6051 = vst [vmem:[%s6034 + $0xc] sm:$0xf] %v6050
      %v6052 = vld [vmem:[%s6034 + $0x10] sm:$0xf]
      %v6053 = vsel %vm6037, %v5982, %v6052
      %6054 = vst [vmem:[%s6034 + $0x10] sm:$0xf] %v6053
      %v6055 = vld [vmem:[%s6034 + $0x14] sm:$0xf]
      %v6056 = vsel %vm6042, %v5983, %v6055
      %6057 = vst [vmem:[%s6034 + $0x14] sm:$0xf] %v6056
      %v6058 = vld [vmem:[%s6034 + $0x18] sm:$0xf]
      %v6059 = vsel %vm6037, %v5984, %v6058
      %6060 = vst [vmem:[%s6034 + $0x18] sm:$0xf] %v6059
      %v6061 = vld [vmem:[%s6034 + $0x1c] sm:$0xf]
      %v6062 = vsel %vm6042, %v5985, %v6061
      %6063 = vst [vmem:[%s6034 + $0x1c] sm:$0xf] %v6062
      %v6064 = vld [vmem:[%s6034 + $0x20] sm:$0xf]
      %v6065 = vsel %vm6037, %v5986, %v6064
      %6066 = vst [vmem:[%s6034 + $0x20] sm:$0xf] %v6065
      %v6067 = vld [vmem:[%s6034 + $0x24] sm:$0xf]
      %v6068 = vsel %vm6042, %v5987, %v6067
      %6069 = vst [vmem:[%s6034 + $0x24] sm:$0xf] %v6068
      %v6070 = vld [vmem:[%s6034 + $0x28] sm:$0xf]
      %v6071 = vsel %vm6037, %v5988, %v6070
      %6072 = vst [vmem:[%s6034 + $0x28] sm:$0xf] %v6071
      %v6073 = vld [vmem:[%s6034 + $0x2c] sm:$0xf]
      %v6074 = vsel %vm6042, %v5989, %v6073
      %6075 = vst [vmem:[%s6034 + $0x2c] sm:$0xf] %v6074
      %v6076 = vld [vmem:[%s6034 + $0x30] sm:$0xf]
      %v6077 = vsel %vm6037, %v5990, %v6076
      %6078 = vst [vmem:[%s6034 + $0x30] sm:$0xf] %v6077
      %v6079 = vld [vmem:[%s6034 + $0x34] sm:$0xf]
      %v6080 = vsel %vm6042, %v5991, %v6079
      %6081 = vst [vmem:[%s6034 + $0x34] sm:$0xf] %v6080
      %v6082 = vld [vmem:[%s6034 + $0x38] sm:$0xf]
      %v6083 = vsel %vm6037, %v5992, %v6082
      %6084 = vst [vmem:[%s6034 + $0x38] sm:$0xf] %v6083
      %v6085 = vld [vmem:[%s6034 + $0x3c] sm:$0xf]
      %v6086 = vsel %vm6042, %v5993, %v6085
      %6087 = vst [vmem:[%s6034 + $0x3c] sm:$0xf] %v6086
      %v6088 = vld [vmem:[%s6034 + $0x40] sm:$0xf]
      %v6089 = vsel %vm6037, %v5994, %v6088
      %6090 = vst [vmem:[%s6034 + $0x40] sm:$0xf] %v6089
      %v6091 = vld [vmem:[%s6034 + $0x44] sm:$0xf]
      %v6092 = vsel %vm6042, %v5995, %v6091
      %6093 = vst [vmem:[%s6034 + $0x44] sm:$0xf] %v6092
      %v6094 = vld [vmem:[%s6034 + $0x48] sm:$0xf]
      %v6095 = vsel %vm6037, %v5996, %v6094
      %6096 = vst [vmem:[%s6034 + $0x48] sm:$0xf] %v6095
      %v6097 = vld [vmem:[%s6034 + $0x4c] sm:$0xf]
      %v6098 = vsel %vm6042, %v5997, %v6097
      %6099 = vst [vmem:[%s6034 + $0x4c] sm:$0xf] %v6098
      %v6100 = vld [vmem:[%s6034 + $0x50] sm:$0xf]
      %v6101 = vsel %vm6037, %v5998, %v6100
      %6102 = vst [vmem:[%s6034 + $0x50] sm:$0xf] %v6101
      %v6103 = vld [vmem:[%s6034 + $0x54] sm:$0xf]
      %v6104 = vsel %vm6042, %v5999, %v6103
      %6105 = vst [vmem:[%s6034 + $0x54] sm:$0xf] %v6104
      %v6106 = vld [vmem:[%s6034 + $0x58] sm:$0xf]
      %v6107 = vsel %vm6037, %v6000, %v6106
      %6108 = vst [vmem:[%s6034 + $0x58] sm:$0xf] %v6107
      %v6109 = vld [vmem:[%s6034 + $0x5c] sm:$0xf]
      %v6110 = vsel %vm6042, %v6001, %v6109
      %6111 = vst [vmem:[%s6034 + $0x5c] sm:$0xf] %v6110
      %v6112 = vld [vmem:[%s6034 + $0x60] sm:$0xf]
      %v6113 = vsel %vm6037, %v6002, %v6112
      %6114 = vst [vmem:[%s6034 + $0x60] sm:$0xf] %v6113
      %v6115 = vld [vmem:[%s6034 + $0x64] sm:$0xf]
      %v6116 = vsel %vm6042, %v6003, %v6115
      %6117 = vst [vmem:[%s6034 + $0x64] sm:$0xf] %v6116
      %v6118 = vld [vmem:[%s6034 + $0x68] sm:$0xf]
      %v6119 = vsel %vm6037, %v6004, %v6118
      %6120 = vst [vmem:[%s6034 + $0x68] sm:$0xf] %v6119
      %v6121 = vld [vmem:[%s6034 + $0x6c] sm:$0xf]
      %v6122 = vsel %vm6042, %v6005, %v6121
      %6123 = vst [vmem:[%s6034 + $0x6c] sm:$0xf] %v6122
      %v6124 = vld [vmem:[#allocation2] sm:$0xf]
      %v6125 = vld [vmem:[#allocation2 + $0x4] sm:$0xf]
      %v6126 = vld [vmem:[#allocation2 + $0x8] sm:$0xf]
      %v6127 = vld [vmem:[#allocation2 + $0xc] sm:$0xf]
      %v6128 = vld [vmem:[#allocation2 + $0x10] sm:$0xf]
      %v6129 = vld [vmem:[#allocation2 + $0x14] sm:$0xf]
      %v6130 = vld [vmem:[#allocation2 + $0x18] sm:$0xf]
      %v6131 = vld [vmem:[#allocation2 + $0x1c] sm:$0xf]
      %v6132 = vld [vmem:[#allocation2 + $0x20] sm:$0xf]
      %v6133 = vld [vmem:[#allocation2 + $0x24] sm:$0xf]
      %v6134 = vld [vmem:[#allocation2 + $0x28] sm:$0xf]
      %v6135 = vld [vmem:[#allocation2 + $0x2c] sm:$0xf]
      %v6136 = vld [vmem:[#allocation2 + $0x30] sm:$0xf]
      %v6137 = vld [vmem:[#allocation2 + $0x34] sm:$0xf]
      %v6138 = vld [vmem:[#allocation2 + $0x38] sm:$0xf]
      %v6139 = vld [vmem:[#allocation2 + $0x3c] sm:$0xf]
      %v6140 = vld [vmem:[#allocation2 + $0x40] sm:$0xf]
      %v6141 = vld [vmem:[#allocation2 + $0x44] sm:$0xf]
      %v6142 = vld [vmem:[#allocation2 + $0x48] sm:$0xf]
      %v6143 = vld [vmem:[#allocation2 + $0x4c] sm:$0xf]
      %v6144 = vld [vmem:[#allocation2 + $0x50] sm:$0xf]
      %v6145 = vld [vmem:[#allocation2 + $0x54] sm:$0xf]
      %v6146 = vld [vmem:[#allocation2 + $0x58] sm:$0xf]
      %v6147 = vld [vmem:[#allocation2 + $0x5c] sm:$0xf]
      %v6148 = vld [vmem:[#allocation2 + $0x60] sm:$0xf]
      %v6149 = vld [vmem:[#allocation2 + $0x64] sm:$0xf]
      %v6150 = vld [vmem:[#allocation2 + $0x68] sm:$0xf]
      %v6151 = vld [vmem:[#allocation2 + $0x6c] sm:$0xf]
      %v6152 = vld [vmem:[#allocation2 + $0x70] sm:$0xf]
      %v6153 = vld [vmem:[#allocation2 + $0x74] sm:$0xf]
      %v6154 = vld [vmem:[#allocation2 + $0x78] sm:$0xf]
      %v6155 = vld [vmem:[#allocation2 + $0x7c] sm:$0xf]
      %6156 = vst.msk [vmem:[#allocation3] sm:$0xf] %vm5107, %v6124
      %vm6157 = vcmask 256000
      %6158 = vst.msk [vmem:[#allocation3 + $0xc] sm:$0x7] %vm6157, %v6125
      %6159 = vst.msk [vmem:[#allocation3 + $0x18] sm:$0xf] %vm5107, %v6126
      %6160 = vst.msk [vmem:[#allocation3 + $0x24] sm:$0x7] %vm6157, %v6127
      %6161 = vst.msk [vmem:[#allocation3 + $0x30] sm:$0xf] %vm5107, %v6128
      %6162 = vst.msk [vmem:[#allocation3 + $0x3c] sm:$0x7] %vm6157, %v6129
      %6163 = vst.msk [vmem:[#allocation3 + $0x48] sm:$0xf] %vm5107, %v6130
      %6164 = vst.msk [vmem:[#allocation3 + $0x54] sm:$0x7] %vm6157, %v6131
      %6165 = vst.msk [vmem:[#allocation3 + $0x60] sm:$0xf] %vm5107, %v6132
      %6166 = vst.msk [vmem:[#allocation3 + $0x6c] sm:$0x7] %vm6157, %v6133
      %6167 = vst.msk [vmem:[#allocation3 + $0x78] sm:$0xf] %vm5107, %v6134
      %6168 = vst.msk [vmem:[#allocation3 + $0x84] sm:$0x7] %vm6157, %v6135
      %6169 = vst.msk [vmem:[#allocation3 + $0x90] sm:$0xf] %vm5107, %v6136
      %6170 = vst.msk [vmem:[#allocation3 + $0x9c] sm:$0x7] %vm6157, %v6137
      %6171 = vst.msk [vmem:[#allocation3 + $0xa8] sm:$0xf] %vm5107, %v6138
      %6172 = vst.msk [vmem:[#allocation3 + $0xb4] sm:$0x7] %vm6157, %v6139
      %6173 = vst.msk [vmem:[#allocation3 + $0xc0] sm:$0xf] %vm5107, %v6140
      %6174 = vst.msk [vmem:[#allocation3 + $0xcc] sm:$0x7] %vm6157, %v6141
      %6175 = vst.msk [vmem:[#allocation3 + $0xd8] sm:$0xf] %vm5107, %v6142
      %6176 = vst.msk [vmem:[#allocation3 + $0xe4] sm:$0x7] %vm6157, %v6143
      %6177 = vst.msk [vmem:[#allocation3 + $0xf0] sm:$0xf] %vm5107, %v6144
      %6178 = vst.msk [vmem:[#allocation3 + $0xfc] sm:$0x7] %vm6157, %v6145
      %6179 = vst.msk [vmem:[#allocation3 + $0x108] sm:$0xf] %vm5107, %v6146
      %6180 = vst.msk [vmem:[#allocation3 + $0x114] sm:$0x7] %vm6157, %v6147
      %6181 = vst.msk [vmem:[#allocation3 + $0x120] sm:$0xf] %vm5107, %v6148
      %6182 = vst.msk [vmem:[#allocation3 + $0x12c] sm:$0x7] %vm6157, %v6149
      %6183 = vst.msk [vmem:[#allocation3 + $0x138] sm:$0xf] %vm5107, %v6150
      %6184 = vst.msk [vmem:[#allocation3 + $0x144] sm:$0x7] %vm6157, %v6151
      %vm6185 = vsmask.f32 7440
      %vm6186 = vmor %vm6041, %vm6185
      %v6188 = vshrl.u32 %v6124, 16
      %v6190 = vrot.slane %v6188, 4
      %v6191 = vshll.u32 %v6124, 16
      %v6193 = vrot.slane %v6191, 5
      %v6194 = vor.u32 %v6190, %v6193
      %v6195 = vrot.slane %v6194, 4
      %v6197 = vshll.u32 %v6125, 16
      %v6199 = vrot.slane %v6197, 5
      %v6200 = vsel %vm6186, %v6195, %v6199
      %v6201 = vshrl.u32 %v6125, 16
      %v6203 = vrot.slane %v6201, 4
      %v6204 = vor.u32 %v6203, %v6199
      %v6205 = vrot.slane %v6204, 4
      %v6207 = vshrl.u32 %v6126, 16
      %v6209 = vrot.slane %v6207, 4
      %v6210 = vshll.u32 %v6126, 16
      %v6212 = vrot.slane %v6210, 5
      %v6213 = vor.u32 %v6209, %v6212
      %v6214 = vrot.slane %v6213, 4
      %v6216 = vshll.u32 %v6127, 16
      %v6218 = vrot.slane %v6216, 5
      %v6219 = vsel %vm6186, %v6214, %v6218
      %v6220 = vshrl.u32 %v6127, 16
      %v6222 = vrot.slane %v6220, 4
      %v6223 = vor.u32 %v6222, %v6218
      %v6224 = vrot.slane %v6223, 4
      %v6226 = vshrl.u32 %v6128, 16
      %v6228 = vrot.slane %v6226, 4
      %v6229 = vshll.u32 %v6128, 16
      %v6231 = vrot.slane %v6229, 5
      %v6232 = vor.u32 %v6228, %v6231
      %v6233 = vrot.slane %v6232, 4
      %v6235 = vshll.u32 %v6129, 16
      %v6237 = vrot.slane %v6235, 5
      %v6238 = vsel %vm6186, %v6233, %v6237
      %v6239 = vshrl.u32 %v6129, 16
      %v6241 = vrot.slane %v6239, 4
      %v6242 = vor.u32 %v6241, %v6237
      %v6243 = vrot.slane %v6242, 4
      %v6245 = vshrl.u32 %v6130, 16
      %v6247 = vrot.slane %v6245, 4
      %v6248 = vshll.u32 %v6130, 16
      %v6250 = vrot.slane %v6248, 5
      %v6251 = vor.u32 %v6247, %v6250
      %v6252 = vrot.slane %v6251, 4
      %v6254 = vshll.u32 %v6131, 16
      %v6256 = vrot.slane %v6254, 5
      %v6257 = vsel %vm6186, %v6252, %v6256
      %v6258 = vshrl.u32 %v6131, 16
      %v6260 = vrot.slane %v6258, 4
      %v6261 = vor.u32 %v6260, %v6256
      %v6262 = vrot.slane %v6261, 4
      %v6264 = vshrl.u32 %v6132, 16
      %v6266 = vrot.slane %v6264, 4
      %v6267 = vshll.u32 %v6132, 16
      %v6269 = vrot.slane %v6267, 5
      %v6270 = vor.u32 %v6266, %v6269
      %v6271 = vrot.slane %v6270, 4
      %v6273 = vshll.u32 %v6133, 16
      %v6275 = vrot.slane %v6273, 5
      %v6276 = vsel %vm6186, %v6271, %v6275
      %v6277 = vshrl.u32 %v6133, 16
      %v6279 = vrot.slane %v6277, 4
      %v6280 = vor.u32 %v6279, %v6275
      %v6281 = vrot.slane %v6280, 4
      %v6283 = vshrl.u32 %v6134, 16
      %v6285 = vrot.slane %v6283, 4
      %v6286 = vshll.u32 %v6134, 16
      %v6288 = vrot.slane %v6286, 5
      %v6289 = vor.u32 %v6285, %v6288
      %v6290 = vrot.slane %v6289, 4
      %v6292 = vshll.u32 %v6135, 16
      %v6294 = vrot.slane %v6292, 5
      %v6295 = vsel %vm6186, %v6290, %v6294
      %v6296 = vshrl.u32 %v6135, 16
      %v6298 = vrot.slane %v6296, 4
      %v6299 = vor.u32 %v6298, %v6294
      %v6300 = vrot.slane %v6299, 4
      %v6302 = vshrl.u32 %v6136, 16
      %v6304 = vrot.slane %v6302, 4
      %v6305 = vshll.u32 %v6136, 16
      %v6307 = vrot.slane %v6305, 5
      %v6308 = vor.u32 %v6304, %v6307
      %v6309 = vrot.slane %v6308, 4
      %v6311 = vshll.u32 %v6137, 16
      %v6313 = vrot.slane %v6311, 5
      %v6314 = vsel %vm6186, %v6309, %v6313
      %v6315 = vshrl.u32 %v6137, 16
      %v6317 = vrot.slane %v6315, 4
      %v6318 = vor.u32 %v6317, %v6313
      %v6319 = vrot.slane %v6318, 4
      %v6321 = vshrl.u32 %v6138, 16
      %v6323 = vrot.slane %v6321, 4
      %v6324 = vshll.u32 %v6138, 16
      %v6326 = vrot.slane %v6324, 5
      %v6327 = vor.u32 %v6323, %v6326
      %v6328 = vrot.slane %v6327, 4
      %v6330 = vshll.u32 %v6139, 16
      %v6332 = vrot.slane %v6330, 5
      %v6333 = vsel %vm6186, %v6328, %v6332
      %v6334 = vshrl.u32 %v6139, 16
      %v6336 = vrot.slane %v6334, 4
      %v6337 = vor.u32 %v6336, %v6332
      %v6338 = vrot.slane %v6337, 4
      %v6340 = vshrl.u32 %v6140, 16
      %v6342 = vrot.slane %v6340, 4
      %v6343 = vshll.u32 %v6140, 16
      %v6345 = vrot.slane %v6343, 5
      %v6346 = vor.u32 %v6342, %v6345
      %v6347 = vrot.slane %v6346, 4
      %v6349 = vshll.u32 %v6141, 16
      %v6351 = vrot.slane %v6349, 5
      %v6352 = vsel %vm6186, %v6347, %v6351
      %v6353 = vshrl.u32 %v6141, 16
      %v6355 = vrot.slane %v6353, 4
      %v6356 = vor.u32 %v6355, %v6351
      %v6357 = vrot.slane %v6356, 4
      %v6359 = vshrl.u32 %v6142, 16
      %v6361 = vrot.slane %v6359, 4
      %v6362 = vshll.u32 %v6142, 16
      %v6364 = vrot.slane %v6362, 5
      %v6365 = vor.u32 %v6361, %v6364
      %v6366 = vrot.slane %v6365, 4
      %v6368 = vshll.u32 %v6143, 16
      %v6370 = vrot.slane %v6368, 5
      %v6371 = vsel %vm6186, %v6366, %v6370
      %v6372 = vshrl.u32 %v6143, 16
      %v6374 = vrot.slane %v6372, 4
      %v6375 = vor.u32 %v6374, %v6370
      %v6376 = vrot.slane %v6375, 4
      %v6378 = vshrl.u32 %v6144, 16
      %v6380 = vrot.slane %v6378, 4
      %v6381 = vshll.u32 %v6144, 16
      %v6383 = vrot.slane %v6381, 5
      %v6384 = vor.u32 %v6380, %v6383
      %v6385 = vrot.slane %v6384, 4
      %v6387 = vshll.u32 %v6145, 16
      %v6389 = vrot.slane %v6387, 5
      %v6390 = vsel %vm6186, %v6385, %v6389
      %v6391 = vshrl.u32 %v6145, 16
      %v6393 = vrot.slane %v6391, 4
      %v6394 = vor.u32 %v6393, %v6389
      %v6395 = vrot.slane %v6394, 4
      %v6397 = vshrl.u32 %v6146, 16
      %v6399 = vrot.slane %v6397, 4
      %v6400 = vshll.u32 %v6146, 16
      %v6402 = vrot.slane %v6400, 5
      %v6403 = vor.u32 %v6399, %v6402
      %v6404 = vrot.slane %v6403, 4
      %v6406 = vshll.u32 %v6147, 16
      %v6408 = vrot.slane %v6406, 5
      %v6409 = vsel %vm6186, %v6404, %v6408
      %v6410 = vshrl.u32 %v6147, 16
      %v6412 = vrot.slane %v6410, 4
      %v6413 = vor.u32 %v6412, %v6408
      %v6414 = vrot.slane %v6413, 4
      %v6416 = vshrl.u32 %v6148, 16
      %v6418 = vrot.slane %v6416, 4
      %v6419 = vshll.u32 %v6148, 16
      %v6421 = vrot.slane %v6419, 5
      %v6422 = vor.u32 %v6418, %v6421
      %v6423 = vrot.slane %v6422, 4
      %v6425 = vshll.u32 %v6149, 16
      %v6427 = vrot.slane %v6425, 5
      %v6428 = vsel %vm6186, %v6423, %v6427
      %v6429 = vshrl.u32 %v6149, 16
      %v6431 = vrot.slane %v6429, 4
      %v6432 = vor.u32 %v6431, %v6427
      %v6433 = vrot.slane %v6432, 4
      %v6435 = vshrl.u32 %v6150, 16
      %v6437 = vrot.slane %v6435, 4
      %v6438 = vshll.u32 %v6150, 16
      %v6440 = vrot.slane %v6438, 5
      %v6441 = vor.u32 %v6437, %v6440
      %v6442 = vrot.slane %v6441, 4
      %v6444 = vshll.u32 %v6151, 16
      %v6446 = vrot.slane %v6444, 5
      %v6447 = vsel %vm6186, %v6442, %v6446
      %v6448 = vshrl.u32 %v6151, 16
      %v6450 = vrot.slane %v6448, 4
      %v6451 = vor.u32 %v6450, %v6446
      %v6452 = vrot.slane %v6451, 4
      %6453 = vrot.lane.b32.xlu0 %v6200, 32
      %v6454 = vpop.permute.xlu0 %6453
      %6455 = vrot.lane.b32.xlu0 %v6205, 32
      %v6456 = vpop.permute.xlu0 %6455
      %6457 = vrot.lane.b32.xlu0 %v6219, 32
      %v6458 = vpop.permute.xlu0 %6457
      %6459 = vrot.lane.b32.xlu0 %v6224, 32
      %v6460 = vpop.permute.xlu0 %6459
      %6461 = vrot.lane.b32.xlu0 %v6238, 32
      %v6462 = vpop.permute.xlu0 %6461
      %6463 = vrot.lane.b32.xlu0 %v6243, 32
      %v6464 = vpop.permute.xlu0 %6463
      %6465 = vrot.lane.b32.xlu0 %v6257, 32
      %v6466 = vpop.permute.xlu0 %6465
      %6467 = vrot.lane.b32.xlu0 %v6262, 32
      %v6468 = vpop.permute.xlu0 %6467
      %6469 = vrot.lane.b32.xlu0 %v6276, 32
      %v6470 = vpop.permute.xlu0 %6469
      %6471 = vrot.lane.b32.xlu0 %v6281, 32
      %v6472 = vpop.permute.xlu0 %6471
      %6473 = vrot.lane.b32.xlu0 %v6295, 32
      %v6474 = vpop.permute.xlu0 %6473
      %6475 = vrot.lane.b32.xlu0 %v6300, 32
      %v6476 = vpop.permute.xlu0 %6475
      %6477 = vrot.lane.b32.xlu0 %v6314, 32
      %v6478 = vpop.permute.xlu0 %6477
      %6479 = vrot.lane.b32.xlu0 %v6319, 32
      %v6480 = vpop.permute.xlu0 %6479
      %6481 = vrot.lane.b32.xlu0 %v6333, 32
      %v6482 = vpop.permute.xlu0 %6481
      %6483 = vrot.lane.b32.xlu0 %v6338, 32
      %v6484 = vpop.permute.xlu0 %6483
      %6485 = vrot.lane.b32.xlu0 %v6352, 32
      %v6486 = vpop.permute.xlu0 %6485
      %6487 = vrot.lane.b32.xlu0 %v6357, 32
      %v6488 = vpop.permute.xlu0 %6487
      %6489 = vrot.lane.b32.xlu0 %v6371, 32
      %v6490 = vpop.permute.xlu0 %6489
      %6491 = vrot.lane.b32.xlu0 %v6376, 32
      %v6492 = vpop.permute.xlu0 %6491
      %6493 = vrot.lane.b32.xlu0 %v6390, 32
      %v6494 = vpop.permute.xlu0 %6493
      %6495 = vrot.lane.b32.xlu0 %v6395, 32
      %v6496 = vpop.permute.xlu0 %6495
      %6497 = vrot.lane.b32.xlu0 %v6409, 32
      %v6498 = vpop.permute.xlu0 %6497
      %6499 = vrot.lane.b32.xlu0 %v6414, 32
      %v6500 = vpop.permute.xlu0 %6499
      %6501 = vrot.lane.b32.xlu0 %v6428, 32
      %v6502 = vpop.permute.xlu0 %6501
      %6503 = vrot.lane.b32.xlu0 %v6433, 32
      %v6504 = vpop.permute.xlu0 %6503
      %6505 = vrot.lane.b32.xlu0 %v6447, 32
      %v6506 = vpop.permute.xlu0 %6505
      %6507 = vrot.lane.b32.xlu0 %v6452, 32
      %v6508 = vpop.permute.xlu0 %6507
      %vm6537 = vcmask 519424
      %6538 = vst.msk [vmem:[#allocation3] sm:$0xf] %vm6537, %v6454
      %vm6539 = vcmask 518400
      %6540 = vst.msk [vmem:[#allocation3 + $0xc] sm:$0x7] %vm6539, %v6456
      %6541 = vst.msk [vmem:[#allocation3 + $0x18] sm:$0xf] %vm6537, %v6458
      %6542 = vst.msk [vmem:[#allocation3 + $0x24] sm:$0x7] %vm6539, %v6460
      %6543 = vst.msk [vmem:[#allocation3 + $0x30] sm:$0xf] %vm6537, %v6462
      %6544 = vst.msk [vmem:[#allocation3 + $0x3c] sm:$0x7] %vm6539, %v6464
      %6545 = vst.msk [vmem:[#allocation3 + $0x48] sm:$0xf] %vm6537, %v6466
      %6546 = vst.msk [vmem:[#allocation3 + $0x54] sm:$0x7] %vm6539, %v6468
      %6547 = vst.msk [vmem:[#allocation3 + $0x60] sm:$0xf] %vm6537, %v6470
      %6548 = vst.msk [vmem:[#allocation3 + $0x6c] sm:$0x7] %vm6539, %v6472
      %6549 = vst.msk [vmem:[#allocation3 + $0x78] sm:$0xf] %vm6537, %v6474
      %6550 = vst.msk [vmem:[#allocation3 + $0x84] sm:$0x7] %vm6539, %v6476
      %6551 = vst.msk [vmem:[#allocation3 + $0x90] sm:$0xf] %vm6537, %v6478
      %6552 = vst.msk [vmem:[#allocation3 + $0x9c] sm:$0x7] %vm6539, %v6480
      %6553 = vst.msk [vmem:[#allocation3 + $0xa8] sm:$0xf] %vm6537, %v6482
      %6554 = vst.msk [vmem:[#allocation3 + $0xb4] sm:$0x7] %vm6539, %v6484
      %6555 = vst.msk [vmem:[#allocation3 + $0xc0] sm:$0xf] %vm6537, %v6486
      %6556 = vst.msk [vmem:[#allocation3 + $0xcc] sm:$0x7] %vm6539, %v6488
      %6557 = vst.msk [vmem:[#allocation3 + $0xd8] sm:$0xf] %vm6537, %v6490
      %6558 = vst.msk [vmem:[#allocation3 + $0xe4] sm:$0x7] %vm6539, %v6492
      %6559 = vst.msk [vmem:[#allocation3 + $0xf0] sm:$0xf] %vm6537, %v6494
      %6560 = vst.msk [vmem:[#allocation3 + $0xfc] sm:$0x7] %vm6539, %v6496
      %6561 = vst.msk [vmem:[#allocation3 + $0x108] sm:$0xf] %vm6537, %v6498
      %6562 = vst.msk [vmem:[#allocation3 + $0x114] sm:$0x7] %vm6539, %v6500
      %6563 = vst.msk [vmem:[#allocation3 + $0x120] sm:$0xf] %vm6537, %v6502
      %6564 = vst.msk [vmem:[#allocation3 + $0x12c] sm:$0x7] %vm6539, %v6504
      %6565 = vst.msk [vmem:[#allocation3 + $0x138] sm:$0xf] %vm6537, %v6506
      %6566 = vst.msk [vmem:[#allocation3 + $0x144] sm:$0x7] %vm6539, %v6508
      %vm6595 = vcmask 1042432
      %vm6596 = vcmask 1046532
      %vm6597 = vmor %vm6595, %vm6596
      %v6598 = vrot.slane %v6124, 5
      %v6599 = vrot.slane %v6598, 4
      %v6600 = vrot.slane %v6125, 5
      %v6601 = vsel %vm6597, %v6599, %v6600
      %v6602 = vrot.slane %v6600, 4
      %v6603 = vrot.slane %v6126, 5
      %v6604 = vrot.slane %v6603, 4
      %v6605 = vrot.slane %v6127, 5
      %v6606 = vsel %vm6597, %v6604, %v6605
      %v6607 = vrot.slane %v6605, 4
      %v6608 = vrot.slane %v6128, 5
      %v6609 = vrot.slane %v6608, 4
      %v6610 = vrot.slane %v6129, 5
      %v6611 = vsel %vm6597, %v6609, %v6610
      %v6612 = vrot.slane %v6610, 4
      %v6613 = vrot.slane %v6130, 5
      %v6614 = vrot.slane %v6613, 4
      %v6615 = vrot.slane %v6131, 5
      %v6616 = vsel %vm6597, %v6614, %v6615
      %v6617 = vrot.slane %v6615, 4
      %v6618 = vrot.slane %v6132, 5
      %v6619 = vrot.slane %v6618, 4
      %v6620 = vrot.slane %v6133, 5
      %v6621 = vsel %vm6597, %v6619, %v6620
      %v6622 = vrot.slane %v6620, 4
      %v6623 = vrot.slane %v6134, 5
      %v6624 = vrot.slane %v6623, 4
      %v6625 = vrot.slane %v6135, 5
      %v6626 = vsel %vm6597, %v6624, %v6625
      %v6627 = vrot.slane %v6625, 4
      %v6628 = vrot.slane %v6136, 5
      %v6629 = vrot.slane %v6628, 4
      %v6630 = vrot.slane %v6137, 5
      %v6631 = vsel %vm6597, %v6629, %v6630
      %v6632 = vrot.slane %v6630, 4
      %v6633 = vrot.slane %v6138, 5
      %v6634 = vrot.slane %v6633, 4
      %v6635 = vrot.slane %v6139, 5
      %v6636 = vsel %vm6597, %v6634, %v6635
      %v6637 = vrot.slane %v6635, 4
      %v6638 = vrot.slane %v6140, 5
      %v6639 = vrot.slane %v6638, 4
      %v6640 = vrot.slane %v6141, 5
      %v6641 = vsel %vm6597, %v6639, %v6640
      %v6642 = vrot.slane %v6640, 4
      %v6643 = vrot.slane %v6142, 5
      %v6644 = vrot.slane %v6643, 4
      %v6645 = vrot.slane %v6143, 5
      %v6646 = vsel %vm6597, %v6644, %v6645
      %v6647 = vrot.slane %v6645, 4
      %v6648 = vrot.slane %v6144, 5
      %v6649 = vrot.slane %v6648, 4
      %v6650 = vrot.slane %v6145, 5
      %v6651 = vsel %vm6597, %v6649, %v6650
      %v6652 = vrot.slane %v6650, 4
      %v6653 = vrot.slane %v6146, 5
      %v6654 = vrot.slane %v6653, 4
      %v6655 = vrot.slane %v6147, 5
      %v6656 = vsel %vm6597, %v6654, %v6655
      %v6657 = vrot.slane %v6655, 4
      %v6658 = vrot.slane %v6148, 5
      %v6659 = vrot.slane %v6658, 4
      %v6660 = vrot.slane %v6149, 5
      %v6661 = vsel %vm6597, %v6659, %v6660
      %v6662 = vrot.slane %v6660, 4
      %v6663 = vrot.slane %v6150, 5
      %v6664 = vrot.slane %v6663, 4
      %v6665 = vrot.slane %v6151, 5
      %v6666 = vsel %vm6597, %v6664, %v6665
      %v6667 = vrot.slane %v6665, 4
      %6668 = vrot.lane.b32.xlu0 %v6601, 64
      %v6669 = vpop.permute.xlu0 %6668
      %6670 = vrot.lane.b32.xlu0 %v6602, 64
      %v6671 = vpop.permute.xlu0 %6670
      %6672 = vrot.lane.b32.xlu0 %v6606, 64
      %v6673 = vpop.permute.xlu0 %6672
      %6674 = vrot.lane.b32.xlu0 %v6607, 64
      %v6675 = vpop.permute.xlu0 %6674
      %6676 = vrot.lane.b32.xlu0 %v6611, 64
      %v6677 = vpop.permute.xlu0 %6676
      %6678 = vrot.lane.b32.xlu0 %v6612, 64
      %v6679 = vpop.permute.xlu0 %6678
      %6680 = vrot.lane.b32.xlu0 %v6616, 64
      %v6681 = vpop.permute.xlu0 %6680
      %6682 = vrot.lane.b32.xlu0 %v6617, 64
      %v6683 = vpop.permute.xlu0 %6682
      %6684 = vrot.lane.b32.xlu0 %v6621, 64
      %v6685 = vpop.permute.xlu0 %6684
      %6686 = vrot.lane.b32.xlu0 %v6622, 64
      %v6687 = vpop.permute.xlu0 %6686
      %6688 = vrot.lane.b32.xlu0 %v6626, 64
      %v6689 = vpop.permute.xlu0 %6688
      %6690 = vrot.lane.b32.xlu0 %v6627, 64
      %v6691 = vpop.permute.xlu0 %6690
      %6692 = vrot.lane.b32.xlu0 %v6631, 64
      %v6693 = vpop.permute.xlu0 %6692
      %6694 = vrot.lane.b32.xlu0 %v6632, 64
      %v6695 = vpop.permute.xlu0 %6694
      %6696 = vrot.lane.b32.xlu0 %v6636, 64
      %v6697 = vpop.permute.xlu0 %6696
      %6698 = vrot.lane.b32.xlu0 %v6637, 64
      %v6699 = vpop.permute.xlu0 %6698
      %6700 = vrot.lane.b32.xlu0 %v6641, 64
      %v6701 = vpop.permute.xlu0 %6700
      %6702 = vrot.lane.b32.xlu0 %v6642, 64
      %v6703 = vpop.permute.xlu0 %6702
      %6704 = vrot.lane.b32.xlu0 %v6646, 64
      %v6705 = vpop.permute.xlu0 %6704
      %6706 = vrot.lane.b32.xlu0 %v6647, 64
      %v6707 = vpop.permute.xlu0 %6706
      %6708 = vrot.lane.b32.xlu0 %v6651, 64
      %v6709 = vpop.permute.xlu0 %6708
      %6710 = vrot.lane.b32.xlu0 %v6652, 64
      %v6711 = vpop.permute.xlu0 %6710
      %6712 = vrot.lane.b32.xlu0 %v6656, 64
      %v6713 = vpop.permute.xlu0 %6712
      %6714 = vrot.lane.b32.xlu0 %v6657, 64
      %v6715 = vpop.permute.xlu0 %6714
      %6716 = vrot.lane.b32.xlu0 %v6661, 64
      %v6717 = vpop.permute.xlu0 %6716
      %6718 = vrot.lane.b32.xlu0 %v6662, 64
      %v6719 = vpop.permute.xlu0 %6718
      %6720 = vrot.lane.b32.xlu0 %v6666, 64
      %v6721 = vpop.permute.xlu0 %6720
      %6722 = vrot.lane.b32.xlu0 %v6667, 64
      %v6723 = vpop.permute.xlu0 %6722
      %vm6752 = vcmask 781824
      %6753 = vst.msk [vmem:[#allocation3] sm:$0xf] %vm6752, %v6669
      %vm6754 = vcmask 780800
      %6755 = vst.msk [vmem:[#allocation3 + $0xc] sm:$0x7] %vm6754, %v6671
      %6756 = vst.msk [vmem:[#allocation3 + $0x18] sm:$0xf] %vm6752, %v6673
      %6757 = vst.msk [vmem:[#allocation3 + $0x24] sm:$0x7] %vm6754, %v6675
      %6758 = vst.msk [vmem:[#allocation3 + $0x30] sm:$0xf] %vm6752, %v6677
      %6759 = vst.msk [vmem:[#allocation3 + $0x3c] sm:$0x7] %vm6754, %v6679
      %6760 = vst.msk [vmem:[#allocation3 + $0x48] sm:$0xf] %vm6752, %v6681
      %6761 = vst.msk [vmem:[#allocation3 + $0x54] sm:$0x7] %vm6754, %v6683
      %6762 = vst.msk [vmem:[#allocation3 + $0x60] sm:$0xf] %vm6752, %v6685
      %6763 = vst.msk [vmem:[#allocation3 + $0x6c] sm:$0x7] %vm6754, %v6687
      %6764 = vst.msk [vmem:[#allocation3 + $0x78] sm:$0xf] %vm6752, %v6689
      %6765 = vst.msk [vmem:[#allocation3 + $0x84] sm:$0x7] %vm6754, %v6691
      %6766 = vst.msk [vmem:[#allocation3 + $0x90] sm:$0xf] %vm6752, %v6693
      %6767 = vst.msk [vmem:[#allocation3 + $0x9c] sm:$0x7] %vm6754, %v6695
      %6768 = vst.msk [vmem:[#allocation3 + $0xa8] sm:$0xf] %vm6752, %v6697
      %6769 = vst.msk [vmem:[#allocation3 + $0xb4] sm:$0x7] %vm6754, %v6699
      %6770 = vst.msk [vmem:[#allocation3 + $0xc0] sm:$0xf] %vm6752, %v6701
      %6771 = vst.msk [vmem:[#allocation3 + $0xcc] sm:$0x7] %vm6754, %v6703
      %6772 = vst.msk [vmem:[#allocation3 + $0xd8] sm:$0xf] %vm6752, %v6705
      %6773 = vst.msk [vmem:[#allocation3 + $0xe4] sm:$0x7] %vm6754, %v6707
      %6774 = vst.msk [vmem:[#allocation3 + $0xf0] sm:$0xf] %vm6752, %v6709
      %6775 = vst.msk [vmem:[#allocation3 + $0xfc] sm:$0x7] %vm6754, %v6711
      %6776 = vst.msk [vmem:[#allocation3 + $0x108] sm:$0xf] %vm6752, %v6713
      %6777 = vst.msk [vmem:[#allocation3 + $0x114] sm:$0x7] %vm6754, %v6715
      %6778 = vst.msk [vmem:[#allocation3 + $0x120] sm:$0xf] %vm6752, %v6717
      %6779 = vst.msk [vmem:[#allocation3 + $0x12c] sm:$0x7] %vm6754, %v6719
      %6780 = vst.msk [vmem:[#allocation3 + $0x138] sm:$0xf] %vm6752, %v6721
      %6781 = vst.msk [vmem:[#allocation3 + $0x144] sm:$0x7] %vm6754, %v6723
      %6784 = vrot.lane.b32.xlu0 %v6126, 96
      %v6785 = vpop.permute.xlu0 %6784
      %6786 = vrot.lane.b32.xlu0 %v6127, 96
      %v6787 = vpop.permute.xlu0 %6786
      %6788 = vrot.lane.b32.xlu0 %v6128, 96
      %v6789 = vpop.permute.xlu0 %6788
      %6790 = vrot.lane.b32.xlu0 %v6129, 96
      %v6791 = vpop.permute.xlu0 %6790
      %6792 = vrot.lane.b32.xlu0 %v6130, 96
      %v6793 = vpop.permute.xlu0 %6792
      %6794 = vrot.lane.b32.xlu0 %v6131, 96
      %v6795 = vpop.permute.xlu0 %6794
      %6796 = vrot.lane.b32.xlu0 %v6132, 96
      %v6797 = vpop.permute.xlu0 %6796
      %6798 = vrot.lane.b32.xlu0 %v6133, 96
      %v6799 = vpop.permute.xlu0 %6798
      %6800 = vrot.lane.b32.xlu0 %v6134, 96
      %v6801 = vpop.permute.xlu0 %6800
      %6802 = vrot.lane.b32.xlu0 %v6135, 96
      %v6803 = vpop.permute.xlu0 %6802
      %6804 = vrot.lane.b32.xlu0 %v6136, 96
      %v6805 = vpop.permute.xlu0 %6804
      %6806 = vrot.lane.b32.xlu0 %v6137, 96
      %v6807 = vpop.permute.xlu0 %6806
      %6808 = vrot.lane.b32.xlu0 %v6138, 96
      %v6809 = vpop.permute.xlu0 %6808
      %6810 = vrot.lane.b32.xlu0 %v6139, 96
      %v6811 = vpop.permute.xlu0 %6810
      %6812 = vrot.lane.b32.xlu0 %v6140, 96
      %v6813 = vpop.permute.xlu0 %6812
      %6814 = vrot.lane.b32.xlu0 %v6141, 96
      %v6815 = vpop.permute.xlu0 %6814
      %6816 = vrot.lane.b32.xlu0 %v6142, 96
      %v6817 = vpop.permute.xlu0 %6816
      %6818 = vrot.lane.b32.xlu0 %v6143, 96
      %v6819 = vpop.permute.xlu0 %6818
      %6820 = vrot.lane.b32.xlu0 %v6144, 96
      %v6821 = vpop.permute.xlu0 %6820
      %6822 = vrot.lane.b32.xlu0 %v6145, 96
      %v6823 = vpop.permute.xlu0 %6822
      %6824 = vrot.lane.b32.xlu0 %v6146, 96
      %v6825 = vpop.permute.xlu0 %6824
      %6826 = vrot.lane.b32.xlu0 %v6147, 96
      %v6827 = vpop.permute.xlu0 %6826
      %6828 = vrot.lane.b32.xlu0 %v6148, 96
      %v6829 = vpop.permute.xlu0 %6828
      %6830 = vrot.lane.b32.xlu0 %v6149, 96
      %v6831 = vpop.permute.xlu0 %6830
      %6832 = vrot.lane.b32.xlu0 %v6150, 96
      %v6833 = vpop.permute.xlu0 %6832
      %6834 = vrot.lane.b32.xlu0 %v6151, 96
      %v6835 = vpop.permute.xlu0 %6834
      %6836 = vrot.lane.b32.xlu0 %v6152, 96
      %v6837 = vpop.permute.xlu0 %6836
      %6838 = vrot.lane.b32.xlu0 %v6153, 96
      %v6839 = vpop.permute.xlu0 %6838
      %vm6868 = vcmask 1044224
      %6869 = vst.msk [vmem:[#allocation3] sm:$0xf] %vm6868, %v6785
      %vm6870 = vcmask 1043200
      %6871 = vst.msk [vmem:[#allocation3 + $0xc] sm:$0x7] %vm6870, %v6787
      %6872 = vst.msk [vmem:[#allocation3 + $0x18] sm:$0xf] %vm6868, %v6789
      %6873 = vst.msk [vmem:[#allocation3 + $0x24] sm:$0x7] %vm6870, %v6791
      %6874 = vst.msk [vmem:[#allocation3 + $0x30] sm:$0xf] %vm6868, %v6793
      %6875 = vst.msk [vmem:[#allocation3 + $0x3c] sm:$0x7] %vm6870, %v6795
      %6876 = vst.msk [vmem:[#allocation3 + $0x48] sm:$0xf] %vm6868, %v6797
      %6877 = vst.msk [vmem:[#allocation3 + $0x54] sm:$0x7] %vm6870, %v6799
      %6878 = vst.msk [vmem:[#allocation3 + $0x60] sm:$0xf] %vm6868, %v6801
      %6879 = vst.msk [vmem:[#allocation3 + $0x6c] sm:$0x7] %vm6870, %v6803
      %6880 = vst.msk [vmem:[#allocation3 + $0x78] sm:$0xf] %vm6868, %v6805
      %6881 = vst.msk [vmem:[#allocation3 + $0x84] sm:$0x7] %vm6870, %v6807
      %6882 = vst.msk [vmem:[#allocation3 + $0x90] sm:$0xf] %vm6868, %v6809
      %6883 = vst.msk [vmem:[#allocation3 + $0x9c] sm:$0x7] %vm6870, %v6811
      %6884 = vst.msk [vmem:[#allocation3 + $0xa8] sm:$0xf] %vm6868, %v6813
      %6885 = vst.msk [vmem:[#allocation3 + $0xb4] sm:$0x7] %vm6870, %v6815
      %6886 = vst.msk [vmem:[#allocation3 + $0xc0] sm:$0xf] %vm6868, %v6817
      %6887 = vst.msk [vmem:[#allocation3 + $0xcc] sm:$0x7] %vm6870, %v6819
      %6888 = vst.msk [vmem:[#allocation3 + $0xd8] sm:$0xf] %vm6868, %v6821
      %6889 = vst.msk [vmem:[#allocation3 + $0xe4] sm:$0x7] %vm6870, %v6823
      %6890 = vst.msk [vmem:[#allocation3 + $0xf0] sm:$0xf] %vm6868, %v6825
      %6891 = vst.msk [vmem:[#allocation3 + $0xfc] sm:$0x7] %vm6870, %v6827
      %6892 = vst.msk [vmem:[#allocation3 + $0x108] sm:$0xf] %vm6868, %v6829
      %6893 = vst.msk [vmem:[#allocation3 + $0x114] sm:$0x7] %vm6870, %v6831
      %6894 = vst.msk [vmem:[#allocation3 + $0x120] sm:$0xf] %vm6868, %v6833
      %6895 = vst.msk [vmem:[#allocation3 + $0x12c] sm:$0x7] %vm6870, %v6835
      %6896 = vst.msk [vmem:[#allocation3 + $0x138] sm:$0xf] %vm6868, %v6837
      %6897 = vst.msk [vmem:[#allocation3 + $0x144] sm:$0x7] %vm6870, %v6839
      %v6899 = vshrl.u32 %v6152, 16
      %v6901 = vrot.slane %v6899, 4
      %v6902 = vshll.u32 %v6152, 16
      %v6904 = vrot.slane %v6902, 5
      %v6905 = vor.u32 %v6901, %v6904
      %v6906 = vrot.slane %v6905, 4
      %v6908 = vshll.u32 %v6153, 16
      %v6910 = vrot.slane %v6908, 5
      %v6911 = vsel %vm6186, %v6906, %v6910
      %v6912 = vshrl.u32 %v6153, 16
      %v6914 = vrot.slane %v6912, 4
      %v6915 = vor.u32 %v6914, %v6910
      %v6916 = vrot.slane %v6915, 4
      %6945 = vst.msk [vmem:[#allocation3 + $0x4] sm:$0xf] %vm5107, %v6219
      %6946 = vst.msk [vmem:[#allocation3 + $0x10] sm:$0x7] %vm6157, %v6224
      %6947 = vst.msk [vmem:[#allocation3 + $0x1c] sm:$0xf] %vm5107, %v6238
      %6948 = vst.msk [vmem:[#allocation3 + $0x28] sm:$0x7] %vm6157, %v6243
      %6949 = vst.msk [vmem:[#allocation3 + $0x34] sm:$0xf] %vm5107, %v6257
      %6950 = vst.msk [vmem:[#allocation3 + $0x40] sm:$0x7] %vm6157, %v6262
      %6951 = vst.msk [vmem:[#allocation3 + $0x4c] sm:$0xf] %vm5107, %v6276
      %6952 = vst.msk [vmem:[#allocation3 + $0x58] sm:$0x7] %vm6157, %v6281
      %6953 = vst.msk [vmem:[#allocation3 + $0x64] sm:$0xf] %vm5107, %v6295
      %6954 = vst.msk [vmem:[#allocation3 + $0x70] sm:$0x7] %vm6157, %v6300
      %6955 = vst.msk [vmem:[#allocation3 + $0x7c] sm:$0xf] %vm5107, %v6314
      %6956 = vst.msk [vmem:[#allocation3 + $0x88] sm:$0x7] %vm6157, %v6319
      %6957 = vst.msk [vmem:[#allocation3 + $0x94] sm:$0xf] %vm5107, %v6333
      %6958 = vst.msk [vmem:[#allocation3 + $0xa0] sm:$0x7] %vm6157, %v6338
      %6959 = vst.msk [vmem:[#allocation3 + $0xac] sm:$0xf] %vm5107, %v6352
      %6960 = vst.msk [vmem:[#allocation3 + $0xb8] sm:$0x7] %vm6157, %v6357
      %6961 = vst.msk [vmem:[#allocation3 + $0xc4] sm:$0xf] %vm5107, %v6371
      %6962 = vst.msk [vmem:[#allocation3 + $0xd0] sm:$0x7] %vm6157, %v6376
      %6963 = vst.msk [vmem:[#allocation3 + $0xdc] sm:$0xf] %vm5107, %v6390
      %6964 = vst.msk [vmem:[#allocation3 + $0xe8] sm:$0x7] %vm6157, %v6395
      %6965 = vst.msk [vmem:[#allocation3 + $0xf4] sm:$0xf] %vm5107, %v6409
      %6966 = vst.msk [vmem:[#allocation3 + $0x100] sm:$0x7] %vm6157, %v6414
      %6967 = vst.msk [vmem:[#allocation3 + $0x10c] sm:$0xf] %vm5107, %v6428
      %6968 = vst.msk [vmem:[#allocation3 + $0x118] sm:$0x7] %vm6157, %v6433
      %6969 = vst.msk [vmem:[#allocation3 + $0x124] sm:$0xf] %vm5107, %v6447
      %6970 = vst.msk [vmem:[#allocation3 + $0x130] sm:$0x7] %vm6157, %v6452
      %6971 = vst.msk [vmem:[#allocation3 + $0x13c] sm:$0xf] %vm5107, %v6911
      %6972 = vst.msk [vmem:[#allocation3 + $0x148] sm:$0x7] %vm6157, %v6916
      %v6973 = vrot.slane %v6152, 5
      %v6974 = vrot.slane %v6973, 4
      %v6975 = vrot.slane %v6153, 5
      %v6976 = vsel %vm6597, %v6974, %v6975
      %v6977 = vrot.slane %v6975, 4
      %6978 = vrot.lane.b32.xlu0 %v6606, 32
      %v6979 = vpop.permute.xlu0 %6978
      %6980 = vrot.lane.b32.xlu0 %v6607, 32
      %v6981 = vpop.permute.xlu0 %6980
      %6982 = vrot.lane.b32.xlu0 %v6611, 32
      %v6983 = vpop.permute.xlu0 %6982
      %6984 = vrot.lane.b32.xlu0 %v6612, 32
      %v6985 = vpop.permute.xlu0 %6984
      %6986 = vrot.lane.b32.xlu0 %v6616, 32
      %v6987 = vpop.permute.xlu0 %6986
      %6988 = vrot.lane.b32.xlu0 %v6617, 32
      %v6989 = vpop.permute.xlu0 %6988
      %6990 = vrot.lane.b32.xlu0 %v6621, 32
      %v6991 = vpop.permute.xlu0 %6990
      %6992 = vrot.lane.b32.xlu0 %v6622, 32
      %v6993 = vpop.permute.xlu0 %6992
      %6994 = vrot.lane.b32.xlu0 %v6626, 32
      %v6995 = vpop.permute.xlu0 %6994
      %6996 = vrot.lane.b32.xlu0 %v6627, 32
      %v6997 = vpop.permute.xlu0 %6996
      %6998 = vrot.lane.b32.xlu0 %v6631, 32
      %v6999 = vpop.permute.xlu0 %6998
      %7000 = vrot.lane.b32.xlu0 %v6632, 32
      %v7001 = vpop.permute.xlu0 %7000
      %7002 = vrot.lane.b32.xlu0 %v6636, 32
      %v7003 = vpop.permute.xlu0 %7002
      %7004 = vrot.lane.b32.xlu0 %v6637, 32
      %v7005 = vpop.permute.xlu0 %7004
      %7006 = vrot.lane.b32.xlu0 %v6641, 32
      %v7007 = vpop.permute.xlu0 %7006
      %7008 = vrot.lane.b32.xlu0 %v6642, 32
      %v7009 = vpop.permute.xlu0 %7008
      %7010 = vrot.lane.b32.xlu0 %v6646, 32
      %v7011 = vpop.permute.xlu0 %7010
      %7012 = vrot.lane.b32.xlu0 %v6647, 32
      %v7013 = vpop.permute.xlu0 %7012
      %7014 = vrot.lane.b32.xlu0 %v6651, 32
      %v7015 = vpop.permute.xlu0 %7014
      %7016 = vrot.lane.b32.xlu0 %v6652, 32
      %v7017 = vpop.permute.xlu0 %7016
      %7018 = vrot.lane.b32.xlu0 %v6656, 32
      %v7019 = vpop.permute.xlu0 %7018
      %7020 = vrot.lane.b32.xlu0 %v6657, 32
      %v7021 = vpop.permute.xlu0 %7020
      %7022 = vrot.lane.b32.xlu0 %v6661, 32
      %v7023 = vpop.permute.xlu0 %7022
      %7024 = vrot.lane.b32.xlu0 %v6662, 32
      %v7025 = vpop.permute.xlu0 %7024
      %7026 = vrot.lane.b32.xlu0 %v6666, 32
      %v7027 = vpop.permute.xlu0 %7026
      %7028 = vrot.lane.b32.xlu0 %v6667, 32
      %v7029 = vpop.permute.xlu0 %7028
      %7030 = vrot.lane.b32.xlu0 %v6976, 32
      %v7031 = vpop.permute.xlu0 %7030
      %7032 = vrot.lane.b32.xlu0 %v6977, 32
      %v7033 = vpop.permute.xlu0 %7032
      %7062 = vst.msk [vmem:[#allocation3 + $0x4] sm:$0xf] %vm6537, %v6979
      %7063 = vst.msk [vmem:[#allocation3 + $0x10] sm:$0x7] %vm6539, %v6981
      %7064 = vst.msk [vmem:[#allocation3 + $0x1c] sm:$0xf] %vm6537, %v6983
      %7065 = vst.msk [vmem:[#allocation3 + $0x28] sm:$0x7] %vm6539, %v6985
      %7066 = vst.msk [vmem:[#allocation3 + $0x34] sm:$0xf] %vm6537, %v6987
      %7067 = vst.msk [vmem:[#allocation3 + $0x40] sm:$0x7] %vm6539, %v6989
      %7068 = vst.msk [vmem:[#allocation3 + $0x4c] sm:$0xf] %vm6537, %v6991
      %7069 = vst.msk [vmem:[#allocation3 + $0x58] sm:$0x7] %vm6539, %v6993
      %7070 = vst.msk [vmem:[#allocation3 + $0x64] sm:$0xf] %vm6537, %v6995
      %7071 = vst.msk [vmem:[#allocation3 + $0x70] sm:$0x7] %vm6539, %v6997
      %7072 = vst.msk [vmem:[#allocation3 + $0x7c] sm:$0xf] %vm6537, %v6999
      %7073 = vst.msk [vmem:[#allocation3 + $0x88] sm:$0x7] %vm6539, %v7001
      %7074 = vst.msk [vmem:[#allocation3 + $0x94] sm:$0xf] %vm6537, %v7003
      %7075 = vst.msk [vmem:[#allocation3 + $0xa0] sm:$0x7] %vm6539, %v7005
      %7076 = vst.msk [vmem:[#allocation3 + $0xac] sm:$0xf] %vm6537, %v7007
      %7077 = vst.msk [vmem:[#allocation3 + $0xb8] sm:$0x7] %vm6539, %v7009
      %7078 = vst.msk [vmem:[#allocation3 + $0xc4] sm:$0xf] %vm6537, %v7011
      %7079 = vst.msk [vmem:[#allocation3 + $0xd0] sm:$0x7] %vm6539, %v7013
      %7080 = vst.msk [vmem:[#allocation3 + $0xdc] sm:$0xf] %vm6537, %v7015
      %7081 = vst.msk [vmem:[#allocation3 + $0xe8] sm:$0x7] %vm6539, %v7017
      %7082 = vst.msk [vmem:[#allocation3 + $0xf4] sm:$0xf] %vm6537, %v7019
      %7083 = vst.msk [vmem:[#allocation3 + $0x100] sm:$0x7] %vm6539, %v7021
      %7084 = vst.msk [vmem:[#allocation3 + $0x10c] sm:$0xf] %vm6537, %v7023
      %7085 = vst.msk [vmem:[#allocation3 + $0x118] sm:$0x7] %vm6539, %v7025
      %7086 = vst.msk [vmem:[#allocation3 + $0x124] sm:$0xf] %vm6537, %v7027
      %7087 = vst.msk [vmem:[#allocation3 + $0x130] sm:$0x7] %vm6539, %v7029
      %7088 = vst.msk [vmem:[#allocation3 + $0x13c] sm:$0xf] %vm6537, %v7031
      %7089 = vst.msk [vmem:[#allocation3 + $0x148] sm:$0x7] %vm6539, %v7033
      %7092 = vrot.lane.b32.xlu0 %v6128, 64
      %v7093 = vpop.permute.xlu0 %7092
      %7094 = vrot.lane.b32.xlu0 %v6129, 64
      %v7095 = vpop.permute.xlu0 %7094
      %7096 = vrot.lane.b32.xlu0 %v6130, 64
      %v7097 = vpop.permute.xlu0 %7096
      %7098 = vrot.lane.b32.xlu0 %v6131, 64
      %v7099 = vpop.permute.xlu0 %7098
      %7100 = vrot.lane.b32.xlu0 %v6132, 64
      %v7101 = vpop.permute.xlu0 %7100
      %7102 = vrot.lane.b32.xlu0 %v6133, 64
      %v7103 = vpop.permute.xlu0 %7102
      %7104 = vrot.lane.b32.xlu0 %v6134, 64
      %v7105 = vpop.permute.xlu0 %7104
      %7106 = vrot.lane.b32.xlu0 %v6135, 64
      %v7107 = vpop.permute.xlu0 %7106
      %7108 = vrot.lane.b32.xlu0 %v6136, 64
      %v7109 = vpop.permute.xlu0 %7108
      %7110 = vrot.lane.b32.xlu0 %v6137, 64
      %v7111 = vpop.permute.xlu0 %7110
      %7112 = vrot.lane.b32.xlu0 %v6138, 64
      %v7113 = vpop.permute.xlu0 %7112
      %7114 = vrot.lane.b32.xlu0 %v6139, 64
      %v7115 = vpop.permute.xlu0 %7114
      %7116 = vrot.lane.b32.xlu0 %v6140, 64
      %v7117 = vpop.permute.xlu0 %7116
      %7118 = vrot.lane.b32.xlu0 %v6141, 64
      %v7119 = vpop.permute.xlu0 %7118
      %7120 = vrot.lane.b32.xlu0 %v6142, 64
      %v7121 = vpop.permute.xlu0 %7120
      %7122 = vrot.lane.b32.xlu0 %v6143, 64
      %v7123 = vpop.permute.xlu0 %7122
      %7124 = vrot.lane.b32.xlu0 %v6144, 64
      %v7125 = vpop.permute.xlu0 %7124
      %7126 = vrot.lane.b32.xlu0 %v6145, 64
      %v7127 = vpop.permute.xlu0 %7126
      %7128 = vrot.lane.b32.xlu0 %v6146, 64
      %v7129 = vpop.permute.xlu0 %7128
      %7130 = vrot.lane.b32.xlu0 %v6147, 64
      %v7131 = vpop.permute.xlu0 %7130
      %7132 = vrot.lane.b32.xlu0 %v6148, 64
      %v7133 = vpop.permute.xlu0 %7132
      %7134 = vrot.lane.b32.xlu0 %v6149, 64
      %v7135 = vpop.permute.xlu0 %7134
      %7136 = vrot.lane.b32.xlu0 %v6150, 64
      %v7137 = vpop.permute.xlu0 %7136
      %7138 = vrot.lane.b32.xlu0 %v6151, 64
      %v7139 = vpop.permute.xlu0 %7138
      %7140 = vrot.lane.b32.xlu0 %v6152, 64
      %v7141 = vpop.permute.xlu0 %7140
      %7142 = vrot.lane.b32.xlu0 %v6153, 64
      %v7143 = vpop.permute.xlu0 %7142
      %7144 = vrot.lane.b32.xlu0 %v6154, 64
      %v7145 = vpop.permute.xlu0 %7144
      %7146 = vrot.lane.b32.xlu0 %v6155, 64
      %v7147 = vpop.permute.xlu0 %7146
      %7176 = vst.msk [vmem:[#allocation3 + $0x4] sm:$0xf] %vm6752, %v7093
      %7177 = vst.msk [vmem:[#allocation3 + $0x10] sm:$0x7] %vm6754, %v7095
      %7178 = vst.msk [vmem:[#allocation3 + $0x1c] sm:$0xf] %vm6752, %v7097
      %7179 = vst.msk [vmem:[#allocation3 + $0x28] sm:$0x7] %vm6754, %v7099
      %7180 = vst.msk [vmem:[#allocation3 + $0x34] sm:$0xf] %vm6752, %v7101
      %7181 = vst.msk [vmem:[#allocation3 + $0x40] sm:$0x7] %vm6754, %v7103
      %7182 = vst.msk [vmem:[#allocation3 + $0x4c] sm:$0xf] %vm6752, %v7105
      %7183 = vst.msk [vmem:[#allocation3 + $0x58] sm:$0x7] %vm6754, %v7107
      %7184 = vst.msk [vmem:[#allocation3 + $0x64] sm:$0xf] %vm6752, %v7109
      %7185 = vst.msk [vmem:[#allocation3 + $0x70] sm:$0x7] %vm6754, %v7111
      %7186 = vst.msk [vmem:[#allocation3 + $0x7c] sm:$0xf] %vm6752, %v7113
      %7187 = vst.msk [vmem:[#allocation3 + $0x88] sm:$0x7] %vm6754, %v7115
      %7188 = vst.msk [vmem:[#allocation3 + $0x94] sm:$0xf] %vm6752, %v7117
      %7189 = vst.msk [vmem:[#allocation3 + $0xa0] sm:$0x7] %vm6754, %v7119
      %7190 = vst.msk [vmem:[#allocation3 + $0xac] sm:$0xf] %vm6752, %v7121
      %7191 = vst.msk [vmem:[#allocation3 + $0xb8] sm:$0x7] %vm6754, %v7123
      %7192 = vst.msk [vmem:[#allocation3 + $0xc4] sm:$0xf] %vm6752, %v7125
      %7193 = vst.msk [vmem:[#allocation3 + $0xd0] sm:$0x7] %vm6754, %v7127
      %7194 = vst.msk [vmem:[#allocation3 + $0xdc] sm:$0xf] %vm6752, %v7129
      %7195 = vst.msk [vmem:[#allocation3 + $0xe8] sm:$0x7] %vm6754, %v7131
      %7196 = vst.msk [vmem:[#allocation3 + $0xf4] sm:$0xf] %vm6752, %v7133
      %7197 = vst.msk [vmem:[#allocation3 + $0x100] sm:$0x7] %vm6754, %v7135
      %7198 = vst.msk [vmem:[#allocation3 + $0x10c] sm:$0xf] %vm6752, %v7137
      %7199 = vst.msk [vmem:[#allocation3 + $0x118] sm:$0x7] %vm6754, %v7139
      %7200 = vst.msk [vmem:[#allocation3 + $0x124] sm:$0xf] %vm6752, %v7141
      %7201 = vst.msk [vmem:[#allocation3 + $0x130] sm:$0x7] %vm6754, %v7143
      %7202 = vst.msk [vmem:[#allocation3 + $0x13c] sm:$0xf] %vm6752, %v7145
      %7203 = vst.msk [vmem:[#allocation3 + $0x148] sm:$0x7] %vm6754, %v7147
      %v7205 = vshrl.u32 %v6154, 16
      %v7207 = vrot.slane %v7205, 4
      %v7208 = vshll.u32 %v6154, 16
      %v7210 = vrot.slane %v7208, 5
      %v7211 = vor.u32 %v7207, %v7210
      %v7212 = vrot.slane %v7211, 4
      %v7214 = vshll.u32 %v6155, 16
      %v7216 = vrot.slane %v7214, 5
      %v7217 = vsel %vm6186, %v7212, %v7216
      %v7218 = vshrl.u32 %v6155, 16
      %v7220 = vrot.slane %v7218, 4
      %v7221 = vor.u32 %v7220, %v7216
      %v7222 = vrot.slane %v7221, 4
      %7223 = vrot.lane.b32.xlu0 %v6238, 96
      %v7224 = vpop.permute.xlu0 %7223
      %7225 = vrot.lane.b32.xlu0 %v6243, 96
      %v7226 = vpop.permute.xlu0 %7225
      %7227 = vrot.lane.b32.xlu0 %v6257, 96
      %v7228 = vpop.permute.xlu0 %7227
      %7229 = vrot.lane.b32.xlu0 %v6262, 96
      %v7230 = vpop.permute.xlu0 %7229
      %7231 = vrot.lane.b32.xlu0 %v6276, 96
      %v7232 = vpop.permute.xlu0 %7231
      %7233 = vrot.lane.b32.xlu0 %v6281, 96
      %v7234 = vpop.permute.xlu0 %7233
      %7235 = vrot.lane.b32.xlu0 %v6295, 96
      %v7236 = vpop.permute.xlu0 %7235
      %7237 = vrot.lane.b32.xlu0 %v6300, 96
      %v7238 = vpop.permute.xlu0 %7237
      %7239 = vrot.lane.b32.xlu0 %v6314, 96
      %v7240 = vpop.permute.xlu0 %7239
      %7241 = vrot.lane.b32.xlu0 %v6319, 96
      %v7242 = vpop.permute.xlu0 %7241
      %7243 = vrot.lane.b32.xlu0 %v6333, 96
      %v7244 = vpop.permute.xlu0 %7243
      %7245 = vrot.lane.b32.xlu0 %v6338, 96
      %v7246 = vpop.permute.xlu0 %7245
      %7247 = vrot.lane.b32.xlu0 %v6352, 96
      %v7248 = vpop.permute.xlu0 %7247
      %7249 = vrot.lane.b32.xlu0 %v6357, 96
      %v7250 = vpop.permute.xlu0 %7249
      %7251 = vrot.lane.b32.xlu0 %v6371, 96
      %v7252 = vpop.permute.xlu0 %7251
      %7253 = vrot.lane.b32.xlu0 %v6376, 96
      %v7254 = vpop.permute.xlu0 %7253
      %7255 = vrot.lane.b32.xlu0 %v6390, 96
      %v7256 = vpop.permute.xlu0 %7255
      %7257 = vrot.lane.b32.xlu0 %v6395, 96
      %v7258 = vpop.permute.xlu0 %7257
      %7259 = vrot.lane.b32.xlu0 %v6409, 96
      %v7260 = vpop.permute.xlu0 %7259
      %7261 = vrot.lane.b32.xlu0 %v6414, 96
      %v7262 = vpop.permute.xlu0 %7261
      %7263 = vrot.lane.b32.xlu0 %v6428, 96
      %v7264 = vpop.permute.xlu0 %7263
      %7265 = vrot.lane.b32.xlu0 %v6433, 96
      %v7266 = vpop.permute.xlu0 %7265
      %7267 = vrot.lane.b32.xlu0 %v6447, 96
      %v7268 = vpop.permute.xlu0 %7267
      %7269 = vrot.lane.b32.xlu0 %v6452, 96
      %v7270 = vpop.permute.xlu0 %7269
      %7271 = vrot.lane.b32.xlu0 %v6911, 96
      %v7272 = vpop.permute.xlu0 %7271
      %7273 = vrot.lane.b32.xlu0 %v6916, 96
      %v7274 = vpop.permute.xlu0 %7273
      %7275 = vrot.lane.b32.xlu0 %v7217, 96
      %v7276 = vpop.permute.xlu0 %7275
      %7277 = vrot.lane.b32.xlu0 %v7222, 96
      %v7278 = vpop.permute.xlu0 %7277
      %7307 = vst.msk [vmem:[#allocation3 + $0x4] sm:$0xf] %vm6868, %v7224
      %7308 = vst.msk [vmem:[#allocation3 + $0x10] sm:$0x7] %vm6870, %v7226
      %7309 = vst.msk [vmem:[#allocation3 + $0x1c] sm:$0xf] %vm6868, %v7228
      %7310 = vst.msk [vmem:[#allocation3 + $0x28] sm:$0x7] %vm6870, %v7230
      %7311 = vst.msk [vmem:[#allocation3 + $0x34] sm:$0xf] %vm6868, %v7232
      %7312 = vst.msk [vmem:[#allocation3 + $0x40] sm:$0x7] %vm6870, %v7234
      %7313 = vst.msk [vmem:[#allocation3 + $0x4c] sm:$0xf] %vm6868, %v7236
      %7314 = vst.msk [vmem:[#allocation3 + $0x58] sm:$0x7] %vm6870, %v7238
      %7315 = vst.msk [vmem:[#allocation3 + $0x64] sm:$0xf] %vm6868, %v7240
      %7316 = vst.msk [vmem:[#allocation3 + $0x70] sm:$0x7] %vm6870, %v7242
      %7317 = vst.msk [vmem:[#allocation3 + $0x7c] sm:$0xf] %vm6868, %v7244
      %7318 = vst.msk [vmem:[#allocation3 + $0x88] sm:$0x7] %vm6870, %v7246
      %7319 = vst.msk [vmem:[#allocation3 + $0x94] sm:$0xf] %vm6868, %v7248
      %7320 = vst.msk [vmem:[#allocation3 + $0xa0] sm:$0x7] %vm6870, %v7250
      %7321 = vst.msk [vmem:[#allocation3 + $0xac] sm:$0xf] %vm6868, %v7252
      %7322 = vst.msk [vmem:[#allocation3 + $0xb8] sm:$0x7] %vm6870, %v7254
      %7323 = vst.msk [vmem:[#allocation3 + $0xc4] sm:$0xf] %vm6868, %v7256
      %7324 = vst.msk [vmem:[#allocation3 + $0xd0] sm:$0x7] %vm6870, %v7258
      %7325 = vst.msk [vmem:[#allocation3 + $0xdc] sm:$0xf] %vm6868, %v7260
      %7326 = vst.msk [vmem:[#allocation3 + $0xe8] sm:$0x7] %vm6870, %v7262
      %7327 = vst.msk [vmem:[#allocation3 + $0xf4] sm:$0xf] %vm6868, %v7264
      %7328 = vst.msk [vmem:[#allocation3 + $0x100] sm:$0x7] %vm6870, %v7266
      %7329 = vst.msk [vmem:[#allocation3 + $0x10c] sm:$0xf] %vm6868, %v7268
      %7330 = vst.msk [vmem:[#allocation3 + $0x118] sm:$0x7] %vm6870, %v7270
      %7331 = vst.msk [vmem:[#allocation3 + $0x124] sm:$0xf] %vm6868, %v7272
      %7332 = vst.msk [vmem:[#allocation3 + $0x130] sm:$0x7] %vm6870, %v7274
      %7333 = vst.msk [vmem:[#allocation3 + $0x13c] sm:$0xf] %vm6868, %v7276
      %7334 = vst.msk [vmem:[#allocation3 + $0x148] sm:$0x7] %vm6870, %v7278
      %v7335 = vrot.slane %v6154, 5
      %v7336 = vrot.slane %v7335, 4
      %v7337 = vrot.slane %v6155, 5
      %v7338 = vsel %vm6597, %v7336, %v7337
      %v7339 = vrot.slane %v7337, 4
      %7368 = vst.msk [vmem:[#allocation3 + $0x8] sm:$0xf] %vm5107, %v6611
      %7369 = vst.msk [vmem:[#allocation3 + $0x14] sm:$0x7] %vm6157, %v6612
      %7370 = vst.msk [vmem:[#allocation3 + $0x20] sm:$0xf] %vm5107, %v6616
      %7371 = vst.msk [vmem:[#allocation3 + $0x2c] sm:$0x7] %vm6157, %v6617
      %7372 = vst.msk [vmem:[#allocation3 + $0x38] sm:$0xf] %vm5107, %v6621
      %7373 = vst.msk [vmem:[#allocation3 + $0x44] sm:$0x7] %vm6157, %v6622
      %7374 = vst.msk [vmem:[#allocation3 + $0x50] sm:$0xf] %vm5107, %v6626
      %7375 = vst.msk [vmem:[#allocation3 + $0x5c] sm:$0x7] %vm6157, %v6627
      %7376 = vst.msk [vmem:[#allocation3 + $0x68] sm:$0xf] %vm5107, %v6631
      %7377 = vst.msk [vmem:[#allocation3 + $0x74] sm:$0x7] %vm6157, %v6632
      %7378 = vst.msk [vmem:[#allocation3 + $0x80] sm:$0xf] %vm5107, %v6636
      %7379 = vst.msk [vmem:[#allocation3 + $0x8c] sm:$0x7] %vm6157, %v6637
      %7380 = vst.msk [vmem:[#allocation3 + $0x98] sm:$0xf] %vm5107, %v6641
      %7381 = vst.msk [vmem:[#allocation3 + $0xa4] sm:$0x7] %vm6157, %v6642
      %7382 = vst.msk [vmem:[#allocation3 + $0xb0] sm:$0xf] %vm5107, %v6646
      %7383 = vst.msk [vmem:[#allocation3 + $0xbc] sm:$0x7] %vm6157, %v6647
      %7384 = vst.msk [vmem:[#allocation3 + $0xc8] sm:$0xf] %vm5107, %v6651
      %7385 = vst.msk [vmem:[#allocation3 + $0xd4] sm:$0x7] %vm6157, %v6652
      %7386 = vst.msk [vmem:[#allocation3 + $0xe0] sm:$0xf] %vm5107, %v6656
      %7387 = vst.msk [vmem:[#allocation3 + $0xec] sm:$0x7] %vm6157, %v6657
      %7388 = vst.msk [vmem:[#allocation3 + $0xf8] sm:$0xf] %vm5107, %v6661
      %7389 = vst.msk [vmem:[#allocation3 + $0x104] sm:$0x7] %vm6157, %v6662
      %7390 = vst.msk [vmem:[#allocation3 + $0x110] sm:$0xf] %vm5107, %v6666
      %7391 = vst.msk [vmem:[#allocation3 + $0x11c] sm:$0x7] %vm6157, %v6667
      %7392 = vst.msk [vmem:[#allocation3 + $0x128] sm:$0xf] %vm5107, %v6976
      %7393 = vst.msk [vmem:[#allocation3 + $0x134] sm:$0x7] %vm6157, %v6977
      %7394 = vst.msk [vmem:[#allocation3 + $0x140] sm:$0xf] %vm5107, %v7338
      %7395 = vst.msk [vmem:[#allocation3 + $0x14c] sm:$0x7] %vm6157, %v7339
      %v7396 = vld [vmem:[#allocation3] sm:$0xff]
      %v7397 = vld [vmem:[#allocation3 + $0x8] sm:$0xf]
      %v7398 = vld [vmem:[#allocation3 + $0xc] sm:$0x77]
      %v7399 = vld [vmem:[#allocation3 + $0x14] sm:$0x7]
      %v7400 = vld [vmem:[#allocation3 + $0x18] sm:$0xff]
      %v7401 = vld [vmem:[#allocation3 + $0x20] sm:$0xf]
      %v7402 = vld [vmem:[#allocation3 + $0x24] sm:$0x77]
      %v7403 = vld [vmem:[#allocation3 + $0x2c] sm:$0x7]
      %v7404 = vld [vmem:[#allocation3 + $0x30] sm:$0xff]
      %v7405 = vld [vmem:[#allocation3 + $0x38] sm:$0xf]
      %v7406 = vld [vmem:[#allocation3 + $0x3c] sm:$0x77]
      %v7407 = vld [vmem:[#allocation3 + $0x44] sm:$0x7]
      %v7408 = vld [vmem:[#allocation3 + $0x48] sm:$0xff]
      %v7409 = vld [vmem:[#allocation3 + $0x50] sm:$0xf]
      %v7410 = vld [vmem:[#allocation3 + $0x54] sm:$0x77]
      %v7411 = vld [vmem:[#allocation3 + $0x5c] sm:$0x7]
      %v7412 = vld [vmem:[#allocation3 + $0x60] sm:$0xff]
      %v7413 = vld [vmem:[#allocation3 + $0x68] sm:$0xf]
      %v7414 = vld [vmem:[#allocation3 + $0x6c] sm:$0x77]
      %v7415 = vld [vmem:[#allocation3 + $0x74] sm:$0x7]
      %v7416 = vld [vmem:[#allocation3 + $0x78] sm:$0xff]
      %v7417 = vld [vmem:[#allocation3 + $0x80] sm:$0xf]
      %v7418 = vld [vmem:[#allocation3 + $0x84] sm:$0x77]
      %v7419 = vld [vmem:[#allocation3 + $0x8c] sm:$0x7]
      %v7420 = vld [vmem:[#allocation3 + $0x90] sm:$0xff]
      %v7421 = vld [vmem:[#allocation3 + $0x98] sm:$0xf]
      %v7422 = vld [vmem:[#allocation3 + $0x9c] sm:$0x77]
      %v7423 = vld [vmem:[#allocation3 + $0xa4] sm:$0x7]
      %v7424 = vld [vmem:[#allocation3 + $0xa8] sm:$0xff]
      %v7425 = vld [vmem:[#allocation3 + $0xb0] sm:$0xf]
      %v7426 = vld [vmem:[#allocation3 + $0xb4] sm:$0x77]
      %v7427 = vld [vmem:[#allocation3 + $0xbc] sm:$0x7]
      %v7428 = vld [vmem:[#allocation3 + $0xc0] sm:$0xff]
      %v7429 = vld [vmem:[#allocation3 + $0xc8] sm:$0xf]
      %v7430 = vld [vmem:[#allocation3 + $0xcc] sm:$0x77]
      %v7431 = vld [vmem:[#allocation3 + $0xd4] sm:$0x7]
      %v7432 = vld [vmem:[#allocation3 + $0xd8] sm:$0xff]
      %v7433 = vld [vmem:[#allocation3 + $0xe0] sm:$0xf]
      %v7434 = vld [vmem:[#allocation3 + $0xe4] sm:$0x77]
      %v7435 = vld [vmem:[#allocation3 + $0xec] sm:$0x7]
      %v7436 = vld [vmem:[#allocation3 + $0xf0] sm:$0xff]
      %v7437 = vld [vmem:[#allocation3 + $0xf8] sm:$0xf]
      %v7438 = vld [vmem:[#allocation3 + $0xfc] sm:$0x77]
      %v7439 = vld [vmem:[#allocation3 + $0x104] sm:$0x7]
      %v7440 = vld [vmem:[#allocation3 + $0x108] sm:$0xff]
      %v7441 = vld [vmem:[#allocation3 + $0x110] sm:$0xf]
      %v7442 = vld [vmem:[#allocation3 + $0x114] sm:$0x77]
      %v7443 = vld [vmem:[#allocation3 + $0x11c] sm:$0x7]
      %v7444 = vld [vmem:[#allocation3 + $0x120] sm:$0xff]
      %v7445 = vld [vmem:[#allocation3 + $0x128] sm:$0xf]
      %v7446 = vld [vmem:[#allocation3 + $0x12c] sm:$0x77]
      %v7447 = vld [vmem:[#allocation3 + $0x134] sm:$0x7]
      %v7448 = vld [vmem:[#allocation3 + $0x138] sm:$0xff]
      %v7449 = vld [vmem:[#allocation3 + $0x140] sm:$0xf]
      %v7450 = vld [vmem:[#allocation3 + $0x144] sm:$0x77]
      %v7451 = vld [vmem:[#allocation3 + $0x14c] sm:$0x7]
      %v7508 = vrot.slane %v7396, 3
      %v7509 = vrot.slane %v7397, 6
      %v7510 = vrot.slane %v7397, 1
      %v7511 = vrot.slane %v7398, 3
      %v7512 = vrot.slane %v7399, 6
      %v7513 = vrot.slane %v7399, 1
      %v7514 = vrot.slane %v7400, 3
      %v7515 = vrot.slane %v7401, 6
      %v7516 = vrot.slane %v7401, 1
      %v7517 = vrot.slane %v7402, 3
      %v7518 = vrot.slane %v7403, 6
      %v7519 = vrot.slane %v7403, 1
      %v7520 = vrot.slane %v7404, 3
      %v7521 = vrot.slane %v7405, 6
      %v7522 = vrot.slane %v7405, 1
      %v7523 = vrot.slane %v7406, 3
      %v7524 = vrot.slane %v7407, 6
      %v7525 = vrot.slane %v7407, 1
      %v7526 = vrot.slane %v7408, 3
      %v7527 = vrot.slane %v7409, 6
      %v7528 = vrot.slane %v7409, 1
      %v7529 = vrot.slane %v7410, 3
      %v7530 = vrot.slane %v7411, 6
      %v7531 = vrot.slane %v7411, 1
      %v7532 = vrot.slane %v7412, 3
      %v7533 = vrot.slane %v7413, 6
      %v7534 = vrot.slane %v7413, 1
      %v7535 = vrot.slane %v7414, 3
      %v7536 = vrot.slane %v7415, 6
      %v7537 = vrot.slane %v7415, 1
      %v7538 = vrot.slane %v7416, 3
      %v7539 = vrot.slane %v7417, 6
      %v7540 = vrot.slane %v7417, 1
      %v7541 = vrot.slane %v7418, 3
      %v7542 = vrot.slane %v7419, 6
      %v7543 = vrot.slane %v7419, 1
      %v7544 = vrot.slane %v7420, 3
      %v7545 = vrot.slane %v7421, 6
      %v7546 = vrot.slane %v7421, 1
      %v7547 = vrot.slane %v7422, 3
      %v7548 = vrot.slane %v7423, 6
      %v7549 = vrot.slane %v7423, 1
      %v7550 = vrot.slane %v7424, 3
      %v7551 = vrot.slane %v7425, 6
      %v7552 = vrot.slane %v7425, 1
      %v7553 = vrot.slane %v7426, 3
      %v7554 = vrot.slane %v7427, 6
      %v7555 = vrot.slane %v7427, 1
      %v7556 = vrot.slane %v7428, 3
      %v7557 = vrot.slane %v7429, 6
      %v7558 = vrot.slane %v7429, 1
      %v7559 = vrot.slane %v7430, 3
      %v7560 = vrot.slane %v7431, 6
      %v7561 = vrot.slane %v7431, 1
      %v7562 = vrot.slane %v7432, 3
      %v7563 = vrot.slane %v7433, 6
      %v7564 = vrot.slane %v7433, 1
      %v7565 = vrot.slane %v7434, 3
      %v7566 = vrot.slane %v7435, 6
      %v7567 = vrot.slane %v7435, 1
      %v7568 = vrot.slane %v7436, 3
      %v7569 = vrot.slane %v7437, 6
      %v7570 = vrot.slane %v7437, 1
      %v7571 = vrot.slane %v7438, 3
      %v7572 = vrot.slane %v7439, 6
      %v7573 = vrot.slane %v7439, 1
      %v7574 = vrot.slane %v7440, 3
      %v7575 = vrot.slane %v7441, 6
      %v7576 = vrot.slane %v7441, 1
      %v7577 = vrot.slane %v7442, 3
      %v7578 = vrot.slane %v7443, 6
      %v7579 = vrot.slane %v7443, 1
      %v7580 = vrot.slane %v7444, 3
      %v7581 = vrot.slane %v7445, 6
      %v7582 = vrot.slane %v7445, 1
      %v7583 = vrot.slane %v7446, 3
      %v7584 = vrot.slane %v7447, 6
      %v7585 = vrot.slane %v7447, 1
      %v7586 = vrot.slane %v7448, 3
      %v7587 = vrot.slane %v7449, 6
      %v7588 = vrot.slane %v7449, 1
      %v7589 = vrot.slane %v7450, 3
      %v7590 = vrot.slane %v7451, 6
      %v7591 = vrot.slane %v7451, 1
      %vm7592 = vcmask 1040384
      %v7595 = vsel %vm7592, %v7396, %v7508
      %v7598 = vsel %vm5803, %v7509, %v7510
      %vm7599 = vcmask 1041408
      %v7600 = vsel %vm7599, %v7595, %v7598
      %v7601 = vsel %vm5815, %v7396, %v7508
      %v7602 = vsel %vm5805, %v7509, %v7510
      %vm7603 = vcmask 1042433
      %v7604 = vsel %vm7603, %v7601, %v7602
      %v7606 = vrot.slane %v7604, 1
      %v7607 = vsel %vm5803, %v7396, %v7508
      %v7608 = vsel %vm5807, %v7509, %v7510
      %vm7609 = vcmask 1043458
      %v7610 = vsel %vm7609, %v7607, %v7608
      %v7612 = vrot.slane %v7610, 2
      %v7613 = vsel %vm5805, %v7396, %v7508
      %v7614 = vsel %vm5809, %v7509, %v7510
      %vm7615 = vcmask 1044483
      %v7616 = vsel %vm7615, %v7613, %v7614
      %v7618 = vrot.slane %v7616, 3
      %v7621 = vsel %vm7592, %v7398, %v7511
      %v7624 = vsel %vm5803, %v7512, %v7513
      %v7625 = vsel %vm7599, %v7621, %v7624
      %v7626 = vsel %vm5815, %v7398, %v7511
      %v7627 = vsel %vm5805, %v7512, %v7513
      %v7628 = vsel %vm7603, %v7626, %v7627
      %v7630 = vrot.slane %v7628, 1
      %v7631 = vsel %vm5803, %v7398, %v7511
      %v7632 = vsel %vm5807, %v7512, %v7513
      %v7633 = vsel %vm7609, %v7631, %v7632
      %v7635 = vrot.slane %v7633, 2
      %v7638 = vsel %vm7592, %v7400, %v7514
      %v7641 = vsel %vm5803, %v7515, %v7516
      %v7642 = vsel %vm7599, %v7638, %v7641
      %v7643 = vsel %vm5815, %v7400, %v7514
      %v7644 = vsel %vm5805, %v7515, %v7516
      %v7645 = vsel %vm7603, %v7643, %v7644
      %v7647 = vrot.slane %v7645, 1
      %v7648 = vsel %vm5803, %v7400, %v7514
      %v7649 = vsel %vm5807, %v7515, %v7516
      %v7650 = vsel %vm7609, %v7648, %v7649
      %v7652 = vrot.slane %v7650, 2
      %v7653 = vsel %vm5805, %v7400, %v7514
      %v7654 = vsel %vm5809, %v7515, %v7516
      %v7655 = vsel %vm7615, %v7653, %v7654
      %v7657 = vrot.slane %v7655, 3
      %v7660 = vsel %vm7592, %v7402, %v7517
      %v7663 = vsel %vm5803, %v7518, %v7519
      %v7664 = vsel %vm7599, %v7660, %v7663
      %v7665 = vsel %vm5815, %v7402, %v7517
      %v7666 = vsel %vm5805, %v7518, %v7519
      %v7667 = vsel %vm7603, %v7665, %v7666
      %v7669 = vrot.slane %v7667, 1
      %v7670 = vsel %vm5803, %v7402, %v7517
      %v7671 = vsel %vm5807, %v7518, %v7519
      %v7672 = vsel %vm7609, %v7670, %v7671
      %v7674 = vrot.slane %v7672, 2
      %v7677 = vsel %vm7592, %v7404, %v7520
      %v7680 = vsel %vm5803, %v7521, %v7522
      %v7681 = vsel %vm7599, %v7677, %v7680
      %v7682 = vsel %vm5815, %v7404, %v7520
      %v7683 = vsel %vm5805, %v7521, %v7522
      %v7684 = vsel %vm7603, %v7682, %v7683
      %v7686 = vrot.slane %v7684, 1
      %v7687 = vsel %vm5803, %v7404, %v7520
      %v7688 = vsel %vm5807, %v7521, %v7522
      %v7689 = vsel %vm7609, %v7687, %v7688
      %v7691 = vrot.slane %v7689, 2
      %v7692 = vsel %vm5805, %v7404, %v7520
      %v7693 = vsel %vm5809, %v7521, %v7522
      %v7694 = vsel %vm7615, %v7692, %v7693
      %v7696 = vrot.slane %v7694, 3
      %v7699 = vsel %vm7592, %v7406, %v7523
      %v7702 = vsel %vm5803, %v7524, %v7525
      %v7703 = vsel %vm7599, %v7699, %v7702
      %v7704 = vsel %vm5815, %v7406, %v7523
      %v7705 = vsel %vm5805, %v7524, %v7525
      %v7706 = vsel %vm7603, %v7704, %v7705
      %v7708 = vrot.slane %v7706, 1
      %v7709 = vsel %vm5803, %v7406, %v7523
      %v7710 = vsel %vm5807, %v7524, %v7525
      %v7711 = vsel %vm7609, %v7709, %v7710
      %v7713 = vrot.slane %v7711, 2
      %v7716 = vsel %vm7592, %v7408, %v7526
      %v7719 = vsel %vm5803, %v7527, %v7528
      %v7720 = vsel %vm7599, %v7716, %v7719
      %v7721 = vsel %vm5815, %v7408, %v7526
      %v7722 = vsel %vm5805, %v7527, %v7528
      %v7723 = vsel %vm7603, %v7721, %v7722
      %v7725 = vrot.slane %v7723, 1
      %v7726 = vsel %vm5803, %v7408, %v7526
      %v7727 = vsel %vm5807, %v7527, %v7528
      %v7728 = vsel %vm7609, %v7726, %v7727
      %v7730 = vrot.slane %v7728, 2
      %v7731 = vsel %vm5805, %v7408, %v7526
      %v7732 = vsel %vm5809, %v7527, %v7528
      %v7733 = vsel %vm7615, %v7731, %v7732
      %v7735 = vrot.slane %v7733, 3
      %v7738 = vsel %vm7592, %v7410, %v7529
      %v7741 = vsel %vm5803, %v7530, %v7531
      %v7742 = vsel %vm7599, %v7738, %v7741
      %v7743 = vsel %vm5815, %v7410, %v7529
      %v7744 = vsel %vm5805, %v7530, %v7531
      %v7745 = vsel %vm7603, %v7743, %v7744
      %v7747 = vrot.slane %v7745, 1
      %v7748 = vsel %vm5803, %v7410, %v7529
      %v7749 = vsel %vm5807, %v7530, %v7531
      %v7750 = vsel %vm7609, %v7748, %v7749
      %v7752 = vrot.slane %v7750, 2
      %v7755 = vsel %vm7592, %v7412, %v7532
      %v7758 = vsel %vm5803, %v7533, %v7534
      %v7759 = vsel %vm7599, %v7755, %v7758
      %v7760 = vsel %vm5815, %v7412, %v7532
      %v7761 = vsel %vm5805, %v7533, %v7534
      %v7762 = vsel %vm7603, %v7760, %v7761
      %v7764 = vrot.slane %v7762, 1
      %v7765 = vsel %vm5803, %v7412, %v7532
      %v7766 = vsel %vm5807, %v7533, %v7534
      %v7767 = vsel %vm7609, %v7765, %v7766
      %v7769 = vrot.slane %v7767, 2
      %v7770 = vsel %vm5805, %v7412, %v7532
      %v7771 = vsel %vm5809, %v7533, %v7534
      %v7772 = vsel %vm7615, %v7770, %v7771
      %v7774 = vrot.slane %v7772, 3
      %v7777 = vsel %vm7592, %v7414, %v7535
      %v7780 = vsel %vm5803, %v7536, %v7537
      %v7781 = vsel %vm7599, %v7777, %v7780
      %v7782 = vsel %vm5815, %v7414, %v7535
      %v7783 = vsel %vm5805, %v7536, %v7537
      %v7784 = vsel %vm7603, %v7782, %v7783
      %v7786 = vrot.slane %v7784, 1
      %v7787 = vsel %vm5803, %v7414, %v7535
      %v7788 = vsel %vm5807, %v7536, %v7537
      %v7789 = vsel %vm7609, %v7787, %v7788
      %v7791 = vrot.slane %v7789, 2
      %v7794 = vsel %vm7592, %v7416, %v7538
      %v7797 = vsel %vm5803, %v7539, %v7540
      %v7798 = vsel %vm7599, %v7794, %v7797
      %v7799 = vsel %vm5815, %v7416, %v7538
      %v7800 = vsel %vm5805, %v7539, %v7540
      %v7801 = vsel %vm7603, %v7799, %v7800
      %v7803 = vrot.slane %v7801, 1
      %v7804 = vsel %vm5803, %v7416, %v7538
      %v7805 = vsel %vm5807, %v7539, %v7540
      %v7806 = vsel %vm7609, %v7804, %v7805
      %v7808 = vrot.slane %v7806, 2
      %v7809 = vsel %vm5805, %v7416, %v7538
      %v7810 = vsel %vm5809, %v7539, %v7540
      %v7811 = vsel %vm7615, %v7809, %v7810
      %v7813 = vrot.slane %v7811, 3
      %v7816 = vsel %vm7592, %v7418, %v7541
      %v7819 = vsel %vm5803, %v7542, %v7543
      %v7820 = vsel %vm7599, %v7816, %v7819
      %v7821 = vsel %vm5815, %v7418, %v7541
      %v7822 = vsel %vm5805, %v7542, %v7543
      %v7823 = vsel %vm7603, %v7821, %v7822
      %v7825 = vrot.slane %v7823, 1
      %v7826 = vsel %vm5803, %v7418, %v7541
      %v7827 = vsel %vm5807, %v7542, %v7543
      %v7828 = vsel %vm7609, %v7826, %v7827
      %v7830 = vrot.slane %v7828, 2
      %v7833 = vsel %vm7592, %v7420, %v7544
      %v7836 = vsel %vm5803, %v7545, %v7546
      %v7837 = vsel %vm7599, %v7833, %v7836
      %v7838 = vsel %vm5815, %v7420, %v7544
      %v7839 = vsel %vm5805, %v7545, %v7546
      %v7840 = vsel %vm7603, %v7838, %v7839
      %v7842 = vrot.slane %v7840, 1
      %v7843 = vsel %vm5803, %v7420, %v7544
      %v7844 = vsel %vm5807, %v7545, %v7546
      %v7845 = vsel %vm7609, %v7843, %v7844
      %v7847 = vrot.slane %v7845, 2
      %v7848 = vsel %vm5805, %v7420, %v7544
      %v7849 = vsel %vm5809, %v7545, %v7546
      %v7850 = vsel %vm7615, %v7848, %v7849
      %v7852 = vrot.slane %v7850, 3
      %v7855 = vsel %vm7592, %v7422, %v7547
      %v7858 = vsel %vm5803, %v7548, %v7549
      %v7859 = vsel %vm7599, %v7855, %v7858
      %v7860 = vsel %vm5815, %v7422, %v7547
      %v7861 = vsel %vm5805, %v7548, %v7549
      %v7862 = vsel %vm7603, %v7860, %v7861
      %v7864 = vrot.slane %v7862, 1
      %v7865 = vsel %vm5803, %v7422, %v7547
      %v7866 = vsel %vm5807, %v7548, %v7549
      %v7867 = vsel %vm7609, %v7865, %v7866
      %v7869 = vrot.slane %v7867, 2
      %v7872 = vsel %vm7592, %v7424, %v7550
      %v7875 = vsel %vm5803, %v7551, %v7552
      %v7876 = vsel %vm7599, %v7872, %v7875
      %v7877 = vsel %vm5815, %v7424, %v7550
      %v7878 = vsel %vm5805, %v7551, %v7552
      %v7879 = vsel %vm7603, %v7877, %v7878
      %v7881 = vrot.slane %v7879, 1
      %v7882 = vsel %vm5803, %v7424, %v7550
      %v7883 = vsel %vm5807, %v7551, %v7552
      %v7884 = vsel %vm7609, %v7882, %v7883
      %v7886 = vrot.slane %v7884, 2
      %v7887 = vsel %vm5805, %v7424, %v7550
      %v7888 = vsel %vm5809, %v7551, %v7552
      %v7889 = vsel %vm7615, %v7887, %v7888
      %v7891 = vrot.slane %v7889, 3
      %v7894 = vsel %vm7592, %v7426, %v7553
      %v7897 = vsel %vm5803, %v7554, %v7555
      %v7898 = vsel %vm7599, %v7894, %v7897
      %v7899 = vsel %vm5815, %v7426, %v7553
      %v7900 = vsel %vm5805, %v7554, %v7555
      %v7901 = vsel %vm7603, %v7899, %v7900
      %v7903 = vrot.slane %v7901, 1
      %v7904 = vsel %vm5803, %v7426, %v7553
      %v7905 = vsel %vm5807, %v7554, %v7555
      %v7906 = vsel %vm7609, %v7904, %v7905
      %v7908 = vrot.slane %v7906, 2
      %v7911 = vsel %vm7592, %v7428, %v7556
      %v7914 = vsel %vm5803, %v7557, %v7558
      %v7915 = vsel %vm7599, %v7911, %v7914
      %v7916 = vsel %vm5815, %v7428, %v7556
      %v7917 = vsel %vm5805, %v7557, %v7558
      %v7918 = vsel %vm7603, %v7916, %v7917
      %v7920 = vrot.slane %v7918, 1
      %v7921 = vsel %vm5803, %v7428, %v7556
      %v7922 = vsel %vm5807, %v7557, %v7558
      %v7923 = vsel %vm7609, %v7921, %v7922
      %v7925 = vrot.slane %v7923, 2
      %v7926 = vsel %vm5805, %v7428, %v7556
      %v7927 = vsel %vm5809, %v7557, %v7558
      %v7928 = vsel %vm7615, %v7926, %v7927
      %v7930 = vrot.slane %v7928, 3
      %v7933 = vsel %vm7592, %v7430, %v7559
      %v7936 = vsel %vm5803, %v7560, %v7561
      %v7937 = vsel %vm7599, %v7933, %v7936
      %v7938 = vsel %vm5815, %v7430, %v7559
      %v7939 = vsel %vm5805, %v7560, %v7561
      %v7940 = vsel %vm7603, %v7938, %v7939
      %v7942 = vrot.slane %v7940, 1
      %v7943 = vsel %vm5803, %v7430, %v7559
      %v7944 = vsel %vm5807, %v7560, %v7561
      %v7945 = vsel %vm7609, %v7943, %v7944
      %v7947 = vrot.slane %v7945, 2
      %v7950 = vsel %vm7592, %v7432, %v7562
      %v7953 = vsel %vm5803, %v7563, %v7564
      %v7954 = vsel %vm7599, %v7950, %v7953
      %v7955 = vsel %vm5815, %v7432, %v7562
      %v7956 = vsel %vm5805, %v7563, %v7564
      %v7957 = vsel %vm7603, %v7955, %v7956
      %v7959 = vrot.slane %v7957, 1
      %v7960 = vsel %vm5803, %v7432, %v7562
      %v7961 = vsel %vm5807, %v7563, %v7564
      %v7962 = vsel %vm7609, %v7960, %v7961
      %v7964 = vrot.slane %v7962, 2
      %v7965 = vsel %vm5805, %v7432, %v7562
      %v7966 = vsel %vm5809, %v7563, %v7564
      %v7967 = vsel %vm7615, %v7965, %v7966
      %v7969 = vrot.slane %v7967, 3
      %v7972 = vsel %vm7592, %v7434, %v7565
      %v7975 = vsel %vm5803, %v7566, %v7567
      %v7976 = vsel %vm7599, %v7972, %v7975
      %v7977 = vsel %vm5815, %v7434, %v7565
      %v7978 = vsel %vm5805, %v7566, %v7567
      %v7979 = vsel %vm7603, %v7977, %v7978
      %v7981 = vrot.slane %v7979, 1
      %v7982 = vsel %vm5803, %v7434, %v7565
      %v7983 = vsel %vm5807, %v7566, %v7567
      %v7984 = vsel %vm7609, %v7982, %v7983
      %v7986 = vrot.slane %v7984, 2
      %v7989 = vsel %vm7592, %v7436, %v7568
      %v7992 = vsel %vm5803, %v7569, %v7570
      %v7993 = vsel %vm7599, %v7989, %v7992
      %v7994 = vsel %vm5815, %v7436, %v7568
      %v7995 = vsel %vm5805, %v7569, %v7570
      %v7996 = vsel %vm7603, %v7994, %v7995
      %v7998 = vrot.slane %v7996, 1
      %v7999 = vsel %vm5803, %v7436, %v7568
      %v8000 = vsel %vm5807, %v7569, %v7570
      %v8001 = vsel %vm7609, %v7999, %v8000
      %v8003 = vrot.slane %v8001, 2
      %v8004 = vsel %vm5805, %v7436, %v7568
      %v8005 = vsel %vm5809, %v7569, %v7570
      %v8006 = vsel %vm7615, %v8004, %v8005
      %v8008 = vrot.slane %v8006, 3
      %v8011 = vsel %vm7592, %v7438, %v7571
      %v8014 = vsel %vm5803, %v7572, %v7573
      %v8015 = vsel %vm7599, %v8011, %v8014
      %v8016 = vsel %vm5815, %v7438, %v7571
      %v8017 = vsel %vm5805, %v7572, %v7573
      %v8018 = vsel %vm7603, %v8016, %v8017
      %v8020 = vrot.slane %v8018, 1
      %v8021 = vsel %vm5803, %v7438, %v7571
      %v8022 = vsel %vm5807, %v7572, %v7573
      %v8023 = vsel %vm7609, %v8021, %v8022
      %v8025 = vrot.slane %v8023, 2
      %v8028 = vsel %vm7592, %v7440, %v7574
      %v8031 = vsel %vm5803, %v7575, %v7576
      %v8032 = vsel %vm7599, %v8028, %v8031
      %v8033 = vsel %vm5815, %v7440, %v7574
      %v8034 = vsel %vm5805, %v7575, %v7576
      %v8035 = vsel %vm7603, %v8033, %v8034
      %v8037 = vrot.slane %v8035, 1
      %v8038 = vsel %vm5803, %v7440, %v7574
      %v8039 = vsel %vm5807, %v7575, %v7576
      %v8040 = vsel %vm7609, %v8038, %v8039
      %v8042 = vrot.slane %v8040, 2
      %v8043 = vsel %vm5805, %v7440, %v7574
      %v8044 = vsel %vm5809, %v7575, %v7576
      %v8045 = vsel %vm7615, %v8043, %v8044
      %v8047 = vrot.slane %v8045, 3
      %v8050 = vsel %vm7592, %v7442, %v7577
      %v8053 = vsel %vm5803, %v7578, %v7579
      %v8054 = vsel %vm7599, %v8050, %v8053
      %v8055 = vsel %vm5815, %v7442, %v7577
      %v8056 = vsel %vm5805, %v7578, %v7579
      %v8057 = vsel %vm7603, %v8055, %v8056
      %v8059 = vrot.slane %v8057, 1
      %v8060 = vsel %vm5803, %v7442, %v7577
      %v8061 = vsel %vm5807, %v7578, %v7579
      %v8062 = vsel %vm7609, %v8060, %v8061
      %v8064 = vrot.slane %v8062, 2
      %v8067 = vsel %vm7592, %v7444, %v7580
      %v8070 = vsel %vm5803, %v7581, %v7582
      %v8071 = vsel %vm7599, %v8067, %v8070
      %v8072 = vsel %vm5815, %v7444, %v7580
      %v8073 = vsel %vm5805, %v7581, %v7582
      %v8074 = vsel %vm7603, %v8072, %v8073
      %v8076 = vrot.slane %v8074, 1
      %v8077 = vsel %vm5803, %v7444, %v7580
      %v8078 = vsel %vm5807, %v7581, %v7582
      %v8079 = vsel %vm7609, %v8077, %v8078
      %v8081 = vrot.slane %v8079, 2
      %v8082 = vsel %vm5805, %v7444, %v7580
      %v8083 = vsel %vm5809, %v7581, %v7582
      %v8084 = vsel %vm7615, %v8082, %v8083
      %v8086 = vrot.slane %v8084, 3
      %v8089 = vsel %vm7592, %v7446, %v7583
      %v8092 = vsel %vm5803, %v7584, %v7585
      %v8093 = vsel %vm7599, %v8089, %v8092
      %v8094 = vsel %vm5815, %v7446, %v7583
      %v8095 = vsel %vm5805, %v7584, %v7585
      %v8096 = vsel %vm7603, %v8094, %v8095
      %v8098 = vrot.slane %v8096, 1
      %v8099 = vsel %vm5803, %v7446, %v7583
      %v8100 = vsel %vm5807, %v7584, %v7585
      %v8101 = vsel %vm7609, %v8099, %v8100
      %v8103 = vrot.slane %v8101, 2
      %v8106 = vsel %vm7592, %v7448, %v7586
      %v8109 = vsel %vm5803, %v7587, %v7588
      %v8110 = vsel %vm7599, %v8106, %v8109
      %v8111 = vsel %vm5815, %v7448, %v7586
      %v8112 = vsel %vm5805, %v7587, %v7588
      %v8113 = vsel %vm7603, %v8111, %v8112
      %v8115 = vrot.slane %v8113, 1
      %v8116 = vsel %vm5803, %v7448, %v7586
      %v8117 = vsel %vm5807, %v7587, %v7588
      %v8118 = vsel %vm7609, %v8116, %v8117
      %v8120 = vrot.slane %v8118, 2
      %v8121 = vsel %vm5805, %v7448, %v7586
      %v8122 = vsel %vm5809, %v7587, %v7588
      %v8123 = vsel %vm7615, %v8121, %v8122
      %v8125 = vrot.slane %v8123, 3
      %v8128 = vsel %vm7592, %v7450, %v7589
      %v8131 = vsel %vm5803, %v7590, %v7591
      %v8132 = vsel %vm7599, %v8128, %v8131
      %v8133 = vsel %vm5815, %v7450, %v7589
      %v8134 = vsel %vm5805, %v7590, %v7591
      %v8135 = vsel %vm7603, %v8133, %v8134
      %v8137 = vrot.slane %v8135, 1
      %v8138 = vsel %vm5803, %v7450, %v7589
      %v8139 = vsel %vm5807, %v7590, %v7591
      %v8140 = vsel %vm7609, %v8138, %v8139
      %v8142 = vrot.slane %v8140, 2
      %v8143 = vld [vmem:[%s3] sm:$0xf]
      %v8144 = vld [vmem:[%s3 + $0x4] sm:$0xf]
      %v8145 = vld [vmem:[%s3 + $0x8] sm:$0xf]
      %v8146 = vld [vmem:[%s3 + $0xc] sm:$0xf]
      %v8147 = vld [vmem:[%s3 + $0x10] sm:$0xf]
      %v8148 = vld [vmem:[%s3 + $0x14] sm:$0xf]
      %v8149 = vld [vmem:[%s3 + $0x18] sm:$0xf]
      %v8150 = vld [vmem:[%s3 + $0x1c] sm:$0xf]
      %v8151 = vld [vmem:[%s3 + $0x20] sm:$0xf]
      %v8152 = vld [vmem:[%s3 + $0x24] sm:$0xf]
      %v8153 = vld [vmem:[%s3 + $0x28] sm:$0xf]
      %v8154 = vld [vmem:[%s3 + $0x2c] sm:$0xf]
      %v8155 = vld [vmem:[%s3 + $0x30] sm:$0xf]
      %v8156 = vld [vmem:[%s3 + $0x34] sm:$0xf]
      %v8157 = vld [vmem:[%s3 + $0x38] sm:$0xf]
      %v8158 = vld [vmem:[%s3 + $0x3c] sm:$0xf]
      %v8159 = vld [vmem:[%s3 + $0x40] sm:$0xf]
      %v8160 = vld [vmem:[%s3 + $0x44] sm:$0xf]
      %v8161 = vld [vmem:[%s3 + $0x48] sm:$0xf]
      %v8162 = vld [vmem:[%s3 + $0x4c] sm:$0xf]
      %v8163 = vld [vmem:[%s3 + $0x50] sm:$0xf]
      %v8164 = vld [vmem:[%s3 + $0x54] sm:$0xf]
      %v8165 = vld [vmem:[%s3 + $0x58] sm:$0xf]
      %v8166 = vld [vmem:[%s3 + $0x5c] sm:$0xf]
      %v8167 = vld [vmem:[%s3 + $0x60] sm:$0xf]
      %v8168 = vld [vmem:[%s3 + $0x64] sm:$0xf]
      %v8169 = vld [vmem:[%s3 + $0x68] sm:$0xf]
      %v8170 = vld [vmem:[%s3 + $0x6c] sm:$0xf]
      %v8171 = vld [vmem:[%s3 + $0x70] sm:$0xf]
      %v8172 = vld [vmem:[%s3 + $0x74] sm:$0xf]
      %v8173 = vld [vmem:[%s3 + $0x78] sm:$0xf]
      %v8174 = vld [vmem:[%s3 + $0x7c] sm:$0xf]
      %v8175 = vld [vmem:[%s3 + $0x80] sm:$0xf]
      %v8176 = vld [vmem:[%s3 + $0x84] sm:$0xf]
      %v8177 = vld [vmem:[%s3 + $0x88] sm:$0xf]
      %v8178 = vld [vmem:[%s3 + $0x8c] sm:$0xf]
      %v8179 = vld [vmem:[%s4] sm:$0x1]
      %v8181 = vperm.slane %v8179, 0
      %8183 = vst [vmem:[#allocation1] ss:$9 sm:$0xff] %v7600
      %s8185 = scalar_lea.vmem [#allocation1], 1
      %8186 = vst [vmem:[%s8185] ss:$9 sm:$0xff] %v7606
      %s8188 = scalar_lea.vmem [#allocation1], 2
      %8189 = vst [vmem:[%s8188] ss:$9 sm:$0xff] %v7612
      %s8191 = scalar_lea.vmem [#allocation1], 3
      %8192 = vst [vmem:[%s8191] ss:$9 sm:$0xff] %v7618
      %s8193 = scalar_lea.vmem [#allocation1], 4
      %8194 = vst [vmem:[%s8193] ss:$9 sm:$0xff] %v7625
      %s8196 = scalar_lea.vmem [#allocation1], 5
      %8197 = vst [vmem:[%s8196] ss:$9 sm:$0xff] %v7630
      %s8199 = scalar_lea.vmem [#allocation1], 6
      %8200 = vst [vmem:[%s8199] ss:$9 sm:$0xff] %v7635
      %s8201 = scalar_lea.vmem [#allocation1], 7
      %8202 = vst [vmem:[%s8201] ss:$9 sm:$0xff] %v7642
      %v8203 = vld [vmem:[#allocation1] sm:$0xff]
      %v8204 = vld [vmem:[#allocation1 + $0x9] sm:$0xff]
      %v8205 = vld [vmem:[#allocation1 + $0x12] sm:$0xff]
      %8207 = vst [vmem:[#allocation1] ss:$9 sm:$0xff] %v7647
      %8209 = vst [vmem:[%s8185] ss:$9 sm:$0xff] %v7652
      %8211 = vst [vmem:[%s8188] ss:$9 sm:$0xff] %v7657
      %8212 = vst [vmem:[%s8191] ss:$9 sm:$0xff] %v7664
      %8214 = vst [vmem:[%s8193] ss:$9 sm:$0xff] %v7669
      %8216 = vst [vmem:[%s8196] ss:$9 sm:$0xff] %v7674
      %8217 = vst [vmem:[%s8199] ss:$9 sm:$0xff] %v7681
      %8219 = vst [vmem:[%s8201] ss:$9 sm:$0xff] %v7686
      %v8220 = vld [vmem:[#allocation1] sm:$0xff]
      %v8221 = vld [vmem:[#allocation1 + $0x9] sm:$0xff]
      %v8222 = vld [vmem:[#allocation1 + $0x12] sm:$0xff]
      %8224 = vst [vmem:[#allocation1] ss:$9 sm:$0xff] %v7691
      %8226 = vst [vmem:[%s8185] ss:$9 sm:$0xff] %v7696
      %8227 = vst [vmem:[%s8188] ss:$9 sm:$0xff] %v7703
      %8229 = vst [vmem:[%s8191] ss:$9 sm:$0xff] %v7708
      %8231 = vst [vmem:[%s8193] ss:$9 sm:$0xff] %v7713
      %8232 = vst [vmem:[%s8196] ss:$9 sm:$0xff] %v7720
      %8234 = vst [vmem:[%s8199] ss:$9 sm:$0xff] %v7725
      %8236 = vst [vmem:[%s8201] ss:$9 sm:$0xff] %v7730
      %v8237 = vld [vmem:[#allocation1] sm:$0xff]
      %v8238 = vld [vmem:[#allocation1 + $0x9] sm:$0xff]
      %v8239 = vld [vmem:[#allocation1 + $0x12] sm:$0xff]
      %8241 = vst [vmem:[#allocation1] ss:$9 sm:$0xff] %v7735
      %8242 = vst [vmem:[%s8185] ss:$9 sm:$0xff] %v7742
      %8244 = vst [vmem:[%s8188] ss:$9 sm:$0xff] %v7747
      %8246 = vst [vmem:[%s8191] ss:$9 sm:$0xff] %v7752
      %8247 = vst [vmem:[%s8193] ss:$9 sm:$0xff] %v7759
      %8249 = vst [vmem:[%s8196] ss:$9 sm:$0xff] %v7764
      %8251 = vst [vmem:[%s8199] ss:$9 sm:$0xff] %v7769
      %8253 = vst [vmem:[%s8201] ss:$9 sm:$0xff] %v7774
      %v8254 = vld [vmem:[#allocation1] sm:$0xff]
      %v8255 = vld [vmem:[#allocation1 + $0x9] sm:$0xff]
      %v8256 = vld [vmem:[#allocation1 + $0x12] sm:$0xff]
      %8257 = vst [vmem:[#allocation1] ss:$9 sm:$0xff] %v7781
      %8259 = vst [vmem:[%s8185] ss:$9 sm:$0xff] %v7786
      %8261 = vst [vmem:[%s8188] ss:$9 sm:$0xff] %v7791
      %8262 = vst [vmem:[%s8191] ss:$9 sm:$0xff] %v7798
      %8264 = vst [vmem:[%s8193] ss:$9 sm:$0xff] %v7803
      %8266 = vst [vmem:[%s8196] ss:$9 sm:$0xff] %v7808
      %8268 = vst [vmem:[%s8199] ss:$9 sm:$0xff] %v7813
      %8269 = vst [vmem:[%s8201] ss:$9 sm:$0xff] %v7820
      %v8270 = vld [vmem:[#allocation1] sm:$0xff]
      %v8271 = vld [vmem:[#allocation1 + $0x9] sm:$0xff]
      %v8272 = vld [vmem:[#allocation1 + $0x12] sm:$0xff]
      %8274 = vst [vmem:[#allocation1] ss:$9 sm:$0xff] %v7825
      %8276 = vst [vmem:[%s8185] ss:$9 sm:$0xff] %v7830
      %8277 = vst [vmem:[%s8188] ss:$9 sm:$0xff] %v7837
      %8279 = vst [vmem:[%s8191] ss:$9 sm:$0xff] %v7842
      %8281 = vst [vmem:[%s8193] ss:$9 sm:$0xff] %v7847
      %8283 = vst [vmem:[%s8196] ss:$9 sm:$0xff] %v7852
      %8284 = vst [vmem:[%s8199] ss:$9 sm:$0xff] %v7859
      %8286 = vst [vmem:[%s8201] ss:$9 sm:$0xff] %v7864
      %v8287 = vld [vmem:[#allocation1] sm:$0xff]
      %v8288 = vld [vmem:[#allocation1 + $0x9] sm:$0xff]
      %v8289 = vld [vmem:[#allocation1 + $0x12] sm:$0xff]
      %8291 = vst [vmem:[#allocation1] ss:$9 sm:$0xff] %v7869
      %8292 = vst [vmem:[%s8185] ss:$9 sm:$0xff] %v7876
      %8294 = vst [vmem:[%s8188] ss:$9 sm:$0xff] %v7881
      %8296 = vst [vmem:[%s8191] ss:$9 sm:$0xff] %v7886
      %8298 = vst [vmem:[%s8193] ss:$9 sm:$0xff] %v7891
      %8299 = vst [vmem:[%s8196] ss:$9 sm:$0xff] %v7898
      %8301 = vst [vmem:[%s8199] ss:$9 sm:$0xff] %v7903
      %8303 = vst [vmem:[%s8201] ss:$9 sm:$0xff] %v7908
      %v8304 = vld [vmem:[#allocation1] sm:$0xff]
      %v8305 = vld [vmem:[#allocation1 + $0x9] sm:$0xff]
      %v8306 = vld [vmem:[#allocation1 + $0x12] sm:$0xff]
      %8307 = vst [vmem:[#allocation1] ss:$9 sm:$0xff] %v7915
      %8309 = vst [vmem:[%s8185] ss:$9 sm:$0xff] %v7920
      %8311 = vst [vmem:[%s8188] ss:$9 sm:$0xff] %v7925
      %8313 = vst [vmem:[%s8191] ss:$9 sm:$0xff] %v7930
      %8314 = vst [vmem:[%s8193] ss:$9 sm:$0xff] %v7937
      %8316 = vst [vmem:[%s8196] ss:$9 sm:$0xff] %v7942
      %8318 = vst [vmem:[%s8199] ss:$9 sm:$0xff] %v7947
      %8319 = vst [vmem:[%s8201] ss:$9 sm:$0xff] %v7954
      %v8320 = vld [vmem:[#allocation1] sm:$0xff]
      %v8321 = vld [vmem:[#allocation1 + $0x9] sm:$0xff]
      %v8322 = vld [vmem:[#allocation1 + $0x12] sm:$0xff]
      %8324 = vst [vmem:[#allocation1] ss:$9 sm:$0xff] %v7959
      %8326 = vst [vmem:[%s8185] ss:$9 sm:$0xff] %v7964
      %8328 = vst [vmem:[%s8188] ss:$9 sm:$0xff] %v7969
      %8329 = vst [vmem:[%s8191] ss:$9 sm:$0xff] %v7976
      %8331 = vst [vmem:[%s8193] ss:$9 sm:$0xff] %v7981
      %8333 = vst [vmem:[%s8196] ss:$9 sm:$0xff] %v7986
      %8334 = vst [vmem:[%s8199] ss:$9 sm:$0xff] %v7993
      %8336 = vst [vmem:[%s8201] ss:$9 sm:$0xff] %v7998
      %v8337 = vld [vmem:[#allocation1] sm:$0xff]
      %v8338 = vld [vmem:[#allocation1 + $0x9] sm:$0xff]
      %v8339 = vld [vmem:[#allocation1 + $0x12] sm:$0xff]
      %8341 = vst [vmem:[#allocation1] ss:$9 sm:$0xff] %v8003
      %8343 = vst [vmem:[%s8185] ss:$9 sm:$0xff] %v8008
      %8344 = vst [vmem:[%s8188] ss:$9 sm:$0xff] %v8015
      %8346 = vst [vmem:[%s8191] ss:$9 sm:$0xff] %v8020
      %8348 = vst [vmem:[%s8193] ss:$9 sm:$0xff] %v8025
      %8349 = vst [vmem:[%s8196] ss:$9 sm:$0xff] %v8032
      %8351 = vst [vmem:[%s8199] ss:$9 sm:$0xff] %v8037
      %8353 = vst [vmem:[%s8201] ss:$9 sm:$0xff] %v8042
      %v8354 = vld [vmem:[#allocation1] sm:$0xff]
      %v8355 = vld [vmem:[#allocation1 + $0x9] sm:$0xff]
      %v8356 = vld [vmem:[#allocation1 + $0x12] sm:$0xff]
      %8358 = vst [vmem:[#allocation1] ss:$9 sm:$0xff] %v8047
      %8359 = vst [vmem:[%s8185] ss:$9 sm:$0xff] %v8054
      %8361 = vst [vmem:[%s8188] ss:$9 sm:$0xff] %v8059
      %8363 = vst [vmem:[%s8191] ss:$9 sm:$0xff] %v8064
      %8364 = vst [vmem:[%s8193] ss:$9 sm:$0xff] %v8071
      %8366 = vst [vmem:[%s8196] ss:$9 sm:$0xff] %v8076
      %8368 = vst [vmem:[%s8199] ss:$9 sm:$0xff] %v8081
      %8370 = vst [vmem:[%s8201] ss:$9 sm:$0xff] %v8086
      %v8371 = vld [vmem:[#allocation1] sm:$0xff]
      %v8372 = vld [vmem:[#allocation1 + $0x9] sm:$0xff]
      %v8373 = vld [vmem:[#allocation1 + $0x12] sm:$0xff]
      %8374 = vst [vmem:[#allocation1] ss:$9 sm:$0xff] %v8093
      %8376 = vst [vmem:[%s8185] ss:$9 sm:$0xff] %v8098
      %8378 = vst [vmem:[%s8188] ss:$9 sm:$0xff] %v8103
      %8379 = vst [vmem:[%s8191] ss:$9 sm:$0xff] %v8110
      %8381 = vst [vmem:[%s8193] ss:$9 sm:$0xff] %v8115
      %8383 = vst [vmem:[%s8196] ss:$9 sm:$0xff] %v8120
      %8385 = vst [vmem:[%s8199] ss:$9 sm:$0xff] %v8125
      %8386 = vst [vmem:[%s8201] ss:$9 sm:$0xff] %v8132
      %v8387 = vld [vmem:[#allocation1] sm:$0xff]
      %v8388 = vld [vmem:[#allocation1 + $0x9] sm:$0xff]
      %v8389 = vld [vmem:[#allocation1 + $0x12] sm:$0xff]
      %8391 = vst [vmem:[#allocation1] ss:$9 sm:$0xff] %v8137
      %8393 = vst [vmem:[%s8185] ss:$9 sm:$0xff] %v8142
      %v8394 = vld [vmem:[#allocation1] sm:$0xff]
      %v8395 = vld [vmem:[#allocation1 + $0x9] sm:$0xff]
      %v8396 = vld [vmem:[#allocation1 + $0x12] sm:$0xff]
      %v8459 = vunpack.c.l.b16 %v8143
      %v8460 = vunpack.c.l.b16 %v8144
      %v8461 = vunpack.c.l.b16 %v8145
      %v8462 = vunpack.c.l.b16 %v8146
      %v8463 = vunpack.c.l.b16 %v8147
      %v8464 = vunpack.c.l.b16 %v8148
      %v8465 = vunpack.c.l.b16 %v8149
      %v8466 = vunpack.c.l.b16 %v8150
      %v8467 = vunpack.c.l.b16 %v8151
      %v8468 = vunpack.c.l.b16 %v8152
      %v8469 = vunpack.c.l.b16 %v8153
      %v8470 = vunpack.c.l.b16 %v8154
      %v8471 = vunpack.c.l.b16 %v8155
      %v8472 = vunpack.c.l.b16 %v8156
      %v8473 = vunpack.c.l.b16 %v8157
      %v8474 = vunpack.c.l.b16 %v8158
      %v8475 = vunpack.c.l.b16 %v8159
      %v8476 = vunpack.c.l.b16 %v8160
      %v8477 = vunpack.c.l.b16 %v8161
      %v8478 = vunpack.c.l.b16 %v8162
      %v8479 = vunpack.c.l.b16 %v8163
      %v8480 = vunpack.c.l.b16 %v8164
      %v8481 = vunpack.c.l.b16 %v8165
      %v8482 = vunpack.c.l.b16 %v8166
      %v8483 = vunpack.c.l.b16 %v8167
      %v8484 = vunpack.c.l.b16 %v8168
      %v8485 = vunpack.c.l.b16 %v8169
      %v8486 = vunpack.c.l.b16 %v8170
      %v8487 = vunpack.c.l.b16 %v8171
      %v8488 = vunpack.c.l.b16 %v8172
      %v8489 = vunpack.c.l.b16 %v8173
      %v8490 = vunpack.c.l.b16 %v8174
      %v8491 = vunpack.c.l.b16 %v8175
      %v8492 = vunpack.c.l.b16 %v8176
      %v8493 = vunpack.c.l.b16 %v8177
      %v8494 = vunpack.c.l.b16 %v8178
      %v8495 = vpack.c.b16 %v8460, %v8459
      %v8496 = vpack.c.b16 %v8462, %v8461
      %v8497 = vpack.c.b16 %v8464, %v8463
      %v8498 = vpack.c.b16 %v8466, %v8465
      %v8499 = vpack.c.b16 %v8468, %v8467
      %v8500 = vpack.c.b16 %v8470, %v8469
      %v8501 = vpack.c.b16 %v8472, %v8471
      %v8502 = vpack.c.b16 %v8474, %v8473
      %v8503 = vpack.c.b16 %v8476, %v8475
      %v8504 = vpack.c.b16 %v8478, %v8477
      %v8505 = vpack.c.b16 %v8480, %v8479
      %v8506 = vpack.c.b16 %v8482, %v8481
      %v8507 = vpack.c.b16 %v8484, %v8483
      %v8508 = vpack.c.b16 %v8486, %v8485
      %v8509 = vpack.c.b16 %v8488, %v8487
      %v8510 = vpack.c.b16 %v8490, %v8489
      %v8511 = vpack.c.b16 %v8492, %v8491
      %v8512 = vpack.c.b16 %v8494, %v8493
      %v8531 = vsel %vm4518, %v8205, 0
      %v8533 = vsel %vm4518, %v8222, 0
      %v8535 = vsel %vm4518, %v8239, 0
      %v8537 = vsel %vm4518, %v8256, 0
      %v8539 = vsel %vm4518, %v8272, 0
      %v8541 = vsel %vm4518, %v8289, 0
      %v8543 = vsel %vm4518, %v8306, 0
      %v8545 = vsel %vm4518, %v8322, 0
      %v8547 = vsel %vm4518, %v8339, 0
      %v8549 = vsel %vm4518, %v8356, 0
      %v8551 = vsel %vm4518, %v8373, 0
      %v8553 = vsel %vm4518, %v8389, 0
      %v8555 = vsel %vm4518, %v8396, 0
      %8557 = vmatpush.bf16.msra.mxu0 %v8502
      %8558 = vmatpush.bf16.msra.mxu0 %v8501
      %8559 = vmatpush.bf16.msra.mxu0 %v8500
      %8560 = vmatpush.bf16.msra.mxu0 %v8499
      %8561 = vmatpush.bf16.msra.mxu0 %v8498
      %8562 = vmatpush.bf16.msra.mxu0 %v8497
      %8563 = vmatpush.bf16.msra.mxu0 %v8496
      %8564 = vmatpush.bf16.msra.mxu0 %v8495
      %8565 = vmatmul.bf16.gmra.mxu0 %v8203
      %v8566 = vpop.f32.mrf.mxu0
      %v8567 = vadd.f32 %v8181, %v8566
      %v8568 = vpop.f32.mrf.mxu0
      %v8569 = vadd.f32 %v8181, %v8568
      %8570 = vmatmul.bf16.gmra.mxu0 %v8220
      %v8571 = vpop.f32.mrf.mxu0
      %v8572 = vadd.f32 %v8181, %v8571
      %v8573 = vpop.f32.mrf.mxu0
      %v8574 = vadd.f32 %v8181, %v8573
      %8575 = vmatmul.bf16.gmra.mxu0 %v8237
      %v8576 = vpop.f32.mrf.mxu0
      %v8577 = vadd.f32 %v8181, %v8576
      %v8578 = vpop.f32.mrf.mxu0
      %v8579 = vadd.f32 %v8181, %v8578
      %8580 = vmatmul.bf16.gmra.mxu0 %v8254
      %v8581 = vpop.f32.mrf.mxu0
      %v8582 = vadd.f32 %v8181, %v8581
      %v8583 = vpop.f32.mrf.mxu0
      %v8584 = vadd.f32 %v8181, %v8583
      %8585 = vmatmul.bf16.gmra.mxu0 %v8270
      %v8586 = vpop.f32.mrf.mxu0
      %v8587 = vadd.f32 %v8181, %v8586
      %v8588 = vpop.f32.mrf.mxu0
      %v8589 = vadd.f32 %v8181, %v8588
      %8590 = vmatmul.bf16.gmra.mxu0 %v8287
      %v8591 = vpop.f32.mrf.mxu0
      %v8592 = vadd.f32 %v8181, %v8591
      %v8593 = vpop.f32.mrf.mxu0
      %v8594 = vadd.f32 %v8181, %v8593
      %8595 = vmatmul.bf16.gmra.mxu0 %v8304
      %v8596 = vpop.f32.mrf.mxu0
      %v8597 = vadd.f32 %v8181, %v8596
      %v8598 = vpop.f32.mrf.mxu0
      %v8599 = vadd.f32 %v8181, %v8598
      %8600 = vmatmul.bf16.gmra.mxu0 %v8320
      %v8601 = vpop.f32.mrf.mxu0
      %v8602 = vadd.f32 %v8181, %v8601
      %v8603 = vpop.f32.mrf.mxu0
      %v8604 = vadd.f32 %v8181, %v8603
      %8605 = vmatmul.bf16.gmra.mxu0 %v8337
      %v8606 = vpop.f32.mrf.mxu0
      %v8607 = vadd.f32 %v8181, %v8606
      %v8608 = vpop.f32.mrf.mxu0
      %v8609 = vadd.f32 %v8181, %v8608
      %8610 = vmatmul.bf16.gmra.mxu0 %v8354
      %v8611 = vpop.f32.mrf.mxu0
      %v8612 = vadd.f32 %v8181, %v8611
      %v8613 = vpop.f32.mrf.mxu0
      %v8614 = vadd.f32 %v8181, %v8613
      %8615 = vmatmul.bf16.gmra.mxu0 %v8371
      %v8616 = vpop.f32.mrf.mxu0
      %v8617 = vadd.f32 %v8181, %v8616
      %v8618 = vpop.f32.mrf.mxu0
      %v8619 = vadd.f32 %v8181, %v8618
      %8620 = vmatmul.bf16.gmra.mxu0 %v8387
      %v8621 = vpop.f32.mrf.mxu0
      %v8622 = vadd.f32 %v8181, %v8621
      %v8623 = vpop.f32.mrf.mxu0
      %v8624 = vadd.f32 %v8181, %v8623
      %8625 = vmatmul.bf16.gmra.mxu0 %v8394
      %v8626 = vpop.f32.mrf.mxu0
      %v8627 = vadd.f32 %v8181, %v8626
      %v8628 = vpop.f32.mrf.mxu0
      %8629 = vdwg.mxu0
      %8630 = vmatpush.bf16.msra.mxu0 %v8510
      %8631 = vmatpush.bf16.msra.mxu0 %v8509
      %8632 = vmatpush.bf16.msra.mxu0 %v8508
      %8633 = vmatpush.bf16.msra.mxu0 %v8507
      %8634 = vmatpush.bf16.msra.mxu0 %v8506
      %8635 = vmatpush.bf16.msra.mxu0 %v8505
      %8636 = vmatpush.bf16.msra.mxu0 %v8504
      %8637 = vmatpush.bf16.msra.mxu0 %v8503
      %8638 = vmatmul.bf16.gmra.mxu0 %v8204
      %v8639 = vpop.f32.mrf.mxu0
      %v8640 = vadd.f32 %v8567, %v8639
      %v8641 = vpop.f32.mrf.mxu0
      %v8642 = vadd.f32 %v8569, %v8641
      %8643 = vmatmul.bf16.gmra.mxu0 %v8221
      %v8644 = vpop.f32.mrf.mxu0
      %v8645 = vadd.f32 %v8572, %v8644
      %v8646 = vpop.f32.mrf.mxu0
      %v8647 = vadd.f32 %v8574, %v8646
      %8648 = vmatmul.bf16.gmra.mxu0 %v8238
      %v8649 = vpop.f32.mrf.mxu0
      %v8650 = vadd.f32 %v8577, %v8649
      %v8651 = vpop.f32.mrf.mxu0
      %v8652 = vadd.f32 %v8579, %v8651
      %8653 = vmatmul.bf16.gmra.mxu0 %v8255
      %v8654 = vpop.f32.mrf.mxu0
      %v8655 = vadd.f32 %v8582, %v8654
      %v8656 = vpop.f32.mrf.mxu0
      %v8657 = vadd.f32 %v8584, %v8656
      %8658 = vmatmul.bf16.gmra.mxu0 %v8271
      %v8659 = vpop.f32.mrf.mxu0
      %v8660 = vadd.f32 %v8587, %v8659
      %v8661 = vpop.f32.mrf.mxu0
      %v8662 = vadd.f32 %v8589, %v8661
      %8663 = vmatmul.bf16.gmra.mxu0 %v8288
      %v8664 = vpop.f32.mrf.mxu0
      %v8665 = vadd.f32 %v8592, %v8664
      %v8666 = vpop.f32.mrf.mxu0
      %v8667 = vadd.f32 %v8594, %v8666
      %8668 = vmatmul.bf16.gmra.mxu0 %v8305
      %v8669 = vpop.f32.mrf.mxu0
      %v8670 = vadd.f32 %v8597, %v8669
      %v8671 = vpop.f32.mrf.mxu0
      %v8672 = vadd.f32 %v8599, %v8671
      %8673 = vmatmul.bf16.gmra.mxu0 %v8321
      %v8674 = vpop.f32.mrf.mxu0
      %v8675 = vadd.f32 %v8602, %v8674
      %v8676 = vpop.f32.mrf.mxu0
      %v8677 = vadd.f32 %v8604, %v8676
      %8678 = vmatmul.bf16.gmra.mxu0 %v8338
      %v8679 = vpop.f32.mrf.mxu0
      %v8680 = vadd.f32 %v8607, %v8679
      %v8681 = vpop.f32.mrf.mxu0
      %v8682 = vadd.f32 %v8609, %v8681
      %8683 = vmatmul.bf16.gmra.mxu0 %v8355
      %v8684 = vpop.f32.mrf.mxu0
      %v8685 = vadd.f32 %v8612, %v8684
      %v8686 = vpop.f32.mrf.mxu0
      %v8687 = vadd.f32 %v8614, %v8686
      %8688 = vmatmul.bf16.gmra.mxu0 %v8372
      %v8689 = vpop.f32.mrf.mxu0
      %v8690 = vadd.f32 %v8617, %v8689
      %v8691 = vpop.f32.mrf.mxu0
      %v8692 = vadd.f32 %v8619, %v8691
      %8693 = vmatmul.bf16.gmra.mxu0 %v8388
      %v8694 = vpop.f32.mrf.mxu0
      %v8695 = vadd.f32 %v8622, %v8694
      %v8696 = vpop.f32.mrf.mxu0
      %v8697 = vadd.f32 %v8624, %v8696
      %8698 = vmatmul.bf16.gmra.mxu0 %v8395
      %v8699 = vpop.f32.mrf.mxu0
      %v8700 = vadd.f32 %v8627, %v8699
      %v8701 = vpop.f32.mrf.mxu0
      %8702 = vdwg.mxu0
      %8703 = vmatpush.bf16.msra.mxu0 0
      %8704 = vmatpush.bf16.msra.mxu0 0
      %8705 = vmatpush.bf16.msra.mxu0 0
      %8706 = vmatpush.bf16.msra.mxu0 0
      %8707 = vmatpush.bf16.msra.mxu0 0
      %8708 = vmatpush.bf16.msra.mxu0 0
      %8709 = vmatpush.bf16.msra.mxu0 %v8512
      %8710 = vmatpush.bf16.msra.mxu0 %v8511
      %8711 = vmatmul.bf16.gmra.mxu0 %v8531
      %v8712 = vpop.f32.mrf.mxu0
      %v8713 = vadd.f32 %v8640, %v8712
      %v8714 = vpop.f32.mrf.mxu0
      %v8715 = vadd.f32 %v8642, %v8714
      %8716 = vmatmul.bf16.gmra.mxu0 %v8533
      %v8717 = vpop.f32.mrf.mxu0
      %v8718 = vadd.f32 %v8645, %v8717
      %v8719 = vpop.f32.mrf.mxu0
      %v8720 = vadd.f32 %v8647, %v8719
      %8721 = vmatmul.bf16.gmra.mxu0 %v8535
      %v8722 = vpop.f32.mrf.mxu0
      %v8723 = vadd.f32 %v8650, %v8722
      %v8724 = vpop.f32.mrf.mxu0
      %v8725 = vadd.f32 %v8652, %v8724
      %8726 = vmatmul.bf16.gmra.mxu0 %v8537
      %v8727 = vpop.f32.mrf.mxu0
      %v8728 = vadd.f32 %v8655, %v8727
      %v8729 = vpop.f32.mrf.mxu0
      %v8730 = vadd.f32 %v8657, %v8729
      %8731 = vmatmul.bf16.gmra.mxu0 %v8539
      %v8732 = vpop.f32.mrf.mxu0
      %v8733 = vadd.f32 %v8660, %v8732
      %v8734 = vpop.f32.mrf.mxu0
      %v8735 = vadd.f32 %v8662, %v8734
      %8736 = vmatmul.bf16.gmra.mxu0 %v8541
      %v8737 = vpop.f32.mrf.mxu0
      %v8738 = vadd.f32 %v8665, %v8737
      %v8739 = vpop.f32.mrf.mxu0
      %v8740 = vadd.f32 %v8667, %v8739
      %8741 = vmatmul.bf16.gmra.mxu0 %v8543
      %v8742 = vpop.f32.mrf.mxu0
      %v8743 = vadd.f32 %v8670, %v8742
      %v8744 = vpop.f32.mrf.mxu0
      %v8745 = vadd.f32 %v8672, %v8744
      %8746 = vmatmul.bf16.gmra.mxu0 %v8545
      %v8747 = vpop.f32.mrf.mxu0
      %v8748 = vadd.f32 %v8675, %v8747
      %v8749 = vpop.f32.mrf.mxu0
      %v8750 = vadd.f32 %v8677, %v8749
      %8751 = vmatmul.bf16.gmra.mxu0 %v8547
      %v8752 = vpop.f32.mrf.mxu0
      %v8753 = vadd.f32 %v8680, %v8752
      %v8754 = vpop.f32.mrf.mxu0
      %v8755 = vadd.f32 %v8682, %v8754
      %8756 = vmatmul.bf16.gmra.mxu0 %v8549
      %v8757 = vpop.f32.mrf.mxu0
      %v8758 = vadd.f32 %v8685, %v8757
      %v8759 = vpop.f32.mrf.mxu0
      %v8760 = vadd.f32 %v8687, %v8759
      %8761 = vmatmul.bf16.gmra.mxu0 %v8551
      %v8762 = vpop.f32.mrf.mxu0
      %v8763 = vadd.f32 %v8690, %v8762
      %v8764 = vpop.f32.mrf.mxu0
      %v8765 = vadd.f32 %v8692, %v8764
      %8766 = vmatmul.bf16.gmra.mxu0 %v8553
      %v8767 = vpop.f32.mrf.mxu0
      %v8768 = vadd.f32 %v8695, %v8767
      %v8769 = vpop.f32.mrf.mxu0
      %v8770 = vadd.f32 %v8697, %v8769
      %8771 = vmatmul.bf16.gmra.mxu0 %v8555
      %v8772 = vpop.f32.mrf.mxu0
      %v8773 = vadd.f32 %v8700, %v8772
      %v8774 = vpop.f32.mrf.mxu0
      %8775 = vdwg.mxu0
      %v8776 = vmax.f32 %v8713, 0.0
      %v8777 = vmax.f32 %v8715, 0.0
      %v8778 = vmax.f32 %v8718, 0.0
      %v8779 = vmax.f32 %v8720, 0.0
      %v8780 = vmax.f32 %v8723, 0.0
      %v8781 = vmax.f32 %v8725, 0.0
      %v8782 = vmax.f32 %v8728, 0.0
      %v8783 = vmax.f32 %v8730, 0.0
      %v8784 = vmax.f32 %v8733, 0.0
      %v8785 = vmax.f32 %v8735, 0.0
      %v8786 = vmax.f32 %v8738, 0.0
      %v8787 = vmax.f32 %v8740, 0.0
      %v8788 = vmax.f32 %v8743, 0.0
      %v8789 = vmax.f32 %v8745, 0.0
      %v8790 = vmax.f32 %v8748, 0.0
      %v8791 = vmax.f32 %v8750, 0.0
      %v8792 = vmax.f32 %v8753, 0.0
      %v8793 = vmax.f32 %v8755, 0.0
      %v8794 = vmax.f32 %v8758, 0.0
      %v8795 = vmax.f32 %v8760, 0.0
      %v8796 = vmax.f32 %v8763, 0.0
      %v8797 = vmax.f32 %v8765, 0.0
      %v8798 = vmax.f32 %v8768, 0.0
      %v8799 = vmax.f32 %v8770, 0.0
      %v8800 = vmax.f32 %v8773, 0.0
      %v8826 = vrot.slane %v8776, 2
      %v8827 = vrot.slane %v8776, 4
      %v8828 = vrot.slane %v8776, 6
      %v8829 = vrot.slane %v8777, 2
      %v8830 = vrot.slane %v8777, 4
      %v8831 = vrot.slane %v8777, 6
      %v8832 = vrot.slane %v8778, 2
      %v8833 = vrot.slane %v8778, 4
      %v8834 = vrot.slane %v8778, 6
      %v8835 = vrot.slane %v8779, 2
      %v8836 = vrot.slane %v8779, 4
      %v8837 = vrot.slane %v8779, 6
      %v8838 = vrot.slane %v8780, 2
      %v8839 = vrot.slane %v8780, 4
      %v8840 = vrot.slane %v8780, 6
      %v8841 = vrot.slane %v8781, 2
      %v8842 = vrot.slane %v8781, 4
      %v8843 = vrot.slane %v8781, 6
      %v8844 = vrot.slane %v8782, 2
      %v8845 = vrot.slane %v8782, 4
      %v8846 = vrot.slane %v8782, 6
      %v8847 = vrot.slane %v8783, 2
      %v8848 = vrot.slane %v8783, 4
      %v8849 = vrot.slane %v8783, 6
      %v8850 = vrot.slane %v8784, 2
      %v8851 = vrot.slane %v8784, 4
      %v8852 = vrot.slane %v8784, 6
      %v8853 = vrot.slane %v8785, 2
      %v8854 = vrot.slane %v8785, 4
      %v8855 = vrot.slane %v8785, 6
      %v8856 = vrot.slane %v8786, 2
      %v8857 = vrot.slane %v8786, 4
      %v8858 = vrot.slane %v8786, 6
      %v8859 = vrot.slane %v8787, 2
      %v8860 = vrot.slane %v8787, 4
      %v8861 = vrot.slane %v8787, 6
      %v8862 = vrot.slane %v8788, 2
      %v8863 = vrot.slane %v8788, 4
      %v8864 = vrot.slane %v8788, 6
      %v8865 = vrot.slane %v8789, 2
      %v8866 = vrot.slane %v8789, 4
      %v8867 = vrot.slane %v8789, 6
      %v8868 = vrot.slane %v8790, 2
      %v8869 = vrot.slane %v8790, 4
      %v8870 = vrot.slane %v8790, 6
      %v8871 = vrot.slane %v8791, 2
      %v8872 = vrot.slane %v8791, 4
      %v8873 = vrot.slane %v8791, 6
      %v8874 = vrot.slane %v8792, 2
      %v8875 = vrot.slane %v8792, 4
      %v8876 = vrot.slane %v8792, 6
      %v8877 = vrot.slane %v8793, 2
      %v8878 = vrot.slane %v8793, 4
      %v8879 = vrot.slane %v8793, 6
      %v8880 = vrot.slane %v8794, 2
      %v8881 = vrot.slane %v8794, 4
      %v8882 = vrot.slane %v8794, 6
      %v8883 = vrot.slane %v8795, 2
      %v8884 = vrot.slane %v8795, 4
      %v8885 = vrot.slane %v8795, 6
      %v8886 = vrot.slane %v8796, 2
      %v8887 = vrot.slane %v8796, 4
      %v8888 = vrot.slane %v8796, 6
      %v8889 = vrot.slane %v8797, 2
      %v8890 = vrot.slane %v8797, 4
      %v8891 = vrot.slane %v8797, 6
      %v8892 = vrot.slane %v8798, 2
      %v8893 = vrot.slane %v8798, 4
      %v8894 = vrot.slane %v8798, 6
      %v8895 = vrot.slane %v8799, 2
      %v8896 = vrot.slane %v8799, 4
      %v8897 = vrot.slane %v8799, 6
      %v8898 = vrot.slane %v8800, 2
      %vm8972 = vcmask 517120
      %v8973 = vsel %vm8972, %v8776, -inf
      %v8974 = vrot.slane %v8973, 4
      %v8975 = vmax.f32 %v8973, %v8974
      %v8976 = vrot.slane %v8975, 2
      %v8977 = vmax.f32 %v8975, %v8976
      %v8978 = vrot.slane %v8977, 1
      %v8979 = vmax.f32 %v8977, %v8978
      %v8980 = vsel %vm8972, %v8826, -inf
      %v8981 = vrot.slane %v8980, 4
      %v8982 = vmax.f32 %v8980, %v8981
      %v8983 = vrot.slane %v8982, 2
      %v8984 = vmax.f32 %v8982, %v8983
      %v8985 = vrot.slane %v8984, 1
      %v8986 = vmax.f32 %v8984, %v8985
      %v8987 = vsel %vm8972, %v8827, -inf
      %v8988 = vrot.slane %v8987, 4
      %v8989 = vmax.f32 %v8987, %v8988
      %v8990 = vrot.slane %v8989, 2
      %v8991 = vmax.f32 %v8989, %v8990
      %v8992 = vrot.slane %v8991, 1
      %v8993 = vmax.f32 %v8991, %v8992
      %v8994 = vsel %vm8972, %v8828, -inf
      %v8995 = vrot.slane %v8994, 4
      %v8996 = vmax.f32 %v8994, %v8995
      %v8997 = vrot.slane %v8996, 2
      %v8998 = vmax.f32 %v8996, %v8997
      %v8999 = vrot.slane %v8998, 1
      %v9000 = vmax.f32 %v8998, %v8999
      %v9001 = vsel %vm8972, %v8777, -inf
      %v9002 = vrot.slane %v9001, 4
      %v9003 = vmax.f32 %v9001, %v9002
      %v9004 = vrot.slane %v9003, 2
      %v9005 = vmax.f32 %v9003, %v9004
      %v9006 = vrot.slane %v9005, 1
      %v9007 = vmax.f32 %v9005, %v9006
      %v9008 = vsel %vm8972, %v8829, -inf
      %v9009 = vrot.slane %v9008, 4
      %v9010 = vmax.f32 %v9008, %v9009
      %v9011 = vrot.slane %v9010, 2
      %v9012 = vmax.f32 %v9010, %v9011
      %v9013 = vrot.slane %v9012, 1
      %v9014 = vmax.f32 %v9012, %v9013
      %v9015 = vsel %vm8972, %v8830, -inf
      %v9016 = vrot.slane %v9015, 4
      %v9017 = vmax.f32 %v9015, %v9016
      %v9018 = vrot.slane %v9017, 2
      %v9019 = vmax.f32 %v9017, %v9018
      %v9020 = vrot.slane %v9019, 1
      %v9021 = vmax.f32 %v9019, %v9020
      %v9022 = vsel %vm8972, %v8831, -inf
      %v9023 = vrot.slane %v9022, 4
      %v9024 = vmax.f32 %v9022, %v9023
      %v9025 = vrot.slane %v9024, 2
      %v9026 = vmax.f32 %v9024, %v9025
      %v9027 = vrot.slane %v9026, 1
      %v9028 = vmax.f32 %v9026, %v9027
      %v9029 = vsel %vm8972, %v8778, -inf
      %v9030 = vrot.slane %v9029, 4
      %v9031 = vmax.f32 %v9029, %v9030
      %v9032 = vrot.slane %v9031, 2
      %v9033 = vmax.f32 %v9031, %v9032
      %v9034 = vrot.slane %v9033, 1
      %v9035 = vmax.f32 %v9033, %v9034
      %v9036 = vsel %vm8972, %v8832, -inf
      %v9037 = vrot.slane %v9036, 4
      %v9038 = vmax.f32 %v9036, %v9037
      %v9039 = vrot.slane %v9038, 2
      %v9040 = vmax.f32 %v9038, %v9039
      %v9041 = vrot.slane %v9040, 1
      %v9042 = vmax.f32 %v9040, %v9041
      %v9043 = vsel %vm8972, %v8833, -inf
      %v9044 = vrot.slane %v9043, 4
      %v9045 = vmax.f32 %v9043, %v9044
      %v9046 = vrot.slane %v9045, 2
      %v9047 = vmax.f32 %v9045, %v9046
      %v9048 = vrot.slane %v9047, 1
      %v9049 = vmax.f32 %v9047, %v9048
      %v9050 = vsel %vm8972, %v8834, -inf
      %v9051 = vrot.slane %v9050, 4
      %v9052 = vmax.f32 %v9050, %v9051
      %v9053 = vrot.slane %v9052, 2
      %v9054 = vmax.f32 %v9052, %v9053
      %v9055 = vrot.slane %v9054, 1
      %v9056 = vmax.f32 %v9054, %v9055
      %v9057 = vsel %vm8972, %v8779, -inf
      %v9058 = vrot.slane %v9057, 4
      %v9059 = vmax.f32 %v9057, %v9058
      %v9060 = vrot.slane %v9059, 2
      %v9061 = vmax.f32 %v9059, %v9060
      %v9062 = vrot.slane %v9061, 1
      %v9063 = vmax.f32 %v9061, %v9062
      %v9064 = vsel %vm8972, %v8835, -inf
      %v9065 = vrot.slane %v9064, 4
      %v9066 = vmax.f32 %v9064, %v9065
      %v9067 = vrot.slane %v9066, 2
      %v9068 = vmax.f32 %v9066, %v9067
      %v9069 = vrot.slane %v9068, 1
      %v9070 = vmax.f32 %v9068, %v9069
      %v9071 = vsel %vm8972, %v8836, -inf
      %v9072 = vrot.slane %v9071, 4
      %v9073 = vmax.f32 %v9071, %v9072
      %v9074 = vrot.slane %v9073, 2
      %v9075 = vmax.f32 %v9073, %v9074
      %v9076 = vrot.slane %v9075, 1
      %v9077 = vmax.f32 %v9075, %v9076
      %v9078 = vsel %vm8972, %v8837, -inf
      %v9079 = vrot.slane %v9078, 4
      %v9080 = vmax.f32 %v9078, %v9079
      %v9081 = vrot.slane %v9080, 2
      %v9082 = vmax.f32 %v9080, %v9081
      %v9083 = vrot.slane %v9082, 1
      %v9084 = vmax.f32 %v9082, %v9083
      %v9085 = vsel %vm8972, %v8780, -inf
      %v9086 = vrot.slane %v9085, 4
      %v9087 = vmax.f32 %v9085, %v9086
      %v9088 = vrot.slane %v9087, 2
      %v9089 = vmax.f32 %v9087, %v9088
      %v9090 = vrot.slane %v9089, 1
      %v9091 = vmax.f32 %v9089, %v9090
      %v9092 = vsel %vm8972, %v8838, -inf
      %v9093 = vrot.slane %v9092, 4
      %v9094 = vmax.f32 %v9092, %v9093
      %v9095 = vrot.slane %v9094, 2
      %v9096 = vmax.f32 %v9094, %v9095
      %v9097 = vrot.slane %v9096, 1
      %v9098 = vmax.f32 %v9096, %v9097
      %v9099 = vsel %vm8972, %v8839, -inf
      %v9100 = vrot.slane %v9099, 4
      %v9101 = vmax.f32 %v9099, %v9100
      %v9102 = vrot.slane %v9101, 2
      %v9103 = vmax.f32 %v9101, %v9102
      %v9104 = vrot.slane %v9103, 1
      %v9105 = vmax.f32 %v9103, %v9104
      %v9106 = vsel %vm8972, %v8840, -inf
      %v9107 = vrot.slane %v9106, 4
      %v9108 = vmax.f32 %v9106, %v9107
      %v9109 = vrot.slane %v9108, 2
      %v9110 = vmax.f32 %v9108, %v9109
      %v9111 = vrot.slane %v9110, 1
      %v9112 = vmax.f32 %v9110, %v9111
      %v9113 = vsel %vm8972, %v8781, -inf
      %v9114 = vrot.slane %v9113, 4
      %v9115 = vmax.f32 %v9113, %v9114
      %v9116 = vrot.slane %v9115, 2
      %v9117 = vmax.f32 %v9115, %v9116
      %v9118 = vrot.slane %v9117, 1
      %v9119 = vmax.f32 %v9117, %v9118
      %v9120 = vsel %vm8972, %v8841, -inf
      %v9121 = vrot.slane %v9120, 4
      %v9122 = vmax.f32 %v9120, %v9121
      %v9123 = vrot.slane %v9122, 2
      %v9124 = vmax.f32 %v9122, %v9123
      %v9125 = vrot.slane %v9124, 1
      %v9126 = vmax.f32 %v9124, %v9125
      %v9127 = vsel %vm8972, %v8842, -inf
      %v9128 = vrot.slane %v9127, 4
      %v9129 = vmax.f32 %v9127, %v9128
      %v9130 = vrot.slane %v9129, 2
      %v9131 = vmax.f32 %v9129, %v9130
      %v9132 = vrot.slane %v9131, 1
      %v9133 = vmax.f32 %v9131, %v9132
      %v9134 = vsel %vm8972, %v8843, -inf
      %v9135 = vrot.slane %v9134, 4
      %v9136 = vmax.f32 %v9134, %v9135
      %v9137 = vrot.slane %v9136, 2
      %v9138 = vmax.f32 %v9136, %v9137
      %v9139 = vrot.slane %v9138, 1
      %v9140 = vmax.f32 %v9138, %v9139
      %v9141 = vsel %vm8972, %v8782, -inf
      %v9142 = vrot.slane %v9141, 4
      %v9143 = vmax.f32 %v9141, %v9142
      %v9144 = vrot.slane %v9143, 2
      %v9145 = vmax.f32 %v9143, %v9144
      %v9146 = vrot.slane %v9145, 1
      %v9147 = vmax.f32 %v9145, %v9146
      %v9148 = vsel %vm8972, %v8844, -inf
      %v9149 = vrot.slane %v9148, 4
      %v9150 = vmax.f32 %v9148, %v9149
      %v9151 = vrot.slane %v9150, 2
      %v9152 = vmax.f32 %v9150, %v9151
      %v9153 = vrot.slane %v9152, 1
      %v9154 = vmax.f32 %v9152, %v9153
      %v9155 = vsel %vm8972, %v8845, -inf
      %v9156 = vrot.slane %v9155, 4
      %v9157 = vmax.f32 %v9155, %v9156
      %v9158 = vrot.slane %v9157, 2
      %v9159 = vmax.f32 %v9157, %v9158
      %v9160 = vrot.slane %v9159, 1
      %v9161 = vmax.f32 %v9159, %v9160
      %v9162 = vsel %vm8972, %v8846, -inf
      %v9163 = vrot.slane %v9162, 4
      %v9164 = vmax.f32 %v9162, %v9163
      %v9165 = vrot.slane %v9164, 2
      %v9166 = vmax.f32 %v9164, %v9165
      %v9167 = vrot.slane %v9166, 1
      %v9168 = vmax.f32 %v9166, %v9167
      %v9169 = vsel %vm8972, %v8783, -inf
      %v9170 = vrot.slane %v9169, 4
      %v9171 = vmax.f32 %v9169, %v9170
      %v9172 = vrot.slane %v9171, 2
      %v9173 = vmax.f32 %v9171, %v9172
      %v9174 = vrot.slane %v9173, 1
      %v9175 = vmax.f32 %v9173, %v9174
      %v9176 = vsel %vm8972, %v8847, -inf
      %v9177 = vrot.slane %v9176, 4
      %v9178 = vmax.f32 %v9176, %v9177
      %v9179 = vrot.slane %v9178, 2
      %v9180 = vmax.f32 %v9178, %v9179
      %v9181 = vrot.slane %v9180, 1
      %v9182 = vmax.f32 %v9180, %v9181
      %v9183 = vsel %vm8972, %v8848, -inf
      %v9184 = vrot.slane %v9183, 4
      %v9185 = vmax.f32 %v9183, %v9184
      %v9186 = vrot.slane %v9185, 2
      %v9187 = vmax.f32 %v9185, %v9186
      %v9188 = vrot.slane %v9187, 1
      %v9189 = vmax.f32 %v9187, %v9188
      %v9190 = vsel %vm8972, %v8849, -inf
      %v9191 = vrot.slane %v9190, 4
      %v9192 = vmax.f32 %v9190, %v9191
      %v9193 = vrot.slane %v9192, 2
      %v9194 = vmax.f32 %v9192, %v9193
      %v9195 = vrot.slane %v9194, 1
      %v9196 = vmax.f32 %v9194, %v9195
      %v9197 = vsel %vm8972, %v8784, -inf
      %v9198 = vrot.slane %v9197, 4
      %v9199 = vmax.f32 %v9197, %v9198
      %v9200 = vrot.slane %v9199, 2
      %v9201 = vmax.f32 %v9199, %v9200
      %v9202 = vrot.slane %v9201, 1
      %v9203 = vmax.f32 %v9201, %v9202
      %v9204 = vsel %vm8972, %v8850, -inf
      %v9205 = vrot.slane %v9204, 4
      %v9206 = vmax.f32 %v9204, %v9205
      %v9207 = vrot.slane %v9206, 2
      %v9208 = vmax.f32 %v9206, %v9207
      %v9209 = vrot.slane %v9208, 1
      %v9210 = vmax.f32 %v9208, %v9209
      %v9211 = vsel %vm8972, %v8851, -inf
      %v9212 = vrot.slane %v9211, 4
      %v9213 = vmax.f32 %v9211, %v9212
      %v9214 = vrot.slane %v9213, 2
      %v9215 = vmax.f32 %v9213, %v9214
      %v9216 = vrot.slane %v9215, 1
      %v9217 = vmax.f32 %v9215, %v9216
      %v9218 = vsel %vm8972, %v8852, -inf
      %v9219 = vrot.slane %v9218, 4
      %v9220 = vmax.f32 %v9218, %v9219
      %v9221 = vrot.slane %v9220, 2
      %v9222 = vmax.f32 %v9220, %v9221
      %v9223 = vrot.slane %v9222, 1
      %v9224 = vmax.f32 %v9222, %v9223
      %v9225 = vsel %vm8972, %v8785, -inf
      %v9226 = vrot.slane %v9225, 4
      %v9227 = vmax.f32 %v9225, %v9226
      %v9228 = vrot.slane %v9227, 2
      %v9229 = vmax.f32 %v9227, %v9228
      %v9230 = vrot.slane %v9229, 1
      %v9231 = vmax.f32 %v9229, %v9230
      %v9232 = vsel %vm8972, %v8853, -inf
      %v9233 = vrot.slane %v9232, 4
      %v9234 = vmax.f32 %v9232, %v9233
      %v9235 = vrot.slane %v9234, 2
      %v9236 = vmax.f32 %v9234, %v9235
      %v9237 = vrot.slane %v9236, 1
      %v9238 = vmax.f32 %v9236, %v9237
      %v9239 = vsel %vm8972, %v8854, -inf
      %v9240 = vrot.slane %v9239, 4
      %v9241 = vmax.f32 %v9239, %v9240
      %v9242 = vrot.slane %v9241, 2
      %v9243 = vmax.f32 %v9241, %v9242
      %v9244 = vrot.slane %v9243, 1
      %v9245 = vmax.f32 %v9243, %v9244
      %v9246 = vsel %vm8972, %v8855, -inf
      %v9247 = vrot.slane %v9246, 4
      %v9248 = vmax.f32 %v9246, %v9247
      %v9249 = vrot.slane %v9248, 2
      %v9250 = vmax.f32 %v9248, %v9249
      %v9251 = vrot.slane %v9250, 1
      %v9252 = vmax.f32 %v9250, %v9251
      %v9253 = vsel %vm8972, %v8786, -inf
      %v9254 = vrot.slane %v9253, 4
      %v9255 = vmax.f32 %v9253, %v9254
      %v9256 = vrot.slane %v9255, 2
      %v9257 = vmax.f32 %v9255, %v9256
      %v9258 = vrot.slane %v9257, 1
      %v9259 = vmax.f32 %v9257, %v9258
      %v9260 = vsel %vm8972, %v8856, -inf
      %v9261 = vrot.slane %v9260, 4
      %v9262 = vmax.f32 %v9260, %v9261
      %v9263 = vrot.slane %v9262, 2
      %v9264 = vmax.f32 %v9262, %v9263
      %v9265 = vrot.slane %v9264, 1
      %v9266 = vmax.f32 %v9264, %v9265
      %v9267 = vsel %vm8972, %v8857, -inf
      %v9268 = vrot.slane %v9267, 4
      %v9269 = vmax.f32 %v9267, %v9268
      %v9270 = vrot.slane %v9269, 2
      %v9271 = vmax.f32 %v9269, %v9270
      %v9272 = vrot.slane %v9271, 1
      %v9273 = vmax.f32 %v9271, %v9272
      %v9274 = vsel %vm8972, %v8858, -inf
      %v9275 = vrot.slane %v9274, 4
      %v9276 = vmax.f32 %v9274, %v9275
      %v9277 = vrot.slane %v9276, 2
      %v9278 = vmax.f32 %v9276, %v9277
      %v9279 = vrot.slane %v9278, 1
      %v9280 = vmax.f32 %v9278, %v9279
      %v9281 = vsel %vm8972, %v8787, -inf
      %v9282 = vrot.slane %v9281, 4
      %v9283 = vmax.f32 %v9281, %v9282
      %v9284 = vrot.slane %v9283, 2
      %v9285 = vmax.f32 %v9283, %v9284
      %v9286 = vrot.slane %v9285, 1
      %v9287 = vmax.f32 %v9285, %v9286
      %v9288 = vsel %vm8972, %v8859, -inf
      %v9289 = vrot.slane %v9288, 4
      %v9290 = vmax.f32 %v9288, %v9289
      %v9291 = vrot.slane %v9290, 2
      %v9292 = vmax.f32 %v9290, %v9291
      %v9293 = vrot.slane %v9292, 1
      %v9294 = vmax.f32 %v9292, %v9293
      %v9295 = vsel %vm8972, %v8860, -inf
      %v9296 = vrot.slane %v9295, 4
      %v9297 = vmax.f32 %v9295, %v9296
      %v9298 = vrot.slane %v9297, 2
      %v9299 = vmax.f32 %v9297, %v9298
      %v9300 = vrot.slane %v9299, 1
      %v9301 = vmax.f32 %v9299, %v9300
      %v9302 = vsel %vm8972, %v8861, -inf
      %v9303 = vrot.slane %v9302, 4
      %v9304 = vmax.f32 %v9302, %v9303
      %v9305 = vrot.slane %v9304, 2
      %v9306 = vmax.f32 %v9304, %v9305
      %v9307 = vrot.slane %v9306, 1
      %v9308 = vmax.f32 %v9306, %v9307
      %v9309 = vsel %vm8972, %v8788, -inf
      %v9310 = vrot.slane %v9309, 4
      %v9311 = vmax.f32 %v9309, %v9310
      %v9312 = vrot.slane %v9311, 2
      %v9313 = vmax.f32 %v9311, %v9312
      %v9314 = vrot.slane %v9313, 1
      %v9315 = vmax.f32 %v9313, %v9314
      %v9316 = vsel %vm8972, %v8862, -inf
      %v9317 = vrot.slane %v9316, 4
      %v9318 = vmax.f32 %v9316, %v9317
      %v9319 = vrot.slane %v9318, 2
      %v9320 = vmax.f32 %v9318, %v9319
      %v9321 = vrot.slane %v9320, 1
      %v9322 = vmax.f32 %v9320, %v9321
      %v9323 = vsel %vm8972, %v8863, -inf
      %v9324 = vrot.slane %v9323, 4
      %v9325 = vmax.f32 %v9323, %v9324
      %v9326 = vrot.slane %v9325, 2
      %v9327 = vmax.f32 %v9325, %v9326
      %v9328 = vrot.slane %v9327, 1
      %v9329 = vmax.f32 %v9327, %v9328
      %v9330 = vsel %vm8972, %v8864, -inf
      %v9331 = vrot.slane %v9330, 4
      %v9332 = vmax.f32 %v9330, %v9331
      %v9333 = vrot.slane %v9332, 2
      %v9334 = vmax.f32 %v9332, %v9333
      %v9335 = vrot.slane %v9334, 1
      %v9336 = vmax.f32 %v9334, %v9335
      %v9337 = vsel %vm8972, %v8789, -inf
      %v9338 = vrot.slane %v9337, 4
      %v9339 = vmax.f32 %v9337, %v9338
      %v9340 = vrot.slane %v9339, 2
      %v9341 = vmax.f32 %v9339, %v9340
      %v9342 = vrot.slane %v9341, 1
      %v9343 = vmax.f32 %v9341, %v9342
      %v9344 = vsel %vm8972, %v8865, -inf
      %v9345 = vrot.slane %v9344, 4
      %v9346 = vmax.f32 %v9344, %v9345
      %v9347 = vrot.slane %v9346, 2
      %v9348 = vmax.f32 %v9346, %v9347
      %v9349 = vrot.slane %v9348, 1
      %v9350 = vmax.f32 %v9348, %v9349
      %v9351 = vsel %vm8972, %v8866, -inf
      %v9352 = vrot.slane %v9351, 4
      %v9353 = vmax.f32 %v9351, %v9352
      %v9354 = vrot.slane %v9353, 2
      %v9355 = vmax.f32 %v9353, %v9354
      %v9356 = vrot.slane %v9355, 1
      %v9357 = vmax.f32 %v9355, %v9356
      %v9358 = vsel %vm8972, %v8867, -inf
      %v9359 = vrot.slane %v9358, 4
      %v9360 = vmax.f32 %v9358, %v9359
      %v9361 = vrot.slane %v9360, 2
      %v9362 = vmax.f32 %v9360, %v9361
      %v9363 = vrot.slane %v9362, 1
      %v9364 = vmax.f32 %v9362, %v9363
      %v9365 = vsel %vm8972, %v8790, -inf
      %v9366 = vrot.slane %v9365, 4
      %v9367 = vmax.f32 %v9365, %v9366
      %v9368 = vrot.slane %v9367, 2
      %v9369 = vmax.f32 %v9367, %v9368
      %v9370 = vrot.slane %v9369, 1
      %v9371 = vmax.f32 %v9369, %v9370
      %v9372 = vsel %vm8972, %v8868, -inf
      %v9373 = vrot.slane %v9372, 4
      %v9374 = vmax.f32 %v9372, %v9373
      %v9375 = vrot.slane %v9374, 2
      %v9376 = vmax.f32 %v9374, %v9375
      %v9377 = vrot.slane %v9376, 1
      %v9378 = vmax.f32 %v9376, %v9377
      %v9379 = vsel %vm8972, %v8869, -inf
      %v9380 = vrot.slane %v9379, 4
      %v9381 = vmax.f32 %v9379, %v9380
      %v9382 = vrot.slane %v9381, 2
      %v9383 = vmax.f32 %v9381, %v9382
      %v9384 = vrot.slane %v9383, 1
      %v9385 = vmax.f32 %v9383, %v9384
      %v9386 = vsel %vm8972, %v8870, -inf
      %v9387 = vrot.slane %v9386, 4
      %v9388 = vmax.f32 %v9386, %v9387
      %v9389 = vrot.slane %v9388, 2
      %v9390 = vmax.f32 %v9388, %v9389
      %v9391 = vrot.slane %v9390, 1
      %v9392 = vmax.f32 %v9390, %v9391
      %v9393 = vsel %vm8972, %v8791, -inf
      %v9394 = vrot.slane %v9393, 4
      %v9395 = vmax.f32 %v9393, %v9394
      %v9396 = vrot.slane %v9395, 2
      %v9397 = vmax.f32 %v9395, %v9396
      %v9398 = vrot.slane %v9397, 1
      %v9399 = vmax.f32 %v9397, %v9398
      %v9400 = vsel %vm8972, %v8871, -inf
      %v9401 = vrot.slane %v9400, 4
      %v9402 = vmax.f32 %v9400, %v9401
      %v9403 = vrot.slane %v9402, 2
      %v9404 = vmax.f32 %v9402, %v9403
      %v9405 = vrot.slane %v9404, 1
      %v9406 = vmax.f32 %v9404, %v9405
      %v9407 = vsel %vm8972, %v8872, -inf
      %v9408 = vrot.slane %v9407, 4
      %v9409 = vmax.f32 %v9407, %v9408
      %v9410 = vrot.slane %v9409, 2
      %v9411 = vmax.f32 %v9409, %v9410
      %v9412 = vrot.slane %v9411, 1
      %v9413 = vmax.f32 %v9411, %v9412
      %v9414 = vsel %vm8972, %v8873, -inf
      %v9415 = vrot.slane %v9414, 4
      %v9416 = vmax.f32 %v9414, %v9415
      %v9417 = vrot.slane %v9416, 2
      %v9418 = vmax.f32 %v9416, %v9417
      %v9419 = vrot.slane %v9418, 1
      %v9420 = vmax.f32 %v9418, %v9419
      %v9421 = vsel %vm8972, %v8792, -inf
      %v9422 = vrot.slane %v9421, 4
      %v9423 = vmax.f32 %v9421, %v9422
      %v9424 = vrot.slane %v9423, 2
      %v9425 = vmax.f32 %v9423, %v9424
      %v9426 = vrot.slane %v9425, 1
      %v9427 = vmax.f32 %v9425, %v9426
      %v9428 = vsel %vm8972, %v8874, -inf
      %v9429 = vrot.slane %v9428, 4
      %v9430 = vmax.f32 %v9428, %v9429
      %v9431 = vrot.slane %v9430, 2
      %v9432 = vmax.f32 %v9430, %v9431
      %v9433 = vrot.slane %v9432, 1
      %v9434 = vmax.f32 %v9432, %v9433
      %v9435 = vsel %vm8972, %v8875, -inf
      %v9436 = vrot.slane %v9435, 4
      %v9437 = vmax.f32 %v9435, %v9436
      %v9438 = vrot.slane %v9437, 2
      %v9439 = vmax.f32 %v9437, %v9438
      %v9440 = vrot.slane %v9439, 1
      %v9441 = vmax.f32 %v9439, %v9440
      %v9442 = vsel %vm8972, %v8876, -inf
      %v9443 = vrot.slane %v9442, 4
      %v9444 = vmax.f32 %v9442, %v9443
      %v9445 = vrot.slane %v9444, 2
      %v9446 = vmax.f32 %v9444, %v9445
      %v9447 = vrot.slane %v9446, 1
      %v9448 = vmax.f32 %v9446, %v9447
      %v9449 = vsel %vm8972, %v8793, -inf
      %v9450 = vrot.slane %v9449, 4
      %v9451 = vmax.f32 %v9449, %v9450
      %v9452 = vrot.slane %v9451, 2
      %v9453 = vmax.f32 %v9451, %v9452
      %v9454 = vrot.slane %v9453, 1
      %v9455 = vmax.f32 %v9453, %v9454
      %v9456 = vsel %vm8972, %v8877, -inf
      %v9457 = vrot.slane %v9456, 4
      %v9458 = vmax.f32 %v9456, %v9457
      %v9459 = vrot.slane %v9458, 2
      %v9460 = vmax.f32 %v9458, %v9459
      %v9461 = vrot.slane %v9460, 1
      %v9462 = vmax.f32 %v9460, %v9461
      %v9463 = vsel %vm8972, %v8878, -inf
      %v9464 = vrot.slane %v9463, 4
      %v9465 = vmax.f32 %v9463, %v9464
      %v9466 = vrot.slane %v9465, 2
      %v9467 = vmax.f32 %v9465, %v9466
      %v9468 = vrot.slane %v9467, 1
      %v9469 = vmax.f32 %v9467, %v9468
      %v9470 = vsel %vm8972, %v8879, -inf
      %v9471 = vrot.slane %v9470, 4
      %v9472 = vmax.f32 %v9470, %v9471
      %v9473 = vrot.slane %v9472, 2
      %v9474 = vmax.f32 %v9472, %v9473
      %v9475 = vrot.slane %v9474, 1
      %v9476 = vmax.f32 %v9474, %v9475
      %v9477 = vsel %vm8972, %v8794, -inf
      %v9478 = vrot.slane %v9477, 4
      %v9479 = vmax.f32 %v9477, %v9478
      %v9480 = vrot.slane %v9479, 2
      %v9481 = vmax.f32 %v9479, %v9480
      %v9482 = vrot.slane %v9481, 1
      %v9483 = vmax.f32 %v9481, %v9482
      %v9484 = vsel %vm8972, %v8880, -inf
      %v9485 = vrot.slane %v9484, 4
      %v9486 = vmax.f32 %v9484, %v9485
      %v9487 = vrot.slane %v9486, 2
      %v9488 = vmax.f32 %v9486, %v9487
      %v9489 = vrot.slane %v9488, 1
      %v9490 = vmax.f32 %v9488, %v9489
      %v9491 = vsel %vm8972, %v8881, -inf
      %v9492 = vrot.slane %v9491, 4
      %v9493 = vmax.f32 %v9491, %v9492
      %v9494 = vrot.slane %v9493, 2
      %v9495 = vmax.f32 %v9493, %v9494
      %v9496 = vrot.slane %v9495, 1
      %v9497 = vmax.f32 %v9495, %v9496
      %v9498 = vsel %vm8972, %v8882, -inf
      %v9499 = vrot.slane %v9498, 4
      %v9500 = vmax.f32 %v9498, %v9499
      %v9501 = vrot.slane %v9500, 2
      %v9502 = vmax.f32 %v9500, %v9501
      %v9503 = vrot.slane %v9502, 1
      %v9504 = vmax.f32 %v9502, %v9503
      %v9505 = vsel %vm8972, %v8795, -inf
      %v9506 = vrot.slane %v9505, 4
      %v9507 = vmax.f32 %v9505, %v9506
      %v9508 = vrot.slane %v9507, 2
      %v9509 = vmax.f32 %v9507, %v9508
      %v9510 = vrot.slane %v9509, 1
      %v9511 = vmax.f32 %v9509, %v9510
      %v9512 = vsel %vm8972, %v8883, -inf
      %v9513 = vrot.slane %v9512, 4
      %v9514 = vmax.f32 %v9512, %v9513
      %v9515 = vrot.slane %v9514, 2
      %v9516 = vmax.f32 %v9514, %v9515
      %v9517 = vrot.slane %v9516, 1
      %v9518 = vmax.f32 %v9516, %v9517
      %v9519 = vsel %vm8972, %v8884, -inf
      %v9520 = vrot.slane %v9519, 4
      %v9521 = vmax.f32 %v9519, %v9520
      %v9522 = vrot.slane %v9521, 2
      %v9523 = vmax.f32 %v9521, %v9522
      %v9524 = vrot.slane %v9523, 1
      %v9525 = vmax.f32 %v9523, %v9524
      %v9526 = vsel %vm8972, %v8885, -inf
      %v9527 = vrot.slane %v9526, 4
      %v9528 = vmax.f32 %v9526, %v9527
      %v9529 = vrot.slane %v9528, 2
      %v9530 = vmax.f32 %v9528, %v9529
      %v9531 = vrot.slane %v9530, 1
      %v9532 = vmax.f32 %v9530, %v9531
      %v9533 = vsel %vm8972, %v8796, -inf
      %v9534 = vrot.slane %v9533, 4
      %v9535 = vmax.f32 %v9533, %v9534
      %v9536 = vrot.slane %v9535, 2
      %v9537 = vmax.f32 %v9535, %v9536
      %v9538 = vrot.slane %v9537, 1
      %v9539 = vmax.f32 %v9537, %v9538
      %v9540 = vsel %vm8972, %v8886, -inf
      %v9541 = vrot.slane %v9540, 4
      %v9542 = vmax.f32 %v9540, %v9541
      %v9543 = vrot.slane %v9542, 2
      %v9544 = vmax.f32 %v9542, %v9543
      %v9545 = vrot.slane %v9544, 1
      %v9546 = vmax.f32 %v9544, %v9545
      %v9547 = vsel %vm8972, %v8887, -inf
      %v9548 = vrot.slane %v9547, 4
      %v9549 = vmax.f32 %v9547, %v9548
      %v9550 = vrot.slane %v9549, 2
      %v9551 = vmax.f32 %v9549, %v9550
      %v9552 = vrot.slane %v9551, 1
      %v9553 = vmax.f32 %v9551, %v9552
      %v9554 = vsel %vm8972, %v8888, -inf
      %v9555 = vrot.slane %v9554, 4
      %v9556 = vmax.f32 %v9554, %v9555
      %v9557 = vrot.slane %v9556, 2
      %v9558 = vmax.f32 %v9556, %v9557
      %v9559 = vrot.slane %v9558, 1
      %v9560 = vmax.f32 %v9558, %v9559
      %v9561 = vsel %vm8972, %v8797, -inf
      %v9562 = vrot.slane %v9561, 4
      %v9563 = vmax.f32 %v9561, %v9562
      %v9564 = vrot.slane %v9563, 2
      %v9565 = vmax.f32 %v9563, %v9564
      %v9566 = vrot.slane %v9565, 1
      %v9567 = vmax.f32 %v9565, %v9566
      %v9568 = vsel %vm8972, %v8889, -inf
      %v9569 = vrot.slane %v9568, 4
      %v9570 = vmax.f32 %v9568, %v9569
      %v9571 = vrot.slane %v9570, 2
      %v9572 = vmax.f32 %v9570, %v9571
      %v9573 = vrot.slane %v9572, 1
      %v9574 = vmax.f32 %v9572, %v9573
      %v9575 = vsel %vm8972, %v8890, -inf
      %v9576 = vrot.slane %v9575, 4
      %v9577 = vmax.f32 %v9575, %v9576
      %v9578 = vrot.slane %v9577, 2
      %v9579 = vmax.f32 %v9577, %v9578
      %v9580 = vrot.slane %v9579, 1
      %v9581 = vmax.f32 %v9579, %v9580
      %v9582 = vsel %vm8972, %v8891, -inf
      %v9583 = vrot.slane %v9582, 4
      %v9584 = vmax.f32 %v9582, %v9583
      %v9585 = vrot.slane %v9584, 2
      %v9586 = vmax.f32 %v9584, %v9585
      %v9587 = vrot.slane %v9586, 1
      %v9588 = vmax.f32 %v9586, %v9587
      %v9589 = vsel %vm8972, %v8798, -inf
      %v9590 = vrot.slane %v9589, 4
      %v9591 = vmax.f32 %v9589, %v9590
      %v9592 = vrot.slane %v9591, 2
      %v9593 = vmax.f32 %v9591, %v9592
      %v9594 = vrot.slane %v9593, 1
      %v9595 = vmax.f32 %v9593, %v9594
      %v9596 = vsel %vm8972, %v8892, -inf
      %v9597 = vrot.slane %v9596, 4
      %v9598 = vmax.f32 %v9596, %v9597
      %v9599 = vrot.slane %v9598, 2
      %v9600 = vmax.f32 %v9598, %v9599
      %v9601 = vrot.slane %v9600, 1
      %v9602 = vmax.f32 %v9600, %v9601
      %v9603 = vsel %vm8972, %v8893, -inf
      %v9604 = vrot.slane %v9603, 4
      %v9605 = vmax.f32 %v9603, %v9604
      %v9606 = vrot.slane %v9605, 2
      %v9607 = vmax.f32 %v9605, %v9606
      %v9608 = vrot.slane %v9607, 1
      %v9609 = vmax.f32 %v9607, %v9608
      %v9610 = vsel %vm8972, %v8894, -inf
      %v9611 = vrot.slane %v9610, 4
      %v9612 = vmax.f32 %v9610, %v9611
      %v9613 = vrot.slane %v9612, 2
      %v9614 = vmax.f32 %v9612, %v9613
      %v9615 = vrot.slane %v9614, 1
      %v9616 = vmax.f32 %v9614, %v9615
      %v9617 = vsel %vm8972, %v8799, -inf
      %v9618 = vrot.slane %v9617, 4
      %v9619 = vmax.f32 %v9617, %v9618
      %v9620 = vrot.slane %v9619, 2
      %v9621 = vmax.f32 %v9619, %v9620
      %v9622 = vrot.slane %v9621, 1
      %v9623 = vmax.f32 %v9621, %v9622
      %v9624 = vsel %vm8972, %v8895, -inf
      %v9625 = vrot.slane %v9624, 4
      %v9626 = vmax.f32 %v9624, %v9625
      %v9627 = vrot.slane %v9626, 2
      %v9628 = vmax.f32 %v9626, %v9627
      %v9629 = vrot.slane %v9628, 1
      %v9630 = vmax.f32 %v9628, %v9629
      %v9631 = vsel %vm8972, %v8896, -inf
      %v9632 = vrot.slane %v9631, 4
      %v9633 = vmax.f32 %v9631, %v9632
      %v9634 = vrot.slane %v9633, 2
      %v9635 = vmax.f32 %v9633, %v9634
      %v9636 = vrot.slane %v9635, 1
      %v9637 = vmax.f32 %v9635, %v9636
      %v9638 = vsel %vm8972, %v8897, -inf
      %v9639 = vrot.slane %v9638, 4
      %v9640 = vmax.f32 %v9638, %v9639
      %v9641 = vrot.slane %v9640, 2
      %v9642 = vmax.f32 %v9640, %v9641
      %v9643 = vrot.slane %v9642, 1
      %v9644 = vmax.f32 %v9642, %v9643
      %v9645 = vsel %vm8972, %v8800, -inf
      %v9646 = vrot.slane %v9645, 4
      %v9647 = vmax.f32 %v9645, %v9646
      %v9648 = vrot.slane %v9647, 2
      %v9649 = vmax.f32 %v9647, %v9648
      %v9650 = vrot.slane %v9649, 1
      %v9651 = vmax.f32 %v9649, %v9650
      %v9652 = vsel %vm8972, %v8898, -inf
      %v9653 = vrot.slane %v9652, 4
      %v9654 = vmax.f32 %v9652, %v9653
      %v9655 = vrot.slane %v9654, 2
      %v9656 = vmax.f32 %v9654, %v9655
      %v9657 = vrot.slane %v9656, 1
      %v9658 = vmax.f32 %v9656, %v9657
      %vm9659 = vcmask 523264
      %v9660 = vsel %vm9659, %v8979, -inf
      %v9661 = vsel %vm9659, %v9028, -inf
      %v9662 = vmax.f32 %v9660, %v9661
      %v9663 = vsel %vm9659, %v8986, -inf
      %v9664 = vsel %vm9659, %v9035, -inf
      %v9665 = vmax.f32 %v9663, %v9664
      %v9666 = vsel %vm9659, %v8993, -inf
      %v9667 = vsel %vm9659, %v9042, -inf
      %v9668 = vmax.f32 %v9666, %v9667
      %v9669 = vsel %vm9659, %v9000, -inf
      %v9670 = vsel %vm9659, %v9049, -inf
      %v9671 = vmax.f32 %v9669, %v9670
      %v9672 = vsel %vm9659, %v9007, -inf
      %v9673 = vsel %vm9659, %v9056, -inf
      %v9674 = vmax.f32 %v9672, %v9673
      %v9675 = vsel %vm9659, %v9014, -inf
      %v9676 = vsel %vm9659, %v9063, -inf
      %v9677 = vmax.f32 %v9675, %v9676
      %v9678 = vsel %vm9659, %v9021, -inf
      %v9679 = vsel %vm9659, %v9070, -inf
      %v9680 = vmax.f32 %v9678, %v9679
      %v9681 = vsel %vm9659, %v9077, -inf
      %v9682 = vsel %vm9659, %v9126, -inf
      %v9683 = vmax.f32 %v9681, %v9682
      %v9684 = vsel %vm9659, %v9084, -inf
      %v9685 = vsel %vm9659, %v9133, -inf
      %v9686 = vmax.f32 %v9684, %v9685
      %v9687 = vsel %vm9659, %v9091, -inf
      %v9688 = vsel %vm9659, %v9140, -inf
      %v9689 = vmax.f32 %v9687, %v9688
      %v9690 = vsel %vm9659, %v9098, -inf
      %v9691 = vsel %vm9659, %v9147, -inf
      %v9692 = vmax.f32 %v9690, %v9691
      %v9693 = vsel %vm9659, %v9105, -inf
      %v9694 = vsel %vm9659, %v9154, -inf
      %v9695 = vmax.f32 %v9693, %v9694
      %v9696 = vsel %vm9659, %v9112, -inf
      %v9697 = vsel %vm9659, %v9161, -inf
      %v9698 = vmax.f32 %v9696, %v9697
      %v9699 = vsel %vm9659, %v9119, -inf
      %v9700 = vsel %vm9659, %v9168, -inf
      %v9701 = vmax.f32 %v9699, %v9700
      %v9702 = vsel %vm9659, %v9175, -inf
      %v9703 = vsel %vm9659, %v9224, -inf
      %v9704 = vmax.f32 %v9702, %v9703
      %v9705 = vsel %vm9659, %v9182, -inf
      %v9706 = vsel %vm9659, %v9231, -inf
      %v9707 = vmax.f32 %v9705, %v9706
      %v9708 = vsel %vm9659, %v9189, -inf
      %v9709 = vsel %vm9659, %v9238, -inf
      %v9710 = vmax.f32 %v9708, %v9709
      %v9711 = vsel %vm9659, %v9196, -inf
      %v9712 = vsel %vm9659, %v9245, -inf
      %v9713 = vmax.f32 %v9711, %v9712
      %v9714 = vsel %vm9659, %v9203, -inf
      %v9715 = vsel %vm9659, %v9252, -inf
      %v9716 = vmax.f32 %v9714, %v9715
      %v9717 = vsel %vm9659, %v9210, -inf
      %v9718 = vsel %vm9659, %v9259, -inf
      %v9719 = vmax.f32 %v9717, %v9718
      %v9720 = vsel %vm9659, %v9217, -inf
      %v9721 = vsel %vm9659, %v9266, -inf
      %v9722 = vmax.f32 %v9720, %v9721
      %v9723 = vsel %vm9659, %v9273, -inf
      %v9724 = vsel %vm9659, %v9322, -inf
      %v9725 = vmax.f32 %v9723, %v9724
      %v9726 = vsel %vm9659, %v9280, -inf
      %v9727 = vsel %vm9659, %v9329, -inf
      %v9728 = vmax.f32 %v9726, %v9727
      %v9729 = vsel %vm9659, %v9287, -inf
      %v9730 = vsel %vm9659, %v9336, -inf
      %v9731 = vmax.f32 %v9729, %v9730
      %v9732 = vsel %vm9659, %v9294, -inf
      %v9733 = vsel %vm9659, %v9343, -inf
      %v9734 = vmax.f32 %v9732, %v9733
      %v9735 = vsel %vm9659, %v9301, -inf
      %v9736 = vsel %vm9659, %v9350, -inf
      %v9737 = vmax.f32 %v9735, %v9736
      %v9738 = vsel %vm9659, %v9308, -inf
      %v9739 = vsel %vm9659, %v9357, -inf
      %v9740 = vmax.f32 %v9738, %v9739
      %v9741 = vsel %vm9659, %v9315, -inf
      %v9742 = vsel %vm9659, %v9364, -inf
      %v9743 = vmax.f32 %v9741, %v9742
      %v9744 = vsel %vm9659, %v9371, -inf
      %v9745 = vsel %vm9659, %v9420, -inf
      %v9746 = vmax.f32 %v9744, %v9745
      %v9747 = vsel %vm9659, %v9378, -inf
      %v9748 = vsel %vm9659, %v9427, -inf
      %v9749 = vmax.f32 %v9747, %v9748
      %v9750 = vsel %vm9659, %v9385, -inf
      %v9751 = vsel %vm9659, %v9434, -inf
      %v9752 = vmax.f32 %v9750, %v9751
      %v9753 = vsel %vm9659, %v9392, -inf
      %v9754 = vsel %vm9659, %v9441, -inf
      %v9755 = vmax.f32 %v9753, %v9754
      %v9756 = vsel %vm9659, %v9399, -inf
      %v9757 = vsel %vm9659, %v9448, -inf
      %v9758 = vmax.f32 %v9756, %v9757
      %v9759 = vsel %vm9659, %v9406, -inf
      %v9760 = vsel %vm9659, %v9455, -inf
      %v9761 = vmax.f32 %v9759, %v9760
      %v9762 = vsel %vm9659, %v9413, -inf
      %v9763 = vsel %vm9659, %v9462, -inf
      %v9764 = vmax.f32 %v9762, %v9763
      %v9765 = vsel %vm9659, %v9469, -inf
      %v9766 = vsel %vm9659, %v9518, -inf
      %v9767 = vmax.f32 %v9765, %v9766
      %v9768 = vsel %vm9659, %v9476, -inf
      %v9769 = vsel %vm9659, %v9525, -inf
      %v9770 = vmax.f32 %v9768, %v9769
      %v9771 = vsel %vm9659, %v9483, -inf
      %v9772 = vsel %vm9659, %v9532, -inf
      %v9773 = vmax.f32 %v9771, %v9772
      %v9774 = vsel %vm9659, %v9490, -inf
      %v9775 = vsel %vm9659, %v9539, -inf
      %v9776 = vmax.f32 %v9774, %v9775
      %v9777 = vsel %vm9659, %v9497, -inf
      %v9778 = vsel %vm9659, %v9546, -inf
      %v9779 = vmax.f32 %v9777, %v9778
      %v9780 = vsel %vm9659, %v9504, -inf
      %v9781 = vsel %vm9659, %v9553, -inf
      %v9782 = vmax.f32 %v9780, %v9781
      %v9783 = vsel %vm9659, %v9511, -inf
      %v9784 = vsel %vm9659, %v9560, -inf
      %v9785 = vmax.f32 %v9783, %v9784
      %v9786 = vsel %vm9659, %v9567, -inf
      %v9787 = vsel %vm9659, %v9616, -inf
      %v9788 = vmax.f32 %v9786, %v9787
      %v9789 = vsel %vm9659, %v9574, -inf
      %v9790 = vsel %vm9659, %v9623, -inf
      %v9791 = vmax.f32 %v9789, %v9790
      %v9792 = vsel %vm9659, %v9581, -inf
      %v9793 = vsel %vm9659, %v9630, -inf
      %v9794 = vmax.f32 %v9792, %v9793
      %v9795 = vsel %vm9659, %v9588, -inf
      %v9796 = vsel %vm9659, %v9637, -inf
      %v9797 = vmax.f32 %v9795, %v9796
      %v9798 = vsel %vm9659, %v9595, -inf
      %v9799 = vsel %vm9659, %v9644, -inf
      %v9800 = vmax.f32 %v9798, %v9799
      %v9801 = vsel %vm9659, %v9602, -inf
      %v9802 = vsel %vm9659, %v9651, -inf
      %v9803 = vmax.f32 %v9801, %v9802
      %v9804 = vsel %vm9659, %v9609, -inf
      %v9805 = vsel %vm9659, %v9658, -inf
      %v9806 = vmax.f32 %v9804, %v9805
      %v9807 = vpack.c.bf16 %v9662, %v9662
      %v9808 = vpack.c.bf16 %v9665, %v9665
      %v9809 = vpack.c.bf16 %v9668, %v9668
      %v9810 = vpack.c.bf16 %v9671, %v9671
      %v9811 = vpack.c.bf16 %v9674, %v9674
      %v9812 = vpack.c.bf16 %v9677, %v9677
      %v9813 = vpack.c.bf16 %v9680, %v9680
      %v9814 = vpack.c.bf16 %v9683, %v9683
      %v9815 = vpack.c.bf16 %v9686, %v9686
      %v9816 = vpack.c.bf16 %v9689, %v9689
      %v9817 = vpack.c.bf16 %v9692, %v9692
      %v9818 = vpack.c.bf16 %v9695, %v9695
      %v9819 = vpack.c.bf16 %v9698, %v9698
      %v9820 = vpack.c.bf16 %v9701, %v9701
      %v9821 = vpack.c.bf16 %v9704, %v9704
      %v9822 = vpack.c.bf16 %v9707, %v9707
      %v9823 = vpack.c.bf16 %v9710, %v9710
      %v9824 = vpack.c.bf16 %v9713, %v9713
      %v9825 = vpack.c.bf16 %v9716, %v9716
      %v9826 = vpack.c.bf16 %v9719, %v9719
      %v9827 = vpack.c.bf16 %v9722, %v9722
      %v9828 = vpack.c.bf16 %v9725, %v9725
      %v9829 = vpack.c.bf16 %v9728, %v9728
      %v9830 = vpack.c.bf16 %v9731, %v9731
      %v9831 = vpack.c.bf16 %v9734, %v9734
      %v9832 = vpack.c.bf16 %v9737, %v9737
      %v9833 = vpack.c.bf16 %v9740, %v9740
      %v9834 = vpack.c.bf16 %v9743, %v9743
      %v9835 = vpack.c.bf16 %v9746, %v9746
      %v9836 = vpack.c.bf16 %v9749, %v9749
      %v9837 = vpack.c.bf16 %v9752, %v9752
      %v9838 = vpack.c.bf16 %v9755, %v9755
      %v9839 = vpack.c.bf16 %v9758, %v9758
      %v9840 = vpack.c.bf16 %v9761, %v9761
      %v9841 = vpack.c.bf16 %v9764, %v9764
      %v9842 = vpack.c.bf16 %v9767, %v9767
      %v9843 = vpack.c.bf16 %v9770, %v9770
      %v9844 = vpack.c.bf16 %v9773, %v9773
      %v9845 = vpack.c.bf16 %v9776, %v9776
      %v9846 = vpack.c.bf16 %v9779, %v9779
      %v9847 = vpack.c.bf16 %v9782, %v9782
      %v9848 = vpack.c.bf16 %v9785, %v9785
      %v9849 = vpack.c.bf16 %v9788, %v9788
      %v9850 = vpack.c.bf16 %v9791, %v9791
      %v9851 = vpack.c.bf16 %v9794, %v9794
      %v9852 = vpack.c.bf16 %v9797, %v9797
      %v9853 = vpack.c.bf16 %v9800, %v9800
      %v9854 = vpack.c.bf16 %v9803, %v9803
      %v9855 = vpack.c.bf16 %v9806, %v9806
      %v9905 = vunpack.c.l.b16 %v9807
      %v9906 = vunpack.c.l.b16 %v9808
      %v9907 = vunpack.c.l.b16 %v9809
      %v9908 = vunpack.c.l.b16 %v9810
      %v9909 = vunpack.c.l.b16 %v9811
      %v9910 = vunpack.c.l.b16 %v9812
      %v9911 = vunpack.c.l.b16 %v9813
      %v9912 = vunpack.c.l.b16 %v9814
      %v9913 = vunpack.c.l.b16 %v9815
      %v9914 = vunpack.c.l.b16 %v9816
      %v9915 = vunpack.c.l.b16 %v9817
      %v9916 = vunpack.c.l.b16 %v9818
      %v9917 = vunpack.c.l.b16 %v9819
      %v9918 = vunpack.c.l.b16 %v9820
      %v9919 = vunpack.c.l.b16 %v9821
      %v9920 = vunpack.c.l.b16 %v9822
      %v9921 = vunpack.c.l.b16 %v9823
      %v9922 = vunpack.c.l.b16 %v9824
      %v9923 = vunpack.c.l.b16 %v9825
      %v9924 = vunpack.c.l.b16 %v9826
      %v9925 = vunpack.c.l.b16 %v9827
      %v9926 = vunpack.c.l.b16 %v9828
      %v9927 = vunpack.c.l.b16 %v9829
      %v9928 = vunpack.c.l.b16 %v9830
      %v9929 = vunpack.c.l.b16 %v9831
      %v9930 = vunpack.c.l.b16 %v9832
      %v9931 = vunpack.c.l.b16 %v9833
      %v9932 = vunpack.c.l.b16 %v9834
      %v9933 = vunpack.c.l.b16 %v9835
      %v9934 = vunpack.c.l.b16 %v9836
      %v9935 = vunpack.c.l.b16 %v9837
      %v9936 = vunpack.c.l.b16 %v9838
      %v9937 = vunpack.c.l.b16 %v9839
      %v9938 = vunpack.c.l.b16 %v9840
      %v9939 = vunpack.c.l.b16 %v9841
      %v9940 = vunpack.c.l.b16 %v9842
      %v9941 = vunpack.c.l.b16 %v9843
      %v9942 = vunpack.c.l.b16 %v9844
      %v9943 = vunpack.c.l.b16 %v9845
      %v9944 = vunpack.c.l.b16 %v9846
      %v9945 = vunpack.c.l.b16 %v9847
      %v9946 = vunpack.c.l.b16 %v9848
      %v9947 = vunpack.c.l.b16 %v9849
      %v9948 = vunpack.c.l.b16 %v9850
      %v9949 = vunpack.c.l.b16 %v9851
      %v9950 = vunpack.c.l.b16 %v9852
      %v9951 = vunpack.c.l.b16 %v9853
      %v9952 = vunpack.c.l.b16 %v9854
      %v9953 = vunpack.c.l.b16 %v9855
      %v9954 = vsel %vm5815, %v9906, %v9905
      %v9955 = vsel %vm5803, %v9907, %v9954
      %v9956 = vsel %vm5805, %v9908, %v9955
      %v9957 = vsel %vm5807, %v9909, %v9956
      %v9958 = vsel %vm5809, %v9910, %v9957
      %v9959 = vsel %vm5811, %v9911, %v9958
      %v9960 = vsel %vm5813, %v9912, %v9959
      %v9961 = vsel %vm5815, %v9914, %v9913
      %v9962 = vsel %vm5803, %v9915, %v9961
      %v9963 = vsel %vm5805, %v9916, %v9962
      %v9964 = vsel %vm5807, %v9917, %v9963
      %v9965 = vsel %vm5809, %v9918, %v9964
      %v9966 = vsel %vm5811, %v9919, %v9965
      %v9967 = vsel %vm5813, %v9920, %v9966
      %v9968 = vsel %vm5815, %v9922, %v9921
      %v9969 = vsel %vm5803, %v9923, %v9968
      %v9970 = vsel %vm5805, %v9924, %v9969
      %v9971 = vsel %vm5807, %v9925, %v9970
      %v9972 = vsel %vm5809, %v9926, %v9971
      %v9973 = vsel %vm5811, %v9927, %v9972
      %v9974 = vsel %vm5813, %v9928, %v9973
      %v9975 = vsel %vm5815, %v9930, %v9929
      %v9976 = vsel %vm5803, %v9931, %v9975
      %v9977 = vsel %vm5805, %v9932, %v9976
      %v9978 = vsel %vm5807, %v9933, %v9977
      %v9979 = vsel %vm5809, %v9934, %v9978
      %v9980 = vsel %vm5811, %v9935, %v9979
      %v9981 = vsel %vm5813, %v9936, %v9980
      %v9982 = vsel %vm5815, %v9938, %v9937
      %v9983 = vsel %vm5803, %v9939, %v9982
      %v9984 = vsel %vm5805, %v9940, %v9983
      %v9985 = vsel %vm5807, %v9941, %v9984
      %v9986 = vsel %vm5809, %v9942, %v9985
      %v9987 = vsel %vm5811, %v9943, %v9986
      %v9988 = vsel %vm5813, %v9944, %v9987
      %v9989 = vsel %vm5815, %v9946, %v9945
      %v9990 = vsel %vm5803, %v9947, %v9989
      %v9991 = vsel %vm5805, %v9948, %v9990
      %v9992 = vsel %vm5807, %v9949, %v9991
      %v9993 = vsel %vm5809, %v9950, %v9992
      %v9994 = vsel %vm5811, %v9951, %v9993
      %v9995 = vsel %vm5813, %v9952, %v9994
      %v9996 = vpack.c.b16 %v9960, %v9960
      %v9997 = vpack.c.b16 %v9967, %v9967
      %v9998 = vpack.c.b16 %v9974, %v9974
      %v9999 = vpack.c.b16 %v9981, %v9981
      %v10000 = vpack.c.b16 %v9988, %v9988
      %v10001 = vpack.c.b16 %v9995, %v9995
      %v10002 = vpack.c.b16 %v9953, %v9953
      %vm10010 = vcmask 519168
      %10011 = vst.msk [vmem:[%s224] sm:$0xf] %vm10010, %v9996
      %10012 = vst.msk [vmem:[%s224 + $0x4] sm:$0xf] %vm10010, %v9997
      %10013 = vst.msk [vmem:[%s224 + $0x8] sm:$0xf] %vm10010, %v9998
      %10014 = vst.msk [vmem:[%s224 + $0xc] sm:$0xf] %vm10010, %v9999
      %10015 = vst.msk [vmem:[%s224 + $0x10] sm:$0xf] %vm10010, %v10000
      %10016 = vst.msk [vmem:[%s224 + $0x14] sm:$0xf] %vm10010, %v10001
      %vm10017 = vcmask 516096
      %vm10018 = vmand %vm10017, %vm5114
      %v10019 = vld [vmem:[%s224 + $0x18] sm:$0x1]
      %v10020 = vsel %vm10018, %v10002, %v10019
      %10021 = vst [vmem:[%s224 + $0x18] sm:$0x1] %v10020
      %p10022 = scmp.lt.s32.totalorder %s16, 1
      %s10023 = scalar_select %p10022, %s16, 1
      %s10024 = smul.addr %s10023, 7
      %s10025 = smul.addr %s10024, 4
      %s10026 = scalar_lea.vmem %s5, %s10025
      // Predicated region
      $region41: #{cnn_forward.2} parent=39 // pred_check
        %p10027 = pneg %p144
      $region42: #{cnn_forward.2} parent=39 // pred_check_branch
        %10029 = sbr.rel (%p10027) target = $region44
      $region43: #{cnn_forward.2} parent=39 // pred_region
        _
      $region44: #{cnn_forward.2} parent=39 // pred_fallthru
        _
    $region40: #{cnn_forward.2} parent=5 // pred_fallthru
      _
    %p10030 = scmp.le.s32.totalorder 2, %s11
    // Predicated region
    $region45: #{cnn_forward.2} parent=5 // pred_check
      %p10031 = pneg %p10030
    $region46: #{cnn_forward.2} parent=5 // pred_check_branch
      %10033 = sbr.rel (%p10031) target = $region48
    $region47: #{cnn_forward.2} parent=5 // pred_region
      %s10034 = ssub.s32 %s11, 2
      // Predicated region
      $region49: #{cnn_forward.2} parent=47 // pred_check
        %p10035 = pneg %p150
      $region50: #{cnn_forward.2} parent=47 // pred_check_branch
        %10037 = sbr.rel (%p10035) target = $region52
      $region51: #{cnn_forward.2} parent=47 // pred_region
        %p10038 = scmp.lt.s32.totalorder %s17, 1
        %s10039 = scalar_select %p10038, %s17, 1
        %s10040 = smul.addr %s10039, 7
        %s10041 = smul.addr %s10040, 4
        %s10042 = scalar_lea.vmem %s5, %s10041
      $region52: #{cnn_forward.2} parent=47 // pred_fallthru
        _
    $region48: #{cnn_forward.2} parent=5 // pred_fallthru
      _
  $region6: #{cnn_forward.2} parent=0 // loop_footer
    %s15 = sadd.s32 1, %s11
  $region7: #{cnn_forward.2} parent=0 // loop_footer_branch
    %10 = sbr.rel target = $region3
  $region8: #{cnn_forward.2} parent=0 // loop_exit
    _

</llo_original>
